<compile_context>
chip_gen: v5e
topology: v5e:2x2
jax: 0.10.0
libtpu: 0.0.40
codegen_flags: <defaults>
</compile_context>

<pallas_src>
import functools

import jax
import jax.numpy as jnp
from jax.experimental import pallas as pl
from jax.experimental.pallas import tpu as pltpu

LANE = 128            # Cout padded up to a multiple of this (lane-dense stores)
HALO_ALIGN = 32       # halo block row alignment (covers bf16 sublane packing)
EW_BLOCK_BYTES = 4 << 20   # target bytes per elementwise BN+ReLU output block


def _round_up(x, m):
    return (x + m - 1) // m * m


def _cdiv(a, b):
    return (a + b - 1) // b


def _device_kind():
    try:
        return jax.devices()[0].device_kind.lower()
    except Exception:
        return ""


_KIND = _device_kind()
_IS_V7 = ("v7" in _KIND) or ("tpu7" in _KIND)
# 2 partial-stat splits only where there are 2 TensorCores per chip (v7x);
# on single-TC v5e/v6e the parallel split buys nothing.
NSPLIT = 2 if _IS_V7 else 1
# v5e/v6e have 128 MiB VMEM -> spend it on bigger row tiles; v7x has 64 MiB.
ROW_TILE_TARGET = 512 if _IS_V7 else 1024
VMEM_LIMIT = (32 if _IS_V7 else 64) * 1024 * 1024


# ---------------------------------------------------------------- wrapper ----
@functools.partial(jax.jit, static_argnames=("stride", "padding", "add_relu"))
def conv_bn_relu(x, weight, bias, gamma, beta, *, stride=1, padding=1,
                 add_relu=True, eps=1e-5):
    """x: (N, Cin, H, W) f32; weight: (Cout, Cin, kH, kW); returns NCHW f32."""
    del bias  # conv bias is exactly cancelled by the train-mode BatchNorm mean.
    if stride != 1:
        raise NotImplementedError("TODO(synk): stride > 1 not supported")
    N, Cin, H, W = x.shape
    Cout, _, kH, kW = weight.shape
    Hp, Wp = H + 2 * padding, W + 2 * padding
    Ho, Wo = Hp - kH + 1, Wp - kW + 1
    M = N * Ho * Wo                      # number of valid conv outputs per channel
    kHW = kH * kW
    Cp = _round_up(Cout, LANE)           # lane-dense output channels

    # Flat-shift geometry: one "row" = one padded spatial position (n, hp, wp).
    # For kernel offset (ki, kj) the needed input row is simply
    # flat_row + ki*Wp + kj, so a contiguous row tile + a small halo covers all
    # kH*kW shifts of that tile (border positions are junk and masked/cropped).
    HALO = (kH - 1) * Wp + (kW - 1)
    HALO_BS = _round_up(max(HALO, HALO_ALIGN), HALO_ALIGN)
    TMW = _round_up(ROW_TILE_TARGET, HALO_BS)
    rows_data = N * Hp * Wp
    n_tiles = _round_up(max(_cdiv(rows_data, TMW), 1), NSPLIT)
    steps = n_tiles // NSPLIT
    rows2 = n_tiles * TMW
    hblk = TMW // HALO_BS

    # ---- cheap glue: padded NHWC view (read once), validity mask, weights ----
    # TODO(synk): accept/produce NHWC at the module boundary to drop the
    # NCHW<->NHWC transposes (one extra XLA HBM pass each way).
    x_nhwc = jnp.transpose(x, (0, 2, 3, 1))
    x_padded = jnp.pad(x_nhwc, ((0, 0), (padding, padding),
                                (padding, padding), (0, 0)))
    x2 = x_padded.reshape(rows_data, Cin).astype(jnp.bfloat16)
    x2 = jnp.pad(x2, ((0, rows2 + HALO_BS - rows_data), (0, 0)))   # halo stays in-bounds

    valid_hw = (jnp.arange(Hp) < Ho)[:, None] & (jnp.arange(Wp) < Wo)[None, :]
    mask = jnp.broadcast_to(valid_hw[None], (N, Hp, Wp)).reshape(rows_data, 1)
    mask = jnp.pad(mask.astype(jnp.float32), ((0, rows2 - rows_data), (0, 0)))

    w_k = jnp.transpose(weight, (2, 3, 1, 0)).reshape(kHW, Cin, Cout)
    w_k = jnp.pad(w_k, ((0, 0), (0, 0), (0, Cp - Cout))).astype(jnp.bfloat16)

    # ---- kernel 1: shifted-dot conv fused with masked BN batch-stat partials ----
    def conv_stats_kernel(x_ref, xh_ref, m_ref, w_ref, y_ref, sum_ref, sq_ref):
        @pl.when(pl.program_id(1) == 0)
        def _init():
            sum_ref[...] = jnp.zeros_like(sum_ref)
            sq_ref[...] = jnp.zeros_like(sq_ref)

        # Contiguous row tile + halo (same HBM array, two Blocked specs).
        buf = jnp.concatenate([x_ref[...], xh_ref[...]], axis=0)   # (TMW+HALO_BS, Cin)
        acc = jnp.zeros((TMW, Cp), jnp.float32)
        for k in range(kHW):                                       # static 3x3 unroll
            off = (k // kW) * Wp + (k % kW)
            acc = acc + jnp.dot(buf[off:off + TMW, :], w_ref[k],
                                preferred_element_type=jnp.float32)

        m = m_ref[...]                                             # (TMW, 1) f32
        sum_ref[...] += jnp.sum(acc * m, axis=0, keepdims=True)[None]
        sq_ref[...] += jnp.sum(acc * acc * m, axis=0, keepdims=True)[None]
        y_ref[...] = acc.astype(y_ref.dtype)                       # bf16 store

    flops1 = 2 * rows2 * kHW * Cin * Cp
    bytes1 = ((rows2 + HALO_BS) * Cin * 2 + rows2 * 4 + kHW * Cin * Cp * 2
              + rows2 * Cp * 2 + 2 * NSPLIT * Cp * 4)

    y, psum, psq = pl.pallas_call(
        conv_stats_kernel,
        out_shape=(
            jax.ShapeDtypeStruct((rows2, Cp), jnp.bfloat16),
            jax.ShapeDtypeStruct((NSPLIT, 1, Cp), jnp.float32),
            jax.ShapeDtypeStruct((NSPLIT, 1, Cp), jnp.float32),
        ),
        grid_spec=pltpu.PrefetchScalarGridSpec(
            num_scalar_prefetch=0,
            grid=(NSPLIT, steps),
            in_specs=[
                pl.BlockSpec((TMW, Cin), lambda sp, it: (sp * steps + it, 0)),
                pl.BlockSpec((HALO_BS, Cin),
                             lambda sp, it: ((sp * steps + it + 1) * hblk, 0)),
                pl.BlockSpec((TMW, 1), lambda sp, it: (sp * steps + it, 0)),
                # TODO(synk): for large K*Cp weights (>8 MiB bf16) use
                # pipeline_mode=pl.Buffered(1) or a Cout grid axis on v7x.
                pl.BlockSpec((kHW, Cin, Cp), lambda sp, it: (0, 0, 0)),
            ],
            out_specs=(
                pl.BlockSpec((TMW, Cp), lambda sp, it: (sp * steps + it, 0)),
                pl.BlockSpec((1, 1, Cp), lambda sp, it: (sp, 0, 0)),
                pl.BlockSpec((1, 1, Cp), lambda sp, it: (sp, 0, 0)),
            ),
        ),
        compiler_params=pltpu.CompilerParams(
            dimension_semantics=("parallel", "arbitrary"),
            vmem_limit_bytes=VMEM_LIMIT),
        cost_estimate=pl.CostEstimate(flops=flops1, transcendentals=0,
                                      bytes_accessed=bytes1),
    )(x2, x2, mask, w_k)

    # ---- scalar glue: combine partials, fold BN affine into scale/shift ----
    s = jnp.sum(psum, axis=(0, 1))                    # (Cp,)
    sq = jnp.sum(psq, axis=(0, 1))                    # (Cp,)
    cnt = jnp.float32(M)                              # masked: only valid rows counted
    mean = s / cnt
    # TODO(synk): one-pass E[y^2]-E[y]^2 can cancel if |mean| >> std at
    # production sizes; switch to a mean-shifted / Welford combine if needed.
    var = jnp.maximum(sq / cnt - mean * mean, 0.0)
    inv_std = jax.lax.rsqrt(var + eps)
    gamma_p = jnp.pad(gamma.astype(jnp.float32), (0, Cp - Cout))
    beta_p = jnp.pad(beta.astype(jnp.float32), (0, Cp - Cout))
    scale = (gamma_p * inv_std).reshape(1, Cp)
    shift = (beta_p - mean * gamma_p * inv_std).reshape(1, Cp)

    # ---- kernel 2: normalize + affine (+ ReLU), ~4 MiB mem-bound blocks ----
    def bn_act_kernel(y_ref, scale_ref, shift_ref, o_ref):
        v = y_ref[...].astype(jnp.float32) * scale_ref[...] + shift_ref[...]
        if add_relu:
            v = jnp.maximum(v, 0.0)
        o_ref[...] = v

    d = 1
    for cand in range(1, n_tiles + 1):
        if n_tiles % cand == 0 and TMW * cand * Cp * 4 <= EW_BLOCK_BYTES:
            d = cand
    TM_EW = TMW * d
    grid2 = n_tiles // d

    flops2 = 2 * rows2 * Cp
    bytes2 = rows2 * Cp * (2 + 4) + 2 * Cp * 4

    # TODO(synk): could alias the bf16 y buffer in place (input_output_aliases)
    # if a bf16 final output is acceptable; kept f32 output for fidelity.
    out_full = pl.pallas_call(
        bn_act_kernel,
        out_shape=jax.ShapeDtypeStruct((rows2, Cp), jnp.float32),
        grid_spec=pltpu.PrefetchScalarGridSpec(
            num_scalar_prefetch=0,
            grid=(grid2,),
            in_specs=[
                pl.BlockSpec((TM_EW, Cp), lambda i: (i, 0)),
                pl.BlockSpec((1, Cp), lambda i: (0, 0)),
                pl.BlockSpec((1, Cp), lambda i: (0, 0)),
            ],
            out_specs=pl.BlockSpec((TM_EW, Cp), lambda i: (i, 0)),
        ),
        compiler_params=pltpu.CompilerParams(
            dimension_semantics=("parallel",),
            vmem_limit_bytes=VMEM_LIMIT),
        cost_estimate=pl.CostEstimate(flops=flops2, transcendentals=0,
                                      bytes_accessed=bytes2),
    )(y, scale, shift)

    out = out_full[:rows_data].reshape(N, Hp, Wp, Cp)[:, :Ho, :Wo, :Cout]
    return jnp.transpose(out, (0, 3, 1, 2))


# -------------------------------------------------------------- reference ----
def _reference(x, weight, bias, gamma, beta, *, stride=1, padding=1, eps=1e-5):
    y = jax.lax.conv_general_dilated(
        x, weight, window_strides=(stride, stride),
        padding=[(padding, padding), (padding, padding)],
        dimension_numbers=("NCHW", "OIHW", "NCHW"),
        precision=jax.lax.Precision.HIGHEST)
    y = y + bias.reshape(1, -1, 1, 1)
    mean = jnp.mean(y, axis=(0, 2, 3), keepdims=True)
    var = jnp.mean((y - mean) ** 2, axis=(0, 2, 3), keepdims=True)
    y = (y - mean) * jax.lax.rsqrt(var + eps)
    y = y * gamma.reshape(1, -1, 1, 1) + beta.reshape(1, -1, 1, 1)
    return jnp.maximum(y, 0.0)


# ------------------------------------------------------------------- main ----
if __name__ == "__main__":
    key = jax.random.PRNGKey(0)
    k_x, k_w, k_b = jax.random.split(key, 3)

    N, Cin, H, W = 2, 4, 16, 16
    Cout, ksize, stride, padding = 8, 3, 1, 1

    x = jax.random.normal(k_x, (N, Cin, H, W), dtype=jnp.float32)
    fan_in = Cin * ksize * ksize
    bound = 1.0 / (fan_in ** 0.5)
    weight = jax.random.uniform(k_w, (Cout, Cin, ksize, ksize),
                                minval=-bound, maxval=bound, dtype=jnp.float32)
    bias = jax.random.uniform(k_b, (Cout,), minval=-bound, maxval=bound,
                              dtype=jnp.float32)
    gamma = jnp.ones((Cout,), dtype=jnp.float32)   # BatchNorm2d default init
    beta = jnp.zeros((Cout,), dtype=jnp.float32)

    out = conv_bn_relu(x, weight, bias, gamma, beta,
                       stride=stride, padding=padding, add_relu=True)
    out = jax.block_until_ready(out)
    assert out.shape == (N, Cout, H, W)
    assert bool(jnp.all(jnp.isfinite(out)))

    # (1) vs exact f32 reference: tolerance covers bf16 conv operands and the
    # bf16 storage of the conv intermediate (f32 MXU accumulation kept).
    ref = _reference(x, weight, bias, gamma, beta, stride=stride, padding=padding)
    assert jnp.max(jnp.abs(out - ref)) < 5e-2, "mismatch vs f32 reference"

    # (2) vs reference fed the same bf16-rounded operands: isolates the
    # algorithm (conv + train-BN + ReLU).  Residual error is dominated by the
    # bf16 storage of y before normalization (~|z| * 2^-9), hence 2.5e-2.
    xq = x.astype(jnp.bfloat16).astype(jnp.float32)
    wq = weight.astype(jnp.bfloat16).astype(jnp.float32)
    ref_q = _reference(xq, wq, bias, gamma, beta, stride=stride, padding=padding)
    assert jnp.max(jnp.abs(out - ref_q)) < 2.5e-2, "mismatch vs bf16-operand reference"

    print("KERNEL_OK")
</pallas_src>

<mosaic_0001>
module attributes {stable_mosaic.version = 11 : i64} {
  func.func @bn_act_kernel(%arg0: i32, %arg1: memref<1024x128xbf16, #tpu.memory_space<vmem>>, %arg2: memref<1x128xf32, #tpu.memory_space<vmem>>, %arg3: memref<1x128xf32, #tpu.memory_space<vmem>>, %arg4: memref<1024x128xf32, #tpu.memory_space<vmem>>) attributes {dimension_semantics = [#tpu.dimension_semantics<parallel>], iteration_bounds = array<i64: 1>, scalar_prefetch = 0 : i64, scratch_operands = 0 : i64, tpu.core_type = #tpu.core_type<tc>, window_params = [{transform_indices = @transform_0, window_bounds = array<i64: 1024, 128>}, {pipeline_mode = #tpu.pipeline_mode<synchronous>, transform_indices = @transform_1, window_bounds = array<i64: 1, 128>}, {pipeline_mode = #tpu.pipeline_mode<synchronous>, transform_indices = @transform_2, window_bounds = array<i64: 1, 128>}, {transform_indices = @transform_3, window_bounds = array<i64: 1024, 128>}]} {
    %c0 = arith.constant 0 : index
    %c0_0 = arith.constant 0 : index
    %0 = vector.load %arg1[%c0, %c0_0] : memref<1024x128xbf16, #tpu.memory_space<vmem>>, vector<1024x128xbf16>
    %1 = arith.extf %0 : vector<1024x128xbf16> to vector<1024x128xf32>
    %c0_1 = arith.constant 0 : index
    %c0_2 = arith.constant 0 : index
    %2 = vector.load %arg2[%c0_1, %c0_2] : memref<1x128xf32, #tpu.memory_space<vmem>>, vector<1x128xf32>
    %3 = vector.broadcast %2 : vector<1x128xf32> to vector<1024x128xf32>
    %4 = arith.mulf %1, %3 : vector<1024x128xf32>
    %c0_3 = arith.constant 0 : index
    %c0_4 = arith.constant 0 : index
    %5 = vector.load %arg3[%c0_3, %c0_4] : memref<1x128xf32, #tpu.memory_space<vmem>>, vector<1x128xf32>
    %6 = vector.broadcast %5 : vector<1x128xf32> to vector<1024x128xf32>
    %7 = arith.addf %4, %6 : vector<1024x128xf32>
    %cst = arith.constant 0.000000e+00 : f32
    %8 = vector.broadcast %cst : f32 to vector<1024x128xf32>
    %9 = arith.maximumf %7, %8 : vector<1024x128xf32>
    %c0_5 = arith.constant 0 : index
    %c0_6 = arith.constant 0 : index
    %10 = vector.load %arg4[%c0_5, %c0_6] : memref<1024x128xf32, #tpu.memory_space<vmem>>, vector<1024x128xf32>
    tpu.vector_store %arg4[%c0_5, %c0_6], %9 {strides = array<i32>} : memref<1024x128xf32, #tpu.memory_space<vmem>>, vector<1024x128xf32>,
    return
  }
  func.func @transform_0(%arg0: i32) -> (i32, i32) {
    %c0_i32 = arith.constant 0 : i32
    %c0_i32_0 = arith.constant 0 : i32
    return %arg0, %c0_i32 : i32, i32
  }
  func.func @transform_1(%arg0: i32) -> (i32, i32) {
    %c0_i32 = arith.constant 0 : i32
    %c0_i32_0 = arith.constant 0 : i32
    %c0_i32_1 = arith.constant 0 : i32
    return %c0_i32, %c0_i32_0 : i32, i32
  }
  func.func @transform_2(%arg0: i32) -> (i32, i32) {
    %c0_i32 = arith.constant 0 : i32
    %c0_i32_0 = arith.constant 0 : i32
    %c0_i32_1 = arith.constant 0 : i32
    return %c0_i32, %c0_i32_0 : i32, i32
  }
  func.func @transform_3(%arg0: i32) -> (i32, i32) {
    %c0_i32 = arith.constant 0 : i32
    %c0_i32_0 = arith.constant 0 : i32
    return %arg0, %c0_i32 : i32, i32
  }
}

module attributes {stable_mosaic.version = 11 : i64} {
  func.func @conv_stats_kernel(%arg0: i32, %arg1: i32, %arg2: memref<1024x4xbf16, #tpu.memory_space<vmem>>, %arg3: memref<64x4xbf16, #tpu.memory_space<vmem>>, %arg4: memref<1024x1xf32, #tpu.memory_space<vmem>>, %arg5: memref<9x4x128xbf16, #tpu.memory_space<vmem>>, %arg6: memref<1024x128xbf16, #tpu.memory_space<vmem>>, %arg7: memref<1x1x128xf32, #tpu.memory_space<vmem>>, %arg8: memref<1x1x128xf32, #tpu.memory_space<vmem>>) attributes {dimension_semantics = [#tpu.dimension_semantics<parallel>, #tpu.dimension_semantics<arbitrary>], iteration_bounds = array<i64: 1, 1>, scalar_prefetch = 0 : i64, scratch_operands = 0 : i64, tpu.core_type = #tpu.core_type<tc>, window_params = [{transform_indices = @transform_0, window_bounds = array<i64: 1024, 4>}, {transform_indices = @transform_1, window_bounds = array<i64: 64, 4>}, {transform_indices = @transform_2, window_bounds = array<i64: 1024, 1>}, {pipeline_mode = #tpu.pipeline_mode<synchronous>, transform_indices = @transform_3, window_bounds = array<i64: 9, 4, 128>}, {transform_indices = @transform_4, window_bounds = array<i64: 1024, 128>}, {transform_indices = @transform_5, window_bounds = array<i64: 1, 1, 128>}, {transform_indices = @transform_6, window_bounds = array<i64: 1, 1, 128>}]} {
    %c0_i32 = arith.constant 0 : i32
    %0 = arith.cmpi eq, %arg1, %c0_i32 : i32
    %1 = arith.extui %0 : i1 to i32
    %c0_i32_0 = arith.constant 0 : i32
    %2 = arith.cmpi ne, %1, %c0_i32_0 : i32
    scf.if %2 {
      %cst_50 = arith.constant 0.000000e+00 : f32
      %72 = vector.broadcast %cst_50 : f32 to vector<1x1x128xf32>
      %c0_51 = arith.constant 0 : index
      %c0_52 = arith.constant 0 : index
      %c0_53 = arith.constant 0 : index
      %73 = vector.load %arg7[%c0_51, %c0_52, %c0_53] : memref<1x1x128xf32, #tpu.memory_space<vmem>>, vector<1x1x128xf32>
      tpu.vector_store %arg7[%c0_51, %c0_52, %c0_53], %72 {strides = array<i32>} : memref<1x1x128xf32, #tpu.memory_space<vmem>>, vector<1x1x128xf32>,
      %cst_54 = arith.constant 0.000000e+00 : f32
      %74 = vector.broadcast %cst_54 : f32 to vector<1x1x128xf32>
      %c0_55 = arith.constant 0 : index
      %c0_56 = arith.constant 0 : index
      %c0_57 = arith.constant 0 : index
      %75 = vector.load %arg8[%c0_55, %c0_56, %c0_57] : memref<1x1x128xf32, #tpu.memory_space<vmem>>, vector<1x1x128xf32>
      tpu.vector_store %arg8[%c0_55, %c0_56, %c0_57], %74 {strides = array<i32>} : memref<1x1x128xf32, #tpu.memory_space<vmem>>, vector<1x1x128xf32>,
    } else {
    }
    %c0 = arith.constant 0 : index
    %c0_1 = arith.constant 0 : index
    %3 = vector.load %arg2[%c0, %c0_1] : memref<1024x4xbf16, #tpu.memory_space<vmem>>, vector<1024x4xbf16>
    %c0_2 = arith.constant 0 : index
    %c0_3 = arith.constant 0 : index
    %4 = vector.load %arg3[%c0_2, %c0_3] : memref<64x4xbf16, #tpu.memory_space<vmem>>, vector<64x4xbf16>
    %5 = tpu.concatenate %3, %4 in 0 : vector<1024x4xbf16>, vector<64x4xbf16> -> vector<1088x4xbf16>
    %cst = arith.constant 0.000000e+00 : f32
    %6 = vector.broadcast %cst : f32 to vector<1024x128xf32>
    %7 = vector.extract_strided_slice %5 {offsets = [0, 0], sizes = [1024, 4], strides = [1, 1]} : vector<1088x4xbf16> to vector<1024x4xbf16>
    %c0_4 = arith.constant 0 : index
    %c0_5 = arith.constant 0 : index
    %c0_6 = arith.constant 0 : index
    %8 = vector.load %arg5[%c0_4, %c0_5, %c0_6] : memref<9x4x128xbf16, #tpu.memory_space<vmem>>, vector<1x4x128xbf16>
    %9 = vector.shape_cast %8 : vector<1x4x128xbf16> to vector<4x128xbf16>
    %cst_7 = arith.constant dense<0.000000e+00> : vector<1024x128xf32>
    %10 = tpu.matmul %7, %9, %cst_7 {dimension_numbers = #tpu.dot_dimension_numbers<[1], [0], [0], [1], [0, 0, 1, 1], [], []>} : vector<1024x4xbf16>, vector<4x128xbf16>, vector<1024x128xf32> -> vector<1024x128xf32>
    %11 = arith.addf %6, %10 : vector<1024x128xf32>
    %12 = vector.extract_strided_slice %5 {offsets = [1, 0], sizes = [1024, 4], strides = [1, 1]} : vector<1088x4xbf16> to vector<1024x4xbf16>
    %c1 = arith.constant 1 : index
    %c0_8 = arith.constant 0 : index
    %c0_9 = arith.constant 0 : index
    %13 = vector.load %arg5[%c1, %c0_8, %c0_9] : memref<9x4x128xbf16, #tpu.memory_space<vmem>>, vector<1x4x128xbf16>
    %14 = vector.shape_cast %13 : vector<1x4x128xbf16> to vector<4x128xbf16>
    %cst_10 = arith.constant dense<0.000000e+00> : vector<1024x128xf32>
    %15 = tpu.matmul %12, %14, %cst_10 {dimension_numbers = #tpu.dot_dimension_numbers<[1], [0], [0], [1], [0, 0, 1, 1], [], []>} : vector<1024x4xbf16>, vector<4x128xbf16>, vector<1024x128xf32> -> vector<1024x128xf32>
    %16 = arith.addf %11, %15 : vector<1024x128xf32>
    %17 = vector.extract_strided_slice %5 {offsets = [2, 0], sizes = [1024, 4], strides = [1, 1]} : vector<1088x4xbf16> to vector<1024x4xbf16>
    %c2 = arith.constant 2 : index
    %c0_11 = arith.constant 0 : index
    %c0_12 = arith.constant 0 : index
    %18 = vector.load %arg5[%c2, %c0_11, %c0_12] : memref<9x4x128xbf16, #tpu.memory_space<vmem>>, vector<1x4x128xbf16>
    %19 = vector.shape_cast %18 : vector<1x4x128xbf16> to vector<4x128xbf16>
    %cst_13 = arith.constant dense<0.000000e+00> : vector<1024x128xf32>
    %20 = tpu.matmul %17, %19, %cst_13 {dimension_numbers = #tpu.dot_dimension_numbers<[1], [0], [0], [1], [0, 0, 1, 1], [], []>} : vector<1024x4xbf16>, vector<4x128xbf16>, vector<1024x128xf32> -> vector<1024x128xf32>
    %21 = arith.addf %16, %20 : vector<1024x128xf32>
    %22 = vector.extract_strided_slice %5 {offsets = [18, 0], sizes = [1024, 4], strides = [1, 1]} : vector<1088x4xbf16> to vector<1024x4xbf16>
    %c3 = arith.constant 3 : index
    %c0_14 = arith.constant 0 : index
    %c0_15 = arith.constant 0 : index
    %23 = vector.load %arg5[%c3, %c0_14, %c0_15] : memref<9x4x128xbf16, #tpu.memory_space<vmem>>, vector<1x4x128xbf16>
    %24 = vector.shape_cast %23 : vector<1x4x128xbf16> to vector<4x128xbf16>
    %cst_16 = arith.constant dense<0.000000e+00> : vector<1024x128xf32>
    %25 = tpu.matmul %22, %24, %cst_16 {dimension_numbers = #tpu.dot_dimension_numbers<[1], [0], [0], [1], [0, 0, 1, 1], [], []>} : vector<1024x4xbf16>, vector<4x128xbf16>, vector<1024x128xf32> -> vector<1024x128xf32>
    %26 = arith.addf %21, %25 : vector<1024x128xf32>
    %27 = vector.extract_strided_slice %5 {offsets = [19, 0], sizes = [1024, 4], strides = [1, 1]} : vector<1088x4xbf16> to vector<1024x4xbf16>
    %c4 = arith.constant 4 : index
    %c0_17 = arith.constant 0 : index
    %c0_18 = arith.constant 0 : index
    %28 = vector.load %arg5[%c4, %c0_17, %c0_18] : memref<9x4x128xbf16, #tpu.memory_space<vmem>>, vector<1x4x128xbf16>
    %29 = vector.shape_cast %28 : vector<1x4x128xbf16> to vector<4x128xbf16>
    %cst_19 = arith.constant dense<0.000000e+00> : vector<1024x128xf32>
    %30 = tpu.matmul %27, %29, %cst_19 {dimension_numbers = #tpu.dot_dimension_numbers<[1], [0], [0], [1], [0, 0, 1, 1], [], []>} : vector<1024x4xbf16>, vector<4x128xbf16>, vector<1024x128xf32> -> vector<1024x128xf32>
    %31 = arith.addf %26, %30 : vector<1024x128xf32>
    %32 = vector.extract_strided_slice %5 {offsets = [20, 0], sizes = [1024, 4], strides = [1, 1]} : vector<1088x4xbf16> to vector<1024x4xbf16>
    %c5 = arith.constant 5 : index
    %c0_20 = arith.constant 0 : index
    %c0_21 = arith.constant 0 : index
    %33 = vector.load %arg5[%c5, %c0_20, %c0_21] : memref<9x4x128xbf16, #tpu.memory_space<vmem>>, vector<1x4x128xbf16>
    %34 = vector.shape_cast %33 : vector<1x4x128xbf16> to vector<4x128xbf16>
    %cst_22 = arith.constant dense<0.000000e+00> : vector<1024x128xf32>
    %35 = tpu.matmul %32, %34, %cst_22 {dimension_numbers = #tpu.dot_dimension_numbers<[1], [0], [0], [1], [0, 0, 1, 1], [], []>} : vector<1024x4xbf16>, vector<4x128xbf16>, vector<1024x128xf32> -> vector<1024x128xf32>
    %36 = arith.addf %31, %35 : vector<1024x128xf32>
    %37 = vector.extract_strided_slice %5 {offsets = [36, 0], sizes = [1024, 4], strides = [1, 1]} : vector<1088x4xbf16> to vector<1024x4xbf16>
    %c6 = arith.constant 6 : index
    %c0_23 = arith.constant 0 : index
    %c0_24 = arith.constant 0 : index
    %38 = vector.load %arg5[%c6, %c0_23, %c0_24] : memref<9x4x128xbf16, #tpu.memory_space<vmem>>, vector<1x4x128xbf16>
    %39 = vector.shape_cast %38 : vector<1x4x128xbf16> to vector<4x128xbf16>
    %cst_25 = arith.constant dense<0.000000e+00> : vector<1024x128xf32>
    %40 = tpu.matmul %37, %39, %cst_25 {dimension_numbers = #tpu.dot_dimension_numbers<[1], [0], [0], [1], [0, 0, 1, 1], [], []>} : vector<1024x4xbf16>, vector<4x128xbf16>, vector<1024x128xf32> -> vector<1024x128xf32>
    %41 = arith.addf %36, %40 : vector<1024x128xf32>
    %42 = vector.extract_strided_slice %5 {offsets = [37, 0], sizes = [1024, 4], strides = [1, 1]} : vector<1088x4xbf16> to vector<1024x4xbf16>
    %c7 = arith.constant 7 : index
    %c0_26 = arith.constant 0 : index
    %c0_27 = arith.constant 0 : index
    %43 = vector.load %arg5[%c7, %c0_26, %c0_27] : memref<9x4x128xbf16, #tpu.memory_space<vmem>>, vector<1x4x128xbf16>
    %44 = vector.shape_cast %43 : vector<1x4x128xbf16> to vector<4x128xbf16>
    %cst_28 = arith.constant dense<0.000000e+00> : vector<1024x128xf32>
    %45 = tpu.matmul %42, %44, %cst_28 {dimension_numbers = #tpu.dot_dimension_numbers<[1], [0], [0], [1], [0, 0, 1, 1], [], []>} : vector<1024x4xbf16>, vector<4x128xbf16>, vector<1024x128xf32> -> vector<1024x128xf32>
    %46 = arith.addf %41, %45 : vector<1024x128xf32>
    %47 = vector.extract_strided_slice %5 {offsets = [38, 0], sizes = [1024, 4], strides = [1, 1]} : vector<1088x4xbf16> to vector<1024x4xbf16>
    %c8 = arith.constant 8 : index
    %c0_29 = arith.constant 0 : index
    %c0_30 = arith.constant 0 : index
    %48 = vector.load %arg5[%c8, %c0_29, %c0_30] : memref<9x4x128xbf16, #tpu.memory_space<vmem>>, vector<1x4x128xbf16>
    %49 = vector.shape_cast %48 : vector<1x4x128xbf16> to vector<4x128xbf16>
    %cst_31 = arith.constant dense<0.000000e+00> : vector<1024x128xf32>
    %50 = tpu.matmul %47, %49, %cst_31 {dimension_numbers = #tpu.dot_dimension_numbers<[1], [0], [0], [1], [0, 0, 1, 1], [], []>} : vector<1024x4xbf16>, vector<4x128xbf16>, vector<1024x128xf32> -> vector<1024x128xf32>
    %51 = arith.addf %46, %50 : vector<1024x128xf32>
    %c0_32 = arith.constant 0 : index
    %c0_33 = arith.constant 0 : index
    %52 = vector.load %arg4[%c0_32, %c0_33] : memref<1024x1xf32, #tpu.memory_space<vmem>>, vector<1024x1xf32>
    %c0_34 = arith.constant 0 : index
    %c0_35 = arith.constant 0 : index
    %c0_36 = arith.constant 0 : index
    %53 = vector.load %arg7[%c0_34, %c0_35, %c0_36] : memref<1x1x128xf32, #tpu.memory_space<vmem>>, vector<1x1x128xf32>
    %54 = vector.broadcast %52 : vector<1024x1xf32> to vector<1024x128xf32>
    %55 = arith.mulf %51, %54 : vector<1024x128xf32>
    %cst_37 = arith.constant dense<0.000000e+00> : vector<128xf32>
    %56 = vector.multi_reduction <add>, %55, %cst_37 [0] : vector<1024x128xf32> to vector<128xf32>
    %57 = vector.shape_cast %56 : vector<128xf32> to vector<1x128xf32>
    %58 = vector.shape_cast %57 : vector<1x128xf32> to vector<1x1x128xf32>
    %59 = arith.addf %53, %58 : vector<1x1x128xf32>
    %c0_38 = arith.constant 0 : index
    %c0_39 = arith.constant 0 : index
    %c0_40 = arith.constant 0 : index
    %60 = vector.load %arg7[%c0_38, %c0_39, %c0_40] : memref<1x1x128xf32, #tpu.memory_space<vmem>>, vector<1x1x128xf32>
    tpu.vector_store %arg7[%c0_38, %c0_39, %c0_40], %59 {strides = array<i32>} : memref<1x1x128xf32, #tpu.memory_space<vmem>>, vector<1x1x128xf32>,
    %c0_41 = arith.constant 0 : index
    %c0_42 = arith.constant 0 : index
    %c0_43 = arith.constant 0 : index
    %61 = vector.load %arg8[%c0_41, %c0_42, %c0_43] : memref<1x1x128xf32, #tpu.memory_space<vmem>>, vector<1x1x128xf32>
    %62 = arith.mulf %51, %51 : vector<1024x128xf32>
    %63 = vector.broadcast %52 : vector<1024x1xf32> to vector<1024x128xf32>
    %64 = arith.mulf %62, %63 : vector<1024x128xf32>
    %cst_44 = arith.constant dense<0.000000e+00> : vector<128xf32>
    %65 = vector.multi_reduction <add>, %64, %cst_44 [0] : vector<1024x128xf32> to vector<128xf32>
    %66 = vector.shape_cast %65 : vector<128xf32> to vector<1x128xf32>
    %67 = vector.shape_cast %66 : vector<1x128xf32> to vector<1x1x128xf32>
    %68 = arith.addf %61, %67 : vector<1x1x128xf32>
    %c0_45 = arith.constant 0 : index
    %c0_46 = arith.constant 0 : index
    %c0_47 = arith.constant 0 : index
    %69 = vector.load %arg8[%c0_45, %c0_46, %c0_47] : memref<1x1x128xf32, #tpu.memory_space<vmem>>, vector<1x1x128xf32>
    tpu.vector_store %arg8[%c0_45, %c0_46, %c0_47], %68 {strides = array<i32>} : memref<1x1x128xf32, #tpu.memory_space<vmem>>, vector<1x1x128xf32>,
    %70 = arith.truncf %51 : vector<1024x128xf32> to vector<1024x128xbf16>
    %c0_48 = arith.constant 0 : index
    %c0_49 = arith.constant 0 : index
    %71 = vector.load %arg6[%c0_48, %c0_49] : memref<1024x128xbf16, #tpu.memory_space<vmem>>, vector<1024x128xbf16>
    tpu.vector_store %arg6[%c0_48, %c0_49], %70 {strides = array<i32>} : memref<1024x128xbf16, #tpu.memory_space<vmem>>, vector<1024x128xbf16>,
    return
  }
  func.func @transform_0(%arg0: i32, %arg1: i32) -> (i32, i32) {
    %c1_i32 = arith.constant 1 : i32
    %0 = arith.muli %arg0, %c1_i32 : i32
    %1 = arith.addi %0, %arg1 : i32
    %c0_i32 = arith.constant 0 : i32
    %c0_i32_0 = arith.constant 0 : i32
    return %1, %c0_i32 : i32, i32
  }
  func.func @transform_1(%arg0: i32, %arg1: i32) -> (i32, i32) {
    %c1_i32 = arith.constant 1 : i32
    %0 = arith.muli %arg0, %c1_i32 : i32
    %1 = arith.addi %0, %arg1 : i32
    %c1_i32_0 = arith.constant 1 : i32
    %2 = arith.addi %1, %c1_i32_0 : i32
    %c16_i32 = arith.constant 16 : i32
    %3 = arith.muli %2, %c16_i32 : i32
    %c0_i32 = arith.constant 0 : i32
    %c0_i32_1 = arith.constant 0 : i32
    return %3, %c0_i32 : i32, i32
  }
  func.func @transform_2(%arg0: i32, %arg1: i32) -> (i32, i32) {
    %c1_i32 = arith.constant 1 : i32
    %0 = arith.muli %arg0, %c1_i32 : i32
    %1 = arith.addi %0, %arg1 : i32
    %c0_i32 = arith.constant 0 : i32
    %c0_i32_0 = arith.constant 0 : i32
    return %1, %c0_i32 : i32, i32
  }
  func.func @transform_3(%arg0: i32, %arg1: i32) -> (i32, i32, i32) {
    %c0_i32 = arith.constant 0 : i32
    %c0_i32_0 = arith.constant 0 : i32
    %c0_i32_1 = arith.constant 0 : i32
    %c0_i32_2 = arith.constant 0 : i32
    return %c0_i32, %c0_i32_0, %c0_i32_1 : i32, i32, i32
  }
  func.func @transform_4(%arg0: i32, %arg1: i32) -> (i32, i32) {
    %c1_i32 = arith.constant 1 : i32
    %0 = arith.muli %arg0, %c1_i32 : i32
    %1 = arith.addi %0, %arg1 : i32
    %c0_i32 = arith.constant 0 : i32
    %c0_i32_0 = arith.constant 0 : i32
    return %1, %c0_i32 : i32, i32
  }
  func.func @transform_5(%arg0: i32, %arg1: i32) -> (i32, i32, i32) {
    %c0_i32 = arith.constant 0 : i32
    %c0_i32_0 = arith.constant 0 : i32
    %c0_i32_1 = arith.constant 0 : i32
    return %arg0, %c0_i32, %c0_i32_0 : i32, i32, i32
  }
  func.func @transform_6(%arg0: i32, %arg1: i32) -> (i32, i32, i32) {
    %c0_i32 = arith.constant 0 : i32
    %c0_i32_0 = arith.constant 0 : i32
    %c0_i32_1 = arith.constant 0 : i32
    return %arg0, %c0_i32, %c0_i32_0 : i32, i32, i32
  }
}

</mosaic_0001>

<llo_original>
// kernel: conv_bn_relu.3
$region0: #{conv_bn_relu.3}
  #allocation0 [shape = 'u32[]', space=smem, size = 0x4, offset = 0x4, fixed_abs, tag = 'smem constant byte address 0x4 - core index']
  #allocation1 [shape = 'u32[72,128]{1,0:T(1,128)}', space=vmem, size = 0x9000, scoped, tag = 'internal scratch']
  %s0 = inlined_call_operand.vmem [shape: bf16[1024,128], index: 0, kind: input, shape index: {}]
  %s1 = inlined_call_operand.vmem [shape: f32[1,128], index: 1, kind: input, shape index: {}]
  %s2 = inlined_call_operand.vmem [shape: f32[1,128], index: 2, kind: input, shape index: {}]
  %s3 = inlined_call_operand.vmem [shape: f32[1024,128], index: 3, kind: output, shape index: {}]
  %s4 = sld [smem:[#allocation0]]
  $region22: #{conv_bn_relu.3} parent=0
    _
  %s6 = ssub.s32 1, %s4
  %s7 = scalar_select 0, %s6, %s4
  // Predicated region
  $region2: #{conv_bn_relu.3} parent=0 // pred_check
    _
  $region3: #{conv_bn_relu.3} parent=0 // pred_check_branch
    %9 = sbr.rel (0) target = $region5
  $region4: #{conv_bn_relu.3} parent=0 // pred_region
    _
  $region5: #{conv_bn_relu.3} parent=0 // pred_fallthru
    _
  // Predicated region
  $region6: #{conv_bn_relu.3} parent=0 // pred_check
    _
  $region7: #{conv_bn_relu.3} parent=0 // pred_check_branch
    %11 = sbr.rel (0) target = $region9
  $region8: #{conv_bn_relu.3} parent=0 // pred_region
    _
  $region9: #{conv_bn_relu.3} parent=0 // pred_fallthru
    _
  // Predicated region
  $region10: #{conv_bn_relu.3} parent=0 // pred_check
    _
  $region11: #{conv_bn_relu.3} parent=0 // pred_check_branch
    %13 = sbr.rel (0) target = $region13
  $region12: #{conv_bn_relu.3} parent=0 // pred_region
    _
  $region13: #{conv_bn_relu.3} parent=0 // pred_fallthru
    _
  %v14 = vld [vmem:[%s0] sm:$0xf]
  %v15 = vld [vmem:[%s0 + $0x4] sm:$0xf]
  %v16 = vld [vmem:[%s0 + $0x8] sm:$0xf]
  %v17 = vld [vmem:[%s0 + $0xc] sm:$0xf]
  %v18 = vld [vmem:[%s0 + $0x10] sm:$0xf]
  %v19 = vld [vmem:[%s0 + $0x14] sm:$0xf]
  %v20 = vld [vmem:[%s0 + $0x18] sm:$0xf]
  %v21 = vld [vmem:[%s0 + $0x1c] sm:$0xf]
  %v22 = vld [vmem:[%s0 + $0x20] sm:$0xf]
  %v23 = vld [vmem:[%s0 + $0x24] sm:$0xf]
  %v24 = vld [vmem:[%s0 + $0x28] sm:$0xf]
  %v25 = vld [vmem:[%s0 + $0x2c] sm:$0xf]
  %v26 = vld [vmem:[%s0 + $0x30] sm:$0xf]
  %v27 = vld [vmem:[%s0 + $0x34] sm:$0xf]
  %v28 = vld [vmem:[%s0 + $0x38] sm:$0xf]
  %v29 = vld [vmem:[%s0 + $0x3c] sm:$0xf]
  %v30 = vld [vmem:[%s0 + $0x40] sm:$0xf]
  %v31 = vld [vmem:[%s0 + $0x44] sm:$0xf]
  %v32 = vld [vmem:[%s0 + $0x48] sm:$0xf]
  %v33 = vld [vmem:[%s0 + $0x4c] sm:$0xf]
  %v34 = vld [vmem:[%s0 + $0x50] sm:$0xf]
  %v35 = vld [vmem:[%s0 + $0x54] sm:$0xf]
  %v36 = vld [vmem:[%s0 + $0x58] sm:$0xf]
  %v37 = vld [vmem:[%s0 + $0x5c] sm:$0xf]
  %v38 = vld [vmem:[%s0 + $0x60] sm:$0xf]
  %v39 = vld [vmem:[%s0 + $0x64] sm:$0xf]
  %v40 = vld [vmem:[%s0 + $0x68] sm:$0xf]
  %v41 = vld [vmem:[%s0 + $0x6c] sm:$0xf]
  %v42 = vld [vmem:[%s0 + $0x70] sm:$0xf]
  %v43 = vld [vmem:[%s0 + $0x74] sm:$0xf]
  %v44 = vld [vmem:[%s0 + $0x78] sm:$0xf]
  %v45 = vld [vmem:[%s0 + $0x7c] sm:$0xf]
  %v46 = vld [vmem:[%s0 + $0x80] sm:$0xf]
  %v47 = vld [vmem:[%s0 + $0x84] sm:$0xf]
  %v48 = vld [vmem:[%s0 + $0x88] sm:$0xf]
  %v49 = vld [vmem:[%s0 + $0x8c] sm:$0xf]
  %v50 = vld [vmem:[%s0 + $0x90] sm:$0xf]
  %v51 = vld [vmem:[%s0 + $0x94] sm:$0xf]
  %v52 = vld [vmem:[%s0 + $0x98] sm:$0xf]
  %v53 = vld [vmem:[%s0 + $0x9c] sm:$0xf]
  %v54 = vld [vmem:[%s0 + $0xa0] sm:$0xf]
  %v55 = vld [vmem:[%s0 + $0xa4] sm:$0xf]
  %v56 = vld [vmem:[%s0 + $0xa8] sm:$0xf]
  %v57 = vld [vmem:[%s0 + $0xac] sm:$0xf]
  %v58 = vld [vmem:[%s0 + $0xb0] sm:$0xf]
  %v59 = vld [vmem:[%s0 + $0xb4] sm:$0xf]
  %v60 = vld [vmem:[%s0 + $0xb8] sm:$0xf]
  %v61 = vld [vmem:[%s0 + $0xbc] sm:$0xf]
  %v62 = vld [vmem:[%s0 + $0xc0] sm:$0xf]
  %v63 = vld [vmem:[%s0 + $0xc4] sm:$0xf]
  %v64 = vld [vmem:[%s0 + $0xc8] sm:$0xf]
  %v65 = vld [vmem:[%s0 + $0xcc] sm:$0xf]
  %v66 = vld [vmem:[%s0 + $0xd0] sm:$0xf]
  %v67 = vld [vmem:[%s0 + $0xd4] sm:$0xf]
  %v68 = vld [vmem:[%s0 + $0xd8] sm:$0xf]
  %v69 = vld [vmem:[%s0 + $0xdc] sm:$0xf]
  %v70 = vld [vmem:[%s0 + $0xe0] sm:$0xf]
  %v71 = vld [vmem:[%s0 + $0xe4] sm:$0xf]
  %v72 = vld [vmem:[%s0 + $0xe8] sm:$0xf]
  %v73 = vld [vmem:[%s0 + $0xec] sm:$0xf]
  %v74 = vld [vmem:[%s0 + $0xf0] sm:$0xf]
  %v75 = vld [vmem:[%s0 + $0xf4] sm:$0xf]
  %v76 = vld [vmem:[%s0 + $0xf8] sm:$0xf]
  %v77 = vld [vmem:[%s0 + $0xfc] sm:$0xf]
  %v78 = vld [vmem:[%s0 + $0x100] sm:$0xf]
  %v79 = vld [vmem:[%s0 + $0x104] sm:$0xf]
  %v80 = vld [vmem:[%s0 + $0x108] sm:$0xf]
  %v81 = vld [vmem:[%s0 + $0x10c] sm:$0xf]
  %v82 = vld [vmem:[%s0 + $0x110] sm:$0xf]
  %v83 = vld [vmem:[%s0 + $0x114] sm:$0xf]
  %v84 = vld [vmem:[%s0 + $0x118] sm:$0xf]
  %v85 = vld [vmem:[%s0 + $0x11c] sm:$0xf]
  %v86 = vld [vmem:[%s0 + $0x120] sm:$0xf]
  %v87 = vld [vmem:[%s0 + $0x124] sm:$0xf]
  %v88 = vld [vmem:[%s0 + $0x128] sm:$0xf]
  %v89 = vld [vmem:[%s0 + $0x12c] sm:$0xf]
  %v90 = vld [vmem:[%s0 + $0x130] sm:$0xf]
  %v91 = vld [vmem:[%s0 + $0x134] sm:$0xf]
  %v92 = vld [vmem:[%s0 + $0x138] sm:$0xf]
  %v93 = vld [vmem:[%s0 + $0x13c] sm:$0xf]
  %v94 = vld [vmem:[%s0 + $0x140] sm:$0xf]
  %v95 = vld [vmem:[%s0 + $0x144] sm:$0xf]
  %v96 = vld [vmem:[%s0 + $0x148] sm:$0xf]
  %v97 = vld [vmem:[%s0 + $0x14c] sm:$0xf]
  %v98 = vld [vmem:[%s0 + $0x150] sm:$0xf]
  %v99 = vld [vmem:[%s0 + $0x154] sm:$0xf]
  %v100 = vld [vmem:[%s0 + $0x158] sm:$0xf]
  %v101 = vld [vmem:[%s0 + $0x15c] sm:$0xf]
  %v102 = vld [vmem:[%s0 + $0x160] sm:$0xf]
  %v103 = vld [vmem:[%s0 + $0x164] sm:$0xf]
  %v104 = vld [vmem:[%s0 + $0x168] sm:$0xf]
  %v105 = vld [vmem:[%s0 + $0x16c] sm:$0xf]
  %v106 = vld [vmem:[%s0 + $0x170] sm:$0xf]
  %v107 = vld [vmem:[%s0 + $0x174] sm:$0xf]
  %v108 = vld [vmem:[%s0 + $0x178] sm:$0xf]
  %v109 = vld [vmem:[%s0 + $0x17c] sm:$0xf]
  %v110 = vld [vmem:[%s0 + $0x180] sm:$0xf]
  %v111 = vld [vmem:[%s0 + $0x184] sm:$0xf]
  %v112 = vld [vmem:[%s0 + $0x188] sm:$0xf]
  %v113 = vld [vmem:[%s0 + $0x18c] sm:$0xf]
  %v114 = vld [vmem:[%s0 + $0x190] sm:$0xf]
  %v115 = vld [vmem:[%s0 + $0x194] sm:$0xf]
  %v116 = vld [vmem:[%s0 + $0x198] sm:$0xf]
  %v117 = vld [vmem:[%s0 + $0x19c] sm:$0xf]
  %v118 = vld [vmem:[%s0 + $0x1a0] sm:$0xf]
  %v119 = vld [vmem:[%s0 + $0x1a4] sm:$0xf]
  %v120 = vld [vmem:[%s0 + $0x1a8] sm:$0xf]
  %v121 = vld [vmem:[%s0 + $0x1ac] sm:$0xf]
  %v122 = vld [vmem:[%s0 + $0x1b0] sm:$0xf]
  %v123 = vld [vmem:[%s0 + $0x1b4] sm:$0xf]
  %v124 = vld [vmem:[%s0 + $0x1b8] sm:$0xf]
  %v125 = vld [vmem:[%s0 + $0x1bc] sm:$0xf]
  %v126 = vld [vmem:[%s0 + $0x1c0] sm:$0xf]
  %v127 = vld [vmem:[%s0 + $0x1c4] sm:$0xf]
  %v128 = vld [vmem:[%s0 + $0x1c8] sm:$0xf]
  %v129 = vld [vmem:[%s0 + $0x1cc] sm:$0xf]
  %v130 = vld [vmem:[%s0 + $0x1d0] sm:$0xf]
  %v131 = vld [vmem:[%s0 + $0x1d4] sm:$0xf]
  %v132 = vld [vmem:[%s0 + $0x1d8] sm:$0xf]
  %v133 = vld [vmem:[%s0 + $0x1dc] sm:$0xf]
  %v134 = vld [vmem:[%s0 + $0x1e0] sm:$0xf]
  %v135 = vld [vmem:[%s0 + $0x1e4] sm:$0xf]
  %v136 = vld [vmem:[%s0 + $0x1e8] sm:$0xf]
  %v137 = vld [vmem:[%s0 + $0x1ec] sm:$0xf]
  %v138 = vld [vmem:[%s0 + $0x1f0] sm:$0xf]
  %v139 = vld [vmem:[%s0 + $0x1f4] sm:$0xf]
  %v140 = vld [vmem:[%s0 + $0x1f8] sm:$0xf]
  %v141 = vld [vmem:[%s0 + $0x1fc] sm:$0xf]
  %v142 = vunpack.c.l.bf16 %v14
  %v143 = vunpack.c.l.bf16 %v15
  %v144 = vunpack.c.l.bf16 %v16
  %v145 = vunpack.c.l.bf16 %v17
  %v146 = vunpack.c.l.bf16 %v18
  %v147 = vunpack.c.l.bf16 %v19
  %v148 = vunpack.c.l.bf16 %v20
  %v149 = vunpack.c.l.bf16 %v21
  %v150 = vunpack.c.l.bf16 %v22
  %v151 = vunpack.c.l.bf16 %v23
  %v152 = vunpack.c.l.bf16 %v24
  %v153 = vunpack.c.l.bf16 %v25
  %v154 = vunpack.c.l.bf16 %v26
  %v155 = vunpack.c.l.bf16 %v27
  %v156 = vunpack.c.l.bf16 %v28
  %v157 = vunpack.c.l.bf16 %v29
  %v158 = vunpack.c.l.bf16 %v30
  %v159 = vunpack.c.l.bf16 %v31
  %v160 = vunpack.c.l.bf16 %v32
  %v161 = vunpack.c.l.bf16 %v33
  %v162 = vunpack.c.l.bf16 %v34
  %v163 = vunpack.c.l.bf16 %v35
  %v164 = vunpack.c.l.bf16 %v36
  %v165 = vunpack.c.l.bf16 %v37
  %v166 = vunpack.c.l.bf16 %v38
  %v167 = vunpack.c.l.bf16 %v39
  %v168 = vunpack.c.l.bf16 %v40
  %v169 = vunpack.c.l.bf16 %v41
  %v170 = vunpack.c.l.bf16 %v42
  %v171 = vunpack.c.l.bf16 %v43
  %v172 = vunpack.c.l.bf16 %v44
  %v173 = vunpack.c.l.bf16 %v45
  %v174 = vunpack.c.l.bf16 %v46
  %v175 = vunpack.c.l.bf16 %v47
  %v176 = vunpack.c.l.bf16 %v48
  %v177 = vunpack.c.l.bf16 %v49
  %v178 = vunpack.c.l.bf16 %v50
  %v179 = vunpack.c.l.bf16 %v51
  %v180 = vunpack.c.l.bf16 %v52
  %v181 = vunpack.c.l.bf16 %v53
  %v182 = vunpack.c.l.bf16 %v54
  %v183 = vunpack.c.l.bf16 %v55
  %v184 = vunpack.c.l.bf16 %v56
  %v185 = vunpack.c.l.bf16 %v57
  %v186 = vunpack.c.l.bf16 %v58
  %v187 = vunpack.c.l.bf16 %v59
  %v188 = vunpack.c.l.bf16 %v60
  %v189 = vunpack.c.l.bf16 %v61
  %v190 = vunpack.c.l.bf16 %v62
  %v191 = vunpack.c.l.bf16 %v63
  %v192 = vunpack.c.l.bf16 %v64
  %v193 = vunpack.c.l.bf16 %v65
  %v194 = vunpack.c.l.bf16 %v66
  %v195 = vunpack.c.l.bf16 %v67
  %v196 = vunpack.c.l.bf16 %v68
  %v197 = vunpack.c.l.bf16 %v69
  %v198 = vunpack.c.l.bf16 %v70
  %v199 = vunpack.c.l.bf16 %v71
  %v200 = vunpack.c.l.bf16 %v72
  %v201 = vunpack.c.l.bf16 %v73
  %v202 = vunpack.c.l.bf16 %v74
  %v203 = vunpack.c.l.bf16 %v75
  %v204 = vunpack.c.l.bf16 %v76
  %v205 = vunpack.c.l.bf16 %v77
  %v206 = vunpack.c.l.bf16 %v78
  %v207 = vunpack.c.l.bf16 %v79
  %v208 = vunpack.c.l.bf16 %v80
  %v209 = vunpack.c.l.bf16 %v81
  %v210 = vunpack.c.l.bf16 %v82
  %v211 = vunpack.c.l.bf16 %v83
  %v212 = vunpack.c.l.bf16 %v84
  %v213 = vunpack.c.l.bf16 %v85
  %v214 = vunpack.c.l.bf16 %v86
  %v215 = vunpack.c.l.bf16 %v87
  %v216 = vunpack.c.l.bf16 %v88
  %v217 = vunpack.c.l.bf16 %v89
  %v218 = vunpack.c.l.bf16 %v90
  %v219 = vunpack.c.l.bf16 %v91
  %v220 = vunpack.c.l.bf16 %v92
  %v221 = vunpack.c.l.bf16 %v93
  %v222 = vunpack.c.l.bf16 %v94
  %v223 = vunpack.c.l.bf16 %v95
  %v224 = vunpack.c.l.bf16 %v96
  %v225 = vunpack.c.l.bf16 %v97
  %v226 = vunpack.c.l.bf16 %v98
  %v227 = vunpack.c.l.bf16 %v99
  %v228 = vunpack.c.l.bf16 %v100
  %v229 = vunpack.c.l.bf16 %v101
  %v230 = vunpack.c.l.bf16 %v102
  %v231 = vunpack.c.l.bf16 %v103
  %v232 = vunpack.c.l.bf16 %v104
  %v233 = vunpack.c.l.bf16 %v105
  %v234 = vunpack.c.l.bf16 %v106
  %v235 = vunpack.c.l.bf16 %v107
  %v236 = vunpack.c.l.bf16 %v108
  %v237 = vunpack.c.l.bf16 %v109
  %v238 = vunpack.c.l.bf16 %v110
  %v239 = vunpack.c.l.bf16 %v111
  %v240 = vunpack.c.l.bf16 %v112
  %v241 = vunpack.c.l.bf16 %v113
  %v242 = vunpack.c.l.bf16 %v114
  %v243 = vunpack.c.l.bf16 %v115
  %v244 = vunpack.c.l.bf16 %v116
  %v245 = vunpack.c.l.bf16 %v117
  %v246 = vunpack.c.l.bf16 %v118
  %v247 = vunpack.c.l.bf16 %v119
  %v248 = vunpack.c.l.bf16 %v120
  %v249 = vunpack.c.l.bf16 %v121
  %v250 = vunpack.c.l.bf16 %v122
  %v251 = vunpack.c.l.bf16 %v123
  %v252 = vunpack.c.l.bf16 %v124
  %v253 = vunpack.c.l.bf16 %v125
  %v254 = vunpack.c.l.bf16 %v126
  %v255 = vunpack.c.l.bf16 %v127
  %v256 = vunpack.c.l.bf16 %v128
  %v257 = vunpack.c.l.bf16 %v129
  %v258 = vunpack.c.l.bf16 %v130
  %v259 = vunpack.c.l.bf16 %v131
  %v260 = vunpack.c.l.bf16 %v132
  %v261 = vunpack.c.l.bf16 %v133
  %v262 = vunpack.c.l.bf16 %v134
  %v263 = vunpack.c.l.bf16 %v135
  %v264 = vunpack.c.l.bf16 %v136
  %v265 = vunpack.c.l.bf16 %v137
  %v266 = vunpack.c.l.bf16 %v138
  %v267 = vunpack.c.l.bf16 %v139
  %v268 = vunpack.c.l.bf16 %v140
  %v269 = vunpack.c.l.bf16 %v141
  %v270 = vld [vmem:[%s1] sm:$0x1]
  %v272 = vperm.slane %v270, 0
  %v274 = vmul.f32 %v142, %v272
  %v275 = vmul.f32 %v143, %v272
  %v276 = vmul.f32 %v144, %v272
  %v277 = vmul.f32 %v145, %v272
  %v278 = vmul.f32 %v146, %v272
  %v279 = vmul.f32 %v147, %v272
  %v280 = vmul.f32 %v148, %v272
  %v281 = vmul.f32 %v149, %v272
  %v282 = vmul.f32 %v150, %v272
  %v283 = vmul.f32 %v151, %v272
  %v284 = vmul.f32 %v152, %v272
  %v285 = vmul.f32 %v153, %v272
  %v286 = vmul.f32 %v154, %v272
  %v287 = vmul.f32 %v155, %v272
  %v288 = vmul.f32 %v156, %v272
  %v289 = vmul.f32 %v157, %v272
  %v290 = vmul.f32 %v158, %v272
  %v291 = vmul.f32 %v159, %v272
  %v292 = vmul.f32 %v160, %v272
  %v293 = vmul.f32 %v161, %v272
  %v294 = vmul.f32 %v162, %v272
  %v295 = vmul.f32 %v163, %v272
  %v296 = vmul.f32 %v164, %v272
  %v297 = vmul.f32 %v165, %v272
  %v298 = vmul.f32 %v166, %v272
  %v299 = vmul.f32 %v167, %v272
  %v300 = vmul.f32 %v168, %v272
  %v301 = vmul.f32 %v169, %v272
  %v302 = vmul.f32 %v170, %v272
  %v303 = vmul.f32 %v171, %v272
  %v304 = vmul.f32 %v172, %v272
  %v305 = vmul.f32 %v173, %v272
  %v306 = vmul.f32 %v174, %v272
  %v307 = vmul.f32 %v175, %v272
  %v308 = vmul.f32 %v176, %v272
  %v309 = vmul.f32 %v177, %v272
  %v310 = vmul.f32 %v178, %v272
  %v311 = vmul.f32 %v179, %v272
  %v312 = vmul.f32 %v180, %v272
  %v313 = vmul.f32 %v181, %v272
  %v314 = vmul.f32 %v182, %v272
  %v315 = vmul.f32 %v183, %v272
  %v316 = vmul.f32 %v184, %v272
  %v317 = vmul.f32 %v185, %v272
  %v318 = vmul.f32 %v186, %v272
  %v319 = vmul.f32 %v187, %v272
  %v320 = vmul.f32 %v188, %v272
  %v321 = vmul.f32 %v189, %v272
  %v322 = vmul.f32 %v190, %v272
  %v323 = vmul.f32 %v191, %v272
  %v324 = vmul.f32 %v192, %v272
  %v325 = vmul.f32 %v193, %v272
  %v326 = vmul.f32 %v194, %v272
  %v327 = vmul.f32 %v195, %v272
  %v328 = vmul.f32 %v196, %v272
  %v329 = vmul.f32 %v197, %v272
  %v330 = vmul.f32 %v198, %v272
  %v331 = vmul.f32 %v199, %v272
  %v332 = vmul.f32 %v200, %v272
  %v333 = vmul.f32 %v201, %v272
  %v334 = vmul.f32 %v202, %v272
  %v335 = vmul.f32 %v203, %v272
  %v336 = vmul.f32 %v204, %v272
  %v337 = vmul.f32 %v205, %v272
  %v338 = vmul.f32 %v206, %v272
  %v339 = vmul.f32 %v207, %v272
  %v340 = vmul.f32 %v208, %v272
  %v341 = vmul.f32 %v209, %v272
  %v342 = vmul.f32 %v210, %v272
  %v343 = vmul.f32 %v211, %v272
  %v344 = vmul.f32 %v212, %v272
  %v345 = vmul.f32 %v213, %v272
  %v346 = vmul.f32 %v214, %v272
  %v347 = vmul.f32 %v215, %v272
  %v348 = vmul.f32 %v216, %v272
  %v349 = vmul.f32 %v217, %v272
  %v350 = vmul.f32 %v218, %v272
  %v351 = vmul.f32 %v219, %v272
  %v352 = vmul.f32 %v220, %v272
  %v353 = vmul.f32 %v221, %v272
  %v354 = vmul.f32 %v222, %v272
  %v355 = vmul.f32 %v223, %v272
  %v356 = vmul.f32 %v224, %v272
  %v357 = vmul.f32 %v225, %v272
  %v358 = vmul.f32 %v226, %v272
  %v359 = vmul.f32 %v227, %v272
  %v360 = vmul.f32 %v228, %v272
  %v361 = vmul.f32 %v229, %v272
  %v362 = vmul.f32 %v230, %v272
  %v363 = vmul.f32 %v231, %v272
  %v364 = vmul.f32 %v232, %v272
  %v365 = vmul.f32 %v233, %v272
  %v366 = vmul.f32 %v234, %v272
  %v367 = vmul.f32 %v235, %v272
  %v368 = vmul.f32 %v236, %v272
  %v369 = vmul.f32 %v237, %v272
  %v370 = vmul.f32 %v238, %v272
  %v371 = vmul.f32 %v239, %v272
  %v372 = vmul.f32 %v240, %v272
  %v373 = vmul.f32 %v241, %v272
  %v374 = vmul.f32 %v242, %v272
  %v375 = vmul.f32 %v243, %v272
  %v376 = vmul.f32 %v244, %v272
  %v377 = vmul.f32 %v245, %v272
  %v378 = vmul.f32 %v246, %v272
  %v379 = vmul.f32 %v247, %v272
  %v380 = vmul.f32 %v248, %v272
  %v381 = vmul.f32 %v249, %v272
  %v382 = vmul.f32 %v250, %v272
  %v383 = vmul.f32 %v251, %v272
  %v384 = vmul.f32 %v252, %v272
  %v385 = vmul.f32 %v253, %v272
  %v386 = vmul.f32 %v254, %v272
  %v387 = vmul.f32 %v255, %v272
  %v388 = vmul.f32 %v256, %v272
  %v389 = vmul.f32 %v257, %v272
  %v390 = vmul.f32 %v258, %v272
  %v391 = vmul.f32 %v259, %v272
  %v392 = vmul.f32 %v260, %v272
  %v393 = vmul.f32 %v261, %v272
  %v394 = vmul.f32 %v262, %v272
  %v395 = vmul.f32 %v263, %v272
  %v396 = vmul.f32 %v264, %v272
  %v397 = vmul.f32 %v265, %v272
  %v398 = vmul.f32 %v266, %v272
  %v399 = vmul.f32 %v267, %v272
  %v400 = vmul.f32 %v268, %v272
  %v401 = vmul.f32 %v269, %v272
  %v402 = vld [vmem:[%s2] sm:$0x1]
  %v404 = vperm.slane %v402, 0
  %v406 = vadd.f32 %v274, %v404
  %v407 = vadd.f32 %v275, %v404
  %v408 = vadd.f32 %v276, %v404
  %v409 = vadd.f32 %v277, %v404
  %v410 = vadd.f32 %v278, %v404
  %v411 = vadd.f32 %v279, %v404
  %v412 = vadd.f32 %v280, %v404
  %v413 = vadd.f32 %v281, %v404
  %v414 = vadd.f32 %v282, %v404
  %v415 = vadd.f32 %v283, %v404
  %v416 = vadd.f32 %v284, %v404
  %v417 = vadd.f32 %v285, %v404
  %v418 = vadd.f32 %v286, %v404
  %v419 = vadd.f32 %v287, %v404
  %v420 = vadd.f32 %v288, %v404
  %v421 = vadd.f32 %v289, %v404
  %v422 = vadd.f32 %v290, %v404
  %v423 = vadd.f32 %v291, %v404
  %v424 = vadd.f32 %v292, %v404
  %v425 = vadd.f32 %v293, %v404
  %v426 = vadd.f32 %v294, %v404
  %v427 = vadd.f32 %v295, %v404
  %v428 = vadd.f32 %v296, %v404
  %v429 = vadd.f32 %v297, %v404
  %v430 = vadd.f32 %v298, %v404
  %v431 = vadd.f32 %v299, %v404
  %v432 = vadd.f32 %v300, %v404
  %v433 = vadd.f32 %v301, %v404
  %v434 = vadd.f32 %v302, %v404
  %v435 = vadd.f32 %v303, %v404
  %v436 = vadd.f32 %v304, %v404
  %v437 = vadd.f32 %v305, %v404
  %v438 = vadd.f32 %v306, %v404
  %v439 = vadd.f32 %v307, %v404
  %v440 = vadd.f32 %v308, %v404
  %v441 = vadd.f32 %v309, %v404
  %v442 = vadd.f32 %v310, %v404
  %v443 = vadd.f32 %v311, %v404
  %v444 = vadd.f32 %v312, %v404
  %v445 = vadd.f32 %v313, %v404
  %v446 = vadd.f32 %v314, %v404
  %v447 = vadd.f32 %v315, %v404
  %v448 = vadd.f32 %v316, %v404
  %v449 = vadd.f32 %v317, %v404
  %v450 = vadd.f32 %v318, %v404
  %v451 = vadd.f32 %v319, %v404
  %v452 = vadd.f32 %v320, %v404
  %v453 = vadd.f32 %v321, %v404
  %v454 = vadd.f32 %v322, %v404
  %v455 = vadd.f32 %v323, %v404
  %v456 = vadd.f32 %v324, %v404
  %v457 = vadd.f32 %v325, %v404
  %v458 = vadd.f32 %v326, %v404
  %v459 = vadd.f32 %v327, %v404
  %v460 = vadd.f32 %v328, %v404
  %v461 = vadd.f32 %v329, %v404
  %v462 = vadd.f32 %v330, %v404
  %v463 = vadd.f32 %v331, %v404
  %v464 = vadd.f32 %v332, %v404
  %v465 = vadd.f32 %v333, %v404
  %v466 = vadd.f32 %v334, %v404
  %v467 = vadd.f32 %v335, %v404
  %v468 = vadd.f32 %v336, %v404
  %v469 = vadd.f32 %v337, %v404
  %v470 = vadd.f32 %v338, %v404
  %v471 = vadd.f32 %v339, %v404
  %v472 = vadd.f32 %v340, %v404
  %v473 = vadd.f32 %v341, %v404
  %v474 = vadd.f32 %v342, %v404
  %v475 = vadd.f32 %v343, %v404
  %v476 = vadd.f32 %v344, %v404
  %v477 = vadd.f32 %v345, %v404
  %v478 = vadd.f32 %v346, %v404
  %v479 = vadd.f32 %v347, %v404
  %v480 = vadd.f32 %v348, %v404
  %v481 = vadd.f32 %v349, %v404
  %v482 = vadd.f32 %v350, %v404
  %v483 = vadd.f32 %v351, %v404
  %v484 = vadd.f32 %v352, %v404
  %v485 = vadd.f32 %v353, %v404
  %v486 = vadd.f32 %v354, %v404
  %v487 = vadd.f32 %v355, %v404
  %v488 = vadd.f32 %v356, %v404
  %v489 = vadd.f32 %v357, %v404
  %v490 = vadd.f32 %v358, %v404
  %v491 = vadd.f32 %v359, %v404
  %v492 = vadd.f32 %v360, %v404
  %v493 = vadd.f32 %v361, %v404
  %v494 = vadd.f32 %v362, %v404
  %v495 = vadd.f32 %v363, %v404
  %v496 = vadd.f32 %v364, %v404
  %v497 = vadd.f32 %v365, %v404
  %v498 = vadd.f32 %v366, %v404
  %v499 = vadd.f32 %v367, %v404
  %v500 = vadd.f32 %v368, %v404
  %v501 = vadd.f32 %v369, %v404
  %v502 = vadd.f32 %v370, %v404
  %v503 = vadd.f32 %v371, %v404
  %v504 = vadd.f32 %v372, %v404
  %v505 = vadd.f32 %v373, %v404
  %v506 = vadd.f32 %v374, %v404
  %v507 = vadd.f32 %v375, %v404
  %v508 = vadd.f32 %v376, %v404
  %v509 = vadd.f32 %v377, %v404
  %v510 = vadd.f32 %v378, %v404
  %v511 = vadd.f32 %v379, %v404
  %v512 = vadd.f32 %v380, %v404
  %v513 = vadd.f32 %v381, %v404
  %v514 = vadd.f32 %v382, %v404
  %v515 = vadd.f32 %v383, %v404
  %v516 = vadd.f32 %v384, %v404
  %v517 = vadd.f32 %v385, %v404
  %v518 = vadd.f32 %v386, %v404
  %v519 = vadd.f32 %v387, %v404
  %v520 = vadd.f32 %v388, %v404
  %v521 = vadd.f32 %v389, %v404
  %v522 = vadd.f32 %v390, %v404
  %v523 = vadd.f32 %v391, %v404
  %v524 = vadd.f32 %v392, %v404
  %v525 = vadd.f32 %v393, %v404
  %v526 = vadd.f32 %v394, %v404
  %v527 = vadd.f32 %v395, %v404
  %v528 = vadd.f32 %v396, %v404
  %v529 = vadd.f32 %v397, %v404
  %v530 = vadd.f32 %v398, %v404
  %v531 = vadd.f32 %v399, %v404
  %v532 = vadd.f32 %v400, %v404
  %v533 = vadd.f32 %v401, %v404
  %v534 = vmax.f32 %v406, 0.0
  %v535 = vmax.f32 %v407, 0.0
  %v536 = vmax.f32 %v408, 0.0
  %v537 = vmax.f32 %v409, 0.0
  %v538 = vmax.f32 %v410, 0.0
  %v539 = vmax.f32 %v411, 0.0
  %v540 = vmax.f32 %v412, 0.0
  %v541 = vmax.f32 %v413, 0.0
  %v542 = vmax.f32 %v414, 0.0
  %v543 = vmax.f32 %v415, 0.0
  %v544 = vmax.f32 %v416, 0.0
  %v545 = vmax.f32 %v417, 0.0
  %v546 = vmax.f32 %v418, 0.0
  %v547 = vmax.f32 %v419, 0.0
  %v548 = vmax.f32 %v420, 0.0
  %v549 = vmax.f32 %v421, 0.0
  %v550 = vmax.f32 %v422, 0.0
  %v551 = vmax.f32 %v423, 0.0
  %v552 = vmax.f32 %v424, 0.0
  %v553 = vmax.f32 %v425, 0.0
  %v554 = vmax.f32 %v426, 0.0
  %v555 = vmax.f32 %v427, 0.0
  %v556 = vmax.f32 %v428, 0.0
  %v557 = vmax.f32 %v429, 0.0
  %v558 = vmax.f32 %v430, 0.0
  %v559 = vmax.f32 %v431, 0.0
  %v560 = vmax.f32 %v432, 0.0
  %v561 = vmax.f32 %v433, 0.0
  %v562 = vmax.f32 %v434, 0.0
  %v563 = vmax.f32 %v435, 0.0
  %v564 = vmax.f32 %v436, 0.0
  %v565 = vmax.f32 %v437, 0.0
  %v566 = vmax.f32 %v438, 0.0
  %v567 = vmax.f32 %v439, 0.0
  %v568 = vmax.f32 %v440, 0.0
  %v569 = vmax.f32 %v441, 0.0
  %v570 = vmax.f32 %v442, 0.0
  %v571 = vmax.f32 %v443, 0.0
  %v572 = vmax.f32 %v444, 0.0
  %v573 = vmax.f32 %v445, 0.0
  %v574 = vmax.f32 %v446, 0.0
  %v575 = vmax.f32 %v447, 0.0
  %v576 = vmax.f32 %v448, 0.0
  %v577 = vmax.f32 %v449, 0.0
  %v578 = vmax.f32 %v450, 0.0
  %v579 = vmax.f32 %v451, 0.0
  %v580 = vmax.f32 %v452, 0.0
  %v581 = vmax.f32 %v453, 0.0
  %v582 = vmax.f32 %v454, 0.0
  %v583 = vmax.f32 %v455, 0.0
  %v584 = vmax.f32 %v456, 0.0
  %v585 = vmax.f32 %v457, 0.0
  %v586 = vmax.f32 %v458, 0.0
  %v587 = vmax.f32 %v459, 0.0
  %v588 = vmax.f32 %v460, 0.0
  %v589 = vmax.f32 %v461, 0.0
  %v590 = vmax.f32 %v462, 0.0
  %v591 = vmax.f32 %v463, 0.0
  %v592 = vmax.f32 %v464, 0.0
  %v593 = vmax.f32 %v465, 0.0
  %v594 = vmax.f32 %v466, 0.0
  %v595 = vmax.f32 %v467, 0.0
  %v596 = vmax.f32 %v468, 0.0
  %v597 = vmax.f32 %v469, 0.0
  %v598 = vmax.f32 %v470, 0.0
  %v599 = vmax.f32 %v471, 0.0
  %v600 = vmax.f32 %v472, 0.0
  %v601 = vmax.f32 %v473, 0.0
  %v602 = vmax.f32 %v474, 0.0
  %v603 = vmax.f32 %v475, 0.0
  %v604 = vmax.f32 %v476, 0.0
  %v605 = vmax.f32 %v477, 0.0
  %v606 = vmax.f32 %v478, 0.0
  %v607 = vmax.f32 %v479, 0.0
  %v608 = vmax.f32 %v480, 0.0
  %v609 = vmax.f32 %v481, 0.0
  %v610 = vmax.f32 %v482, 0.0
  %v611 = vmax.f32 %v483, 0.0
  %v612 = vmax.f32 %v484, 0.0
  %v613 = vmax.f32 %v485, 0.0
  %v614 = vmax.f32 %v486, 0.0
  %v615 = vmax.f32 %v487, 0.0
  %v616 = vmax.f32 %v488, 0.0
  %v617 = vmax.f32 %v489, 0.0
  %v618 = vmax.f32 %v490, 0.0
  %v619 = vmax.f32 %v491, 0.0
  %v620 = vmax.f32 %v492, 0.0
  %v621 = vmax.f32 %v493, 0.0
  %v622 = vmax.f32 %v494, 0.0
  %v623 = vmax.f32 %v495, 0.0
  %v624 = vmax.f32 %v496, 0.0
  %v625 = vmax.f32 %v497, 0.0
  %v626 = vmax.f32 %v498, 0.0
  %v627 = vmax.f32 %v499, 0.0
  %v628 = vmax.f32 %v500, 0.0
  %v629 = vmax.f32 %v501, 0.0
  %v630 = vmax.f32 %v502, 0.0
  %v631 = vmax.f32 %v503, 0.0
  %v632 = vmax.f32 %v504, 0.0
  %v633 = vmax.f32 %v505, 0.0
  %v634 = vmax.f32 %v506, 0.0
  %v635 = vmax.f32 %v507, 0.0
  %v636 = vmax.f32 %v508, 0.0
  %v637 = vmax.f32 %v509, 0.0
  %v638 = vmax.f32 %v510, 0.0
  %v639 = vmax.f32 %v511, 0.0
  %v640 = vmax.f32 %v512, 0.0
  %v641 = vmax.f32 %v513, 0.0
  %v642 = vmax.f32 %v514, 0.0
  %v643 = vmax.f32 %v515, 0.0
  %v644 = vmax.f32 %v516, 0.0
  %v645 = vmax.f32 %v517, 0.0
  %v646 = vmax.f32 %v518, 0.0
  %v647 = vmax.f32 %v519, 0.0
  %v648 = vmax.f32 %v520, 0.0
  %v649 = vmax.f32 %v521, 0.0
  %v650 = vmax.f32 %v522, 0.0
  %v651 = vmax.f32 %v523, 0.0
  %v652 = vmax.f32 %v524, 0.0
  %v653 = vmax.f32 %v525, 0.0
  %v654 = vmax.f32 %v526, 0.0
  %v655 = vmax.f32 %v527, 0.0
  %v656 = vmax.f32 %v528, 0.0
  %v657 = vmax.f32 %v529, 0.0
  %v658 = vmax.f32 %v530, 0.0
  %v659 = vmax.f32 %v531, 0.0
  %v660 = vmax.f32 %v532, 0.0
  %v661 = vmax.f32 %v533, 0.0
  %662 = vst [vmem:[%s3] sm:$0xff] %v534
  %663 = vst [vmem:[%s3 + $0x8] sm:$0xff] %v535
  %664 = vst [vmem:[%s3 + $0x10] sm:$0xff] %v536
  %665 = vst [vmem:[%s3 + $0x18] sm:$0xff] %v537
  %666 = vst [vmem:[%s3 + $0x20] sm:$0xff] %v538
  %667 = vst [vmem:[%s3 + $0x28] sm:$0xff] %v539
  %668 = vst [vmem:[%s3 + $0x30] sm:$0xff] %v540
  %669 = vst [vmem:[%s3 + $0x38] sm:$0xff] %v541
  %670 = vst [vmem:[%s3 + $0x40] sm:$0xff] %v542
  %671 = vst [vmem:[%s3 + $0x48] sm:$0xff] %v543
  %672 = vst [vmem:[%s3 + $0x50] sm:$0xff] %v544
  %673 = vst [vmem:[%s3 + $0x58] sm:$0xff] %v545
  %674 = vst [vmem:[%s3 + $0x60] sm:$0xff] %v546
  %675 = vst [vmem:[%s3 + $0x68] sm:$0xff] %v547
  %676 = vst [vmem:[%s3 + $0x70] sm:$0xff] %v548
  %677 = vst [vmem:[%s3 + $0x78] sm:$0xff] %v549
  %678 = vst [vmem:[%s3 + $0x80] sm:$0xff] %v550
  %679 = vst [vmem:[%s3 + $0x88] sm:$0xff] %v551
  %680 = vst [vmem:[%s3 + $0x90] sm:$0xff] %v552
  %681 = vst [vmem:[%s3 + $0x98] sm:$0xff] %v553
  %682 = vst [vmem:[%s3 + $0xa0] sm:$0xff] %v554
  %683 = vst [vmem:[%s3 + $0xa8] sm:$0xff] %v555
  %684 = vst [vmem:[%s3 + $0xb0] sm:$0xff] %v556
  %685 = vst [vmem:[%s3 + $0xb8] sm:$0xff] %v557
  %686 = vst [vmem:[%s3 + $0xc0] sm:$0xff] %v558
  %687 = vst [vmem:[%s3 + $0xc8] sm:$0xff] %v559
  %688 = vst [vmem:[%s3 + $0xd0] sm:$0xff] %v560
  %689 = vst [vmem:[%s3 + $0xd8] sm:$0xff] %v561
  %690 = vst [vmem:[%s3 + $0xe0] sm:$0xff] %v562
  %691 = vst [vmem:[%s3 + $0xe8] sm:$0xff] %v563
  %692 = vst [vmem:[%s3 + $0xf0] sm:$0xff] %v564
  %693 = vst [vmem:[%s3 + $0xf8] sm:$0xff] %v565
  %694 = vst [vmem:[%s3 + $0x100] sm:$0xff] %v566
  %695 = vst [vmem:[%s3 + $0x108] sm:$0xff] %v567
  %696 = vst [vmem:[%s3 + $0x110] sm:$0xff] %v568
  %697 = vst [vmem:[%s3 + $0x118] sm:$0xff] %v569
  %698 = vst [vmem:[%s3 + $0x120] sm:$0xff] %v570
  %699 = vst [vmem:[%s3 + $0x128] sm:$0xff] %v571
  %700 = vst [vmem:[%s3 + $0x130] sm:$0xff] %v572
  %701 = vst [vmem:[%s3 + $0x138] sm:$0xff] %v573
  %702 = vst [vmem:[%s3 + $0x140] sm:$0xff] %v574
  %703 = vst [vmem:[%s3 + $0x148] sm:$0xff] %v575
  %704 = vst [vmem:[%s3 + $0x150] sm:$0xff] %v576
  %705 = vst [vmem:[%s3 + $0x158] sm:$0xff] %v577
  %706 = vst [vmem:[%s3 + $0x160] sm:$0xff] %v578
  %707 = vst [vmem:[%s3 + $0x168] sm:$0xff] %v579
  %708 = vst [vmem:[%s3 + $0x170] sm:$0xff] %v580
  %709 = vst [vmem:[%s3 + $0x178] sm:$0xff] %v581
  %710 = vst [vmem:[%s3 + $0x180] sm:$0xff] %v582
  %711 = vst [vmem:[%s3 + $0x188] sm:$0xff] %v583
  %712 = vst [vmem:[%s3 + $0x190] sm:$0xff] %v584
  %713 = vst [vmem:[%s3 + $0x198] sm:$0xff] %v585
  %714 = vst [vmem:[%s3 + $0x1a0] sm:$0xff] %v586
  %715 = vst [vmem:[%s3 + $0x1a8] sm:$0xff] %v587
  %716 = vst [vmem:[%s3 + $0x1b0] sm:$0xff] %v588
  %717 = vst [vmem:[%s3 + $0x1b8] sm:$0xff] %v589
  %718 = vst [vmem:[%s3 + $0x1c0] sm:$0xff] %v590
  %719 = vst [vmem:[%s3 + $0x1c8] sm:$0xff] %v591
  %720 = vst [vmem:[%s3 + $0x1d0] sm:$0xff] %v592
  %721 = vst [vmem:[%s3 + $0x1d8] sm:$0xff] %v593
  %722 = vst [vmem:[%s3 + $0x1e0] sm:$0xff] %v594
  %723 = vst [vmem:[%s3 + $0x1e8] sm:$0xff] %v595
  %724 = vst [vmem:[%s3 + $0x1f0] sm:$0xff] %v596
  %725 = vst [vmem:[%s3 + $0x1f8] sm:$0xff] %v597
  %726 = vst [vmem:[%s3 + $0x200] sm:$0xff] %v598
  %727 = vst [vmem:[%s3 + $0x208] sm:$0xff] %v599
  %728 = vst [vmem:[%s3 + $0x210] sm:$0xff] %v600
  %729 = vst [vmem:[%s3 + $0x218] sm:$0xff] %v601
  %730 = vst [vmem:[%s3 + $0x220] sm:$0xff] %v602
  %731 = vst [vmem:[%s3 + $0x228] sm:$0xff] %v603
  %732 = vst [vmem:[%s3 + $0x230] sm:$0xff] %v604
  %733 = vst [vmem:[%s3 + $0x238] sm:$0xff] %v605
  %734 = vst [vmem:[%s3 + $0x240] sm:$0xff] %v606
  %735 = vst [vmem:[%s3 + $0x248] sm:$0xff] %v607
  %736 = vst [vmem:[%s3 + $0x250] sm:$0xff] %v608
  %737 = vst [vmem:[%s3 + $0x258] sm:$0xff] %v609
  %738 = vst [vmem:[%s3 + $0x260] sm:$0xff] %v610
  %739 = vst [vmem:[%s3 + $0x268] sm:$0xff] %v611
  %740 = vst [vmem:[%s3 + $0x270] sm:$0xff] %v612
  %741 = vst [vmem:[%s3 + $0x278] sm:$0xff] %v613
  %742 = vst [vmem:[%s3 + $0x280] sm:$0xff] %v614
  %743 = vst [vmem:[%s3 + $0x288] sm:$0xff] %v615
  %744 = vst [vmem:[%s3 + $0x290] sm:$0xff] %v616
  %745 = vst [vmem:[%s3 + $0x298] sm:$0xff] %v617
  %746 = vst [vmem:[%s3 + $0x2a0] sm:$0xff] %v618
  %747 = vst [vmem:[%s3 + $0x2a8] sm:$0xff] %v619
  %748 = vst [vmem:[%s3 + $0x2b0] sm:$0xff] %v620
  %749 = vst [vmem:[%s3 + $0x2b8] sm:$0xff] %v621
  %750 = vst [vmem:[%s3 + $0x2c0] sm:$0xff] %v622
  %751 = vst [vmem:[%s3 + $0x2c8] sm:$0xff] %v623
  %752 = vst [vmem:[%s3 + $0x2d0] sm:$0xff] %v624
  %753 = vst [vmem:[%s3 + $0x2d8] sm:$0xff] %v625
  %754 = vst [vmem:[%s3 + $0x2e0] sm:$0xff] %v626
  %755 = vst [vmem:[%s3 + $0x2e8] sm:$0xff] %v627
  %756 = vst [vmem:[%s3 + $0x2f0] sm:$0xff] %v628
  %757 = vst [vmem:[%s3 + $0x2f8] sm:$0xff] %v629
  %758 = vst [vmem:[%s3 + $0x300] sm:$0xff] %v630
  %759 = vst [vmem:[%s3 + $0x308] sm:$0xff] %v631
  %760 = vst [vmem:[%s3 + $0x310] sm:$0xff] %v632
  %761 = vst [vmem:[%s3 + $0x318] sm:$0xff] %v633
  %762 = vst [vmem:[%s3 + $0x320] sm:$0xff] %v634
  %763 = vst [vmem:[%s3 + $0x328] sm:$0xff] %v635
  %764 = vst [vmem:[%s3 + $0x330] sm:$0xff] %v636
  %765 = vst [vmem:[%s3 + $0x338] sm:$0xff] %v637
  %766 = vst [vmem:[%s3 + $0x340] sm:$0xff] %v638
  %767 = vst [vmem:[%s3 + $0x348] sm:$0xff] %v639
  %768 = vst [vmem:[%s3 + $0x350] sm:$0xff] %v640
  %769 = vst [vmem:[%s3 + $0x358] sm:$0xff] %v641
  %770 = vst [vmem:[%s3 + $0x360] sm:$0xff] %v642
  %771 = vst [vmem:[%s3 + $0x368] sm:$0xff] %v643
  %772 = vst [vmem:[%s3 + $0x370] sm:$0xff] %v644
  %773 = vst [vmem:[%s3 + $0x378] sm:$0xff] %v645
  %774 = vst [vmem:[%s3 + $0x380] sm:$0xff] %v646
  %775 = vst [vmem:[%s3 + $0x388] sm:$0xff] %v647
  %776 = vst [vmem:[%s3 + $0x390] sm:$0xff] %v648
  %777 = vst [vmem:[%s3 + $0x398] sm:$0xff] %v649
  %778 = vst [vmem:[%s3 + $0x3a0] sm:$0xff] %v650
  %779 = vst [vmem:[%s3 + $0x3a8] sm:$0xff] %v651
  %780 = vst [vmem:[%s3 + $0x3b0] sm:$0xff] %v652
  %781 = vst [vmem:[%s3 + $0x3b8] sm:$0xff] %v653
  %782 = vst [vmem:[%s3 + $0x3c0] sm:$0xff] %v654
  %783 = vst [vmem:[%s3 + $0x3c8] sm:$0xff] %v655
  %784 = vst [vmem:[%s3 + $0x3d0] sm:$0xff] %v656
  %785 = vst [vmem:[%s3 + $0x3d8] sm:$0xff] %v657
  %786 = vst [vmem:[%s3 + $0x3e0] sm:$0xff] %v658
  %787 = vst [vmem:[%s3 + $0x3e8] sm:$0xff] %v659
  %788 = vst [vmem:[%s3 + $0x3f0] sm:$0xff] %v660
  %789 = vst [vmem:[%s3 + $0x3f8] sm:$0xff] %v661
  // Predicated region
  $region14: #{conv_bn_relu.3} parent=0 // pred_check
    _
  $region15: #{conv_bn_relu.3} parent=0 // pred_check_branch
    %791 = sbr.rel (0) target = $region17
  $region16: #{conv_bn_relu.3} parent=0 // pred_region
    _
  $region17: #{conv_bn_relu.3} parent=0 // pred_fallthru
    _
  // Predicated region
  $region18: #{conv_bn_relu.3} parent=0 // pred_check
    _
  $region19: #{conv_bn_relu.3} parent=0 // pred_check_branch
    %793 = sbr.rel (0) target = $region21
  $region20: #{conv_bn_relu.3} parent=0 // pred_region
    _
  $region21: #{conv_bn_relu.3} parent=0 // pred_fallthru
    _

// kernel: conv_bn_relu.2
$region0: #{conv_bn_relu.2}
  #allocation0 [shape = 'u32[]', space=smem, size = 0x4, offset = 0x4, fixed_abs, tag = 'smem constant byte address 0x4 - core index']
  #allocation1 [shape = 'u32[72,128]{1,0:T(1,128)}', space=vmem, size = 0x9000, scoped, tag = 'internal scratch']
  %s0 = inlined_call_operand.vmem [shape: bf16[1088,4], index: 0, kind: input, shape index: {}, may-alias: {0,1}]
  %s1 = inlined_call_operand.vmem [shape: bf16[1088,4], index: 1, kind: input, shape index: {}, may-alias: {0,1}]
  %s2 = inlined_call_operand.vmem [shape: f32[1024,1], index: 2, kind: input, shape index: {}]
  %s3 = inlined_call_operand.vmem [shape: bf16[9,4,128], index: 3, kind: input, shape index: {}]
  %s4 = inlined_call_operand.vmem [shape: bf16[1024,128], index: 4, kind: output, shape index: {0}]
  %s5 = inlined_call_operand.vmem [shape: f32[1,1,128], index: 5, kind: output, shape index: {1}]
  %s6 = inlined_call_operand.vmem [shape: f32[1,1,128], index: 6, kind: output, shape index: {2}]
  %7 = xla_tuple %s4, %s5, %s6
  %s8 = sld [smem:[#allocation0]]
  $region46: #{conv_bn_relu.2} parent=0
    _
  %s10 = ssub.s32 1, %s8
  %s11 = scalar_select 0, %s10, %s8
  // Predicated region
  $region2: #{conv_bn_relu.2} parent=0 // pred_check
    _
  $region3: #{conv_bn_relu.2} parent=0 // pred_check_branch
    %13 = sbr.rel (0) target = $region5
  $region4: #{conv_bn_relu.2} parent=0 // pred_region
    %s14 = sadd.s32 0, 0
    %s15 = smul.u32 128, %s14
    %s16 = ssub.s32 136, %s15
    %p17 = scmp.lt.s32.totalorder %s16, 128
    %s18 = scalar_select %p17, %s16, 128
    %s19 = smul.u32 4, %s18
    %p20 = scmp.lt.s32.totalorder %s15, 135
    %s21 = scalar_select %p20, %s15, 135
    %s22 = smul.addr %s21, 4
    %s23 = scalar_lea.vmem %s0, %s22
    %s24 = sadd.s32 0, 0
    %s25 = smul.u32 128, %s24
    %s26 = ssub.s32 136, %s25
    %p27 = scmp.lt.s32.totalorder %s26, 128
    %s28 = scalar_select %p27, %s26, 128
    %s29 = smul.u32 4, %s28
  $region5: #{conv_bn_relu.2} parent=0 // pred_fallthru
    _
  // Predicated region
  $region6: #{conv_bn_relu.2} parent=0 // pred_check
    _
  $region7: #{conv_bn_relu.2} parent=0 // pred_check_branch
    %31 = sbr.rel (0) target = $region9
  $region8: #{conv_bn_relu.2} parent=0 // pred_region
    %s32 = sadd.s32 0, 0
    %s33 = sadd.s32 %s32, 1
    %s34 = smul.u32 %s33, 16
    %s35 = smul.u32 8, %s34
    %p36 = scmp.lt.s32.totalorder %s35, 135
    %s37 = scalar_select %p36, %s35, 135
    %s38 = smul.addr %s37, 4
    %s39 = scalar_lea.vmem %s1, %s38
    %s40 = sadd.s32 0, 0
    %s41 = sadd.s32 %s40, 1
    %s42 = smul.u32 %s41, 16
    %s43 = smul.u32 8, %s42
  $region9: #{conv_bn_relu.2} parent=0 // pred_fallthru
    _
  // Predicated region
  $region10: #{conv_bn_relu.2} parent=0 // pred_check
    _
  $region11: #{conv_bn_relu.2} parent=0 // pred_check_branch
    %45 = sbr.rel (0) target = $region13
  $region12: #{conv_bn_relu.2} parent=0 // pred_region
    %s46 = sadd.s32 0, 0
    %s47 = smul.u32 128, %s46
    %p48 = scmp.lt.s32.totalorder %s47, 127
    %s49 = scalar_select %p48, %s47, 127
    %s50 = smul.addr %s49, 8
    %s51 = scalar_lea.vmem %s2, %s50
    %s52 = sadd.s32 0, 0
    %s53 = smul.u32 128, %s52
  $region13: #{conv_bn_relu.2} parent=0 // pred_fallthru
    _
  // Predicated region
  $region14: #{conv_bn_relu.2} parent=0 // pred_check
    _
  $region15: #{conv_bn_relu.2} parent=0 // pred_check_branch
    %55 = sbr.rel (0) target = $region17
  $region16: #{conv_bn_relu.2} parent=0 // pred_region
    _
  $region17: #{conv_bn_relu.2} parent=0 // pred_fallthru
    _
  %s56 = sadd.s32 0, 0
  %s57 = smul.u32 128, %s56
  %s58 = ssub.s32 136, %s57
  %p59 = scmp.lt.s32.totalorder %s58, 128
  %s60 = scalar_select %p59, %s58, 128
  %s61 = smul.u32 4, %s60
  %p62 = scmp.lt.s32.totalorder %s57, 135
  %s63 = scalar_select %p62, %s57, 135
  %s64 = smul.addr %s63, 4
  %s65 = scalar_lea.vmem %s0, %s64
  %s66 = sadd.s32 0, 0
  %s67 = sadd.s32 %s66, 1
  %s68 = smul.u32 %s67, 16
  %s69 = smul.u32 8, %s68
  %p70 = scmp.lt.s32.totalorder %s69, 135
  %s71 = scalar_select %p70, %s69, 135
  %s72 = smul.addr %s71, 4
  %s73 = scalar_lea.vmem %s1, %s72
  %s74 = sadd.s32 0, 0
  %s75 = smul.u32 128, %s74
  %p76 = scmp.lt.s32.totalorder %s75, 127
  %s77 = scalar_select %p76, %s75, 127
  %s78 = smul.addr %s77, 8
  %s79 = scalar_lea.vmem %s2, %s78
  %s80 = sadd.s32 0, 0
  %s81 = smul.u32 128, %s80
  %p82 = scmp.lt.s32.totalorder %s81, 127
  %s83 = scalar_select %p82, %s81, 127
  %s84 = smul.addr %s83, 4
  %s85 = scalar_lea.vmem %s4, %s84
  %s86 = sadd.s32 0, 0
  %s87 = smul.u32 128, %s86
  %s88 = ssub.s32 136, %s87
  %p89 = scmp.lt.s32.totalorder %s88, 128
  %s90 = scalar_select %p89, %s88, 128
  %s91 = smul.u32 4, %s90
  %p92 = scmp.lt.s32.totalorder %s87, 135
  %s93 = scalar_select %p92, %s87, 135
  %s94 = smul.addr %s93, 4
  %s95 = scalar_lea.vmem %s0, %s94
  %s96 = sadd.s32 0, 0
  %s97 = smul.u32 128, %s96
  %s98 = ssub.s32 136, %s97
  %p99 = scmp.lt.s32.totalorder %s98, 128
  %s100 = scalar_select %p99, %s98, 128
  %s101 = smul.u32 4, %s100
  %s102 = sadd.s32 0, 0
  %s103 = sadd.s32 %s102, 1
  %s104 = smul.u32 %s103, 16
  %s105 = smul.u32 8, %s104
  %p106 = scmp.lt.s32.totalorder %s105, 135
  %s107 = scalar_select %p106, %s105, 135
  %s108 = smul.addr %s107, 4
  %s109 = scalar_lea.vmem %s1, %s108
  %s110 = sadd.s32 0, 0
  %s111 = sadd.s32 %s110, 1
  %s112 = smul.u32 %s111, 16
  %s113 = smul.u32 8, %s112
  %s114 = sadd.s32 0, 0
  %s115 = smul.u32 128, %s114
  %p116 = scmp.lt.s32.totalorder %s115, 127
  %s117 = scalar_select %p116, %s115, 127
  %s118 = smul.addr %s117, 8
  %s119 = scalar_lea.vmem %s2, %s118
  %s120 = sadd.s32 0, 0
  %s121 = smul.u32 128, %s120
  %s122 = sadd.s32 0, 0
  %s123 = smul.u32 128, %s122
  %p124 = scmp.lt.s32.totalorder %s123, 127
  %s125 = scalar_select %p124, %s123, 127
  %s126 = smul.addr %s125, 4
  %s127 = scalar_lea.vmem %s4, %s126
  %s128 = sadd.s32 0, 0
  %s129 = smul.u32 128, %s128
  %p131 = scmp.eq.s32.totalorder 0, 0
  // Predicated region
  $region18: #{conv_bn_relu.2} parent=0 // pred_check
    %p132 = pneg %p131
  $region19: #{conv_bn_relu.2} parent=0 // pred_check_branch
    %134 = sbr.rel (%p132) target = $region21
  $region20: #{conv_bn_relu.2} parent=0 // pred_region
    %135 = vst [vmem:[%s5] sm:$0x1] 0.0
    %136 = vst [vmem:[%s6] sm:$0x1] 0.0
  $region21: #{conv_bn_relu.2} parent=0 // pred_fallthru
    _
  %v137 = vld [vmem:[%s95] sm:$0xf]
  %v138 = vld [vmem:[%s95 + $0x4] sm:$0xf]
  %v139 = vld [vmem:[%s95 + $0x8] sm:$0xf]
  %v140 = vld [vmem:[%s95 + $0xc] sm:$0xf]
  %v141 = vld [vmem:[%s95 + $0x10] sm:$0xf]
  %v142 = vld [vmem:[%s95 + $0x14] sm:$0xf]
  %v143 = vld [vmem:[%s95 + $0x18] sm:$0xf]
  %v144 = vld [vmem:[%s95 + $0x1c] sm:$0xf]
  %v145 = vld [vmem:[%s95 + $0x20] sm:$0xf]
  %v146 = vld [vmem:[%s95 + $0x24] sm:$0xf]
  %v147 = vld [vmem:[%s95 + $0x28] sm:$0xf]
  %v148 = vld [vmem:[%s95 + $0x2c] sm:$0xf]
  %v149 = vld [vmem:[%s95 + $0x30] sm:$0xf]
  %v150 = vld [vmem:[%s95 + $0x34] sm:$0xf]
  %v151 = vld [vmem:[%s95 + $0x38] sm:$0xf]
  %v152 = vld [vmem:[%s95 + $0x3c] sm:$0xf]
  %v153 = vld [vmem:[%s95 + $0x40] sm:$0xf]
  %v154 = vld [vmem:[%s95 + $0x44] sm:$0xf]
  %v155 = vld [vmem:[%s95 + $0x48] sm:$0xf]
  %v156 = vld [vmem:[%s95 + $0x4c] sm:$0xf]
  %v157 = vld [vmem:[%s95 + $0x50] sm:$0xf]
  %v158 = vld [vmem:[%s95 + $0x54] sm:$0xf]
  %v159 = vld [vmem:[%s95 + $0x58] sm:$0xf]
  %v160 = vld [vmem:[%s95 + $0x5c] sm:$0xf]
  %v161 = vld [vmem:[%s95 + $0x60] sm:$0xf]
  %v162 = vld [vmem:[%s95 + $0x64] sm:$0xf]
  %v163 = vld [vmem:[%s95 + $0x68] sm:$0xf]
  %v164 = vld [vmem:[%s95 + $0x6c] sm:$0xf]
  %v165 = vld [vmem:[%s95 + $0x70] sm:$0xf]
  %v166 = vld [vmem:[%s95 + $0x74] sm:$0xf]
  %v167 = vld [vmem:[%s95 + $0x78] sm:$0xf]
  %v168 = vld [vmem:[%s95 + $0x7c] sm:$0xf]
  %v169 = vld [vmem:[%s95 + $0x80] sm:$0xf]
  %v170 = vld [vmem:[%s95 + $0x84] sm:$0xf]
  %v171 = vld [vmem:[%s95 + $0x88] sm:$0xf]
  %v172 = vld [vmem:[%s95 + $0x8c] sm:$0xf]
  %v173 = vld [vmem:[%s95 + $0x90] sm:$0xf]
  %v174 = vld [vmem:[%s95 + $0x94] sm:$0xf]
  %v175 = vld [vmem:[%s95 + $0x98] sm:$0xf]
  %v176 = vld [vmem:[%s95 + $0x9c] sm:$0xf]
  %v177 = vld [vmem:[%s95 + $0xa0] sm:$0xf]
  %v178 = vld [vmem:[%s95 + $0xa4] sm:$0xf]
  %v179 = vld [vmem:[%s95 + $0xa8] sm:$0xf]
  %v180 = vld [vmem:[%s95 + $0xac] sm:$0xf]
  %v181 = vld [vmem:[%s95 + $0xb0] sm:$0xf]
  %v182 = vld [vmem:[%s95 + $0xb4] sm:$0xf]
  %v183 = vld [vmem:[%s95 + $0xb8] sm:$0xf]
  %v184 = vld [vmem:[%s95 + $0xbc] sm:$0xf]
  %v185 = vld [vmem:[%s95 + $0xc0] sm:$0xf]
  %v186 = vld [vmem:[%s95 + $0xc4] sm:$0xf]
  %v187 = vld [vmem:[%s95 + $0xc8] sm:$0xf]
  %v188 = vld [vmem:[%s95 + $0xcc] sm:$0xf]
  %v189 = vld [vmem:[%s95 + $0xd0] sm:$0xf]
  %v190 = vld [vmem:[%s95 + $0xd4] sm:$0xf]
  %v191 = vld [vmem:[%s95 + $0xd8] sm:$0xf]
  %v192 = vld [vmem:[%s95 + $0xdc] sm:$0xf]
  %v193 = vld [vmem:[%s95 + $0xe0] sm:$0xf]
  %v194 = vld [vmem:[%s95 + $0xe4] sm:$0xf]
  %v195 = vld [vmem:[%s95 + $0xe8] sm:$0xf]
  %v196 = vld [vmem:[%s95 + $0xec] sm:$0xf]
  %v197 = vld [vmem:[%s95 + $0xf0] sm:$0xf]
  %v198 = vld [vmem:[%s95 + $0xf4] sm:$0xf]
  %v199 = vld [vmem:[%s95 + $0xf8] sm:$0xf]
  %v200 = vld [vmem:[%s95 + $0xfc] sm:$0xf]
  %v201 = vld [vmem:[%s95 + $0x100] sm:$0xf]
  %v202 = vld [vmem:[%s95 + $0x104] sm:$0xf]
  %v203 = vld [vmem:[%s95 + $0x108] sm:$0xf]
  %v204 = vld [vmem:[%s95 + $0x10c] sm:$0xf]
  %v205 = vld [vmem:[%s95 + $0x110] sm:$0xf]
  %v206 = vld [vmem:[%s95 + $0x114] sm:$0xf]
  %v207 = vld [vmem:[%s95 + $0x118] sm:$0xf]
  %v208 = vld [vmem:[%s95 + $0x11c] sm:$0xf]
  %v209 = vld [vmem:[%s95 + $0x120] sm:$0xf]
  %v210 = vld [vmem:[%s95 + $0x124] sm:$0xf]
  %v211 = vld [vmem:[%s95 + $0x128] sm:$0xf]
  %v212 = vld [vmem:[%s95 + $0x12c] sm:$0xf]
  %v213 = vld [vmem:[%s95 + $0x130] sm:$0xf]
  %v214 = vld [vmem:[%s95 + $0x134] sm:$0xf]
  %v215 = vld [vmem:[%s95 + $0x138] sm:$0xf]
  %v216 = vld [vmem:[%s95 + $0x13c] sm:$0xf]
  %v217 = vld [vmem:[%s95 + $0x140] sm:$0xf]
  %v218 = vld [vmem:[%s95 + $0x144] sm:$0xf]
  %v219 = vld [vmem:[%s95 + $0x148] sm:$0xf]
  %v220 = vld [vmem:[%s95 + $0x14c] sm:$0xf]
  %v221 = vld [vmem:[%s95 + $0x150] sm:$0xf]
  %v222 = vld [vmem:[%s95 + $0x154] sm:$0xf]
  %v223 = vld [vmem:[%s95 + $0x158] sm:$0xf]
  %v224 = vld [vmem:[%s95 + $0x15c] sm:$0xf]
  %v225 = vld [vmem:[%s95 + $0x160] sm:$0xf]
  %v226 = vld [vmem:[%s95 + $0x164] sm:$0xf]
  %v227 = vld [vmem:[%s95 + $0x168] sm:$0xf]
  %v228 = vld [vmem:[%s95 + $0x16c] sm:$0xf]
  %v229 = vld [vmem:[%s95 + $0x170] sm:$0xf]
  %v230 = vld [vmem:[%s95 + $0x174] sm:$0xf]
  %v231 = vld [vmem:[%s95 + $0x178] sm:$0xf]
  %v232 = vld [vmem:[%s95 + $0x17c] sm:$0xf]
  %v233 = vld [vmem:[%s95 + $0x180] sm:$0xf]
  %v234 = vld [vmem:[%s95 + $0x184] sm:$0xf]
  %v235 = vld [vmem:[%s95 + $0x188] sm:$0xf]
  %v236 = vld [vmem:[%s95 + $0x18c] sm:$0xf]
  %v237 = vld [vmem:[%s95 + $0x190] sm:$0xf]
  %v238 = vld [vmem:[%s95 + $0x194] sm:$0xf]
  %v239 = vld [vmem:[%s95 + $0x198] sm:$0xf]
  %v240 = vld [vmem:[%s95 + $0x19c] sm:$0xf]
  %v241 = vld [vmem:[%s95 + $0x1a0] sm:$0xf]
  %v242 = vld [vmem:[%s95 + $0x1a4] sm:$0xf]
  %v243 = vld [vmem:[%s95 + $0x1a8] sm:$0xf]
  %v244 = vld [vmem:[%s95 + $0x1ac] sm:$0xf]
  %v245 = vld [vmem:[%s95 + $0x1b0] sm:$0xf]
  %v246 = vld [vmem:[%s95 + $0x1b4] sm:$0xf]
  %v247 = vld [vmem:[%s95 + $0x1b8] sm:$0xf]
  %v248 = vld [vmem:[%s95 + $0x1bc] sm:$0xf]
  %v249 = vld [vmem:[%s95 + $0x1c0] sm:$0xf]
  %v250 = vld [vmem:[%s95 + $0x1c4] sm:$0xf]
  %v251 = vld [vmem:[%s95 + $0x1c8] sm:$0xf]
  %v252 = vld [vmem:[%s95 + $0x1cc] sm:$0xf]
  %v253 = vld [vmem:[%s95 + $0x1d0] sm:$0xf]
  %v254 = vld [vmem:[%s95 + $0x1d4] sm:$0xf]
  %v255 = vld [vmem:[%s95 + $0x1d8] sm:$0xf]
  %v256 = vld [vmem:[%s95 + $0x1dc] sm:$0xf]
  %v257 = vld [vmem:[%s95 + $0x1e0] sm:$0xf]
  %v258 = vld [vmem:[%s95 + $0x1e4] sm:$0xf]
  %v259 = vld [vmem:[%s95 + $0x1e8] sm:$0xf]
  %v260 = vld [vmem:[%s95 + $0x1ec] sm:$0xf]
  %v261 = vld [vmem:[%s95 + $0x1f0] sm:$0xf]
  %v262 = vld [vmem:[%s95 + $0x1f4] sm:$0xf]
  %v263 = vld [vmem:[%s95 + $0x1f8] sm:$0xf]
  %v264 = vld [vmem:[%s95 + $0x1fc] sm:$0xf]
  %v265 = vld [vmem:[%s109] sm:$0xf]
  %v266 = vld [vmem:[%s109 + $0x4] sm:$0xf]
  %v267 = vld [vmem:[%s109 + $0x8] sm:$0xf]
  %v268 = vld [vmem:[%s109 + $0xc] sm:$0xf]
  %v269 = vld [vmem:[%s109 + $0x10] sm:$0xf]
  %v270 = vld [vmem:[%s109 + $0x14] sm:$0xf]
  %v399 = vunpack.c.l.b16 %v137
  %v400 = vunpack.c.l.b16 %v138
  %v401 = vunpack.c.l.b16 %v139
  %v402 = vunpack.c.l.b16 %v140
  %v403 = vunpack.c.l.b16 %v141
  %v404 = vunpack.c.l.b16 %v142
  %v405 = vunpack.c.l.b16 %v143
  %v406 = vunpack.c.l.b16 %v144
  %v407 = vunpack.c.l.b16 %v145
  %v408 = vunpack.c.l.b16 %v146
  %v409 = vunpack.c.l.b16 %v147
  %v410 = vunpack.c.l.b16 %v148
  %v411 = vunpack.c.l.b16 %v149
  %v412 = vunpack.c.l.b16 %v150
  %v413 = vunpack.c.l.b16 %v151
  %v414 = vunpack.c.l.b16 %v152
  %v415 = vunpack.c.l.b16 %v153
  %v416 = vunpack.c.l.b16 %v154
  %v417 = vunpack.c.l.b16 %v155
  %v418 = vunpack.c.l.b16 %v156
  %v419 = vunpack.c.l.b16 %v157
  %v420 = vunpack.c.l.b16 %v158
  %v421 = vunpack.c.l.b16 %v159
  %v422 = vunpack.c.l.b16 %v160
  %v423 = vunpack.c.l.b16 %v161
  %v424 = vunpack.c.l.b16 %v162
  %v425 = vunpack.c.l.b16 %v163
  %v426 = vunpack.c.l.b16 %v164
  %v427 = vunpack.c.l.b16 %v165
  %v428 = vunpack.c.l.b16 %v166
  %v429 = vunpack.c.l.b16 %v167
  %v430 = vunpack.c.l.b16 %v168
  %v431 = vunpack.c.l.b16 %v169
  %v432 = vunpack.c.l.b16 %v170
  %v433 = vunpack.c.l.b16 %v171
  %v434 = vunpack.c.l.b16 %v172
  %v435 = vunpack.c.l.b16 %v173
  %v436 = vunpack.c.l.b16 %v174
  %v437 = vunpack.c.l.b16 %v175
  %v438 = vunpack.c.l.b16 %v176
  %v439 = vunpack.c.l.b16 %v177
  %v440 = vunpack.c.l.b16 %v178
  %v441 = vunpack.c.l.b16 %v179
  %v442 = vunpack.c.l.b16 %v180
  %v443 = vunpack.c.l.b16 %v181
  %v444 = vunpack.c.l.b16 %v182
  %v445 = vunpack.c.l.b16 %v183
  %v446 = vunpack.c.l.b16 %v184
  %v447 = vunpack.c.l.b16 %v185
  %v448 = vunpack.c.l.b16 %v186
  %v449 = vunpack.c.l.b16 %v187
  %v450 = vunpack.c.l.b16 %v188
  %v451 = vunpack.c.l.b16 %v189
  %v452 = vunpack.c.l.b16 %v190
  %v453 = vunpack.c.l.b16 %v191
  %v454 = vunpack.c.l.b16 %v192
  %v455 = vunpack.c.l.b16 %v193
  %v456 = vunpack.c.l.b16 %v194
  %v457 = vunpack.c.l.b16 %v195
  %v458 = vunpack.c.l.b16 %v196
  %v459 = vunpack.c.l.b16 %v197
  %v460 = vunpack.c.l.b16 %v198
  %v461 = vunpack.c.l.b16 %v199
  %v462 = vunpack.c.l.b16 %v200
  %v463 = vunpack.c.l.b16 %v201
  %v464 = vunpack.c.l.b16 %v202
  %v465 = vunpack.c.l.b16 %v203
  %v466 = vunpack.c.l.b16 %v204
  %v467 = vunpack.c.l.b16 %v205
  %v468 = vunpack.c.l.b16 %v206
  %v469 = vunpack.c.l.b16 %v207
  %v470 = vunpack.c.l.b16 %v208
  %v471 = vunpack.c.l.b16 %v209
  %v472 = vunpack.c.l.b16 %v210
  %v473 = vunpack.c.l.b16 %v211
  %v474 = vunpack.c.l.b16 %v212
  %v475 = vunpack.c.l.b16 %v213
  %v476 = vunpack.c.l.b16 %v214
  %v477 = vunpack.c.l.b16 %v215
  %v478 = vunpack.c.l.b16 %v216
  %v479 = vunpack.c.l.b16 %v217
  %v480 = vunpack.c.l.b16 %v218
  %v481 = vunpack.c.l.b16 %v219
  %v482 = vunpack.c.l.b16 %v220
  %v483 = vunpack.c.l.b16 %v221
  %v484 = vunpack.c.l.b16 %v222
  %v485 = vunpack.c.l.b16 %v223
  %v486 = vunpack.c.l.b16 %v224
  %v487 = vunpack.c.l.b16 %v225
  %v488 = vunpack.c.l.b16 %v226
  %v489 = vunpack.c.l.b16 %v227
  %v490 = vunpack.c.l.b16 %v228
  %v491 = vunpack.c.l.b16 %v229
  %v492 = vunpack.c.l.b16 %v230
  %v493 = vunpack.c.l.b16 %v231
  %v494 = vunpack.c.l.b16 %v232
  %v495 = vunpack.c.l.b16 %v233
  %v496 = vunpack.c.l.b16 %v234
  %v497 = vunpack.c.l.b16 %v235
  %v498 = vunpack.c.l.b16 %v236
  %v499 = vunpack.c.l.b16 %v237
  %v500 = vunpack.c.l.b16 %v238
  %v501 = vunpack.c.l.b16 %v239
  %v502 = vunpack.c.l.b16 %v240
  %v503 = vunpack.c.l.b16 %v241
  %v504 = vunpack.c.l.b16 %v242
  %v505 = vunpack.c.l.b16 %v243
  %v506 = vunpack.c.l.b16 %v244
  %v507 = vunpack.c.l.b16 %v245
  %v508 = vunpack.c.l.b16 %v246
  %v509 = vunpack.c.l.b16 %v247
  %v510 = vunpack.c.l.b16 %v248
  %v511 = vunpack.c.l.b16 %v249
  %v512 = vunpack.c.l.b16 %v250
  %v513 = vunpack.c.l.b16 %v251
  %v514 = vunpack.c.l.b16 %v252
  %v515 = vunpack.c.l.b16 %v253
  %v516 = vunpack.c.l.b16 %v254
  %v517 = vunpack.c.l.b16 %v255
  %v518 = vunpack.c.l.b16 %v256
  %v519 = vunpack.c.l.b16 %v257
  %v520 = vunpack.c.l.b16 %v258
  %v521 = vunpack.c.l.b16 %v259
  %v522 = vunpack.c.l.b16 %v260
  %v523 = vunpack.c.l.b16 %v261
  %v524 = vunpack.c.l.b16 %v262
  %v525 = vunpack.c.l.b16 %v263
  %v526 = vunpack.c.l.b16 %v264
  %v527 = vpack.c.b16 %v400, %v399
  %v528 = vpack.c.b16 %v402, %v401
  %v529 = vpack.c.b16 %v404, %v403
  %v530 = vpack.c.b16 %v406, %v405
  %v531 = vpack.c.b16 %v408, %v407
  %v532 = vpack.c.b16 %v410, %v409
  %v533 = vpack.c.b16 %v412, %v411
  %v534 = vpack.c.b16 %v414, %v413
  %v535 = vpack.c.b16 %v416, %v415
  %v536 = vpack.c.b16 %v418, %v417
  %v537 = vpack.c.b16 %v420, %v419
  %v538 = vpack.c.b16 %v422, %v421
  %v539 = vpack.c.b16 %v424, %v423
  %v540 = vpack.c.b16 %v426, %v425
  %v541 = vpack.c.b16 %v428, %v427
  %v542 = vpack.c.b16 %v430, %v429
  %v543 = vpack.c.b16 %v432, %v431
  %v544 = vpack.c.b16 %v434, %v433
  %v545 = vpack.c.b16 %v436, %v435
  %v546 = vpack.c.b16 %v438, %v437
  %v547 = vpack.c.b16 %v440, %v439
  %v548 = vpack.c.b16 %v442, %v441
  %v549 = vpack.c.b16 %v444, %v443
  %v550 = vpack.c.b16 %v446, %v445
  %v551 = vpack.c.b16 %v448, %v447
  %v552 = vpack.c.b16 %v450, %v449
  %v553 = vpack.c.b16 %v452, %v451
  %v554 = vpack.c.b16 %v454, %v453
  %v555 = vpack.c.b16 %v456, %v455
  %v556 = vpack.c.b16 %v458, %v457
  %v557 = vpack.c.b16 %v460, %v459
  %v558 = vpack.c.b16 %v462, %v461
  %v559 = vpack.c.b16 %v464, %v463
  %v560 = vpack.c.b16 %v466, %v465
  %v561 = vpack.c.b16 %v468, %v467
  %v562 = vpack.c.b16 %v470, %v469
  %v563 = vpack.c.b16 %v472, %v471
  %v564 = vpack.c.b16 %v474, %v473
  %v565 = vpack.c.b16 %v476, %v475
  %v566 = vpack.c.b16 %v478, %v477
  %v567 = vpack.c.b16 %v480, %v479
  %v568 = vpack.c.b16 %v482, %v481
  %v569 = vpack.c.b16 %v484, %v483
  %v570 = vpack.c.b16 %v486, %v485
  %v571 = vpack.c.b16 %v488, %v487
  %v572 = vpack.c.b16 %v490, %v489
  %v573 = vpack.c.b16 %v492, %v491
  %v574 = vpack.c.b16 %v494, %v493
  %v575 = vpack.c.b16 %v496, %v495
  %v576 = vpack.c.b16 %v498, %v497
  %v577 = vpack.c.b16 %v500, %v499
  %v578 = vpack.c.b16 %v502, %v501
  %v579 = vpack.c.b16 %v504, %v503
  %v580 = vpack.c.b16 %v506, %v505
  %v581 = vpack.c.b16 %v508, %v507
  %v582 = vpack.c.b16 %v510, %v509
  %v583 = vpack.c.b16 %v512, %v511
  %v584 = vpack.c.b16 %v514, %v513
  %v585 = vpack.c.b16 %v516, %v515
  %v586 = vpack.c.b16 %v518, %v517
  %v587 = vpack.c.b16 %v520, %v519
  %v588 = vpack.c.b16 %v522, %v521
  %v589 = vpack.c.b16 %v524, %v523
  %v590 = vpack.c.b16 %v526, %v525
  %v597 = vunpack.c.l.b16 %v265
  %v598 = vunpack.c.l.b16 %v266
  %v599 = vunpack.c.l.b16 %v267
  %v600 = vunpack.c.l.b16 %v268
  %v601 = vunpack.c.l.b16 %v269
  %v602 = vunpack.c.l.b16 %v270
  %v603 = vpack.c.b16 %v598, %v597
  %v604 = vpack.c.b16 %v600, %v599
  %v605 = vpack.c.b16 %v602, %v601
  %v606 = vld [vmem:[%s3] sm:$0x3]
  %s607 = scalar_lea.vmem %s3, 2
  %v608 = vld [vmem:[%s607] sm:$0x3]
  %vm609 = vsmask.f32 7424
  %v611 = vshrl.u32 %v527, 16
  %v613 = vshll.u32 %v527, 16
  %v615 = vrot.slane %v613, 1
  %v616 = vor.u32 %v611, %v615
  %v618 = vshll.u32 %v528, 16
  %v620 = vrot.slane %v618, 1
  %v621 = vsel %vm609, %v616, %v620
  %v622 = vshrl.u32 %v528, 16
  %v624 = vor.u32 %v622, %v620
  %v626 = vshll.u32 %v529, 16
  %v628 = vrot.slane %v626, 1
  %v629 = vsel %vm609, %v624, %v628
  %v630 = vshrl.u32 %v529, 16
  %v632 = vor.u32 %v630, %v628
  %v634 = vshll.u32 %v530, 16
  %v636 = vrot.slane %v634, 1
  %v637 = vsel %vm609, %v632, %v636
  %v638 = vshrl.u32 %v530, 16
  %v640 = vor.u32 %v638, %v636
  %v642 = vshll.u32 %v531, 16
  %v644 = vrot.slane %v642, 1
  %v645 = vsel %vm609, %v640, %v644
  %v646 = vshrl.u32 %v531, 16
  %v648 = vor.u32 %v646, %v644
  %v650 = vshll.u32 %v532, 16
  %v652 = vrot.slane %v650, 1
  %v653 = vsel %vm609, %v648, %v652
  %v654 = vshrl.u32 %v532, 16
  %v656 = vor.u32 %v654, %v652
  %v658 = vshll.u32 %v533, 16
  %v660 = vrot.slane %v658, 1
  %v661 = vsel %vm609, %v656, %v660
  %v662 = vshrl.u32 %v533, 16
  %v664 = vor.u32 %v662, %v660
  %v666 = vshll.u32 %v534, 16
  %v668 = vrot.slane %v666, 1
  %v669 = vsel %vm609, %v664, %v668
  %v670 = vshrl.u32 %v534, 16
  %v672 = vor.u32 %v670, %v668
  %v674 = vshll.u32 %v535, 16
  %v676 = vrot.slane %v674, 1
  %v677 = vsel %vm609, %v672, %v676
  %v678 = vshrl.u32 %v535, 16
  %v680 = vor.u32 %v678, %v676
  %v682 = vshll.u32 %v536, 16
  %v684 = vrot.slane %v682, 1
  %v685 = vsel %vm609, %v680, %v684
  %v686 = vshrl.u32 %v536, 16
  %v688 = vor.u32 %v686, %v684
  %v690 = vshll.u32 %v537, 16
  %v692 = vrot.slane %v690, 1
  %v693 = vsel %vm609, %v688, %v692
  %v694 = vshrl.u32 %v537, 16
  %v696 = vor.u32 %v694, %v692
  %v698 = vshll.u32 %v538, 16
  %v700 = vrot.slane %v698, 1
  %v701 = vsel %vm609, %v696, %v700
  %v702 = vshrl.u32 %v538, 16
  %v704 = vor.u32 %v702, %v700
  %v706 = vshll.u32 %v539, 16
  %v708 = vrot.slane %v706, 1
  %v709 = vsel %vm609, %v704, %v708
  %v710 = vshrl.u32 %v539, 16
  %v712 = vor.u32 %v710, %v708
  %v714 = vshll.u32 %v540, 16
  %v716 = vrot.slane %v714, 1
  %v717 = vsel %vm609, %v712, %v716
  %v718 = vshrl.u32 %v540, 16
  %v720 = vor.u32 %v718, %v716
  %v722 = vshll.u32 %v541, 16
  %v724 = vrot.slane %v722, 1
  %v725 = vsel %vm609, %v720, %v724
  %v726 = vshrl.u32 %v541, 16
  %v728 = vor.u32 %v726, %v724
  %v730 = vshll.u32 %v542, 16
  %v732 = vrot.slane %v730, 1
  %v733 = vsel %vm609, %v728, %v732
  %v734 = vshrl.u32 %v542, 16
  %v736 = vor.u32 %v734, %v732
  %v738 = vshll.u32 %v543, 16
  %v740 = vrot.slane %v738, 1
  %v741 = vsel %vm609, %v736, %v740
  %v742 = vshrl.u32 %v543, 16
  %v744 = vor.u32 %v742, %v740
  %v746 = vshll.u32 %v544, 16
  %v748 = vrot.slane %v746, 1
  %v749 = vsel %vm609, %v744, %v748
  %v750 = vshrl.u32 %v544, 16
  %v752 = vor.u32 %v750, %v748
  %v754 = vshll.u32 %v545, 16
  %v756 = vrot.slane %v754, 1
  %v757 = vsel %vm609, %v752, %v756
  %v758 = vshrl.u32 %v545, 16
  %v760 = vor.u32 %v758, %v756
  %v762 = vshll.u32 %v546, 16
  %v764 = vrot.slane %v762, 1
  %v765 = vsel %vm609, %v760, %v764
  %v766 = vshrl.u32 %v546, 16
  %v768 = vor.u32 %v766, %v764
  %v770 = vshll.u32 %v547, 16
  %v772 = vrot.slane %v770, 1
  %v773 = vsel %vm609, %v768, %v772
  %v774 = vshrl.u32 %v547, 16
  %v776 = vor.u32 %v774, %v772
  %v778 = vshll.u32 %v548, 16
  %v780 = vrot.slane %v778, 1
  %v781 = vsel %vm609, %v776, %v780
  %v782 = vshrl.u32 %v548, 16
  %v784 = vor.u32 %v782, %v780
  %v786 = vshll.u32 %v549, 16
  %v788 = vrot.slane %v786, 1
  %v789 = vsel %vm609, %v784, %v788
  %v790 = vshrl.u32 %v549, 16
  %v792 = vor.u32 %v790, %v788
  %v794 = vshll.u32 %v550, 16
  %v796 = vrot.slane %v794, 1
  %v797 = vsel %vm609, %v792, %v796
  %v798 = vshrl.u32 %v550, 16
  %v800 = vor.u32 %v798, %v796
  %v802 = vshll.u32 %v551, 16
  %v804 = vrot.slane %v802, 1
  %v805 = vsel %vm609, %v800, %v804
  %v806 = vshrl.u32 %v551, 16
  %v808 = vor.u32 %v806, %v804
  %v810 = vshll.u32 %v552, 16
  %v812 = vrot.slane %v810, 1
  %v813 = vsel %vm609, %v808, %v812
  %v814 = vshrl.u32 %v552, 16
  %v816 = vor.u32 %v814, %v812
  %v818 = vshll.u32 %v553, 16
  %v820 = vrot.slane %v818, 1
  %v821 = vsel %vm609, %v816, %v820
  %v822 = vshrl.u32 %v553, 16
  %v824 = vor.u32 %v822, %v820
  %v826 = vshll.u32 %v554, 16
  %v828 = vrot.slane %v826, 1
  %v829 = vsel %vm609, %v824, %v828
  %v830 = vshrl.u32 %v554, 16
  %v832 = vor.u32 %v830, %v828
  %v834 = vshll.u32 %v555, 16
  %v836 = vrot.slane %v834, 1
  %v837 = vsel %vm609, %v832, %v836
  %v838 = vshrl.u32 %v555, 16
  %v840 = vor.u32 %v838, %v836
  %v842 = vshll.u32 %v556, 16
  %v844 = vrot.slane %v842, 1
  %v845 = vsel %vm609, %v840, %v844
  %v846 = vshrl.u32 %v556, 16
  %v848 = vor.u32 %v846, %v844
  %v850 = vshll.u32 %v557, 16
  %v852 = vrot.slane %v850, 1
  %v853 = vsel %vm609, %v848, %v852
  %v854 = vshrl.u32 %v557, 16
  %v856 = vor.u32 %v854, %v852
  %v858 = vshll.u32 %v558, 16
  %v860 = vrot.slane %v858, 1
  %v861 = vsel %vm609, %v856, %v860
  %v862 = vshrl.u32 %v558, 16
  %v864 = vor.u32 %v862, %v860
  %v866 = vshll.u32 %v559, 16
  %v868 = vrot.slane %v866, 1
  %v869 = vsel %vm609, %v864, %v868
  %v870 = vshrl.u32 %v559, 16
  %v872 = vor.u32 %v870, %v868
  %v874 = vshll.u32 %v560, 16
  %v876 = vrot.slane %v874, 1
  %v877 = vsel %vm609, %v872, %v876
  %v878 = vshrl.u32 %v560, 16
  %v880 = vor.u32 %v878, %v876
  %v882 = vshll.u32 %v561, 16
  %v884 = vrot.slane %v882, 1
  %v885 = vsel %vm609, %v880, %v884
  %v886 = vshrl.u32 %v561, 16
  %v888 = vor.u32 %v886, %v884
  %v890 = vshll.u32 %v562, 16
  %v892 = vrot.slane %v890, 1
  %v893 = vsel %vm609, %v888, %v892
  %v894 = vshrl.u32 %v562, 16
  %v896 = vor.u32 %v894, %v892
  %v898 = vshll.u32 %v563, 16
  %v900 = vrot.slane %v898, 1
  %v901 = vsel %vm609, %v896, %v900
  %v902 = vshrl.u32 %v563, 16
  %v904 = vor.u32 %v902, %v900
  %v906 = vshll.u32 %v564, 16
  %v908 = vrot.slane %v906, 1
  %v909 = vsel %vm609, %v904, %v908
  %v910 = vshrl.u32 %v564, 16
  %v912 = vor.u32 %v910, %v908
  %v914 = vshll.u32 %v565, 16
  %v916 = vrot.slane %v914, 1
  %v917 = vsel %vm609, %v912, %v916
  %v918 = vshrl.u32 %v565, 16
  %v920 = vor.u32 %v918, %v916
  %v922 = vshll.u32 %v566, 16
  %v924 = vrot.slane %v922, 1
  %v925 = vsel %vm609, %v920, %v924
  %v926 = vshrl.u32 %v566, 16
  %v928 = vor.u32 %v926, %v924
  %v930 = vshll.u32 %v567, 16
  %v932 = vrot.slane %v930, 1
  %v933 = vsel %vm609, %v928, %v932
  %v934 = vshrl.u32 %v567, 16
  %v936 = vor.u32 %v934, %v932
  %v938 = vshll.u32 %v568, 16
  %v940 = vrot.slane %v938, 1
  %v941 = vsel %vm609, %v936, %v940
  %v942 = vshrl.u32 %v568, 16
  %v944 = vor.u32 %v942, %v940
  %v946 = vshll.u32 %v569, 16
  %v948 = vrot.slane %v946, 1
  %v949 = vsel %vm609, %v944, %v948
  %v950 = vshrl.u32 %v569, 16
  %v952 = vor.u32 %v950, %v948
  %v954 = vshll.u32 %v570, 16
  %v956 = vrot.slane %v954, 1
  %v957 = vsel %vm609, %v952, %v956
  %v958 = vshrl.u32 %v570, 16
  %v960 = vor.u32 %v958, %v956
  %v962 = vshll.u32 %v571, 16
  %v964 = vrot.slane %v962, 1
  %v965 = vsel %vm609, %v960, %v964
  %v966 = vshrl.u32 %v571, 16
  %v968 = vor.u32 %v966, %v964
  %v970 = vshll.u32 %v572, 16
  %v972 = vrot.slane %v970, 1
  %v973 = vsel %vm609, %v968, %v972
  %v974 = vshrl.u32 %v572, 16
  %v976 = vor.u32 %v974, %v972
  %v978 = vshll.u32 %v573, 16
  %v980 = vrot.slane %v978, 1
  %v981 = vsel %vm609, %v976, %v980
  %v982 = vshrl.u32 %v573, 16
  %v984 = vor.u32 %v982, %v980
  %v986 = vshll.u32 %v574, 16
  %v988 = vrot.slane %v986, 1
  %v989 = vsel %vm609, %v984, %v988
  %v990 = vshrl.u32 %v574, 16
  %v992 = vor.u32 %v990, %v988
  %v994 = vshll.u32 %v575, 16
  %v996 = vrot.slane %v994, 1
  %v997 = vsel %vm609, %v992, %v996
  %v998 = vshrl.u32 %v575, 16
  %v1000 = vor.u32 %v998, %v996
  %v1002 = vshll.u32 %v576, 16
  %v1004 = vrot.slane %v1002, 1
  %v1005 = vsel %vm609, %v1000, %v1004
  %v1006 = vshrl.u32 %v576, 16
  %v1008 = vor.u32 %v1006, %v1004
  %v1010 = vshll.u32 %v577, 16
  %v1012 = vrot.slane %v1010, 1
  %v1013 = vsel %vm609, %v1008, %v1012
  %v1014 = vshrl.u32 %v577, 16
  %v1016 = vor.u32 %v1014, %v1012
  %v1018 = vshll.u32 %v578, 16
  %v1020 = vrot.slane %v1018, 1
  %v1021 = vsel %vm609, %v1016, %v1020
  %v1022 = vshrl.u32 %v578, 16
  %v1024 = vor.u32 %v1022, %v1020
  %v1026 = vshll.u32 %v579, 16
  %v1028 = vrot.slane %v1026, 1
  %v1029 = vsel %vm609, %v1024, %v1028
  %v1030 = vshrl.u32 %v579, 16
  %v1032 = vor.u32 %v1030, %v1028
  %v1034 = vshll.u32 %v580, 16
  %v1036 = vrot.slane %v1034, 1
  %v1037 = vsel %vm609, %v1032, %v1036
  %v1038 = vshrl.u32 %v580, 16
  %v1040 = vor.u32 %v1038, %v1036
  %v1042 = vshll.u32 %v581, 16
  %v1044 = vrot.slane %v1042, 1
  %v1045 = vsel %vm609, %v1040, %v1044
  %v1046 = vshrl.u32 %v581, 16
  %v1048 = vor.u32 %v1046, %v1044
  %v1050 = vshll.u32 %v582, 16
  %v1052 = vrot.slane %v1050, 1
  %v1053 = vsel %vm609, %v1048, %v1052
  %v1054 = vshrl.u32 %v582, 16
  %v1056 = vor.u32 %v1054, %v1052
  %v1058 = vshll.u32 %v583, 16
  %v1060 = vrot.slane %v1058, 1
  %v1061 = vsel %vm609, %v1056, %v1060
  %v1062 = vshrl.u32 %v583, 16
  %v1064 = vor.u32 %v1062, %v1060
  %v1066 = vshll.u32 %v584, 16
  %v1068 = vrot.slane %v1066, 1
  %v1069 = vsel %vm609, %v1064, %v1068
  %v1070 = vshrl.u32 %v584, 16
  %v1072 = vor.u32 %v1070, %v1068
  %v1074 = vshll.u32 %v585, 16
  %v1076 = vrot.slane %v1074, 1
  %v1077 = vsel %vm609, %v1072, %v1076
  %v1078 = vshrl.u32 %v585, 16
  %v1080 = vor.u32 %v1078, %v1076
  %v1082 = vshll.u32 %v586, 16
  %v1084 = vrot.slane %v1082, 1
  %v1085 = vsel %vm609, %v1080, %v1084
  %v1086 = vshrl.u32 %v586, 16
  %v1088 = vor.u32 %v1086, %v1084
  %v1090 = vshll.u32 %v587, 16
  %v1092 = vrot.slane %v1090, 1
  %v1093 = vsel %vm609, %v1088, %v1092
  %v1094 = vshrl.u32 %v587, 16
  %v1096 = vor.u32 %v1094, %v1092
  %v1098 = vshll.u32 %v588, 16
  %v1100 = vrot.slane %v1098, 1
  %v1101 = vsel %vm609, %v1096, %v1100
  %v1102 = vshrl.u32 %v588, 16
  %v1104 = vor.u32 %v1102, %v1100
  %v1106 = vshll.u32 %v589, 16
  %v1108 = vrot.slane %v1106, 1
  %v1109 = vsel %vm609, %v1104, %v1108
  %v1110 = vshrl.u32 %v589, 16
  %v1112 = vor.u32 %v1110, %v1108
  %v1114 = vshll.u32 %v590, 16
  %v1116 = vrot.slane %v1114, 1
  %v1117 = vsel %vm609, %v1112, %v1116
  %v1118 = vshrl.u32 %v590, 16
  %v1120 = vor.u32 %v1118, %v1116
  %v1122 = vshll.u32 %v603, 16
  %v1124 = vrot.slane %v1122, 1
  %v1125 = vsel %vm609, %v1120, %v1124
  %vm1126 = vcmask 31744
  %v1128 = vsel %vm1126, %v621, 0
  %v1131 = vsel %vm1126, %v629, 0
  %v1134 = vsel %vm1126, %v637, 0
  %v1137 = vsel %vm1126, %v645, 0
  %v1140 = vsel %vm1126, %v653, 0
  %v1143 = vsel %vm1126, %v661, 0
  %v1146 = vsel %vm1126, %v669, 0
  %v1149 = vsel %vm1126, %v677, 0
  %v1152 = vsel %vm1126, %v685, 0
  %v1155 = vsel %vm1126, %v693, 0
  %v1158 = vsel %vm1126, %v701, 0
  %v1161 = vsel %vm1126, %v709, 0
  %v1164 = vsel %vm1126, %v717, 0
  %v1167 = vsel %vm1126, %v725, 0
  %v1170 = vsel %vm1126, %v733, 0
  %v1173 = vsel %vm1126, %v741, 0
  %v1176 = vsel %vm1126, %v749, 0
  %v1179 = vsel %vm1126, %v757, 0
  %v1182 = vsel %vm1126, %v765, 0
  %v1185 = vsel %vm1126, %v773, 0
  %v1188 = vsel %vm1126, %v781, 0
  %v1191 = vsel %vm1126, %v789, 0
  %v1194 = vsel %vm1126, %v797, 0
  %v1197 = vsel %vm1126, %v805, 0
  %v1200 = vsel %vm1126, %v813, 0
  %v1203 = vsel %vm1126, %v821, 0
  %v1206 = vsel %vm1126, %v829, 0
  %v1209 = vsel %vm1126, %v837, 0
  %v1212 = vsel %vm1126, %v845, 0
  %v1215 = vsel %vm1126, %v853, 0
  %v1218 = vsel %vm1126, %v861, 0
  %v1221 = vsel %vm1126, %v869, 0
  %v1224 = vsel %vm1126, %v877, 0
  %v1227 = vsel %vm1126, %v885, 0
  %v1230 = vsel %vm1126, %v893, 0
  %v1233 = vsel %vm1126, %v901, 0
  %v1236 = vsel %vm1126, %v909, 0
  %v1239 = vsel %vm1126, %v917, 0
  %v1242 = vsel %vm1126, %v925, 0
  %v1245 = vsel %vm1126, %v933, 0
  %v1248 = vsel %vm1126, %v941, 0
  %v1251 = vsel %vm1126, %v949, 0
  %v1254 = vsel %vm1126, %v957, 0
  %v1257 = vsel %vm1126, %v965, 0
  %v1260 = vsel %vm1126, %v973, 0
  %v1263 = vsel %vm1126, %v981, 0
  %v1266 = vsel %vm1126, %v989, 0
  %v1269 = vsel %vm1126, %v997, 0
  %v1272 = vsel %vm1126, %v1005, 0
  %v1275 = vsel %vm1126, %v1013, 0
  %v1278 = vsel %vm1126, %v1021, 0
  %v1281 = vsel %vm1126, %v1029, 0
  %v1284 = vsel %vm1126, %v1037, 0
  %v1287 = vsel %vm1126, %v1045, 0
  %v1290 = vsel %vm1126, %v1053, 0
  %v1293 = vsel %vm1126, %v1061, 0
  %v1296 = vsel %vm1126, %v1069, 0
  %v1299 = vsel %vm1126, %v1077, 0
  %v1302 = vsel %vm1126, %v1085, 0
  %v1305 = vsel %vm1126, %v1093, 0
  %v1308 = vsel %vm1126, %v1101, 0
  %v1311 = vsel %vm1126, %v1109, 0
  %v1314 = vsel %vm1126, %v1117, 0
  %v1317 = vsel %vm1126, %v1125, 0
  %vm1319 = vcmask 1041408
  %v1321 = vsel %vm1319, %v608, 0
  %1323 = vmatpush.bf16.msra.mxu0 0
  %1324 = vmatpush.bf16.msra.mxu0 0
  %1325 = vmatpush.bf16.msra.mxu0 0
  %1326 = vmatpush.bf16.msra.mxu0 0
  %1327 = vmatpush.bf16.msra.mxu0 0
  %1328 = vmatpush.bf16.msra.mxu0 0
  %1329 = vmatpush.bf16.msra.mxu0 0
  %1330 = vmatpush.bf16.msra.mxu0 %v1321
  %1331 = vmatmul.bf16.gmra.mxu0 %v1128
  %v1332 = vpop.f32.mrf.mxu0
  %v1333 = vadd.f32 0.0, %v1332
  %v1334 = vpop.f32.mrf.mxu0
  %v1335 = vadd.f32 0.0, %v1334
  %1336 = vmatmul.bf16.gmra.mxu0 %v1131
  %v1337 = vpop.f32.mrf.mxu0
  %v1338 = vadd.f32 0.0, %v1337
  %v1339 = vpop.f32.mrf.mxu0
  %v1340 = vadd.f32 0.0, %v1339
  %1341 = vmatmul.bf16.gmra.mxu0 %v1134
  %v1342 = vpop.f32.mrf.mxu0
  %v1343 = vadd.f32 0.0, %v1342
  %v1344 = vpop.f32.mrf.mxu0
  %v1345 = vadd.f32 0.0, %v1344
  %1346 = vmatmul.bf16.gmra.mxu0 %v1137
  %v1347 = vpop.f32.mrf.mxu0
  %v1348 = vadd.f32 0.0, %v1347
  %v1349 = vpop.f32.mrf.mxu0
  %v1350 = vadd.f32 0.0, %v1349
  %1351 = vmatmul.bf16.gmra.mxu0 %v1140
  %v1352 = vpop.f32.mrf.mxu0
  %v1353 = vadd.f32 0.0, %v1352
  %v1354 = vpop.f32.mrf.mxu0
  %v1355 = vadd.f32 0.0, %v1354
  %1356 = vmatmul.bf16.gmra.mxu0 %v1143
  %v1357 = vpop.f32.mrf.mxu0
  %v1358 = vadd.f32 0.0, %v1357
  %v1359 = vpop.f32.mrf.mxu0
  %v1360 = vadd.f32 0.0, %v1359
  %1361 = vmatmul.bf16.gmra.mxu0 %v1146
  %v1362 = vpop.f32.mrf.mxu0
  %v1363 = vadd.f32 0.0, %v1362
  %v1364 = vpop.f32.mrf.mxu0
  %v1365 = vadd.f32 0.0, %v1364
  %1366 = vmatmul.bf16.gmra.mxu0 %v1149
  %v1367 = vpop.f32.mrf.mxu0
  %v1368 = vadd.f32 0.0, %v1367
  %v1369 = vpop.f32.mrf.mxu0
  %v1370 = vadd.f32 0.0, %v1369
  %1371 = vmatmul.bf16.gmra.mxu0 %v1152
  %v1372 = vpop.f32.mrf.mxu0
  %v1373 = vadd.f32 0.0, %v1372
  %v1374 = vpop.f32.mrf.mxu0
  %v1375 = vadd.f32 0.0, %v1374
  %1376 = vmatmul.bf16.gmra.mxu0 %v1155
  %v1377 = vpop.f32.mrf.mxu0
  %v1378 = vadd.f32 0.0, %v1377
  %v1379 = vpop.f32.mrf.mxu0
  %v1380 = vadd.f32 0.0, %v1379
  %1381 = vmatmul.bf16.gmra.mxu0 %v1158
  %v1382 = vpop.f32.mrf.mxu0
  %v1383 = vadd.f32 0.0, %v1382
  %v1384 = vpop.f32.mrf.mxu0
  %v1385 = vadd.f32 0.0, %v1384
  %1386 = vmatmul.bf16.gmra.mxu0 %v1161
  %v1387 = vpop.f32.mrf.mxu0
  %v1388 = vadd.f32 0.0, %v1387
  %v1389 = vpop.f32.mrf.mxu0
  %v1390 = vadd.f32 0.0, %v1389
  %1391 = vmatmul.bf16.gmra.mxu0 %v1164
  %v1392 = vpop.f32.mrf.mxu0
  %v1393 = vadd.f32 0.0, %v1392
  %v1394 = vpop.f32.mrf.mxu0
  %v1395 = vadd.f32 0.0, %v1394
  %1396 = vmatmul.bf16.gmra.mxu0 %v1167
  %v1397 = vpop.f32.mrf.mxu0
  %v1398 = vadd.f32 0.0, %v1397
  %v1399 = vpop.f32.mrf.mxu0
  %v1400 = vadd.f32 0.0, %v1399
  %1401 = vmatmul.bf16.gmra.mxu0 %v1170
  %v1402 = vpop.f32.mrf.mxu0
  %v1403 = vadd.f32 0.0, %v1402
  %v1404 = vpop.f32.mrf.mxu0
  %v1405 = vadd.f32 0.0, %v1404
  %1406 = vmatmul.bf16.gmra.mxu0 %v1173
  %v1407 = vpop.f32.mrf.mxu0
  %v1408 = vadd.f32 0.0, %v1407
  %v1409 = vpop.f32.mrf.mxu0
  %v1410 = vadd.f32 0.0, %v1409
  %1411 = vmatmul.bf16.gmra.mxu0 %v1176
  %v1412 = vpop.f32.mrf.mxu0
  %v1413 = vadd.f32 0.0, %v1412
  %v1414 = vpop.f32.mrf.mxu0
  %v1415 = vadd.f32 0.0, %v1414
  %1416 = vmatmul.bf16.gmra.mxu0 %v1179
  %v1417 = vpop.f32.mrf.mxu0
  %v1418 = vadd.f32 0.0, %v1417
  %v1419 = vpop.f32.mrf.mxu0
  %v1420 = vadd.f32 0.0, %v1419
  %1421 = vmatmul.bf16.gmra.mxu0 %v1182
  %v1422 = vpop.f32.mrf.mxu0
  %v1423 = vadd.f32 0.0, %v1422
  %v1424 = vpop.f32.mrf.mxu0
  %v1425 = vadd.f32 0.0, %v1424
  %1426 = vmatmul.bf16.gmra.mxu0 %v1185
  %v1427 = vpop.f32.mrf.mxu0
  %v1428 = vadd.f32 0.0, %v1427
  %v1429 = vpop.f32.mrf.mxu0
  %v1430 = vadd.f32 0.0, %v1429
  %1431 = vmatmul.bf16.gmra.mxu0 %v1188
  %v1432 = vpop.f32.mrf.mxu0
  %v1433 = vadd.f32 0.0, %v1432
  %v1434 = vpop.f32.mrf.mxu0
  %v1435 = vadd.f32 0.0, %v1434
  %1436 = vmatmul.bf16.gmra.mxu0 %v1191
  %v1437 = vpop.f32.mrf.mxu0
  %v1438 = vadd.f32 0.0, %v1437
  %v1439 = vpop.f32.mrf.mxu0
  %v1440 = vadd.f32 0.0, %v1439
  %1441 = vmatmul.bf16.gmra.mxu0 %v1194
  %v1442 = vpop.f32.mrf.mxu0
  %v1443 = vadd.f32 0.0, %v1442
  %v1444 = vpop.f32.mrf.mxu0
  %v1445 = vadd.f32 0.0, %v1444
  %1446 = vmatmul.bf16.gmra.mxu0 %v1197
  %v1447 = vpop.f32.mrf.mxu0
  %v1448 = vadd.f32 0.0, %v1447
  %v1449 = vpop.f32.mrf.mxu0
  %v1450 = vadd.f32 0.0, %v1449
  %1451 = vmatmul.bf16.gmra.mxu0 %v1200
  %v1452 = vpop.f32.mrf.mxu0
  %v1453 = vadd.f32 0.0, %v1452
  %v1454 = vpop.f32.mrf.mxu0
  %v1455 = vadd.f32 0.0, %v1454
  %1456 = vmatmul.bf16.gmra.mxu0 %v1203
  %v1457 = vpop.f32.mrf.mxu0
  %v1458 = vadd.f32 0.0, %v1457
  %v1459 = vpop.f32.mrf.mxu0
  %v1460 = vadd.f32 0.0, %v1459
  %1461 = vmatmul.bf16.gmra.mxu0 %v1206
  %v1462 = vpop.f32.mrf.mxu0
  %v1463 = vadd.f32 0.0, %v1462
  %v1464 = vpop.f32.mrf.mxu0
  %v1465 = vadd.f32 0.0, %v1464
  %1466 = vmatmul.bf16.gmra.mxu0 %v1209
  %v1467 = vpop.f32.mrf.mxu0
  %v1468 = vadd.f32 0.0, %v1467
  %v1469 = vpop.f32.mrf.mxu0
  %v1470 = vadd.f32 0.0, %v1469
  %1471 = vmatmul.bf16.gmra.mxu0 %v1212
  %v1472 = vpop.f32.mrf.mxu0
  %v1473 = vadd.f32 0.0, %v1472
  %v1474 = vpop.f32.mrf.mxu0
  %v1475 = vadd.f32 0.0, %v1474
  %1476 = vmatmul.bf16.gmra.mxu0 %v1215
  %v1477 = vpop.f32.mrf.mxu0
  %v1478 = vadd.f32 0.0, %v1477
  %v1479 = vpop.f32.mrf.mxu0
  %v1480 = vadd.f32 0.0, %v1479
  %1481 = vmatmul.bf16.gmra.mxu0 %v1218
  %v1482 = vpop.f32.mrf.mxu0
  %v1483 = vadd.f32 0.0, %v1482
  %v1484 = vpop.f32.mrf.mxu0
  %v1485 = vadd.f32 0.0, %v1484
  %1486 = vmatmul.bf16.gmra.mxu0 %v1221
  %v1487 = vpop.f32.mrf.mxu0
  %v1488 = vadd.f32 0.0, %v1487
  %v1489 = vpop.f32.mrf.mxu0
  %v1490 = vadd.f32 0.0, %v1489
  %1491 = vmatmul.bf16.gmra.mxu0 %v1224
  %v1492 = vpop.f32.mrf.mxu0
  %v1493 = vadd.f32 0.0, %v1492
  %v1494 = vpop.f32.mrf.mxu0
  %v1495 = vadd.f32 0.0, %v1494
  %1496 = vmatmul.bf16.gmra.mxu0 %v1227
  %v1497 = vpop.f32.mrf.mxu0
  %v1498 = vadd.f32 0.0, %v1497
  %v1499 = vpop.f32.mrf.mxu0
  %v1500 = vadd.f32 0.0, %v1499
  %1501 = vmatmul.bf16.gmra.mxu0 %v1230
  %v1502 = vpop.f32.mrf.mxu0
  %v1503 = vadd.f32 0.0, %v1502
  %v1504 = vpop.f32.mrf.mxu0
  %v1505 = vadd.f32 0.0, %v1504
  %1506 = vmatmul.bf16.gmra.mxu0 %v1233
  %v1507 = vpop.f32.mrf.mxu0
  %v1508 = vadd.f32 0.0, %v1507
  %v1509 = vpop.f32.mrf.mxu0
  %v1510 = vadd.f32 0.0, %v1509
  %1511 = vmatmul.bf16.gmra.mxu0 %v1236
  %v1512 = vpop.f32.mrf.mxu0
  %v1513 = vadd.f32 0.0, %v1512
  %v1514 = vpop.f32.mrf.mxu0
  %v1515 = vadd.f32 0.0, %v1514
  %1516 = vmatmul.bf16.gmra.mxu0 %v1239
  %v1517 = vpop.f32.mrf.mxu0
  %v1518 = vadd.f32 0.0, %v1517
  %v1519 = vpop.f32.mrf.mxu0
  %v1520 = vadd.f32 0.0, %v1519
  %1521 = vmatmul.bf16.gmra.mxu0 %v1242
  %v1522 = vpop.f32.mrf.mxu0
  %v1523 = vadd.f32 0.0, %v1522
  %v1524 = vpop.f32.mrf.mxu0
  %v1525 = vadd.f32 0.0, %v1524
  %1526 = vmatmul.bf16.gmra.mxu0 %v1245
  %v1527 = vpop.f32.mrf.mxu0
  %v1528 = vadd.f32 0.0, %v1527
  %v1529 = vpop.f32.mrf.mxu0
  %v1530 = vadd.f32 0.0, %v1529
  %1531 = vmatmul.bf16.gmra.mxu0 %v1248
  %v1532 = vpop.f32.mrf.mxu0
  %v1533 = vadd.f32 0.0, %v1532
  %v1534 = vpop.f32.mrf.mxu0
  %v1535 = vadd.f32 0.0, %v1534
  %1536 = vmatmul.bf16.gmra.mxu0 %v1251
  %v1537 = vpop.f32.mrf.mxu0
  %v1538 = vadd.f32 0.0, %v1537
  %v1539 = vpop.f32.mrf.mxu0
  %v1540 = vadd.f32 0.0, %v1539
  %1541 = vmatmul.bf16.gmra.mxu0 %v1254
  %v1542 = vpop.f32.mrf.mxu0
  %v1543 = vadd.f32 0.0, %v1542
  %v1544 = vpop.f32.mrf.mxu0
  %v1545 = vadd.f32 0.0, %v1544
  %1546 = vmatmul.bf16.gmra.mxu0 %v1257
  %v1547 = vpop.f32.mrf.mxu0
  %v1548 = vadd.f32 0.0, %v1547
  %v1549 = vpop.f32.mrf.mxu0
  %v1550 = vadd.f32 0.0, %v1549
  %1551 = vmatmul.bf16.gmra.mxu0 %v1260
  %v1552 = vpop.f32.mrf.mxu0
  %v1553 = vadd.f32 0.0, %v1552
  %v1554 = vpop.f32.mrf.mxu0
  %v1555 = vadd.f32 0.0, %v1554
  %1556 = vmatmul.bf16.gmra.mxu0 %v1263
  %v1557 = vpop.f32.mrf.mxu0
  %v1558 = vadd.f32 0.0, %v1557
  %v1559 = vpop.f32.mrf.mxu0
  %v1560 = vadd.f32 0.0, %v1559
  %1561 = vmatmul.bf16.gmra.mxu0 %v1266
  %v1562 = vpop.f32.mrf.mxu0
  %v1563 = vadd.f32 0.0, %v1562
  %v1564 = vpop.f32.mrf.mxu0
  %v1565 = vadd.f32 0.0, %v1564
  %1566 = vmatmul.bf16.gmra.mxu0 %v1269
  %v1567 = vpop.f32.mrf.mxu0
  %v1568 = vadd.f32 0.0, %v1567
  %v1569 = vpop.f32.mrf.mxu0
  %v1570 = vadd.f32 0.0, %v1569
  %1571 = vmatmul.bf16.gmra.mxu0 %v1272
  %v1572 = vpop.f32.mrf.mxu0
  %v1573 = vadd.f32 0.0, %v1572
  %v1574 = vpop.f32.mrf.mxu0
  %v1575 = vadd.f32 0.0, %v1574
  %1576 = vmatmul.bf16.gmra.mxu0 %v1275
  %v1577 = vpop.f32.mrf.mxu0
  %v1578 = vadd.f32 0.0, %v1577
  %v1579 = vpop.f32.mrf.mxu0
  %v1580 = vadd.f32 0.0, %v1579
  %1581 = vmatmul.bf16.gmra.mxu0 %v1278
  %v1582 = vpop.f32.mrf.mxu0
  %v1583 = vadd.f32 0.0, %v1582
  %v1584 = vpop.f32.mrf.mxu0
  %v1585 = vadd.f32 0.0, %v1584
  %1586 = vmatmul.bf16.gmra.mxu0 %v1281
  %v1587 = vpop.f32.mrf.mxu0
  %v1588 = vadd.f32 0.0, %v1587
  %v1589 = vpop.f32.mrf.mxu0
  %v1590 = vadd.f32 0.0, %v1589
  %1591 = vmatmul.bf16.gmra.mxu0 %v1284
  %v1592 = vpop.f32.mrf.mxu0
  %v1593 = vadd.f32 0.0, %v1592
  %v1594 = vpop.f32.mrf.mxu0
  %v1595 = vadd.f32 0.0, %v1594
  %1596 = vmatmul.bf16.gmra.mxu0 %v1287
  %v1597 = vpop.f32.mrf.mxu0
  %v1598 = vadd.f32 0.0, %v1597
  %v1599 = vpop.f32.mrf.mxu0
  %v1600 = vadd.f32 0.0, %v1599
  %1601 = vmatmul.bf16.gmra.mxu0 %v1290
  %v1602 = vpop.f32.mrf.mxu0
  %v1603 = vadd.f32 0.0, %v1602
  %v1604 = vpop.f32.mrf.mxu0
  %v1605 = vadd.f32 0.0, %v1604
  %1606 = vmatmul.bf16.gmra.mxu0 %v1293
  %v1607 = vpop.f32.mrf.mxu0
  %v1608 = vadd.f32 0.0, %v1607
  %v1609 = vpop.f32.mrf.mxu0
  %v1610 = vadd.f32 0.0, %v1609
  %1611 = vmatmul.bf16.gmra.mxu0 %v1296
  %v1612 = vpop.f32.mrf.mxu0
  %v1613 = vadd.f32 0.0, %v1612
  %v1614 = vpop.f32.mrf.mxu0
  %v1615 = vadd.f32 0.0, %v1614
  %1616 = vmatmul.bf16.gmra.mxu0 %v1299
  %v1617 = vpop.f32.mrf.mxu0
  %v1618 = vadd.f32 0.0, %v1617
  %v1619 = vpop.f32.mrf.mxu0
  %v1620 = vadd.f32 0.0, %v1619
  %1621 = vmatmul.bf16.gmra.mxu0 %v1302
  %v1622 = vpop.f32.mrf.mxu0
  %v1623 = vadd.f32 0.0, %v1622
  %v1624 = vpop.f32.mrf.mxu0
  %v1625 = vadd.f32 0.0, %v1624
  %1626 = vmatmul.bf16.gmra.mxu0 %v1305
  %v1627 = vpop.f32.mrf.mxu0
  %v1628 = vadd.f32 0.0, %v1627
  %v1629 = vpop.f32.mrf.mxu0
  %v1630 = vadd.f32 0.0, %v1629
  %1631 = vmatmul.bf16.gmra.mxu0 %v1308
  %v1632 = vpop.f32.mrf.mxu0
  %v1633 = vadd.f32 0.0, %v1632
  %v1634 = vpop.f32.mrf.mxu0
  %v1635 = vadd.f32 0.0, %v1634
  %1636 = vmatmul.bf16.gmra.mxu0 %v1311
  %v1637 = vpop.f32.mrf.mxu0
  %v1638 = vadd.f32 0.0, %v1637
  %v1639 = vpop.f32.mrf.mxu0
  %v1640 = vadd.f32 0.0, %v1639
  %1641 = vmatmul.bf16.gmra.mxu0 %v1314
  %v1642 = vpop.f32.mrf.mxu0
  %v1643 = vadd.f32 0.0, %v1642
  %v1644 = vpop.f32.mrf.mxu0
  %v1645 = vadd.f32 0.0, %v1644
  %1646 = vmatmul.bf16.gmra.mxu0 %v1317
  %v1647 = vpop.f32.mrf.mxu0
  %v1648 = vadd.f32 0.0, %v1647
  %v1649 = vpop.f32.mrf.mxu0
  %v1650 = vadd.f32 0.0, %v1649
  %1651 = vdwg.mxu0
  %v1652 = vsel %vm1126, %v527, 0
  %v1654 = vsel %vm1126, %v528, 0
  %v1656 = vsel %vm1126, %v529, 0
  %v1658 = vsel %vm1126, %v530, 0
  %v1660 = vsel %vm1126, %v531, 0
  %v1662 = vsel %vm1126, %v532, 0
  %v1664 = vsel %vm1126, %v533, 0
  %v1666 = vsel %vm1126, %v534, 0
  %v1668 = vsel %vm1126, %v535, 0
  %v1670 = vsel %vm1126, %v536, 0
  %v1672 = vsel %vm1126, %v537, 0
  %v1674 = vsel %vm1126, %v538, 0
  %v1676 = vsel %vm1126, %v539, 0
  %v1678 = vsel %vm1126, %v540, 0
  %v1680 = vsel %vm1126, %v541, 0
  %v1682 = vsel %vm1126, %v542, 0
  %v1684 = vsel %vm1126, %v543, 0
  %v1686 = vsel %vm1126, %v544, 0
  %v1688 = vsel %vm1126, %v545, 0
  %v1690 = vsel %vm1126, %v546, 0
  %v1692 = vsel %vm1126, %v547, 0
  %v1694 = vsel %vm1126, %v548, 0
  %v1696 = vsel %vm1126, %v549, 0
  %v1698 = vsel %vm1126, %v550, 0
  %v1700 = vsel %vm1126, %v551, 0
  %v1702 = vsel %vm1126, %v552, 0
  %v1704 = vsel %vm1126, %v553, 0
  %v1706 = vsel %vm1126, %v554, 0
  %v1708 = vsel %vm1126, %v555, 0
  %v1710 = vsel %vm1126, %v556, 0
  %v1712 = vsel %vm1126, %v557, 0
  %v1714 = vsel %vm1126, %v558, 0
  %v1716 = vsel %vm1126, %v559, 0
  %v1718 = vsel %vm1126, %v560, 0
  %v1720 = vsel %vm1126, %v561, 0
  %v1722 = vsel %vm1126, %v562, 0
  %v1724 = vsel %vm1126, %v563, 0
  %v1726 = vsel %vm1126, %v564, 0
  %v1728 = vsel %vm1126, %v565, 0
  %v1730 = vsel %vm1126, %v566, 0
  %v1732 = vsel %vm1126, %v567, 0
  %v1734 = vsel %vm1126, %v568, 0
  %v1736 = vsel %vm1126, %v569, 0
  %v1738 = vsel %vm1126, %v570, 0
  %v1740 = vsel %vm1126, %v571, 0
  %v1742 = vsel %vm1126, %v572, 0
  %v1744 = vsel %vm1126, %v573, 0
  %v1746 = vsel %vm1126, %v574, 0
  %v1748 = vsel %vm1126, %v575, 0
  %v1750 = vsel %vm1126, %v576, 0
  %v1752 = vsel %vm1126, %v577, 0
  %v1754 = vsel %vm1126, %v578, 0
  %v1756 = vsel %vm1126, %v579, 0
  %v1758 = vsel %vm1126, %v580, 0
  %v1760 = vsel %vm1126, %v581, 0
  %v1762 = vsel %vm1126, %v582, 0
  %v1764 = vsel %vm1126, %v583, 0
  %v1766 = vsel %vm1126, %v584, 0
  %v1768 = vsel %vm1126, %v585, 0
  %v1770 = vsel %vm1126, %v586, 0
  %v1772 = vsel %vm1126, %v587, 0
  %v1774 = vsel %vm1126, %v588, 0
  %v1776 = vsel %vm1126, %v589, 0
  %v1778 = vsel %vm1126, %v590, 0
  %v1781 = vsel %vm1319, %v606, 0
  %1783 = vmatpush.bf16.msra.mxu0 0
  %1784 = vmatpush.bf16.msra.mxu0 0
  %1785 = vmatpush.bf16.msra.mxu0 0
  %1786 = vmatpush.bf16.msra.mxu0 0
  %1787 = vmatpush.bf16.msra.mxu0 0
  %1788 = vmatpush.bf16.msra.mxu0 0
  %1789 = vmatpush.bf16.msra.mxu0 0
  %1790 = vmatpush.bf16.msra.mxu0 %v1781
  %1791 = vmatmul.bf16.gmra.mxu0 %v1652
  %v1792 = vpop.f32.mrf.mxu0
  %v1793 = vadd.f32 %v1333, %v1792
  %v1794 = vpop.f32.mrf.mxu0
  %v1795 = vadd.f32 %v1335, %v1794
  %1796 = vmatmul.bf16.gmra.mxu0 %v1654
  %v1797 = vpop.f32.mrf.mxu0
  %v1798 = vadd.f32 %v1338, %v1797
  %v1799 = vpop.f32.mrf.mxu0
  %v1800 = vadd.f32 %v1340, %v1799
  %1801 = vmatmul.bf16.gmra.mxu0 %v1656
  %v1802 = vpop.f32.mrf.mxu0
  %v1803 = vadd.f32 %v1343, %v1802
  %v1804 = vpop.f32.mrf.mxu0
  %v1805 = vadd.f32 %v1345, %v1804
  %1806 = vmatmul.bf16.gmra.mxu0 %v1658
  %v1807 = vpop.f32.mrf.mxu0
  %v1808 = vadd.f32 %v1348, %v1807
  %v1809 = vpop.f32.mrf.mxu0
  %v1810 = vadd.f32 %v1350, %v1809
  %1811 = vmatmul.bf16.gmra.mxu0 %v1660
  %v1812 = vpop.f32.mrf.mxu0
  %v1813 = vadd.f32 %v1353, %v1812
  %v1814 = vpop.f32.mrf.mxu0
  %v1815 = vadd.f32 %v1355, %v1814
  %1816 = vmatmul.bf16.gmra.mxu0 %v1662
  %v1817 = vpop.f32.mrf.mxu0
  %v1818 = vadd.f32 %v1358, %v1817
  %v1819 = vpop.f32.mrf.mxu0
  %v1820 = vadd.f32 %v1360, %v1819
  %1821 = vmatmul.bf16.gmra.mxu0 %v1664
  %v1822 = vpop.f32.mrf.mxu0
  %v1823 = vadd.f32 %v1363, %v1822
  %v1824 = vpop.f32.mrf.mxu0
  %v1825 = vadd.f32 %v1365, %v1824
  %1826 = vmatmul.bf16.gmra.mxu0 %v1666
  %v1827 = vpop.f32.mrf.mxu0
  %v1828 = vadd.f32 %v1368, %v1827
  %v1829 = vpop.f32.mrf.mxu0
  %v1830 = vadd.f32 %v1370, %v1829
  %1831 = vmatmul.bf16.gmra.mxu0 %v1668
  %v1832 = vpop.f32.mrf.mxu0
  %v1833 = vadd.f32 %v1373, %v1832
  %v1834 = vpop.f32.mrf.mxu0
  %v1835 = vadd.f32 %v1375, %v1834
  %1836 = vmatmul.bf16.gmra.mxu0 %v1670
  %v1837 = vpop.f32.mrf.mxu0
  %v1838 = vadd.f32 %v1378, %v1837
  %v1839 = vpop.f32.mrf.mxu0
  %v1840 = vadd.f32 %v1380, %v1839
  %1841 = vmatmul.bf16.gmra.mxu0 %v1672
  %v1842 = vpop.f32.mrf.mxu0
  %v1843 = vadd.f32 %v1383, %v1842
  %v1844 = vpop.f32.mrf.mxu0
  %v1845 = vadd.f32 %v1385, %v1844
  %1846 = vmatmul.bf16.gmra.mxu0 %v1674
  %v1847 = vpop.f32.mrf.mxu0
  %v1848 = vadd.f32 %v1388, %v1847
  %v1849 = vpop.f32.mrf.mxu0
  %v1850 = vadd.f32 %v1390, %v1849
  %1851 = vmatmul.bf16.gmra.mxu0 %v1676
  %v1852 = vpop.f32.mrf.mxu0
  %v1853 = vadd.f32 %v1393, %v1852
  %v1854 = vpop.f32.mrf.mxu0
  %v1855 = vadd.f32 %v1395, %v1854
  %1856 = vmatmul.bf16.gmra.mxu0 %v1678
  %v1857 = vpop.f32.mrf.mxu0
  %v1858 = vadd.f32 %v1398, %v1857
  %v1859 = vpop.f32.mrf.mxu0
  %v1860 = vadd.f32 %v1400, %v1859
  %1861 = vmatmul.bf16.gmra.mxu0 %v1680
  %v1862 = vpop.f32.mrf.mxu0
  %v1863 = vadd.f32 %v1403, %v1862
  %v1864 = vpop.f32.mrf.mxu0
  %v1865 = vadd.f32 %v1405, %v1864
  %1866 = vmatmul.bf16.gmra.mxu0 %v1682
  %v1867 = vpop.f32.mrf.mxu0
  %v1868 = vadd.f32 %v1408, %v1867
  %v1869 = vpop.f32.mrf.mxu0
  %v1870 = vadd.f32 %v1410, %v1869
  %1871 = vmatmul.bf16.gmra.mxu0 %v1684
  %v1872 = vpop.f32.mrf.mxu0
  %v1873 = vadd.f32 %v1413, %v1872
  %v1874 = vpop.f32.mrf.mxu0
  %v1875 = vadd.f32 %v1415, %v1874
  %1876 = vmatmul.bf16.gmra.mxu0 %v1686
  %v1877 = vpop.f32.mrf.mxu0
  %v1878 = vadd.f32 %v1418, %v1877
  %v1879 = vpop.f32.mrf.mxu0
  %v1880 = vadd.f32 %v1420, %v1879
  %1881 = vmatmul.bf16.gmra.mxu0 %v1688
  %v1882 = vpop.f32.mrf.mxu0
  %v1883 = vadd.f32 %v1423, %v1882
  %v1884 = vpop.f32.mrf.mxu0
  %v1885 = vadd.f32 %v1425, %v1884
  %1886 = vmatmul.bf16.gmra.mxu0 %v1690
  %v1887 = vpop.f32.mrf.mxu0
  %v1888 = vadd.f32 %v1428, %v1887
  %v1889 = vpop.f32.mrf.mxu0
  %v1890 = vadd.f32 %v1430, %v1889
  %1891 = vmatmul.bf16.gmra.mxu0 %v1692
  %v1892 = vpop.f32.mrf.mxu0
  %v1893 = vadd.f32 %v1433, %v1892
  %v1894 = vpop.f32.mrf.mxu0
  %v1895 = vadd.f32 %v1435, %v1894
  %1896 = vmatmul.bf16.gmra.mxu0 %v1694
  %v1897 = vpop.f32.mrf.mxu0
  %v1898 = vadd.f32 %v1438, %v1897
  %v1899 = vpop.f32.mrf.mxu0
  %v1900 = vadd.f32 %v1440, %v1899
  %1901 = vmatmul.bf16.gmra.mxu0 %v1696
  %v1902 = vpop.f32.mrf.mxu0
  %v1903 = vadd.f32 %v1443, %v1902
  %v1904 = vpop.f32.mrf.mxu0
  %v1905 = vadd.f32 %v1445, %v1904
  %1906 = vmatmul.bf16.gmra.mxu0 %v1698
  %v1907 = vpop.f32.mrf.mxu0
  %v1908 = vadd.f32 %v1448, %v1907
  %v1909 = vpop.f32.mrf.mxu0
  %v1910 = vadd.f32 %v1450, %v1909
  %1911 = vmatmul.bf16.gmra.mxu0 %v1700
  %v1912 = vpop.f32.mrf.mxu0
  %v1913 = vadd.f32 %v1453, %v1912
  %v1914 = vpop.f32.mrf.mxu0
  %v1915 = vadd.f32 %v1455, %v1914
  %1916 = vmatmul.bf16.gmra.mxu0 %v1702
  %v1917 = vpop.f32.mrf.mxu0
  %v1918 = vadd.f32 %v1458, %v1917
  %v1919 = vpop.f32.mrf.mxu0
  %v1920 = vadd.f32 %v1460, %v1919
  %1921 = vmatmul.bf16.gmra.mxu0 %v1704
  %v1922 = vpop.f32.mrf.mxu0
  %v1923 = vadd.f32 %v1463, %v1922
  %v1924 = vpop.f32.mrf.mxu0
  %v1925 = vadd.f32 %v1465, %v1924
  %1926 = vmatmul.bf16.gmra.mxu0 %v1706
  %v1927 = vpop.f32.mrf.mxu0
  %v1928 = vadd.f32 %v1468, %v1927
  %v1929 = vpop.f32.mrf.mxu0
  %v1930 = vadd.f32 %v1470, %v1929
  %1931 = vmatmul.bf16.gmra.mxu0 %v1708
  %v1932 = vpop.f32.mrf.mxu0
  %v1933 = vadd.f32 %v1473, %v1932
  %v1934 = vpop.f32.mrf.mxu0
  %v1935 = vadd.f32 %v1475, %v1934
  %1936 = vmatmul.bf16.gmra.mxu0 %v1710
  %v1937 = vpop.f32.mrf.mxu0
  %v1938 = vadd.f32 %v1478, %v1937
  %v1939 = vpop.f32.mrf.mxu0
  %v1940 = vadd.f32 %v1480, %v1939
  %1941 = vmatmul.bf16.gmra.mxu0 %v1712
  %v1942 = vpop.f32.mrf.mxu0
  %v1943 = vadd.f32 %v1483, %v1942
  %v1944 = vpop.f32.mrf.mxu0
  %v1945 = vadd.f32 %v1485, %v1944
  %1946 = vmatmul.bf16.gmra.mxu0 %v1714
  %v1947 = vpop.f32.mrf.mxu0
  %v1948 = vadd.f32 %v1488, %v1947
  %v1949 = vpop.f32.mrf.mxu0
  %v1950 = vadd.f32 %v1490, %v1949
  %1951 = vmatmul.bf16.gmra.mxu0 %v1716
  %v1952 = vpop.f32.mrf.mxu0
  %v1953 = vadd.f32 %v1493, %v1952
  %v1954 = vpop.f32.mrf.mxu0
  %v1955 = vadd.f32 %v1495, %v1954
  %1956 = vmatmul.bf16.gmra.mxu0 %v1718
  %v1957 = vpop.f32.mrf.mxu0
  %v1958 = vadd.f32 %v1498, %v1957
  %v1959 = vpop.f32.mrf.mxu0
  %v1960 = vadd.f32 %v1500, %v1959
  %1961 = vmatmul.bf16.gmra.mxu0 %v1720
  %v1962 = vpop.f32.mrf.mxu0
  %v1963 = vadd.f32 %v1503, %v1962
  %v1964 = vpop.f32.mrf.mxu0
  %v1965 = vadd.f32 %v1505, %v1964
  %1966 = vmatmul.bf16.gmra.mxu0 %v1722
  %v1967 = vpop.f32.mrf.mxu0
  %v1968 = vadd.f32 %v1508, %v1967
  %v1969 = vpop.f32.mrf.mxu0
  %v1970 = vadd.f32 %v1510, %v1969
  %1971 = vmatmul.bf16.gmra.mxu0 %v1724
  %v1972 = vpop.f32.mrf.mxu0
  %v1973 = vadd.f32 %v1513, %v1972
  %v1974 = vpop.f32.mrf.mxu0
  %v1975 = vadd.f32 %v1515, %v1974
  %1976 = vmatmul.bf16.gmra.mxu0 %v1726
  %v1977 = vpop.f32.mrf.mxu0
  %v1978 = vadd.f32 %v1518, %v1977
  %v1979 = vpop.f32.mrf.mxu0
  %v1980 = vadd.f32 %v1520, %v1979
  %1981 = vmatmul.bf16.gmra.mxu0 %v1728
  %v1982 = vpop.f32.mrf.mxu0
  %v1983 = vadd.f32 %v1523, %v1982
  %v1984 = vpop.f32.mrf.mxu0
  %v1985 = vadd.f32 %v1525, %v1984
  %1986 = vmatmul.bf16.gmra.mxu0 %v1730
  %v1987 = vpop.f32.mrf.mxu0
  %v1988 = vadd.f32 %v1528, %v1987
  %v1989 = vpop.f32.mrf.mxu0
  %v1990 = vadd.f32 %v1530, %v1989
  %1991 = vmatmul.bf16.gmra.mxu0 %v1732
  %v1992 = vpop.f32.mrf.mxu0
  %v1993 = vadd.f32 %v1533, %v1992
  %v1994 = vpop.f32.mrf.mxu0
  %v1995 = vadd.f32 %v1535, %v1994
  %1996 = vmatmul.bf16.gmra.mxu0 %v1734
  %v1997 = vpop.f32.mrf.mxu0
  %v1998 = vadd.f32 %v1538, %v1997
  %v1999 = vpop.f32.mrf.mxu0
  %v2000 = vadd.f32 %v1540, %v1999
  %2001 = vmatmul.bf16.gmra.mxu0 %v1736
  %v2002 = vpop.f32.mrf.mxu0
  %v2003 = vadd.f32 %v1543, %v2002
  %v2004 = vpop.f32.mrf.mxu0
  %v2005 = vadd.f32 %v1545, %v2004
  %2006 = vmatmul.bf16.gmra.mxu0 %v1738
  %v2007 = vpop.f32.mrf.mxu0
  %v2008 = vadd.f32 %v1548, %v2007
  %v2009 = vpop.f32.mrf.mxu0
  %v2010 = vadd.f32 %v1550, %v2009
  %2011 = vmatmul.bf16.gmra.mxu0 %v1740
  %v2012 = vpop.f32.mrf.mxu0
  %v2013 = vadd.f32 %v1553, %v2012
  %v2014 = vpop.f32.mrf.mxu0
  %v2015 = vadd.f32 %v1555, %v2014
  %2016 = vmatmul.bf16.gmra.mxu0 %v1742
  %v2017 = vpop.f32.mrf.mxu0
  %v2018 = vadd.f32 %v1558, %v2017
  %v2019 = vpop.f32.mrf.mxu0
  %v2020 = vadd.f32 %v1560, %v2019
  %2021 = vmatmul.bf16.gmra.mxu0 %v1744
  %v2022 = vpop.f32.mrf.mxu0
  %v2023 = vadd.f32 %v1563, %v2022
  %v2024 = vpop.f32.mrf.mxu0
  %v2025 = vadd.f32 %v1565, %v2024
  %2026 = vmatmul.bf16.gmra.mxu0 %v1746
  %v2027 = vpop.f32.mrf.mxu0
  %v2028 = vadd.f32 %v1568, %v2027
  %v2029 = vpop.f32.mrf.mxu0
  %v2030 = vadd.f32 %v1570, %v2029
  %2031 = vmatmul.bf16.gmra.mxu0 %v1748
  %v2032 = vpop.f32.mrf.mxu0
  %v2033 = vadd.f32 %v1573, %v2032
  %v2034 = vpop.f32.mrf.mxu0
  %v2035 = vadd.f32 %v1575, %v2034
  %2036 = vmatmul.bf16.gmra.mxu0 %v1750
  %v2037 = vpop.f32.mrf.mxu0
  %v2038 = vadd.f32 %v1578, %v2037
  %v2039 = vpop.f32.mrf.mxu0
  %v2040 = vadd.f32 %v1580, %v2039
  %2041 = vmatmul.bf16.gmra.mxu0 %v1752
  %v2042 = vpop.f32.mrf.mxu0
  %v2043 = vadd.f32 %v1583, %v2042
  %v2044 = vpop.f32.mrf.mxu0
  %v2045 = vadd.f32 %v1585, %v2044
  %2046 = vmatmul.bf16.gmra.mxu0 %v1754
  %v2047 = vpop.f32.mrf.mxu0
  %v2048 = vadd.f32 %v1588, %v2047
  %v2049 = vpop.f32.mrf.mxu0
  %v2050 = vadd.f32 %v1590, %v2049
  %2051 = vmatmul.bf16.gmra.mxu0 %v1756
  %v2052 = vpop.f32.mrf.mxu0
  %v2053 = vadd.f32 %v1593, %v2052
  %v2054 = vpop.f32.mrf.mxu0
  %v2055 = vadd.f32 %v1595, %v2054
  %2056 = vmatmul.bf16.gmra.mxu0 %v1758
  %v2057 = vpop.f32.mrf.mxu0
  %v2058 = vadd.f32 %v1598, %v2057
  %v2059 = vpop.f32.mrf.mxu0
  %v2060 = vadd.f32 %v1600, %v2059
  %2061 = vmatmul.bf16.gmra.mxu0 %v1760
  %v2062 = vpop.f32.mrf.mxu0
  %v2063 = vadd.f32 %v1603, %v2062
  %v2064 = vpop.f32.mrf.mxu0
  %v2065 = vadd.f32 %v1605, %v2064
  %2066 = vmatmul.bf16.gmra.mxu0 %v1762
  %v2067 = vpop.f32.mrf.mxu0
  %v2068 = vadd.f32 %v1608, %v2067
  %v2069 = vpop.f32.mrf.mxu0
  %v2070 = vadd.f32 %v1610, %v2069
  %2071 = vmatmul.bf16.gmra.mxu0 %v1764
  %v2072 = vpop.f32.mrf.mxu0
  %v2073 = vadd.f32 %v1613, %v2072
  %v2074 = vpop.f32.mrf.mxu0
  %v2075 = vadd.f32 %v1615, %v2074
  %2076 = vmatmul.bf16.gmra.mxu0 %v1766
  %v2077 = vpop.f32.mrf.mxu0
  %v2078 = vadd.f32 %v1618, %v2077
  %v2079 = vpop.f32.mrf.mxu0
  %v2080 = vadd.f32 %v1620, %v2079
  %2081 = vmatmul.bf16.gmra.mxu0 %v1768
  %v2082 = vpop.f32.mrf.mxu0
  %v2083 = vadd.f32 %v1623, %v2082
  %v2084 = vpop.f32.mrf.mxu0
  %v2085 = vadd.f32 %v1625, %v2084
  %2086 = vmatmul.bf16.gmra.mxu0 %v1770
  %v2087 = vpop.f32.mrf.mxu0
  %v2088 = vadd.f32 %v1628, %v2087
  %v2089 = vpop.f32.mrf.mxu0
  %v2090 = vadd.f32 %v1630, %v2089
  %2091 = vmatmul.bf16.gmra.mxu0 %v1772
  %v2092 = vpop.f32.mrf.mxu0
  %v2093 = vadd.f32 %v1633, %v2092
  %v2094 = vpop.f32.mrf.mxu0
  %v2095 = vadd.f32 %v1635, %v2094
  %2096 = vmatmul.bf16.gmra.mxu0 %v1774
  %v2097 = vpop.f32.mrf.mxu0
  %v2098 = vadd.f32 %v1638, %v2097
  %v2099 = vpop.f32.mrf.mxu0
  %v2100 = vadd.f32 %v1640, %v2099
  %2101 = vmatmul.bf16.gmra.mxu0 %v1776
  %v2102 = vpop.f32.mrf.mxu0
  %v2103 = vadd.f32 %v1643, %v2102
  %v2104 = vpop.f32.mrf.mxu0
  %v2105 = vadd.f32 %v1645, %v2104
  %2106 = vmatmul.bf16.gmra.mxu0 %v1778
  %v2107 = vpop.f32.mrf.mxu0
  %v2108 = vadd.f32 %v1648, %v2107
  %v2109 = vpop.f32.mrf.mxu0
  %v2110 = vadd.f32 %v1650, %v2109
  %2111 = vdwg.mxu0
  %s2112 = scalar_lea.vmem %s3, 4
  %v2113 = vld [vmem:[%s2112] sm:$0x3]
  %vm2114 = vcmask 1046528
  %v2115 = vrot.slane %v527, 1
  %v2116 = vrot.slane %v528, 1
  %v2117 = vsel %vm2114, %v2115, %v2116
  %v2118 = vrot.slane %v529, 1
  %v2119 = vsel %vm2114, %v2116, %v2118
  %v2120 = vrot.slane %v530, 1
  %v2121 = vsel %vm2114, %v2118, %v2120
  %v2122 = vrot.slane %v531, 1
  %v2123 = vsel %vm2114, %v2120, %v2122
  %v2124 = vrot.slane %v532, 1
  %v2125 = vsel %vm2114, %v2122, %v2124
  %v2126 = vrot.slane %v533, 1
  %v2127 = vsel %vm2114, %v2124, %v2126
  %v2128 = vrot.slane %v534, 1
  %v2129 = vsel %vm2114, %v2126, %v2128
  %v2130 = vrot.slane %v535, 1
  %v2131 = vsel %vm2114, %v2128, %v2130
  %v2132 = vrot.slane %v536, 1
  %v2133 = vsel %vm2114, %v2130, %v2132
  %v2134 = vrot.slane %v537, 1
  %v2135 = vsel %vm2114, %v2132, %v2134
  %v2136 = vrot.slane %v538, 1
  %v2137 = vsel %vm2114, %v2134, %v2136
  %v2138 = vrot.slane %v539, 1
  %v2139 = vsel %vm2114, %v2136, %v2138
  %v2140 = vrot.slane %v540, 1
  %v2141 = vsel %vm2114, %v2138, %v2140
  %v2142 = vrot.slane %v541, 1
  %v2143 = vsel %vm2114, %v2140, %v2142
  %v2144 = vrot.slane %v542, 1
  %v2145 = vsel %vm2114, %v2142, %v2144
  %v2146 = vrot.slane %v543, 1
  %v2147 = vsel %vm2114, %v2144, %v2146
  %v2148 = vrot.slane %v544, 1
  %v2149 = vsel %vm2114, %v2146, %v2148
  %v2150 = vrot.slane %v545, 1
  %v2151 = vsel %vm2114, %v2148, %v2150
  %v2152 = vrot.slane %v546, 1
  %v2153 = vsel %vm2114, %v2150, %v2152
  %v2154 = vrot.slane %v547, 1
  %v2155 = vsel %vm2114, %v2152, %v2154
  %v2156 = vrot.slane %v548, 1
  %v2157 = vsel %vm2114, %v2154, %v2156
  %v2158 = vrot.slane %v549, 1
  %v2159 = vsel %vm2114, %v2156, %v2158
  %v2160 = vrot.slane %v550, 1
  %v2161 = vsel %vm2114, %v2158, %v2160
  %v2162 = vrot.slane %v551, 1
  %v2163 = vsel %vm2114, %v2160, %v2162
  %v2164 = vrot.slane %v552, 1
  %v2165 = vsel %vm2114, %v2162, %v2164
  %v2166 = vrot.slane %v553, 1
  %v2167 = vsel %vm2114, %v2164, %v2166
  %v2168 = vrot.slane %v554, 1
  %v2169 = vsel %vm2114, %v2166, %v2168
  %v2170 = vrot.slane %v555, 1
  %v2171 = vsel %vm2114, %v2168, %v2170
  %v2172 = vrot.slane %v556, 1
  %v2173 = vsel %vm2114, %v2170, %v2172
  %v2174 = vrot.slane %v557, 1
  %v2175 = vsel %vm2114, %v2172, %v2174
  %v2176 = vrot.slane %v558, 1
  %v2177 = vsel %vm2114, %v2174, %v2176
  %v2178 = vrot.slane %v559, 1
  %v2179 = vsel %vm2114, %v2176, %v2178
  %v2180 = vrot.slane %v560, 1
  %v2181 = vsel %vm2114, %v2178, %v2180
  %v2182 = vrot.slane %v561, 1
  %v2183 = vsel %vm2114, %v2180, %v2182
  %v2184 = vrot.slane %v562, 1
  %v2185 = vsel %vm2114, %v2182, %v2184
  %v2186 = vrot.slane %v563, 1
  %v2187 = vsel %vm2114, %v2184, %v2186
  %v2188 = vrot.slane %v564, 1
  %v2189 = vsel %vm2114, %v2186, %v2188
  %v2190 = vrot.slane %v565, 1
  %v2191 = vsel %vm2114, %v2188, %v2190
  %v2192 = vrot.slane %v566, 1
  %v2193 = vsel %vm2114, %v2190, %v2192
  %v2194 = vrot.slane %v567, 1
  %v2195 = vsel %vm2114, %v2192, %v2194
  %v2196 = vrot.slane %v568, 1
  %v2197 = vsel %vm2114, %v2194, %v2196
  %v2198 = vrot.slane %v569, 1
  %v2199 = vsel %vm2114, %v2196, %v2198
  %v2200 = vrot.slane %v570, 1
  %v2201 = vsel %vm2114, %v2198, %v2200
  %v2202 = vrot.slane %v571, 1
  %v2203 = vsel %vm2114, %v2200, %v2202
  %v2204 = vrot.slane %v572, 1
  %v2205 = vsel %vm2114, %v2202, %v2204
  %v2206 = vrot.slane %v573, 1
  %v2207 = vsel %vm2114, %v2204, %v2206
  %v2208 = vrot.slane %v574, 1
  %v2209 = vsel %vm2114, %v2206, %v2208
  %v2210 = vrot.slane %v575, 1
  %v2211 = vsel %vm2114, %v2208, %v2210
  %v2212 = vrot.slane %v576, 1
  %v2213 = vsel %vm2114, %v2210, %v2212
  %v2214 = vrot.slane %v577, 1
  %v2215 = vsel %vm2114, %v2212, %v2214
  %v2216 = vrot.slane %v578, 1
  %v2217 = vsel %vm2114, %v2214, %v2216
  %v2218 = vrot.slane %v579, 1
  %v2219 = vsel %vm2114, %v2216, %v2218
  %v2220 = vrot.slane %v580, 1
  %v2221 = vsel %vm2114, %v2218, %v2220
  %v2222 = vrot.slane %v581, 1
  %v2223 = vsel %vm2114, %v2220, %v2222
  %v2224 = vrot.slane %v582, 1
  %v2225 = vsel %vm2114, %v2222, %v2224
  %v2226 = vrot.slane %v583, 1
  %v2227 = vsel %vm2114, %v2224, %v2226
  %v2228 = vrot.slane %v584, 1
  %v2229 = vsel %vm2114, %v2226, %v2228
  %v2230 = vrot.slane %v585, 1
  %v2231 = vsel %vm2114, %v2228, %v2230
  %v2232 = vrot.slane %v586, 1
  %v2233 = vsel %vm2114, %v2230, %v2232
  %v2234 = vrot.slane %v587, 1
  %v2235 = vsel %vm2114, %v2232, %v2234
  %v2236 = vrot.slane %v588, 1
  %v2237 = vsel %vm2114, %v2234, %v2236
  %v2238 = vrot.slane %v589, 1
  %v2239 = vsel %vm2114, %v2236, %v2238
  %v2240 = vrot.slane %v590, 1
  %v2241 = vsel %vm2114, %v2238, %v2240
  %v2242 = vrot.slane %v603, 1
  %v2243 = vsel %vm2114, %v2240, %v2242
  %v2245 = vsel %vm1126, %v2117, 0
  %v2248 = vsel %vm1126, %v2119, 0
  %v2251 = vsel %vm1126, %v2121, 0
  %v2254 = vsel %vm1126, %v2123, 0
  %v2257 = vsel %vm1126, %v2125, 0
  %v2260 = vsel %vm1126, %v2127, 0
  %v2263 = vsel %vm1126, %v2129, 0
  %v2266 = vsel %vm1126, %v2131, 0
  %v2269 = vsel %vm1126, %v2133, 0
  %v2272 = vsel %vm1126, %v2135, 0
  %v2275 = vsel %vm1126, %v2137, 0
  %v2278 = vsel %vm1126, %v2139, 0
  %v2281 = vsel %vm1126, %v2141, 0
  %v2284 = vsel %vm1126, %v2143, 0
  %v2287 = vsel %vm1126, %v2145, 0
  %v2290 = vsel %vm1126, %v2147, 0
  %v2293 = vsel %vm1126, %v2149, 0
  %v2296 = vsel %vm1126, %v2151, 0
  %v2299 = vsel %vm1126, %v2153, 0
  %v2302 = vsel %vm1126, %v2155, 0
  %v2305 = vsel %vm1126, %v2157, 0
  %v2308 = vsel %vm1126, %v2159, 0
  %v2311 = vsel %vm1126, %v2161, 0
  %v2314 = vsel %vm1126, %v2163, 0
  %v2317 = vsel %vm1126, %v2165, 0
  %v2320 = vsel %vm1126, %v2167, 0
  %v2323 = vsel %vm1126, %v2169, 0
  %v2326 = vsel %vm1126, %v2171, 0
  %v2329 = vsel %vm1126, %v2173, 0
  %v2332 = vsel %vm1126, %v2175, 0
  %v2335 = vsel %vm1126, %v2177, 0
  %v2338 = vsel %vm1126, %v2179, 0
  %v2341 = vsel %vm1126, %v2181, 0
  %v2344 = vsel %vm1126, %v2183, 0
  %v2347 = vsel %vm1126, %v2185, 0
  %v2350 = vsel %vm1126, %v2187, 0
  %v2353 = vsel %vm1126, %v2189, 0
  %v2356 = vsel %vm1126, %v2191, 0
  %v2359 = vsel %vm1126, %v2193, 0
  %v2362 = vsel %vm1126, %v2195, 0
  %v2365 = vsel %vm1126, %v2197, 0
  %v2368 = vsel %vm1126, %v2199, 0
  %v2371 = vsel %vm1126, %v2201, 0
  %v2374 = vsel %vm1126, %v2203, 0
  %v2377 = vsel %vm1126, %v2205, 0
  %v2380 = vsel %vm1126, %v2207, 0
  %v2383 = vsel %vm1126, %v2209, 0
  %v2386 = vsel %vm1126, %v2211, 0
  %v2389 = vsel %vm1126, %v2213, 0
  %v2392 = vsel %vm1126, %v2215, 0
  %v2395 = vsel %vm1126, %v2217, 0
  %v2398 = vsel %vm1126, %v2219, 0
  %v2401 = vsel %vm1126, %v2221, 0
  %v2404 = vsel %vm1126, %v2223, 0
  %v2407 = vsel %vm1126, %v2225, 0
  %v2410 = vsel %vm1126, %v2227, 0
  %v2413 = vsel %vm1126, %v2229, 0
  %v2416 = vsel %vm1126, %v2231, 0
  %v2419 = vsel %vm1126, %v2233, 0
  %v2422 = vsel %vm1126, %v2235, 0
  %v2425 = vsel %vm1126, %v2237, 0
  %v2428 = vsel %vm1126, %v2239, 0
  %v2431 = vsel %vm1126, %v2241, 0
  %v2434 = vsel %vm1126, %v2243, 0
  %v2437 = vsel %vm1319, %v2113, 0
  %2439 = vmatpush.bf16.msra.mxu0 0
  %2440 = vmatpush.bf16.msra.mxu0 0
  %2441 = vmatpush.bf16.msra.mxu0 0
  %2442 = vmatpush.bf16.msra.mxu0 0
  %2443 = vmatpush.bf16.msra.mxu0 0
  %2444 = vmatpush.bf16.msra.mxu0 0
  %2445 = vmatpush.bf16.msra.mxu0 0
  %2446 = vmatpush.bf16.msra.mxu0 %v2437
  %2447 = vmatmul.bf16.gmra.mxu0 %v2245
  %v2448 = vpop.f32.mrf.mxu0
  %v2449 = vadd.f32 0.0, %v2448
  %v2450 = vpop.f32.mrf.mxu0
  %v2451 = vadd.f32 0.0, %v2450
  %2452 = vmatmul.bf16.gmra.mxu0 %v2248
  %v2453 = vpop.f32.mrf.mxu0
  %v2454 = vadd.f32 0.0, %v2453
  %v2455 = vpop.f32.mrf.mxu0
  %v2456 = vadd.f32 0.0, %v2455
  %2457 = vmatmul.bf16.gmra.mxu0 %v2251
  %v2458 = vpop.f32.mrf.mxu0
  %v2459 = vadd.f32 0.0, %v2458
  %v2460 = vpop.f32.mrf.mxu0
  %v2461 = vadd.f32 0.0, %v2460
  %2462 = vmatmul.bf16.gmra.mxu0 %v2254
  %v2463 = vpop.f32.mrf.mxu0
  %v2464 = vadd.f32 0.0, %v2463
  %v2465 = vpop.f32.mrf.mxu0
  %v2466 = vadd.f32 0.0, %v2465
  %2467 = vmatmul.bf16.gmra.mxu0 %v2257
  %v2468 = vpop.f32.mrf.mxu0
  %v2469 = vadd.f32 0.0, %v2468
  %v2470 = vpop.f32.mrf.mxu0
  %v2471 = vadd.f32 0.0, %v2470
  %2472 = vmatmul.bf16.gmra.mxu0 %v2260
  %v2473 = vpop.f32.mrf.mxu0
  %v2474 = vadd.f32 0.0, %v2473
  %v2475 = vpop.f32.mrf.mxu0
  %v2476 = vadd.f32 0.0, %v2475
  %2477 = vmatmul.bf16.gmra.mxu0 %v2263
  %v2478 = vpop.f32.mrf.mxu0
  %v2479 = vadd.f32 0.0, %v2478
  %v2480 = vpop.f32.mrf.mxu0
  %v2481 = vadd.f32 0.0, %v2480
  %2482 = vmatmul.bf16.gmra.mxu0 %v2266
  %v2483 = vpop.f32.mrf.mxu0
  %v2484 = vadd.f32 0.0, %v2483
  %v2485 = vpop.f32.mrf.mxu0
  %v2486 = vadd.f32 0.0, %v2485
  %2487 = vmatmul.bf16.gmra.mxu0 %v2269
  %v2488 = vpop.f32.mrf.mxu0
  %v2489 = vadd.f32 0.0, %v2488
  %v2490 = vpop.f32.mrf.mxu0
  %v2491 = vadd.f32 0.0, %v2490
  %2492 = vmatmul.bf16.gmra.mxu0 %v2272
  %v2493 = vpop.f32.mrf.mxu0
  %v2494 = vadd.f32 0.0, %v2493
  %v2495 = vpop.f32.mrf.mxu0
  %v2496 = vadd.f32 0.0, %v2495
  %2497 = vmatmul.bf16.gmra.mxu0 %v2275
  %v2498 = vpop.f32.mrf.mxu0
  %v2499 = vadd.f32 0.0, %v2498
  %v2500 = vpop.f32.mrf.mxu0
  %v2501 = vadd.f32 0.0, %v2500
  %2502 = vmatmul.bf16.gmra.mxu0 %v2278
  %v2503 = vpop.f32.mrf.mxu0
  %v2504 = vadd.f32 0.0, %v2503
  %v2505 = vpop.f32.mrf.mxu0
  %v2506 = vadd.f32 0.0, %v2505
  %2507 = vmatmul.bf16.gmra.mxu0 %v2281
  %v2508 = vpop.f32.mrf.mxu0
  %v2509 = vadd.f32 0.0, %v2508
  %v2510 = vpop.f32.mrf.mxu0
  %v2511 = vadd.f32 0.0, %v2510
  %2512 = vmatmul.bf16.gmra.mxu0 %v2284
  %v2513 = vpop.f32.mrf.mxu0
  %v2514 = vadd.f32 0.0, %v2513
  %v2515 = vpop.f32.mrf.mxu0
  %v2516 = vadd.f32 0.0, %v2515
  %2517 = vmatmul.bf16.gmra.mxu0 %v2287
  %v2518 = vpop.f32.mrf.mxu0
  %v2519 = vadd.f32 0.0, %v2518
  %v2520 = vpop.f32.mrf.mxu0
  %v2521 = vadd.f32 0.0, %v2520
  %2522 = vmatmul.bf16.gmra.mxu0 %v2290
  %v2523 = vpop.f32.mrf.mxu0
  %v2524 = vadd.f32 0.0, %v2523
  %v2525 = vpop.f32.mrf.mxu0
  %v2526 = vadd.f32 0.0, %v2525
  %2527 = vmatmul.bf16.gmra.mxu0 %v2293
  %v2528 = vpop.f32.mrf.mxu0
  %v2529 = vadd.f32 0.0, %v2528
  %v2530 = vpop.f32.mrf.mxu0
  %v2531 = vadd.f32 0.0, %v2530
  %2532 = vmatmul.bf16.gmra.mxu0 %v2296
  %v2533 = vpop.f32.mrf.mxu0
  %v2534 = vadd.f32 0.0, %v2533
  %v2535 = vpop.f32.mrf.mxu0
  %v2536 = vadd.f32 0.0, %v2535
  %2537 = vmatmul.bf16.gmra.mxu0 %v2299
  %v2538 = vpop.f32.mrf.mxu0
  %v2539 = vadd.f32 0.0, %v2538
  %v2540 = vpop.f32.mrf.mxu0
  %v2541 = vadd.f32 0.0, %v2540
  %2542 = vmatmul.bf16.gmra.mxu0 %v2302
  %v2543 = vpop.f32.mrf.mxu0
  %v2544 = vadd.f32 0.0, %v2543
  %v2545 = vpop.f32.mrf.mxu0
  %v2546 = vadd.f32 0.0, %v2545
  %2547 = vmatmul.bf16.gmra.mxu0 %v2305
  %v2548 = vpop.f32.mrf.mxu0
  %v2549 = vadd.f32 0.0, %v2548
  %v2550 = vpop.f32.mrf.mxu0
  %v2551 = vadd.f32 0.0, %v2550
  %2552 = vmatmul.bf16.gmra.mxu0 %v2308
  %v2553 = vpop.f32.mrf.mxu0
  %v2554 = vadd.f32 0.0, %v2553
  %v2555 = vpop.f32.mrf.mxu0
  %v2556 = vadd.f32 0.0, %v2555
  %2557 = vmatmul.bf16.gmra.mxu0 %v2311
  %v2558 = vpop.f32.mrf.mxu0
  %v2559 = vadd.f32 0.0, %v2558
  %v2560 = vpop.f32.mrf.mxu0
  %v2561 = vadd.f32 0.0, %v2560
  %2562 = vmatmul.bf16.gmra.mxu0 %v2314
  %v2563 = vpop.f32.mrf.mxu0
  %v2564 = vadd.f32 0.0, %v2563
  %v2565 = vpop.f32.mrf.mxu0
  %v2566 = vadd.f32 0.0, %v2565
  %2567 = vmatmul.bf16.gmra.mxu0 %v2317
  %v2568 = vpop.f32.mrf.mxu0
  %v2569 = vadd.f32 0.0, %v2568
  %v2570 = vpop.f32.mrf.mxu0
  %v2571 = vadd.f32 0.0, %v2570
  %2572 = vmatmul.bf16.gmra.mxu0 %v2320
  %v2573 = vpop.f32.mrf.mxu0
  %v2574 = vadd.f32 0.0, %v2573
  %v2575 = vpop.f32.mrf.mxu0
  %v2576 = vadd.f32 0.0, %v2575
  %2577 = vmatmul.bf16.gmra.mxu0 %v2323
  %v2578 = vpop.f32.mrf.mxu0
  %v2579 = vadd.f32 0.0, %v2578
  %v2580 = vpop.f32.mrf.mxu0
  %v2581 = vadd.f32 0.0, %v2580
  %2582 = vmatmul.bf16.gmra.mxu0 %v2326
  %v2583 = vpop.f32.mrf.mxu0
  %v2584 = vadd.f32 0.0, %v2583
  %v2585 = vpop.f32.mrf.mxu0
  %v2586 = vadd.f32 0.0, %v2585
  %2587 = vmatmul.bf16.gmra.mxu0 %v2329
  %v2588 = vpop.f32.mrf.mxu0
  %v2589 = vadd.f32 0.0, %v2588
  %v2590 = vpop.f32.mrf.mxu0
  %v2591 = vadd.f32 0.0, %v2590
  %2592 = vmatmul.bf16.gmra.mxu0 %v2332
  %v2593 = vpop.f32.mrf.mxu0
  %v2594 = vadd.f32 0.0, %v2593
  %v2595 = vpop.f32.mrf.mxu0
  %v2596 = vadd.f32 0.0, %v2595
  %2597 = vmatmul.bf16.gmra.mxu0 %v2335
  %v2598 = vpop.f32.mrf.mxu0
  %v2599 = vadd.f32 0.0, %v2598
  %v2600 = vpop.f32.mrf.mxu0
  %v2601 = vadd.f32 0.0, %v2600
  %2602 = vmatmul.bf16.gmra.mxu0 %v2338
  %v2603 = vpop.f32.mrf.mxu0
  %v2604 = vadd.f32 0.0, %v2603
  %v2605 = vpop.f32.mrf.mxu0
  %v2606 = vadd.f32 0.0, %v2605
  %2607 = vmatmul.bf16.gmra.mxu0 %v2341
  %v2608 = vpop.f32.mrf.mxu0
  %v2609 = vadd.f32 0.0, %v2608
  %v2610 = vpop.f32.mrf.mxu0
  %v2611 = vadd.f32 0.0, %v2610
  %2612 = vmatmul.bf16.gmra.mxu0 %v2344
  %v2613 = vpop.f32.mrf.mxu0
  %v2614 = vadd.f32 0.0, %v2613
  %v2615 = vpop.f32.mrf.mxu0
  %v2616 = vadd.f32 0.0, %v2615
  %2617 = vmatmul.bf16.gmra.mxu0 %v2347
  %v2618 = vpop.f32.mrf.mxu0
  %v2619 = vadd.f32 0.0, %v2618
  %v2620 = vpop.f32.mrf.mxu0
  %v2621 = vadd.f32 0.0, %v2620
  %2622 = vmatmul.bf16.gmra.mxu0 %v2350
  %v2623 = vpop.f32.mrf.mxu0
  %v2624 = vadd.f32 0.0, %v2623
  %v2625 = vpop.f32.mrf.mxu0
  %v2626 = vadd.f32 0.0, %v2625
  %2627 = vmatmul.bf16.gmra.mxu0 %v2353
  %v2628 = vpop.f32.mrf.mxu0
  %v2629 = vadd.f32 0.0, %v2628
  %v2630 = vpop.f32.mrf.mxu0
  %v2631 = vadd.f32 0.0, %v2630
  %2632 = vmatmul.bf16.gmra.mxu0 %v2356
  %v2633 = vpop.f32.mrf.mxu0
  %v2634 = vadd.f32 0.0, %v2633
  %v2635 = vpop.f32.mrf.mxu0
  %v2636 = vadd.f32 0.0, %v2635
  %2637 = vmatmul.bf16.gmra.mxu0 %v2359
  %v2638 = vpop.f32.mrf.mxu0
  %v2639 = vadd.f32 0.0, %v2638
  %v2640 = vpop.f32.mrf.mxu0
  %v2641 = vadd.f32 0.0, %v2640
  %2642 = vmatmul.bf16.gmra.mxu0 %v2362
  %v2643 = vpop.f32.mrf.mxu0
  %v2644 = vadd.f32 0.0, %v2643
  %v2645 = vpop.f32.mrf.mxu0
  %v2646 = vadd.f32 0.0, %v2645
  %2647 = vmatmul.bf16.gmra.mxu0 %v2365
  %v2648 = vpop.f32.mrf.mxu0
  %v2649 = vadd.f32 0.0, %v2648
  %v2650 = vpop.f32.mrf.mxu0
  %v2651 = vadd.f32 0.0, %v2650
  %2652 = vmatmul.bf16.gmra.mxu0 %v2368
  %v2653 = vpop.f32.mrf.mxu0
  %v2654 = vadd.f32 0.0, %v2653
  %v2655 = vpop.f32.mrf.mxu0
  %v2656 = vadd.f32 0.0, %v2655
  %2657 = vmatmul.bf16.gmra.mxu0 %v2371
  %v2658 = vpop.f32.mrf.mxu0
  %v2659 = vadd.f32 0.0, %v2658
  %v2660 = vpop.f32.mrf.mxu0
  %v2661 = vadd.f32 0.0, %v2660
  %2662 = vmatmul.bf16.gmra.mxu0 %v2374
  %v2663 = vpop.f32.mrf.mxu0
  %v2664 = vadd.f32 0.0, %v2663
  %v2665 = vpop.f32.mrf.mxu0
  %v2666 = vadd.f32 0.0, %v2665
  %2667 = vmatmul.bf16.gmra.mxu0 %v2377
  %v2668 = vpop.f32.mrf.mxu0
  %v2669 = vadd.f32 0.0, %v2668
  %v2670 = vpop.f32.mrf.mxu0
  %v2671 = vadd.f32 0.0, %v2670
  %2672 = vmatmul.bf16.gmra.mxu0 %v2380
  %v2673 = vpop.f32.mrf.mxu0
  %v2674 = vadd.f32 0.0, %v2673
  %v2675 = vpop.f32.mrf.mxu0
  %v2676 = vadd.f32 0.0, %v2675
  %2677 = vmatmul.bf16.gmra.mxu0 %v2383
  %v2678 = vpop.f32.mrf.mxu0
  %v2679 = vadd.f32 0.0, %v2678
  %v2680 = vpop.f32.mrf.mxu0
  %v2681 = vadd.f32 0.0, %v2680
  %2682 = vmatmul.bf16.gmra.mxu0 %v2386
  %v2683 = vpop.f32.mrf.mxu0
  %v2684 = vadd.f32 0.0, %v2683
  %v2685 = vpop.f32.mrf.mxu0
  %v2686 = vadd.f32 0.0, %v2685
  %2687 = vmatmul.bf16.gmra.mxu0 %v2389
  %v2688 = vpop.f32.mrf.mxu0
  %v2689 = vadd.f32 0.0, %v2688
  %v2690 = vpop.f32.mrf.mxu0
  %v2691 = vadd.f32 0.0, %v2690
  %2692 = vmatmul.bf16.gmra.mxu0 %v2392
  %v2693 = vpop.f32.mrf.mxu0
  %v2694 = vadd.f32 0.0, %v2693
  %v2695 = vpop.f32.mrf.mxu0
  %v2696 = vadd.f32 0.0, %v2695
  %2697 = vmatmul.bf16.gmra.mxu0 %v2395
  %v2698 = vpop.f32.mrf.mxu0
  %v2699 = vadd.f32 0.0, %v2698
  %v2700 = vpop.f32.mrf.mxu0
  %v2701 = vadd.f32 0.0, %v2700
  %2702 = vmatmul.bf16.gmra.mxu0 %v2398
  %v2703 = vpop.f32.mrf.mxu0
  %v2704 = vadd.f32 0.0, %v2703
  %v2705 = vpop.f32.mrf.mxu0
  %v2706 = vadd.f32 0.0, %v2705
  %2707 = vmatmul.bf16.gmra.mxu0 %v2401
  %v2708 = vpop.f32.mrf.mxu0
  %v2709 = vadd.f32 0.0, %v2708
  %v2710 = vpop.f32.mrf.mxu0
  %v2711 = vadd.f32 0.0, %v2710
  %2712 = vmatmul.bf16.gmra.mxu0 %v2404
  %v2713 = vpop.f32.mrf.mxu0
  %v2714 = vadd.f32 0.0, %v2713
  %v2715 = vpop.f32.mrf.mxu0
  %v2716 = vadd.f32 0.0, %v2715
  %2717 = vmatmul.bf16.gmra.mxu0 %v2407
  %v2718 = vpop.f32.mrf.mxu0
  %v2719 = vadd.f32 0.0, %v2718
  %v2720 = vpop.f32.mrf.mxu0
  %v2721 = vadd.f32 0.0, %v2720
  %2722 = vmatmul.bf16.gmra.mxu0 %v2410
  %v2723 = vpop.f32.mrf.mxu0
  %v2724 = vadd.f32 0.0, %v2723
  %v2725 = vpop.f32.mrf.mxu0
  %v2726 = vadd.f32 0.0, %v2725
  %2727 = vmatmul.bf16.gmra.mxu0 %v2413
  %v2728 = vpop.f32.mrf.mxu0
  %v2729 = vadd.f32 0.0, %v2728
  %v2730 = vpop.f32.mrf.mxu0
  %v2731 = vadd.f32 0.0, %v2730
  %2732 = vmatmul.bf16.gmra.mxu0 %v2416
  %v2733 = vpop.f32.mrf.mxu0
  %v2734 = vadd.f32 0.0, %v2733
  %v2735 = vpop.f32.mrf.mxu0
  %v2736 = vadd.f32 0.0, %v2735
  %2737 = vmatmul.bf16.gmra.mxu0 %v2419
  %v2738 = vpop.f32.mrf.mxu0
  %v2739 = vadd.f32 0.0, %v2738
  %v2740 = vpop.f32.mrf.mxu0
  %v2741 = vadd.f32 0.0, %v2740
  %2742 = vmatmul.bf16.gmra.mxu0 %v2422
  %v2743 = vpop.f32.mrf.mxu0
  %v2744 = vadd.f32 0.0, %v2743
  %v2745 = vpop.f32.mrf.mxu0
  %v2746 = vadd.f32 0.0, %v2745
  %2747 = vmatmul.bf16.gmra.mxu0 %v2425
  %v2748 = vpop.f32.mrf.mxu0
  %v2749 = vadd.f32 0.0, %v2748
  %v2750 = vpop.f32.mrf.mxu0
  %v2751 = vadd.f32 0.0, %v2750
  %2752 = vmatmul.bf16.gmra.mxu0 %v2428
  %v2753 = vpop.f32.mrf.mxu0
  %v2754 = vadd.f32 0.0, %v2753
  %v2755 = vpop.f32.mrf.mxu0
  %v2756 = vadd.f32 0.0, %v2755
  %2757 = vmatmul.bf16.gmra.mxu0 %v2431
  %v2758 = vpop.f32.mrf.mxu0
  %v2759 = vadd.f32 0.0, %v2758
  %v2760 = vpop.f32.mrf.mxu0
  %v2761 = vadd.f32 0.0, %v2760
  %2762 = vmatmul.bf16.gmra.mxu0 %v2434
  %v2763 = vpop.f32.mrf.mxu0
  %v2764 = vadd.f32 0.0, %v2763
  %v2765 = vpop.f32.mrf.mxu0
  %v2766 = vadd.f32 0.0, %v2765
  %2767 = vdwg.mxu0
  %v2768 = vadd.f32 %v1793, %v2449
  %v2769 = vadd.f32 %v1795, %v2451
  %v2770 = vadd.f32 %v1798, %v2454
  %v2771 = vadd.f32 %v1800, %v2456
  %v2772 = vadd.f32 %v1803, %v2459
  %v2773 = vadd.f32 %v1805, %v2461
  %v2774 = vadd.f32 %v1808, %v2464
  %v2775 = vadd.f32 %v1810, %v2466
  %v2776 = vadd.f32 %v1813, %v2469
  %v2777 = vadd.f32 %v1815, %v2471
  %v2778 = vadd.f32 %v1818, %v2474
  %v2779 = vadd.f32 %v1820, %v2476
  %v2780 = vadd.f32 %v1823, %v2479
  %v2781 = vadd.f32 %v1825, %v2481
  %v2782 = vadd.f32 %v1828, %v2484
  %v2783 = vadd.f32 %v1830, %v2486
  %v2784 = vadd.f32 %v1833, %v2489
  %v2785 = vadd.f32 %v1835, %v2491
  %v2786 = vadd.f32 %v1838, %v2494
  %v2787 = vadd.f32 %v1840, %v2496
  %v2788 = vadd.f32 %v1843, %v2499
  %v2789 = vadd.f32 %v1845, %v2501
  %v2790 = vadd.f32 %v1848, %v2504
  %v2791 = vadd.f32 %v1850, %v2506
  %v2792 = vadd.f32 %v1853, %v2509
  %v2793 = vadd.f32 %v1855, %v2511
  %v2794 = vadd.f32 %v1858, %v2514
  %v2795 = vadd.f32 %v1860, %v2516
  %v2796 = vadd.f32 %v1863, %v2519
  %v2797 = vadd.f32 %v1865, %v2521
  %v2798 = vadd.f32 %v1868, %v2524
  %v2799 = vadd.f32 %v1870, %v2526
  %v2800 = vadd.f32 %v1873, %v2529
  %v2801 = vadd.f32 %v1875, %v2531
  %v2802 = vadd.f32 %v1878, %v2534
  %v2803 = vadd.f32 %v1880, %v2536
  %v2804 = vadd.f32 %v1883, %v2539
  %v2805 = vadd.f32 %v1885, %v2541
  %v2806 = vadd.f32 %v1888, %v2544
  %v2807 = vadd.f32 %v1890, %v2546
  %v2808 = vadd.f32 %v1893, %v2549
  %v2809 = vadd.f32 %v1895, %v2551
  %v2810 = vadd.f32 %v1898, %v2554
  %v2811 = vadd.f32 %v1900, %v2556
  %v2812 = vadd.f32 %v1903, %v2559
  %v2813 = vadd.f32 %v1905, %v2561
  %v2814 = vadd.f32 %v1908, %v2564
  %v2815 = vadd.f32 %v1910, %v2566
  %v2816 = vadd.f32 %v1913, %v2569
  %v2817 = vadd.f32 %v1915, %v2571
  %v2818 = vadd.f32 %v1918, %v2574
  %v2819 = vadd.f32 %v1920, %v2576
  %v2820 = vadd.f32 %v1923, %v2579
  %v2821 = vadd.f32 %v1925, %v2581
  %v2822 = vadd.f32 %v1928, %v2584
  %v2823 = vadd.f32 %v1930, %v2586
  %v2824 = vadd.f32 %v1933, %v2589
  %v2825 = vadd.f32 %v1935, %v2591
  %v2826 = vadd.f32 %v1938, %v2594
  %v2827 = vadd.f32 %v1940, %v2596
  %v2828 = vadd.f32 %v1943, %v2599
  %v2829 = vadd.f32 %v1945, %v2601
  %v2830 = vadd.f32 %v1948, %v2604
  %v2831 = vadd.f32 %v1950, %v2606
  %v2832 = vadd.f32 %v1953, %v2609
  %v2833 = vadd.f32 %v1955, %v2611
  %v2834 = vadd.f32 %v1958, %v2614
  %v2835 = vadd.f32 %v1960, %v2616
  %v2836 = vadd.f32 %v1963, %v2619
  %v2837 = vadd.f32 %v1965, %v2621
  %v2838 = vadd.f32 %v1968, %v2624
  %v2839 = vadd.f32 %v1970, %v2626
  %v2840 = vadd.f32 %v1973, %v2629
  %v2841 = vadd.f32 %v1975, %v2631
  %v2842 = vadd.f32 %v1978, %v2634
  %v2843 = vadd.f32 %v1980, %v2636
  %v2844 = vadd.f32 %v1983, %v2639
  %v2845 = vadd.f32 %v1985, %v2641
  %v2846 = vadd.f32 %v1988, %v2644
  %v2847 = vadd.f32 %v1990, %v2646
  %v2848 = vadd.f32 %v1993, %v2649
  %v2849 = vadd.f32 %v1995, %v2651
  %v2850 = vadd.f32 %v1998, %v2654
  %v2851 = vadd.f32 %v2000, %v2656
  %v2852 = vadd.f32 %v2003, %v2659
  %v2853 = vadd.f32 %v2005, %v2661
  %v2854 = vadd.f32 %v2008, %v2664
  %v2855 = vadd.f32 %v2010, %v2666
  %v2856 = vadd.f32 %v2013, %v2669
  %v2857 = vadd.f32 %v2015, %v2671
  %v2858 = vadd.f32 %v2018, %v2674
  %v2859 = vadd.f32 %v2020, %v2676
  %v2860 = vadd.f32 %v2023, %v2679
  %v2861 = vadd.f32 %v2025, %v2681
  %v2862 = vadd.f32 %v2028, %v2684
  %v2863 = vadd.f32 %v2030, %v2686
  %v2864 = vadd.f32 %v2033, %v2689
  %v2865 = vadd.f32 %v2035, %v2691
  %v2866 = vadd.f32 %v2038, %v2694
  %v2867 = vadd.f32 %v2040, %v2696
  %v2868 = vadd.f32 %v2043, %v2699
  %v2869 = vadd.f32 %v2045, %v2701
  %v2870 = vadd.f32 %v2048, %v2704
  %v2871 = vadd.f32 %v2050, %v2706
  %v2872 = vadd.f32 %v2053, %v2709
  %v2873 = vadd.f32 %v2055, %v2711
  %v2874 = vadd.f32 %v2058, %v2714
  %v2875 = vadd.f32 %v2060, %v2716
  %v2876 = vadd.f32 %v2063, %v2719
  %v2877 = vadd.f32 %v2065, %v2721
  %v2878 = vadd.f32 %v2068, %v2724
  %v2879 = vadd.f32 %v2070, %v2726
  %v2880 = vadd.f32 %v2073, %v2729
  %v2881 = vadd.f32 %v2075, %v2731
  %v2882 = vadd.f32 %v2078, %v2734
  %v2883 = vadd.f32 %v2080, %v2736
  %v2884 = vadd.f32 %v2083, %v2739
  %v2885 = vadd.f32 %v2085, %v2741
  %v2886 = vadd.f32 %v2088, %v2744
  %v2887 = vadd.f32 %v2090, %v2746
  %v2888 = vadd.f32 %v2093, %v2749
  %v2889 = vadd.f32 %v2095, %v2751
  %v2890 = vadd.f32 %v2098, %v2754
  %v2891 = vadd.f32 %v2100, %v2756
  %v2892 = vadd.f32 %v2103, %v2759
  %v2893 = vadd.f32 %v2105, %v2761
  %v2894 = vadd.f32 %v2108, %v2764
  %v2895 = vadd.f32 %v2110, %v2766
  %s2896 = scalar_lea.vmem %s3, 6
  %v2897 = vld [vmem:[%s2896] sm:$0x3]
  %v2898 = vrot.slane %v604, 1
  %v2899 = vsel %vm2114, %v2242, %v2898
  %v2901 = vsel %vm1126, %v2899, 0
  %v2904 = vsel %vm1319, %v2897, 0
  %2906 = vmatpush.bf16.msra.mxu0 0
  %2907 = vmatpush.bf16.msra.mxu0 0
  %2908 = vmatpush.bf16.msra.mxu0 0
  %2909 = vmatpush.bf16.msra.mxu0 0
  %2910 = vmatpush.bf16.msra.mxu0 0
  %2911 = vmatpush.bf16.msra.mxu0 0
  %2912 = vmatpush.bf16.msra.mxu0 0
  %2913 = vmatpush.bf16.msra.mxu0 %v2904
  %2914 = vmatmul.bf16.gmra.mxu0 %v2248
  %v2915 = vpop.f32.mrf.mxu0
  %v2916 = vadd.f32 0.0, %v2915
  %v2917 = vpop.f32.mrf.mxu0
  %v2918 = vadd.f32 0.0, %v2917
  %2919 = vmatmul.bf16.gmra.mxu0 %v2251
  %v2920 = vpop.f32.mrf.mxu0
  %v2921 = vadd.f32 0.0, %v2920
  %v2922 = vpop.f32.mrf.mxu0
  %v2923 = vadd.f32 0.0, %v2922
  %2924 = vmatmul.bf16.gmra.mxu0 %v2254
  %v2925 = vpop.f32.mrf.mxu0
  %v2926 = vadd.f32 0.0, %v2925
  %v2927 = vpop.f32.mrf.mxu0
  %v2928 = vadd.f32 0.0, %v2927
  %2929 = vmatmul.bf16.gmra.mxu0 %v2257
  %v2930 = vpop.f32.mrf.mxu0
  %v2931 = vadd.f32 0.0, %v2930
  %v2932 = vpop.f32.mrf.mxu0
  %v2933 = vadd.f32 0.0, %v2932
  %2934 = vmatmul.bf16.gmra.mxu0 %v2260
  %v2935 = vpop.f32.mrf.mxu0
  %v2936 = vadd.f32 0.0, %v2935
  %v2937 = vpop.f32.mrf.mxu0
  %v2938 = vadd.f32 0.0, %v2937
  %2939 = vmatmul.bf16.gmra.mxu0 %v2263
  %v2940 = vpop.f32.mrf.mxu0
  %v2941 = vadd.f32 0.0, %v2940
  %v2942 = vpop.f32.mrf.mxu0
  %v2943 = vadd.f32 0.0, %v2942
  %2944 = vmatmul.bf16.gmra.mxu0 %v2266
  %v2945 = vpop.f32.mrf.mxu0
  %v2946 = vadd.f32 0.0, %v2945
  %v2947 = vpop.f32.mrf.mxu0
  %v2948 = vadd.f32 0.0, %v2947
  %2949 = vmatmul.bf16.gmra.mxu0 %v2269
  %v2950 = vpop.f32.mrf.mxu0
  %v2951 = vadd.f32 0.0, %v2950
  %v2952 = vpop.f32.mrf.mxu0
  %v2953 = vadd.f32 0.0, %v2952
  %2954 = vmatmul.bf16.gmra.mxu0 %v2272
  %v2955 = vpop.f32.mrf.mxu0
  %v2956 = vadd.f32 0.0, %v2955
  %v2957 = vpop.f32.mrf.mxu0
  %v2958 = vadd.f32 0.0, %v2957
  %2959 = vmatmul.bf16.gmra.mxu0 %v2275
  %v2960 = vpop.f32.mrf.mxu0
  %v2961 = vadd.f32 0.0, %v2960
  %v2962 = vpop.f32.mrf.mxu0
  %v2963 = vadd.f32 0.0, %v2962
  %2964 = vmatmul.bf16.gmra.mxu0 %v2278
  %v2965 = vpop.f32.mrf.mxu0
  %v2966 = vadd.f32 0.0, %v2965
  %v2967 = vpop.f32.mrf.mxu0
  %v2968 = vadd.f32 0.0, %v2967
  %2969 = vmatmul.bf16.gmra.mxu0 %v2281
  %v2970 = vpop.f32.mrf.mxu0
  %v2971 = vadd.f32 0.0, %v2970
  %v2972 = vpop.f32.mrf.mxu0
  %v2973 = vadd.f32 0.0, %v2972
  %2974 = vmatmul.bf16.gmra.mxu0 %v2284
  %v2975 = vpop.f32.mrf.mxu0
  %v2976 = vadd.f32 0.0, %v2975
  %v2977 = vpop.f32.mrf.mxu0
  %v2978 = vadd.f32 0.0, %v2977
  %2979 = vmatmul.bf16.gmra.mxu0 %v2287
  %v2980 = vpop.f32.mrf.mxu0
  %v2981 = vadd.f32 0.0, %v2980
  %v2982 = vpop.f32.mrf.mxu0
  %v2983 = vadd.f32 0.0, %v2982
  %2984 = vmatmul.bf16.gmra.mxu0 %v2290
  %v2985 = vpop.f32.mrf.mxu0
  %v2986 = vadd.f32 0.0, %v2985
  %v2987 = vpop.f32.mrf.mxu0
  %v2988 = vadd.f32 0.0, %v2987
  %2989 = vmatmul.bf16.gmra.mxu0 %v2293
  %v2990 = vpop.f32.mrf.mxu0
  %v2991 = vadd.f32 0.0, %v2990
  %v2992 = vpop.f32.mrf.mxu0
  %v2993 = vadd.f32 0.0, %v2992
  %2994 = vmatmul.bf16.gmra.mxu0 %v2296
  %v2995 = vpop.f32.mrf.mxu0
  %v2996 = vadd.f32 0.0, %v2995
  %v2997 = vpop.f32.mrf.mxu0
  %v2998 = vadd.f32 0.0, %v2997
  %2999 = vmatmul.bf16.gmra.mxu0 %v2299
  %v3000 = vpop.f32.mrf.mxu0
  %v3001 = vadd.f32 0.0, %v3000
  %v3002 = vpop.f32.mrf.mxu0
  %v3003 = vadd.f32 0.0, %v3002
  %3004 = vmatmul.bf16.gmra.mxu0 %v2302
  %v3005 = vpop.f32.mrf.mxu0
  %v3006 = vadd.f32 0.0, %v3005
  %v3007 = vpop.f32.mrf.mxu0
  %v3008 = vadd.f32 0.0, %v3007
  %3009 = vmatmul.bf16.gmra.mxu0 %v2305
  %v3010 = vpop.f32.mrf.mxu0
  %v3011 = vadd.f32 0.0, %v3010
  %v3012 = vpop.f32.mrf.mxu0
  %v3013 = vadd.f32 0.0, %v3012
  %3014 = vmatmul.bf16.gmra.mxu0 %v2308
  %v3015 = vpop.f32.mrf.mxu0
  %v3016 = vadd.f32 0.0, %v3015
  %v3017 = vpop.f32.mrf.mxu0
  %v3018 = vadd.f32 0.0, %v3017
  %3019 = vmatmul.bf16.gmra.mxu0 %v2311
  %v3020 = vpop.f32.mrf.mxu0
  %v3021 = vadd.f32 0.0, %v3020
  %v3022 = vpop.f32.mrf.mxu0
  %v3023 = vadd.f32 0.0, %v3022
  %3024 = vmatmul.bf16.gmra.mxu0 %v2314
  %v3025 = vpop.f32.mrf.mxu0
  %v3026 = vadd.f32 0.0, %v3025
  %v3027 = vpop.f32.mrf.mxu0
  %v3028 = vadd.f32 0.0, %v3027
  %3029 = vmatmul.bf16.gmra.mxu0 %v2317
  %v3030 = vpop.f32.mrf.mxu0
  %v3031 = vadd.f32 0.0, %v3030
  %v3032 = vpop.f32.mrf.mxu0
  %v3033 = vadd.f32 0.0, %v3032
  %3034 = vmatmul.bf16.gmra.mxu0 %v2320
  %v3035 = vpop.f32.mrf.mxu0
  %v3036 = vadd.f32 0.0, %v3035
  %v3037 = vpop.f32.mrf.mxu0
  %v3038 = vadd.f32 0.0, %v3037
  %3039 = vmatmul.bf16.gmra.mxu0 %v2323
  %v3040 = vpop.f32.mrf.mxu0
  %v3041 = vadd.f32 0.0, %v3040
  %v3042 = vpop.f32.mrf.mxu0
  %v3043 = vadd.f32 0.0, %v3042
  %3044 = vmatmul.bf16.gmra.mxu0 %v2326
  %v3045 = vpop.f32.mrf.mxu0
  %v3046 = vadd.f32 0.0, %v3045
  %v3047 = vpop.f32.mrf.mxu0
  %v3048 = vadd.f32 0.0, %v3047
  %3049 = vmatmul.bf16.gmra.mxu0 %v2329
  %v3050 = vpop.f32.mrf.mxu0
  %v3051 = vadd.f32 0.0, %v3050
  %v3052 = vpop.f32.mrf.mxu0
  %v3053 = vadd.f32 0.0, %v3052
  %3054 = vmatmul.bf16.gmra.mxu0 %v2332
  %v3055 = vpop.f32.mrf.mxu0
  %v3056 = vadd.f32 0.0, %v3055
  %v3057 = vpop.f32.mrf.mxu0
  %v3058 = vadd.f32 0.0, %v3057
  %3059 = vmatmul.bf16.gmra.mxu0 %v2335
  %v3060 = vpop.f32.mrf.mxu0
  %v3061 = vadd.f32 0.0, %v3060
  %v3062 = vpop.f32.mrf.mxu0
  %v3063 = vadd.f32 0.0, %v3062
  %3064 = vmatmul.bf16.gmra.mxu0 %v2338
  %v3065 = vpop.f32.mrf.mxu0
  %v3066 = vadd.f32 0.0, %v3065
  %v3067 = vpop.f32.mrf.mxu0
  %v3068 = vadd.f32 0.0, %v3067
  %3069 = vmatmul.bf16.gmra.mxu0 %v2341
  %v3070 = vpop.f32.mrf.mxu0
  %v3071 = vadd.f32 0.0, %v3070
  %v3072 = vpop.f32.mrf.mxu0
  %v3073 = vadd.f32 0.0, %v3072
  %3074 = vmatmul.bf16.gmra.mxu0 %v2344
  %v3075 = vpop.f32.mrf.mxu0
  %v3076 = vadd.f32 0.0, %v3075
  %v3077 = vpop.f32.mrf.mxu0
  %v3078 = vadd.f32 0.0, %v3077
  %3079 = vmatmul.bf16.gmra.mxu0 %v2347
  %v3080 = vpop.f32.mrf.mxu0
  %v3081 = vadd.f32 0.0, %v3080
  %v3082 = vpop.f32.mrf.mxu0
  %v3083 = vadd.f32 0.0, %v3082
  %3084 = vmatmul.bf16.gmra.mxu0 %v2350
  %v3085 = vpop.f32.mrf.mxu0
  %v3086 = vadd.f32 0.0, %v3085
  %v3087 = vpop.f32.mrf.mxu0
  %v3088 = vadd.f32 0.0, %v3087
  %3089 = vmatmul.bf16.gmra.mxu0 %v2353
  %v3090 = vpop.f32.mrf.mxu0
  %v3091 = vadd.f32 0.0, %v3090
  %v3092 = vpop.f32.mrf.mxu0
  %v3093 = vadd.f32 0.0, %v3092
  %3094 = vmatmul.bf16.gmra.mxu0 %v2356
  %v3095 = vpop.f32.mrf.mxu0
  %v3096 = vadd.f32 0.0, %v3095
  %v3097 = vpop.f32.mrf.mxu0
  %v3098 = vadd.f32 0.0, %v3097
  %3099 = vmatmul.bf16.gmra.mxu0 %v2359
  %v3100 = vpop.f32.mrf.mxu0
  %v3101 = vadd.f32 0.0, %v3100
  %v3102 = vpop.f32.mrf.mxu0
  %v3103 = vadd.f32 0.0, %v3102
  %3104 = vmatmul.bf16.gmra.mxu0 %v2362
  %v3105 = vpop.f32.mrf.mxu0
  %v3106 = vadd.f32 0.0, %v3105
  %v3107 = vpop.f32.mrf.mxu0
  %v3108 = vadd.f32 0.0, %v3107
  %3109 = vmatmul.bf16.gmra.mxu0 %v2365
  %v3110 = vpop.f32.mrf.mxu0
  %v3111 = vadd.f32 0.0, %v3110
  %v3112 = vpop.f32.mrf.mxu0
  %v3113 = vadd.f32 0.0, %v3112
  %3114 = vmatmul.bf16.gmra.mxu0 %v2368
  %v3115 = vpop.f32.mrf.mxu0
  %v3116 = vadd.f32 0.0, %v3115
  %v3117 = vpop.f32.mrf.mxu0
  %v3118 = vadd.f32 0.0, %v3117
  %3119 = vmatmul.bf16.gmra.mxu0 %v2371
  %v3120 = vpop.f32.mrf.mxu0
  %v3121 = vadd.f32 0.0, %v3120
  %v3122 = vpop.f32.mrf.mxu0
  %v3123 = vadd.f32 0.0, %v3122
  %3124 = vmatmul.bf16.gmra.mxu0 %v2374
  %v3125 = vpop.f32.mrf.mxu0
  %v3126 = vadd.f32 0.0, %v3125
  %v3127 = vpop.f32.mrf.mxu0
  %v3128 = vadd.f32 0.0, %v3127
  %3129 = vmatmul.bf16.gmra.mxu0 %v2377
  %v3130 = vpop.f32.mrf.mxu0
  %v3131 = vadd.f32 0.0, %v3130
  %v3132 = vpop.f32.mrf.mxu0
  %v3133 = vadd.f32 0.0, %v3132
  %3134 = vmatmul.bf16.gmra.mxu0 %v2380
  %v3135 = vpop.f32.mrf.mxu0
  %v3136 = vadd.f32 0.0, %v3135
  %v3137 = vpop.f32.mrf.mxu0
  %v3138 = vadd.f32 0.0, %v3137
  %3139 = vmatmul.bf16.gmra.mxu0 %v2383
  %v3140 = vpop.f32.mrf.mxu0
  %v3141 = vadd.f32 0.0, %v3140
  %v3142 = vpop.f32.mrf.mxu0
  %v3143 = vadd.f32 0.0, %v3142
  %3144 = vmatmul.bf16.gmra.mxu0 %v2386
  %v3145 = vpop.f32.mrf.mxu0
  %v3146 = vadd.f32 0.0, %v3145
  %v3147 = vpop.f32.mrf.mxu0
  %v3148 = vadd.f32 0.0, %v3147
  %3149 = vmatmul.bf16.gmra.mxu0 %v2389
  %v3150 = vpop.f32.mrf.mxu0
  %v3151 = vadd.f32 0.0, %v3150
  %v3152 = vpop.f32.mrf.mxu0
  %v3153 = vadd.f32 0.0, %v3152
  %3154 = vmatmul.bf16.gmra.mxu0 %v2392
  %v3155 = vpop.f32.mrf.mxu0
  %v3156 = vadd.f32 0.0, %v3155
  %v3157 = vpop.f32.mrf.mxu0
  %v3158 = vadd.f32 0.0, %v3157
  %3159 = vmatmul.bf16.gmra.mxu0 %v2395
  %v3160 = vpop.f32.mrf.mxu0
  %v3161 = vadd.f32 0.0, %v3160
  %v3162 = vpop.f32.mrf.mxu0
  %v3163 = vadd.f32 0.0, %v3162
  %3164 = vmatmul.bf16.gmra.mxu0 %v2398
  %v3165 = vpop.f32.mrf.mxu0
  %v3166 = vadd.f32 0.0, %v3165
  %v3167 = vpop.f32.mrf.mxu0
  %v3168 = vadd.f32 0.0, %v3167
  %3169 = vmatmul.bf16.gmra.mxu0 %v2401
  %v3170 = vpop.f32.mrf.mxu0
  %v3171 = vadd.f32 0.0, %v3170
  %v3172 = vpop.f32.mrf.mxu0
  %v3173 = vadd.f32 0.0, %v3172
  %3174 = vmatmul.bf16.gmra.mxu0 %v2404
  %v3175 = vpop.f32.mrf.mxu0
  %v3176 = vadd.f32 0.0, %v3175
  %v3177 = vpop.f32.mrf.mxu0
  %v3178 = vadd.f32 0.0, %v3177
  %3179 = vmatmul.bf16.gmra.mxu0 %v2407
  %v3180 = vpop.f32.mrf.mxu0
  %v3181 = vadd.f32 0.0, %v3180
  %v3182 = vpop.f32.mrf.mxu0
  %v3183 = vadd.f32 0.0, %v3182
  %3184 = vmatmul.bf16.gmra.mxu0 %v2410
  %v3185 = vpop.f32.mrf.mxu0
  %v3186 = vadd.f32 0.0, %v3185
  %v3187 = vpop.f32.mrf.mxu0
  %v3188 = vadd.f32 0.0, %v3187
  %3189 = vmatmul.bf16.gmra.mxu0 %v2413
  %v3190 = vpop.f32.mrf.mxu0
  %v3191 = vadd.f32 0.0, %v3190
  %v3192 = vpop.f32.mrf.mxu0
  %v3193 = vadd.f32 0.0, %v3192
  %3194 = vmatmul.bf16.gmra.mxu0 %v2416
  %v3195 = vpop.f32.mrf.mxu0
  %v3196 = vadd.f32 0.0, %v3195
  %v3197 = vpop.f32.mrf.mxu0
  %v3198 = vadd.f32 0.0, %v3197
  %3199 = vmatmul.bf16.gmra.mxu0 %v2419
  %v3200 = vpop.f32.mrf.mxu0
  %v3201 = vadd.f32 0.0, %v3200
  %v3202 = vpop.f32.mrf.mxu0
  %v3203 = vadd.f32 0.0, %v3202
  %3204 = vmatmul.bf16.gmra.mxu0 %v2422
  %v3205 = vpop.f32.mrf.mxu0
  %v3206 = vadd.f32 0.0, %v3205
  %v3207 = vpop.f32.mrf.mxu0
  %v3208 = vadd.f32 0.0, %v3207
  %3209 = vmatmul.bf16.gmra.mxu0 %v2425
  %v3210 = vpop.f32.mrf.mxu0
  %v3211 = vadd.f32 0.0, %v3210
  %v3212 = vpop.f32.mrf.mxu0
  %v3213 = vadd.f32 0.0, %v3212
  %3214 = vmatmul.bf16.gmra.mxu0 %v2428
  %v3215 = vpop.f32.mrf.mxu0
  %v3216 = vadd.f32 0.0, %v3215
  %v3217 = vpop.f32.mrf.mxu0
  %v3218 = vadd.f32 0.0, %v3217
  %3219 = vmatmul.bf16.gmra.mxu0 %v2431
  %v3220 = vpop.f32.mrf.mxu0
  %v3221 = vadd.f32 0.0, %v3220
  %v3222 = vpop.f32.mrf.mxu0
  %v3223 = vadd.f32 0.0, %v3222
  %3224 = vmatmul.bf16.gmra.mxu0 %v2434
  %v3225 = vpop.f32.mrf.mxu0
  %v3226 = vadd.f32 0.0, %v3225
  %v3227 = vpop.f32.mrf.mxu0
  %v3228 = vadd.f32 0.0, %v3227
  %3229 = vmatmul.bf16.gmra.mxu0 %v2901
  %v3230 = vpop.f32.mrf.mxu0
  %v3231 = vadd.f32 0.0, %v3230
  %v3232 = vpop.f32.mrf.mxu0
  %v3233 = vadd.f32 0.0, %v3232
  %3234 = vdwg.mxu0
  %v3235 = vadd.f32 %v2768, %v2916
  %v3236 = vadd.f32 %v2769, %v2918
  %v3237 = vadd.f32 %v2770, %v2921
  %v3238 = vadd.f32 %v2771, %v2923
  %v3239 = vadd.f32 %v2772, %v2926
  %v3240 = vadd.f32 %v2773, %v2928
  %v3241 = vadd.f32 %v2774, %v2931
  %v3242 = vadd.f32 %v2775, %v2933
  %v3243 = vadd.f32 %v2776, %v2936
  %v3244 = vadd.f32 %v2777, %v2938
  %v3245 = vadd.f32 %v2778, %v2941
  %v3246 = vadd.f32 %v2779, %v2943
  %v3247 = vadd.f32 %v2780, %v2946
  %v3248 = vadd.f32 %v2781, %v2948
  %v3249 = vadd.f32 %v2782, %v2951
  %v3250 = vadd.f32 %v2783, %v2953
  %v3251 = vadd.f32 %v2784, %v2956
  %v3252 = vadd.f32 %v2785, %v2958
  %v3253 = vadd.f32 %v2786, %v2961
  %v3254 = vadd.f32 %v2787, %v2963
  %v3255 = vadd.f32 %v2788, %v2966
  %v3256 = vadd.f32 %v2789, %v2968
  %v3257 = vadd.f32 %v2790, %v2971
  %v3258 = vadd.f32 %v2791, %v2973
  %v3259 = vadd.f32 %v2792, %v2976
  %v3260 = vadd.f32 %v2793, %v2978
  %v3261 = vadd.f32 %v2794, %v2981
  %v3262 = vadd.f32 %v2795, %v2983
  %v3263 = vadd.f32 %v2796, %v2986
  %v3264 = vadd.f32 %v2797, %v2988
  %v3265 = vadd.f32 %v2798, %v2991
  %v3266 = vadd.f32 %v2799, %v2993
  %v3267 = vadd.f32 %v2800, %v2996
  %v3268 = vadd.f32 %v2801, %v2998
  %v3269 = vadd.f32 %v2802, %v3001
  %v3270 = vadd.f32 %v2803, %v3003
  %v3271 = vadd.f32 %v2804, %v3006
  %v3272 = vadd.f32 %v2805, %v3008
  %v3273 = vadd.f32 %v2806, %v3011
  %v3274 = vadd.f32 %v2807, %v3013
  %v3275 = vadd.f32 %v2808, %v3016
  %v3276 = vadd.f32 %v2809, %v3018
  %v3277 = vadd.f32 %v2810, %v3021
  %v3278 = vadd.f32 %v2811, %v3023
  %v3279 = vadd.f32 %v2812, %v3026
  %v3280 = vadd.f32 %v2813, %v3028
  %v3281 = vadd.f32 %v2814, %v3031
  %v3282 = vadd.f32 %v2815, %v3033
  %v3283 = vadd.f32 %v2816, %v3036
  %v3284 = vadd.f32 %v2817, %v3038
  %v3285 = vadd.f32 %v2818, %v3041
  %v3286 = vadd.f32 %v2819, %v3043
  %v3287 = vadd.f32 %v2820, %v3046
  %v3288 = vadd.f32 %v2821, %v3048
  %v3289 = vadd.f32 %v2822, %v3051
  %v3290 = vadd.f32 %v2823, %v3053
  %v3291 = vadd.f32 %v2824, %v3056
  %v3292 = vadd.f32 %v2825, %v3058
  %v3293 = vadd.f32 %v2826, %v3061
  %v3294 = vadd.f32 %v2827, %v3063
  %v3295 = vadd.f32 %v2828, %v3066
  %v3296 = vadd.f32 %v2829, %v3068
  %v3297 = vadd.f32 %v2830, %v3071
  %v3298 = vadd.f32 %v2831, %v3073
  %v3299 = vadd.f32 %v2832, %v3076
  %v3300 = vadd.f32 %v2833, %v3078
  %v3301 = vadd.f32 %v2834, %v3081
  %v3302 = vadd.f32 %v2835, %v3083
  %v3303 = vadd.f32 %v2836, %v3086
  %v3304 = vadd.f32 %v2837, %v3088
  %v3305 = vadd.f32 %v2838, %v3091
  %v3306 = vadd.f32 %v2839, %v3093
  %v3307 = vadd.f32 %v2840, %v3096
  %v3308 = vadd.f32 %v2841, %v3098
  %v3309 = vadd.f32 %v2842, %v3101
  %v3310 = vadd.f32 %v2843, %v3103
  %v3311 = vadd.f32 %v2844, %v3106
  %v3312 = vadd.f32 %v2845, %v3108
  %v3313 = vadd.f32 %v2846, %v3111
  %v3314 = vadd.f32 %v2847, %v3113
  %v3315 = vadd.f32 %v2848, %v3116
  %v3316 = vadd.f32 %v2849, %v3118
  %v3317 = vadd.f32 %v2850, %v3121
  %v3318 = vadd.f32 %v2851, %v3123
  %v3319 = vadd.f32 %v2852, %v3126
  %v3320 = vadd.f32 %v2853, %v3128
  %v3321 = vadd.f32 %v2854, %v3131
  %v3322 = vadd.f32 %v2855, %v3133
  %v3323 = vadd.f32 %v2856, %v3136
  %v3324 = vadd.f32 %v2857, %v3138
  %v3325 = vadd.f32 %v2858, %v3141
  %v3326 = vadd.f32 %v2859, %v3143
  %v3327 = vadd.f32 %v2860, %v3146
  %v3328 = vadd.f32 %v2861, %v3148
  %v3329 = vadd.f32 %v2862, %v3151
  %v3330 = vadd.f32 %v2863, %v3153
  %v3331 = vadd.f32 %v2864, %v3156
  %v3332 = vadd.f32 %v2865, %v3158
  %v3333 = vadd.f32 %v2866, %v3161
  %v3334 = vadd.f32 %v2867, %v3163
  %v3335 = vadd.f32 %v2868, %v3166
  %v3336 = vadd.f32 %v2869, %v3168
  %v3337 = vadd.f32 %v2870, %v3171
  %v3338 = vadd.f32 %v2871, %v3173
  %v3339 = vadd.f32 %v2872, %v3176
  %v3340 = vadd.f32 %v2873, %v3178
  %v3341 = vadd.f32 %v2874, %v3181
  %v3342 = vadd.f32 %v2875, %v3183
  %v3343 = vadd.f32 %v2876, %v3186
  %v3344 = vadd.f32 %v2877, %v3188
  %v3345 = vadd.f32 %v2878, %v3191
  %v3346 = vadd.f32 %v2879, %v3193
  %v3347 = vadd.f32 %v2880, %v3196
  %v3348 = vadd.f32 %v2881, %v3198
  %v3349 = vadd.f32 %v2882, %v3201
  %v3350 = vadd.f32 %v2883, %v3203
  %v3351 = vadd.f32 %v2884, %v3206
  %v3352 = vadd.f32 %v2885, %v3208
  %v3353 = vadd.f32 %v2886, %v3211
  %v3354 = vadd.f32 %v2887, %v3213
  %v3355 = vadd.f32 %v2888, %v3216
  %v3356 = vadd.f32 %v2889, %v3218
  %v3357 = vadd.f32 %v2890, %v3221
  %v3358 = vadd.f32 %v2891, %v3223
  %v3359 = vadd.f32 %v2892, %v3226
  %v3360 = vadd.f32 %v2893, %v3228
  %v3361 = vadd.f32 %v2894, %v3231
  %v3362 = vadd.f32 %v2895, %v3233
  %s3363 = scalar_lea.vmem %s3, 8
  %v3364 = vld [vmem:[%s3363] sm:$0x3]
  %vm3365 = vsmask.f32 6400
  %v3366 = vrot.slane %v622, 1
  %v3367 = vrot.slane %v618, 2
  %v3368 = vor.u32 %v3366, %v3367
  %v3369 = vrot.slane %v630, 1
  %v3370 = vrot.slane %v626, 2
  %v3371 = vor.u32 %v3369, %v3370
  %v3372 = vsel %vm3365, %v3368, %v3371
  %v3373 = vrot.slane %v638, 1
  %v3374 = vrot.slane %v634, 2
  %v3375 = vor.u32 %v3373, %v3374
  %v3376 = vsel %vm3365, %v3371, %v3375
  %v3377 = vrot.slane %v646, 1
  %v3378 = vrot.slane %v642, 2
  %v3379 = vor.u32 %v3377, %v3378
  %v3380 = vsel %vm3365, %v3375, %v3379
  %v3381 = vrot.slane %v654, 1
  %v3382 = vrot.slane %v650, 2
  %v3383 = vor.u32 %v3381, %v3382
  %v3384 = vsel %vm3365, %v3379, %v3383
  %v3385 = vrot.slane %v662, 1
  %v3386 = vrot.slane %v658, 2
  %v3387 = vor.u32 %v3385, %v3386
  %v3388 = vsel %vm3365, %v3383, %v3387
  %v3389 = vrot.slane %v670, 1
  %v3390 = vrot.slane %v666, 2
  %v3391 = vor.u32 %v3389, %v3390
  %v3392 = vsel %vm3365, %v3387, %v3391
  %v3393 = vrot.slane %v678, 1
  %v3394 = vrot.slane %v674, 2
  %v3395 = vor.u32 %v3393, %v3394
  %v3396 = vsel %vm3365, %v3391, %v3395
  %v3397 = vrot.slane %v686, 1
  %v3398 = vrot.slane %v682, 2
  %v3399 = vor.u32 %v3397, %v3398
  %v3400 = vsel %vm3365, %v3395, %v3399
  %v3401 = vrot.slane %v694, 1
  %v3402 = vrot.slane %v690, 2
  %v3403 = vor.u32 %v3401, %v3402
  %v3404 = vsel %vm3365, %v3399, %v3403
  %v3405 = vrot.slane %v702, 1
  %v3406 = vrot.slane %v698, 2
  %v3407 = vor.u32 %v3405, %v3406
  %v3408 = vsel %vm3365, %v3403, %v3407
  %v3409 = vrot.slane %v710, 1
  %v3410 = vrot.slane %v706, 2
  %v3411 = vor.u32 %v3409, %v3410
  %v3412 = vsel %vm3365, %v3407, %v3411
  %v3413 = vrot.slane %v718, 1
  %v3414 = vrot.slane %v714, 2
  %v3415 = vor.u32 %v3413, %v3414
  %v3416 = vsel %vm3365, %v3411, %v3415
  %v3417 = vrot.slane %v726, 1
  %v3418 = vrot.slane %v722, 2
  %v3419 = vor.u32 %v3417, %v3418
  %v3420 = vsel %vm3365, %v3415, %v3419
  %v3421 = vrot.slane %v734, 1
  %v3422 = vrot.slane %v730, 2
  %v3423 = vor.u32 %v3421, %v3422
  %v3424 = vsel %vm3365, %v3419, %v3423
  %v3425 = vrot.slane %v742, 1
  %v3426 = vrot.slane %v738, 2
  %v3427 = vor.u32 %v3425, %v3426
  %v3428 = vsel %vm3365, %v3423, %v3427
  %v3429 = vrot.slane %v750, 1
  %v3430 = vrot.slane %v746, 2
  %v3431 = vor.u32 %v3429, %v3430
  %v3432 = vsel %vm3365, %v3427, %v3431
  %v3433 = vrot.slane %v758, 1
  %v3434 = vrot.slane %v754, 2
  %v3435 = vor.u32 %v3433, %v3434
  %v3436 = vsel %vm3365, %v3431, %v3435
  %v3437 = vrot.slane %v766, 1
  %v3438 = vrot.slane %v762, 2
  %v3439 = vor.u32 %v3437, %v3438
  %v3440 = vsel %vm3365, %v3435, %v3439
  %v3441 = vrot.slane %v774, 1
  %v3442 = vrot.slane %v770, 2
  %v3443 = vor.u32 %v3441, %v3442
  %v3444 = vsel %vm3365, %v3439, %v3443
  %v3445 = vrot.slane %v782, 1
  %v3446 = vrot.slane %v778, 2
  %v3447 = vor.u32 %v3445, %v3446
  %v3448 = vsel %vm3365, %v3443, %v3447
  %v3449 = vrot.slane %v790, 1
  %v3450 = vrot.slane %v786, 2
  %v3451 = vor.u32 %v3449, %v3450
  %v3452 = vsel %vm3365, %v3447, %v3451
  %v3453 = vrot.slane %v798, 1
  %v3454 = vrot.slane %v794, 2
  %v3455 = vor.u32 %v3453, %v3454
  %v3456 = vsel %vm3365, %v3451, %v3455
  %v3457 = vrot.slane %v806, 1
  %v3458 = vrot.slane %v802, 2
  %v3459 = vor.u32 %v3457, %v3458
  %v3460 = vsel %vm3365, %v3455, %v3459
  %v3461 = vrot.slane %v814, 1
  %v3462 = vrot.slane %v810, 2
  %v3463 = vor.u32 %v3461, %v3462
  %v3464 = vsel %vm3365, %v3459, %v3463
  %v3465 = vrot.slane %v822, 1
  %v3466 = vrot.slane %v818, 2
  %v3467 = vor.u32 %v3465, %v3466
  %v3468 = vsel %vm3365, %v3463, %v3467
  %v3469 = vrot.slane %v830, 1
  %v3470 = vrot.slane %v826, 2
  %v3471 = vor.u32 %v3469, %v3470
  %v3472 = vsel %vm3365, %v3467, %v3471
  %v3473 = vrot.slane %v838, 1
  %v3474 = vrot.slane %v834, 2
  %v3475 = vor.u32 %v3473, %v3474
  %v3476 = vsel %vm3365, %v3471, %v3475
  %v3477 = vrot.slane %v846, 1
  %v3478 = vrot.slane %v842, 2
  %v3479 = vor.u32 %v3477, %v3478
  %v3480 = vsel %vm3365, %v3475, %v3479
  %v3481 = vrot.slane %v854, 1
  %v3482 = vrot.slane %v850, 2
  %v3483 = vor.u32 %v3481, %v3482
  %v3484 = vsel %vm3365, %v3479, %v3483
  %v3485 = vrot.slane %v862, 1
  %v3486 = vrot.slane %v858, 2
  %v3487 = vor.u32 %v3485, %v3486
  %v3488 = vsel %vm3365, %v3483, %v3487
  %v3489 = vrot.slane %v870, 1
  %v3490 = vrot.slane %v866, 2
  %v3491 = vor.u32 %v3489, %v3490
  %v3492 = vsel %vm3365, %v3487, %v3491
  %v3493 = vrot.slane %v878, 1
  %v3494 = vrot.slane %v874, 2
  %v3495 = vor.u32 %v3493, %v3494
  %v3496 = vsel %vm3365, %v3491, %v3495
  %v3497 = vrot.slane %v886, 1
  %v3498 = vrot.slane %v882, 2
  %v3499 = vor.u32 %v3497, %v3498
  %v3500 = vsel %vm3365, %v3495, %v3499
  %v3501 = vrot.slane %v894, 1
  %v3502 = vrot.slane %v890, 2
  %v3503 = vor.u32 %v3501, %v3502
  %v3504 = vsel %vm3365, %v3499, %v3503
  %v3505 = vrot.slane %v902, 1
  %v3506 = vrot.slane %v898, 2
  %v3507 = vor.u32 %v3505, %v3506
  %v3508 = vsel %vm3365, %v3503, %v3507
  %v3509 = vrot.slane %v910, 1
  %v3510 = vrot.slane %v906, 2
  %v3511 = vor.u32 %v3509, %v3510
  %v3512 = vsel %vm3365, %v3507, %v3511
  %v3513 = vrot.slane %v918, 1
  %v3514 = vrot.slane %v914, 2
  %v3515 = vor.u32 %v3513, %v3514
  %v3516 = vsel %vm3365, %v3511, %v3515
  %v3517 = vrot.slane %v926, 1
  %v3518 = vrot.slane %v922, 2
  %v3519 = vor.u32 %v3517, %v3518
  %v3520 = vsel %vm3365, %v3515, %v3519
  %v3521 = vrot.slane %v934, 1
  %v3522 = vrot.slane %v930, 2
  %v3523 = vor.u32 %v3521, %v3522
  %v3524 = vsel %vm3365, %v3519, %v3523
  %v3525 = vrot.slane %v942, 1
  %v3526 = vrot.slane %v938, 2
  %v3527 = vor.u32 %v3525, %v3526
  %v3528 = vsel %vm3365, %v3523, %v3527
  %v3529 = vrot.slane %v950, 1
  %v3530 = vrot.slane %v946, 2
  %v3531 = vor.u32 %v3529, %v3530
  %v3532 = vsel %vm3365, %v3527, %v3531
  %v3533 = vrot.slane %v958, 1
  %v3534 = vrot.slane %v954, 2
  %v3535 = vor.u32 %v3533, %v3534
  %v3536 = vsel %vm3365, %v3531, %v3535
  %v3537 = vrot.slane %v966, 1
  %v3538 = vrot.slane %v962, 2
  %v3539 = vor.u32 %v3537, %v3538
  %v3540 = vsel %vm3365, %v3535, %v3539
  %v3541 = vrot.slane %v974, 1
  %v3542 = vrot.slane %v970, 2
  %v3543 = vor.u32 %v3541, %v3542
  %v3544 = vsel %vm3365, %v3539, %v3543
  %v3545 = vrot.slane %v982, 1
  %v3546 = vrot.slane %v978, 2
  %v3547 = vor.u32 %v3545, %v3546
  %v3548 = vsel %vm3365, %v3543, %v3547
  %v3549 = vrot.slane %v990, 1
  %v3550 = vrot.slane %v986, 2
  %v3551 = vor.u32 %v3549, %v3550
  %v3552 = vsel %vm3365, %v3547, %v3551
  %v3553 = vrot.slane %v998, 1
  %v3554 = vrot.slane %v994, 2
  %v3555 = vor.u32 %v3553, %v3554
  %v3556 = vsel %vm3365, %v3551, %v3555
  %v3557 = vrot.slane %v1006, 1
  %v3558 = vrot.slane %v1002, 2
  %v3559 = vor.u32 %v3557, %v3558
  %v3560 = vsel %vm3365, %v3555, %v3559
  %v3561 = vrot.slane %v1014, 1
  %v3562 = vrot.slane %v1010, 2
  %v3563 = vor.u32 %v3561, %v3562
  %v3564 = vsel %vm3365, %v3559, %v3563
  %v3565 = vrot.slane %v1022, 1
  %v3566 = vrot.slane %v1018, 2
  %v3567 = vor.u32 %v3565, %v3566
  %v3568 = vsel %vm3365, %v3563, %v3567
  %v3569 = vrot.slane %v1030, 1
  %v3570 = vrot.slane %v1026, 2
  %v3571 = vor.u32 %v3569, %v3570
  %v3572 = vsel %vm3365, %v3567, %v3571
  %v3573 = vrot.slane %v1038, 1
  %v3574 = vrot.slane %v1034, 2
  %v3575 = vor.u32 %v3573, %v3574
  %v3576 = vsel %vm3365, %v3571, %v3575
  %v3577 = vrot.slane %v1046, 1
  %v3578 = vrot.slane %v1042, 2
  %v3579 = vor.u32 %v3577, %v3578
  %v3580 = vsel %vm3365, %v3575, %v3579
  %v3581 = vrot.slane %v1054, 1
  %v3582 = vrot.slane %v1050, 2
  %v3583 = vor.u32 %v3581, %v3582
  %v3584 = vsel %vm3365, %v3579, %v3583
  %v3585 = vrot.slane %v1062, 1
  %v3586 = vrot.slane %v1058, 2
  %v3587 = vor.u32 %v3585, %v3586
  %v3588 = vsel %vm3365, %v3583, %v3587
  %v3589 = vrot.slane %v1070, 1
  %v3590 = vrot.slane %v1066, 2
  %v3591 = vor.u32 %v3589, %v3590
  %v3592 = vsel %vm3365, %v3587, %v3591
  %v3593 = vrot.slane %v1078, 1
  %v3594 = vrot.slane %v1074, 2
  %v3595 = vor.u32 %v3593, %v3594
  %v3596 = vsel %vm3365, %v3591, %v3595
  %v3597 = vrot.slane %v1086, 1
  %v3598 = vrot.slane %v1082, 2
  %v3599 = vor.u32 %v3597, %v3598
  %v3600 = vsel %vm3365, %v3595, %v3599
  %v3601 = vrot.slane %v1094, 1
  %v3602 = vrot.slane %v1090, 2
  %v3603 = vor.u32 %v3601, %v3602
  %v3604 = vsel %vm3365, %v3599, %v3603
  %v3605 = vrot.slane %v1102, 1
  %v3606 = vrot.slane %v1098, 2
  %v3607 = vor.u32 %v3605, %v3606
  %v3608 = vsel %vm3365, %v3603, %v3607
  %v3609 = vrot.slane %v1110, 1
  %v3610 = vrot.slane %v1106, 2
  %v3611 = vor.u32 %v3609, %v3610
  %v3612 = vsel %vm3365, %v3607, %v3611
  %v3613 = vrot.slane %v1118, 1
  %v3614 = vrot.slane %v1114, 2
  %v3615 = vor.u32 %v3613, %v3614
  %v3616 = vsel %vm3365, %v3611, %v3615
  %v3617 = vshrl.u32 %v603, 16
  %v3619 = vrot.slane %v3617, 1
  %v3620 = vrot.slane %v1122, 2
  %v3621 = vor.u32 %v3619, %v3620
  %v3622 = vsel %vm3365, %v3615, %v3621
  %v3624 = vshrl.u32 %v604, 16
  %v3626 = vrot.slane %v3624, 1
  %v3627 = vshll.u32 %v604, 16
  %v3629 = vrot.slane %v3627, 2
  %v3630 = vor.u32 %v3626, %v3629
  %v3631 = vsel %vm3365, %v3621, %v3630
  %v3633 = vsel %vm1126, %v3372, 0
  %v3636 = vsel %vm1126, %v3376, 0
  %v3639 = vsel %vm1126, %v3380, 0
  %v3642 = vsel %vm1126, %v3384, 0
  %v3645 = vsel %vm1126, %v3388, 0
  %v3648 = vsel %vm1126, %v3392, 0
  %v3651 = vsel %vm1126, %v3396, 0
  %v3654 = vsel %vm1126, %v3400, 0
  %v3657 = vsel %vm1126, %v3404, 0
  %v3660 = vsel %vm1126, %v3408, 0
  %v3663 = vsel %vm1126, %v3412, 0
  %v3666 = vsel %vm1126, %v3416, 0
  %v3669 = vsel %vm1126, %v3420, 0
  %v3672 = vsel %vm1126, %v3424, 0
  %v3675 = vsel %vm1126, %v3428, 0
  %v3678 = vsel %vm1126, %v3432, 0
  %v3681 = vsel %vm1126, %v3436, 0
  %v3684 = vsel %vm1126, %v3440, 0
  %v3687 = vsel %vm1126, %v3444, 0
  %v3690 = vsel %vm1126, %v3448, 0
  %v3693 = vsel %vm1126, %v3452, 0
  %v3696 = vsel %vm1126, %v3456, 0
  %v3699 = vsel %vm1126, %v3460, 0
  %v3702 = vsel %vm1126, %v3464, 0
  %v3705 = vsel %vm1126, %v3468, 0
  %v3708 = vsel %vm1126, %v3472, 0
  %v3711 = vsel %vm1126, %v3476, 0
  %v3714 = vsel %vm1126, %v3480, 0
  %v3717 = vsel %vm1126, %v3484, 0
  %v3720 = vsel %vm1126, %v3488, 0
  %v3723 = vsel %vm1126, %v3492, 0
  %v3726 = vsel %vm1126, %v3496, 0
  %v3729 = vsel %vm1126, %v3500, 0
  %v3732 = vsel %vm1126, %v3504, 0
  %v3735 = vsel %vm1126, %v3508, 0
  %v3738 = vsel %vm1126, %v3512, 0
  %v3741 = vsel %vm1126, %v3516, 0
  %v3744 = vsel %vm1126, %v3520, 0
  %v3747 = vsel %vm1126, %v3524, 0
  %v3750 = vsel %vm1126, %v3528, 0
  %v3753 = vsel %vm1126, %v3532, 0
  %v3756 = vsel %vm1126, %v3536, 0
  %v3759 = vsel %vm1126, %v3540, 0
  %v3762 = vsel %vm1126, %v3544, 0
  %v3765 = vsel %vm1126, %v3548, 0
  %v3768 = vsel %vm1126, %v3552, 0
  %v3771 = vsel %vm1126, %v3556, 0
  %v3774 = vsel %vm1126, %v3560, 0
  %v3777 = vsel %vm1126, %v3564, 0
  %v3780 = vsel %vm1126, %v3568, 0
  %v3783 = vsel %vm1126, %v3572, 0
  %v3786 = vsel %vm1126, %v3576, 0
  %v3789 = vsel %vm1126, %v3580, 0
  %v3792 = vsel %vm1126, %v3584, 0
  %v3795 = vsel %vm1126, %v3588, 0
  %v3798 = vsel %vm1126, %v3592, 0
  %v3801 = vsel %vm1126, %v3596, 0
  %v3804 = vsel %vm1126, %v3600, 0
  %v3807 = vsel %vm1126, %v3604, 0
  %v3810 = vsel %vm1126, %v3608, 0
  %v3813 = vsel %vm1126, %v3612, 0
  %v3816 = vsel %vm1126, %v3616, 0
  %v3819 = vsel %vm1126, %v3622, 0
  %v3822 = vsel %vm1126, %v3631, 0
  %v3825 = vsel %vm1319, %v3364, 0
  %3827 = vmatpush.bf16.msra.mxu0 0
  %3828 = vmatpush.bf16.msra.mxu0 0
  %3829 = vmatpush.bf16.msra.mxu0 0
  %3830 = vmatpush.bf16.msra.mxu0 0
  %3831 = vmatpush.bf16.msra.mxu0 0
  %3832 = vmatpush.bf16.msra.mxu0 0
  %3833 = vmatpush.bf16.msra.mxu0 0
  %3834 = vmatpush.bf16.msra.mxu0 %v3825
  %3835 = vmatmul.bf16.gmra.mxu0 %v3633
  %v3836 = vpop.f32.mrf.mxu0
  %v3837 = vadd.f32 0.0, %v3836
  %v3838 = vpop.f32.mrf.mxu0
  %v3839 = vadd.f32 0.0, %v3838
  %3840 = vmatmul.bf16.gmra.mxu0 %v3636
  %v3841 = vpop.f32.mrf.mxu0
  %v3842 = vadd.f32 0.0, %v3841
  %v3843 = vpop.f32.mrf.mxu0
  %v3844 = vadd.f32 0.0, %v3843
  %3845 = vmatmul.bf16.gmra.mxu0 %v3639
  %v3846 = vpop.f32.mrf.mxu0
  %v3847 = vadd.f32 0.0, %v3846
  %v3848 = vpop.f32.mrf.mxu0
  %v3849 = vadd.f32 0.0, %v3848
  %3850 = vmatmul.bf16.gmra.mxu0 %v3642
  %v3851 = vpop.f32.mrf.mxu0
  %v3852 = vadd.f32 0.0, %v3851
  %v3853 = vpop.f32.mrf.mxu0
  %v3854 = vadd.f32 0.0, %v3853
  %3855 = vmatmul.bf16.gmra.mxu0 %v3645
  %v3856 = vpop.f32.mrf.mxu0
  %v3857 = vadd.f32 0.0, %v3856
  %v3858 = vpop.f32.mrf.mxu0
  %v3859 = vadd.f32 0.0, %v3858
  %3860 = vmatmul.bf16.gmra.mxu0 %v3648
  %v3861 = vpop.f32.mrf.mxu0
  %v3862 = vadd.f32 0.0, %v3861
  %v3863 = vpop.f32.mrf.mxu0
  %v3864 = vadd.f32 0.0, %v3863
  %3865 = vmatmul.bf16.gmra.mxu0 %v3651
  %v3866 = vpop.f32.mrf.mxu0
  %v3867 = vadd.f32 0.0, %v3866
  %v3868 = vpop.f32.mrf.mxu0
  %v3869 = vadd.f32 0.0, %v3868
  %3870 = vmatmul.bf16.gmra.mxu0 %v3654
  %v3871 = vpop.f32.mrf.mxu0
  %v3872 = vadd.f32 0.0, %v3871
  %v3873 = vpop.f32.mrf.mxu0
  %v3874 = vadd.f32 0.0, %v3873
  %3875 = vmatmul.bf16.gmra.mxu0 %v3657
  %v3876 = vpop.f32.mrf.mxu0
  %v3877 = vadd.f32 0.0, %v3876
  %v3878 = vpop.f32.mrf.mxu0
  %v3879 = vadd.f32 0.0, %v3878
  %3880 = vmatmul.bf16.gmra.mxu0 %v3660
  %v3881 = vpop.f32.mrf.mxu0
  %v3882 = vadd.f32 0.0, %v3881
  %v3883 = vpop.f32.mrf.mxu0
  %v3884 = vadd.f32 0.0, %v3883
  %3885 = vmatmul.bf16.gmra.mxu0 %v3663
  %v3886 = vpop.f32.mrf.mxu0
  %v3887 = vadd.f32 0.0, %v3886
  %v3888 = vpop.f32.mrf.mxu0
  %v3889 = vadd.f32 0.0, %v3888
  %3890 = vmatmul.bf16.gmra.mxu0 %v3666
  %v3891 = vpop.f32.mrf.mxu0
  %v3892 = vadd.f32 0.0, %v3891
  %v3893 = vpop.f32.mrf.mxu0
  %v3894 = vadd.f32 0.0, %v3893
  %3895 = vmatmul.bf16.gmra.mxu0 %v3669
  %v3896 = vpop.f32.mrf.mxu0
  %v3897 = vadd.f32 0.0, %v3896
  %v3898 = vpop.f32.mrf.mxu0
  %v3899 = vadd.f32 0.0, %v3898
  %3900 = vmatmul.bf16.gmra.mxu0 %v3672
  %v3901 = vpop.f32.mrf.mxu0
  %v3902 = vadd.f32 0.0, %v3901
  %v3903 = vpop.f32.mrf.mxu0
  %v3904 = vadd.f32 0.0, %v3903
  %3905 = vmatmul.bf16.gmra.mxu0 %v3675
  %v3906 = vpop.f32.mrf.mxu0
  %v3907 = vadd.f32 0.0, %v3906
  %v3908 = vpop.f32.mrf.mxu0
  %v3909 = vadd.f32 0.0, %v3908
  %3910 = vmatmul.bf16.gmra.mxu0 %v3678
  %v3911 = vpop.f32.mrf.mxu0
  %v3912 = vadd.f32 0.0, %v3911
  %v3913 = vpop.f32.mrf.mxu0
  %v3914 = vadd.f32 0.0, %v3913
  %3915 = vmatmul.bf16.gmra.mxu0 %v3681
  %v3916 = vpop.f32.mrf.mxu0
  %v3917 = vadd.f32 0.0, %v3916
  %v3918 = vpop.f32.mrf.mxu0
  %v3919 = vadd.f32 0.0, %v3918
  %3920 = vmatmul.bf16.gmra.mxu0 %v3684
  %v3921 = vpop.f32.mrf.mxu0
  %v3922 = vadd.f32 0.0, %v3921
  %v3923 = vpop.f32.mrf.mxu0
  %v3924 = vadd.f32 0.0, %v3923
  %3925 = vmatmul.bf16.gmra.mxu0 %v3687
  %v3926 = vpop.f32.mrf.mxu0
  %v3927 = vadd.f32 0.0, %v3926
  %v3928 = vpop.f32.mrf.mxu0
  %v3929 = vadd.f32 0.0, %v3928
  %3930 = vmatmul.bf16.gmra.mxu0 %v3690
  %v3931 = vpop.f32.mrf.mxu0
  %v3932 = vadd.f32 0.0, %v3931
  %v3933 = vpop.f32.mrf.mxu0
  %v3934 = vadd.f32 0.0, %v3933
  %3935 = vmatmul.bf16.gmra.mxu0 %v3693
  %v3936 = vpop.f32.mrf.mxu0
  %v3937 = vadd.f32 0.0, %v3936
  %v3938 = vpop.f32.mrf.mxu0
  %v3939 = vadd.f32 0.0, %v3938
  %3940 = vmatmul.bf16.gmra.mxu0 %v3696
  %v3941 = vpop.f32.mrf.mxu0
  %v3942 = vadd.f32 0.0, %v3941
  %v3943 = vpop.f32.mrf.mxu0
  %v3944 = vadd.f32 0.0, %v3943
  %3945 = vmatmul.bf16.gmra.mxu0 %v3699
  %v3946 = vpop.f32.mrf.mxu0
  %v3947 = vadd.f32 0.0, %v3946
  %v3948 = vpop.f32.mrf.mxu0
  %v3949 = vadd.f32 0.0, %v3948
  %3950 = vmatmul.bf16.gmra.mxu0 %v3702
  %v3951 = vpop.f32.mrf.mxu0
  %v3952 = vadd.f32 0.0, %v3951
  %v3953 = vpop.f32.mrf.mxu0
  %v3954 = vadd.f32 0.0, %v3953
  %3955 = vmatmul.bf16.gmra.mxu0 %v3705
  %v3956 = vpop.f32.mrf.mxu0
  %v3957 = vadd.f32 0.0, %v3956
  %v3958 = vpop.f32.mrf.mxu0
  %v3959 = vadd.f32 0.0, %v3958
  %3960 = vmatmul.bf16.gmra.mxu0 %v3708
  %v3961 = vpop.f32.mrf.mxu0
  %v3962 = vadd.f32 0.0, %v3961
  %v3963 = vpop.f32.mrf.mxu0
  %v3964 = vadd.f32 0.0, %v3963
  %3965 = vmatmul.bf16.gmra.mxu0 %v3711
  %v3966 = vpop.f32.mrf.mxu0
  %v3967 = vadd.f32 0.0, %v3966
  %v3968 = vpop.f32.mrf.mxu0
  %v3969 = vadd.f32 0.0, %v3968
  %3970 = vmatmul.bf16.gmra.mxu0 %v3714
  %v3971 = vpop.f32.mrf.mxu0
  %v3972 = vadd.f32 0.0, %v3971
  %v3973 = vpop.f32.mrf.mxu0
  %v3974 = vadd.f32 0.0, %v3973
  %3975 = vmatmul.bf16.gmra.mxu0 %v3717
  %v3976 = vpop.f32.mrf.mxu0
  %v3977 = vadd.f32 0.0, %v3976
  %v3978 = vpop.f32.mrf.mxu0
  %v3979 = vadd.f32 0.0, %v3978
  %3980 = vmatmul.bf16.gmra.mxu0 %v3720
  %v3981 = vpop.f32.mrf.mxu0
  %v3982 = vadd.f32 0.0, %v3981
  %v3983 = vpop.f32.mrf.mxu0
  %v3984 = vadd.f32 0.0, %v3983
  %3985 = vmatmul.bf16.gmra.mxu0 %v3723
  %v3986 = vpop.f32.mrf.mxu0
  %v3987 = vadd.f32 0.0, %v3986
  %v3988 = vpop.f32.mrf.mxu0
  %v3989 = vadd.f32 0.0, %v3988
  %3990 = vmatmul.bf16.gmra.mxu0 %v3726
  %v3991 = vpop.f32.mrf.mxu0
  %v3992 = vadd.f32 0.0, %v3991
  %v3993 = vpop.f32.mrf.mxu0
  %v3994 = vadd.f32 0.0, %v3993
  %3995 = vmatmul.bf16.gmra.mxu0 %v3729
  %v3996 = vpop.f32.mrf.mxu0
  %v3997 = vadd.f32 0.0, %v3996
  %v3998 = vpop.f32.mrf.mxu0
  %v3999 = vadd.f32 0.0, %v3998
  %4000 = vmatmul.bf16.gmra.mxu0 %v3732
  %v4001 = vpop.f32.mrf.mxu0
  %v4002 = vadd.f32 0.0, %v4001
  %v4003 = vpop.f32.mrf.mxu0
  %v4004 = vadd.f32 0.0, %v4003
  %4005 = vmatmul.bf16.gmra.mxu0 %v3735
  %v4006 = vpop.f32.mrf.mxu0
  %v4007 = vadd.f32 0.0, %v4006
  %v4008 = vpop.f32.mrf.mxu0
  %v4009 = vadd.f32 0.0, %v4008
  %4010 = vmatmul.bf16.gmra.mxu0 %v3738
  %v4011 = vpop.f32.mrf.mxu0
  %v4012 = vadd.f32 0.0, %v4011
  %v4013 = vpop.f32.mrf.mxu0
  %v4014 = vadd.f32 0.0, %v4013
  %4015 = vmatmul.bf16.gmra.mxu0 %v3741
  %v4016 = vpop.f32.mrf.mxu0
  %v4017 = vadd.f32 0.0, %v4016
  %v4018 = vpop.f32.mrf.mxu0
  %v4019 = vadd.f32 0.0, %v4018
  %4020 = vmatmul.bf16.gmra.mxu0 %v3744
  %v4021 = vpop.f32.mrf.mxu0
  %v4022 = vadd.f32 0.0, %v4021
  %v4023 = vpop.f32.mrf.mxu0
  %v4024 = vadd.f32 0.0, %v4023
  %4025 = vmatmul.bf16.gmra.mxu0 %v3747
  %v4026 = vpop.f32.mrf.mxu0
  %v4027 = vadd.f32 0.0, %v4026
  %v4028 = vpop.f32.mrf.mxu0
  %v4029 = vadd.f32 0.0, %v4028
  %4030 = vmatmul.bf16.gmra.mxu0 %v3750
  %v4031 = vpop.f32.mrf.mxu0
  %v4032 = vadd.f32 0.0, %v4031
  %v4033 = vpop.f32.mrf.mxu0
  %v4034 = vadd.f32 0.0, %v4033
  %4035 = vmatmul.bf16.gmra.mxu0 %v3753
  %v4036 = vpop.f32.mrf.mxu0
  %v4037 = vadd.f32 0.0, %v4036
  %v4038 = vpop.f32.mrf.mxu0
  %v4039 = vadd.f32 0.0, %v4038
  %4040 = vmatmul.bf16.gmra.mxu0 %v3756
  %v4041 = vpop.f32.mrf.mxu0
  %v4042 = vadd.f32 0.0, %v4041
  %v4043 = vpop.f32.mrf.mxu0
  %v4044 = vadd.f32 0.0, %v4043
  %4045 = vmatmul.bf16.gmra.mxu0 %v3759
  %v4046 = vpop.f32.mrf.mxu0
  %v4047 = vadd.f32 0.0, %v4046
  %v4048 = vpop.f32.mrf.mxu0
  %v4049 = vadd.f32 0.0, %v4048
  %4050 = vmatmul.bf16.gmra.mxu0 %v3762
  %v4051 = vpop.f32.mrf.mxu0
  %v4052 = vadd.f32 0.0, %v4051
  %v4053 = vpop.f32.mrf.mxu0
  %v4054 = vadd.f32 0.0, %v4053
  %4055 = vmatmul.bf16.gmra.mxu0 %v3765
  %v4056 = vpop.f32.mrf.mxu0
  %v4057 = vadd.f32 0.0, %v4056
  %v4058 = vpop.f32.mrf.mxu0
  %v4059 = vadd.f32 0.0, %v4058
  %4060 = vmatmul.bf16.gmra.mxu0 %v3768
  %v4061 = vpop.f32.mrf.mxu0
  %v4062 = vadd.f32 0.0, %v4061
  %v4063 = vpop.f32.mrf.mxu0
  %v4064 = vadd.f32 0.0, %v4063
  %4065 = vmatmul.bf16.gmra.mxu0 %v3771
  %v4066 = vpop.f32.mrf.mxu0
  %v4067 = vadd.f32 0.0, %v4066
  %v4068 = vpop.f32.mrf.mxu0
  %v4069 = vadd.f32 0.0, %v4068
  %4070 = vmatmul.bf16.gmra.mxu0 %v3774
  %v4071 = vpop.f32.mrf.mxu0
  %v4072 = vadd.f32 0.0, %v4071
  %v4073 = vpop.f32.mrf.mxu0
  %v4074 = vadd.f32 0.0, %v4073
  %4075 = vmatmul.bf16.gmra.mxu0 %v3777
  %v4076 = vpop.f32.mrf.mxu0
  %v4077 = vadd.f32 0.0, %v4076
  %v4078 = vpop.f32.mrf.mxu0
  %v4079 = vadd.f32 0.0, %v4078
  %4080 = vmatmul.bf16.gmra.mxu0 %v3780
  %v4081 = vpop.f32.mrf.mxu0
  %v4082 = vadd.f32 0.0, %v4081
  %v4083 = vpop.f32.mrf.mxu0
  %v4084 = vadd.f32 0.0, %v4083
  %4085 = vmatmul.bf16.gmra.mxu0 %v3783
  %v4086 = vpop.f32.mrf.mxu0
  %v4087 = vadd.f32 0.0, %v4086
  %v4088 = vpop.f32.mrf.mxu0
  %v4089 = vadd.f32 0.0, %v4088
  %4090 = vmatmul.bf16.gmra.mxu0 %v3786
  %v4091 = vpop.f32.mrf.mxu0
  %v4092 = vadd.f32 0.0, %v4091
  %v4093 = vpop.f32.mrf.mxu0
  %v4094 = vadd.f32 0.0, %v4093
  %4095 = vmatmul.bf16.gmra.mxu0 %v3789
  %v4096 = vpop.f32.mrf.mxu0
  %v4097 = vadd.f32 0.0, %v4096
  %v4098 = vpop.f32.mrf.mxu0
  %v4099 = vadd.f32 0.0, %v4098
  %4100 = vmatmul.bf16.gmra.mxu0 %v3792
  %v4101 = vpop.f32.mrf.mxu0
  %v4102 = vadd.f32 0.0, %v4101
  %v4103 = vpop.f32.mrf.mxu0
  %v4104 = vadd.f32 0.0, %v4103
  %4105 = vmatmul.bf16.gmra.mxu0 %v3795
  %v4106 = vpop.f32.mrf.mxu0
  %v4107 = vadd.f32 0.0, %v4106
  %v4108 = vpop.f32.mrf.mxu0
  %v4109 = vadd.f32 0.0, %v4108
  %4110 = vmatmul.bf16.gmra.mxu0 %v3798
  %v4111 = vpop.f32.mrf.mxu0
  %v4112 = vadd.f32 0.0, %v4111
  %v4113 = vpop.f32.mrf.mxu0
  %v4114 = vadd.f32 0.0, %v4113
  %4115 = vmatmul.bf16.gmra.mxu0 %v3801
  %v4116 = vpop.f32.mrf.mxu0
  %v4117 = vadd.f32 0.0, %v4116
  %v4118 = vpop.f32.mrf.mxu0
  %v4119 = vadd.f32 0.0, %v4118
  %4120 = vmatmul.bf16.gmra.mxu0 %v3804
  %v4121 = vpop.f32.mrf.mxu0
  %v4122 = vadd.f32 0.0, %v4121
  %v4123 = vpop.f32.mrf.mxu0
  %v4124 = vadd.f32 0.0, %v4123
  %4125 = vmatmul.bf16.gmra.mxu0 %v3807
  %v4126 = vpop.f32.mrf.mxu0
  %v4127 = vadd.f32 0.0, %v4126
  %v4128 = vpop.f32.mrf.mxu0
  %v4129 = vadd.f32 0.0, %v4128
  %4130 = vmatmul.bf16.gmra.mxu0 %v3810
  %v4131 = vpop.f32.mrf.mxu0
  %v4132 = vadd.f32 0.0, %v4131
  %v4133 = vpop.f32.mrf.mxu0
  %v4134 = vadd.f32 0.0, %v4133
  %4135 = vmatmul.bf16.gmra.mxu0 %v3813
  %v4136 = vpop.f32.mrf.mxu0
  %v4137 = vadd.f32 0.0, %v4136
  %v4138 = vpop.f32.mrf.mxu0
  %v4139 = vadd.f32 0.0, %v4138
  %4140 = vmatmul.bf16.gmra.mxu0 %v3816
  %v4141 = vpop.f32.mrf.mxu0
  %v4142 = vadd.f32 0.0, %v4141
  %v4143 = vpop.f32.mrf.mxu0
  %v4144 = vadd.f32 0.0, %v4143
  %4145 = vmatmul.bf16.gmra.mxu0 %v3819
  %v4146 = vpop.f32.mrf.mxu0
  %v4147 = vadd.f32 0.0, %v4146
  %v4148 = vpop.f32.mrf.mxu0
  %v4149 = vadd.f32 0.0, %v4148
  %4150 = vmatmul.bf16.gmra.mxu0 %v3822
  %v4151 = vpop.f32.mrf.mxu0
  %v4152 = vadd.f32 0.0, %v4151
  %v4153 = vpop.f32.mrf.mxu0
  %v4154 = vadd.f32 0.0, %v4153
  %4155 = vdwg.mxu0
  %v4156 = vadd.f32 %v3235, %v3837
  %v4157 = vadd.f32 %v3236, %v3839
  %v4158 = vadd.f32 %v3237, %v3842
  %v4159 = vadd.f32 %v3238, %v3844
  %v4160 = vadd.f32 %v3239, %v3847
  %v4161 = vadd.f32 %v3240, %v3849
  %v4162 = vadd.f32 %v3241, %v3852
  %v4163 = vadd.f32 %v3242, %v3854
  %v4164 = vadd.f32 %v3243, %v3857
  %v4165 = vadd.f32 %v3244, %v3859
  %v4166 = vadd.f32 %v3245, %v3862
  %v4167 = vadd.f32 %v3246, %v3864
  %v4168 = vadd.f32 %v3247, %v3867
  %v4169 = vadd.f32 %v3248, %v3869
  %v4170 = vadd.f32 %v3249, %v3872
  %v4171 = vadd.f32 %v3250, %v3874
  %v4172 = vadd.f32 %v3251, %v3877
  %v4173 = vadd.f32 %v3252, %v3879
  %v4174 = vadd.f32 %v3253, %v3882
  %v4175 = vadd.f32 %v3254, %v3884
  %v4176 = vadd.f32 %v3255, %v3887
  %v4177 = vadd.f32 %v3256, %v3889
  %v4178 = vadd.f32 %v3257, %v3892
  %v4179 = vadd.f32 %v3258, %v3894
  %v4180 = vadd.f32 %v3259, %v3897
  %v4181 = vadd.f32 %v3260, %v3899
  %v4182 = vadd.f32 %v3261, %v3902
  %v4183 = vadd.f32 %v3262, %v3904
  %v4184 = vadd.f32 %v3263, %v3907
  %v4185 = vadd.f32 %v3264, %v3909
  %v4186 = vadd.f32 %v3265, %v3912
  %v4187 = vadd.f32 %v3266, %v3914
  %v4188 = vadd.f32 %v3267, %v3917
  %v4189 = vadd.f32 %v3268, %v3919
  %v4190 = vadd.f32 %v3269, %v3922
  %v4191 = vadd.f32 %v3270, %v3924
  %v4192 = vadd.f32 %v3271, %v3927
  %v4193 = vadd.f32 %v3272, %v3929
  %v4194 = vadd.f32 %v3273, %v3932
  %v4195 = vadd.f32 %v3274, %v3934
  %v4196 = vadd.f32 %v3275, %v3937
  %v4197 = vadd.f32 %v3276, %v3939
  %v4198 = vadd.f32 %v3277, %v3942
  %v4199 = vadd.f32 %v3278, %v3944
  %v4200 = vadd.f32 %v3279, %v3947
  %v4201 = vadd.f32 %v3280, %v3949
  %v4202 = vadd.f32 %v3281, %v3952
  %v4203 = vadd.f32 %v3282, %v3954
  %v4204 = vadd.f32 %v3283, %v3957
  %v4205 = vadd.f32 %v3284, %v3959
  %v4206 = vadd.f32 %v3285, %v3962
  %v4207 = vadd.f32 %v3286, %v3964
  %v4208 = vadd.f32 %v3287, %v3967
  %v4209 = vadd.f32 %v3288, %v3969
  %v4210 = vadd.f32 %v3289, %v3972
  %v4211 = vadd.f32 %v3290, %v3974
  %v4212 = vadd.f32 %v3291, %v3977
  %v4213 = vadd.f32 %v3292, %v3979
  %v4214 = vadd.f32 %v3293, %v3982
  %v4215 = vadd.f32 %v3294, %v3984
  %v4216 = vadd.f32 %v3295, %v3987
  %v4217 = vadd.f32 %v3296, %v3989
  %v4218 = vadd.f32 %v3297, %v3992
  %v4219 = vadd.f32 %v3298, %v3994
  %v4220 = vadd.f32 %v3299, %v3997
  %v4221 = vadd.f32 %v3300, %v3999
  %v4222 = vadd.f32 %v3301, %v4002
  %v4223 = vadd.f32 %v3302, %v4004
  %v4224 = vadd.f32 %v3303, %v4007
  %v4225 = vadd.f32 %v3304, %v4009
  %v4226 = vadd.f32 %v3305, %v4012
  %v4227 = vadd.f32 %v3306, %v4014
  %v4228 = vadd.f32 %v3307, %v4017
  %v4229 = vadd.f32 %v3308, %v4019
  %v4230 = vadd.f32 %v3309, %v4022
  %v4231 = vadd.f32 %v3310, %v4024
  %v4232 = vadd.f32 %v3311, %v4027
  %v4233 = vadd.f32 %v3312, %v4029
  %v4234 = vadd.f32 %v3313, %v4032
  %v4235 = vadd.f32 %v3314, %v4034
  %v4236 = vadd.f32 %v3315, %v4037
  %v4237 = vadd.f32 %v3316, %v4039
  %v4238 = vadd.f32 %v3317, %v4042
  %v4239 = vadd.f32 %v3318, %v4044
  %v4240 = vadd.f32 %v3319, %v4047
  %v4241 = vadd.f32 %v3320, %v4049
  %v4242 = vadd.f32 %v3321, %v4052
  %v4243 = vadd.f32 %v3322, %v4054
  %v4244 = vadd.f32 %v3323, %v4057
  %v4245 = vadd.f32 %v3324, %v4059
  %v4246 = vadd.f32 %v3325, %v4062
  %v4247 = vadd.f32 %v3326, %v4064
  %v4248 = vadd.f32 %v3327, %v4067
  %v4249 = vadd.f32 %v3328, %v4069
  %v4250 = vadd.f32 %v3329, %v4072
  %v4251 = vadd.f32 %v3330, %v4074
  %v4252 = vadd.f32 %v3331, %v4077
  %v4253 = vadd.f32 %v3332, %v4079
  %v4254 = vadd.f32 %v3333, %v4082
  %v4255 = vadd.f32 %v3334, %v4084
  %v4256 = vadd.f32 %v3335, %v4087
  %v4257 = vadd.f32 %v3336, %v4089
  %v4258 = vadd.f32 %v3337, %v4092
  %v4259 = vadd.f32 %v3338, %v4094
  %v4260 = vadd.f32 %v3339, %v4097
  %v4261 = vadd.f32 %v3340, %v4099
  %v4262 = vadd.f32 %v3341, %v4102
  %v4263 = vadd.f32 %v3342, %v4104
  %v4264 = vadd.f32 %v3343, %v4107
  %v4265 = vadd.f32 %v3344, %v4109
  %v4266 = vadd.f32 %v3345, %v4112
  %v4267 = vadd.f32 %v3346, %v4114
  %v4268 = vadd.f32 %v3347, %v4117
  %v4269 = vadd.f32 %v3348, %v4119
  %v4270 = vadd.f32 %v3349, %v4122
  %v4271 = vadd.f32 %v3350, %v4124
  %v4272 = vadd.f32 %v3351, %v4127
  %v4273 = vadd.f32 %v3352, %v4129
  %v4274 = vadd.f32 %v3353, %v4132
  %v4275 = vadd.f32 %v3354, %v4134
  %v4276 = vadd.f32 %v3355, %v4137
  %v4277 = vadd.f32 %v3356, %v4139
  %v4278 = vadd.f32 %v3357, %v4142
  %v4279 = vadd.f32 %v3358, %v4144
  %v4280 = vadd.f32 %v3359, %v4147
  %v4281 = vadd.f32 %v3360, %v4149
  %v4282 = vadd.f32 %v3361, %v4152
  %v4283 = vadd.f32 %v3362, %v4154
  %s4284 = scalar_lea.vmem %s3, 10
  %v4285 = vld [vmem:[%s4284] sm:$0x3]
  %vm4286 = vcmask 1045504
  %v4287 = vrot.slane %v528, 2
  %v4288 = vrot.slane %v529, 2
  %v4289 = vsel %vm4286, %v4287, %v4288
  %v4290 = vrot.slane %v530, 2
  %v4291 = vsel %vm4286, %v4288, %v4290
  %v4292 = vrot.slane %v531, 2
  %v4293 = vsel %vm4286, %v4290, %v4292
  %v4294 = vrot.slane %v532, 2
  %v4295 = vsel %vm4286, %v4292, %v4294
  %v4296 = vrot.slane %v533, 2
  %v4297 = vsel %vm4286, %v4294, %v4296
  %v4298 = vrot.slane %v534, 2
  %v4299 = vsel %vm4286, %v4296, %v4298
  %v4300 = vrot.slane %v535, 2
  %v4301 = vsel %vm4286, %v4298, %v4300
  %v4302 = vrot.slane %v536, 2
  %v4303 = vsel %vm4286, %v4300, %v4302
  %v4304 = vrot.slane %v537, 2
  %v4305 = vsel %vm4286, %v4302, %v4304
  %v4306 = vrot.slane %v538, 2
  %v4307 = vsel %vm4286, %v4304, %v4306
  %v4308 = vrot.slane %v539, 2
  %v4309 = vsel %vm4286, %v4306, %v4308
  %v4310 = vrot.slane %v540, 2
  %v4311 = vsel %vm4286, %v4308, %v4310
  %v4312 = vrot.slane %v541, 2
  %v4313 = vsel %vm4286, %v4310, %v4312
  %v4314 = vrot.slane %v542, 2
  %v4315 = vsel %vm4286, %v4312, %v4314
  %v4316 = vrot.slane %v543, 2
  %v4317 = vsel %vm4286, %v4314, %v4316
  %v4318 = vrot.slane %v544, 2
  %v4319 = vsel %vm4286, %v4316, %v4318
  %v4320 = vrot.slane %v545, 2
  %v4321 = vsel %vm4286, %v4318, %v4320
  %v4322 = vrot.slane %v546, 2
  %v4323 = vsel %vm4286, %v4320, %v4322
  %v4324 = vrot.slane %v547, 2
  %v4325 = vsel %vm4286, %v4322, %v4324
  %v4326 = vrot.slane %v548, 2
  %v4327 = vsel %vm4286, %v4324, %v4326
  %v4328 = vrot.slane %v549, 2
  %v4329 = vsel %vm4286, %v4326, %v4328
  %v4330 = vrot.slane %v550, 2
  %v4331 = vsel %vm4286, %v4328, %v4330
  %v4332 = vrot.slane %v551, 2
  %v4333 = vsel %vm4286, %v4330, %v4332
  %v4334 = vrot.slane %v552, 2
  %v4335 = vsel %vm4286, %v4332, %v4334
  %v4336 = vrot.slane %v553, 2
  %v4337 = vsel %vm4286, %v4334, %v4336
  %v4338 = vrot.slane %v554, 2
  %v4339 = vsel %vm4286, %v4336, %v4338
  %v4340 = vrot.slane %v555, 2
  %v4341 = vsel %vm4286, %v4338, %v4340
  %v4342 = vrot.slane %v556, 2
  %v4343 = vsel %vm4286, %v4340, %v4342
  %v4344 = vrot.slane %v557, 2
  %v4345 = vsel %vm4286, %v4342, %v4344
  %v4346 = vrot.slane %v558, 2
  %v4347 = vsel %vm4286, %v4344, %v4346
  %v4348 = vrot.slane %v559, 2
  %v4349 = vsel %vm4286, %v4346, %v4348
  %v4350 = vrot.slane %v560, 2
  %v4351 = vsel %vm4286, %v4348, %v4350
  %v4352 = vrot.slane %v561, 2
  %v4353 = vsel %vm4286, %v4350, %v4352
  %v4354 = vrot.slane %v562, 2
  %v4355 = vsel %vm4286, %v4352, %v4354
  %v4356 = vrot.slane %v563, 2
  %v4357 = vsel %vm4286, %v4354, %v4356
  %v4358 = vrot.slane %v564, 2
  %v4359 = vsel %vm4286, %v4356, %v4358
  %v4360 = vrot.slane %v565, 2
  %v4361 = vsel %vm4286, %v4358, %v4360
  %v4362 = vrot.slane %v566, 2
  %v4363 = vsel %vm4286, %v4360, %v4362
  %v4364 = vrot.slane %v567, 2
  %v4365 = vsel %vm4286, %v4362, %v4364
  %v4366 = vrot.slane %v568, 2
  %v4367 = vsel %vm4286, %v4364, %v4366
  %v4368 = vrot.slane %v569, 2
  %v4369 = vsel %vm4286, %v4366, %v4368
  %v4370 = vrot.slane %v570, 2
  %v4371 = vsel %vm4286, %v4368, %v4370
  %v4372 = vrot.slane %v571, 2
  %v4373 = vsel %vm4286, %v4370, %v4372
  %v4374 = vrot.slane %v572, 2
  %v4375 = vsel %vm4286, %v4372, %v4374
  %v4376 = vrot.slane %v573, 2
  %v4377 = vsel %vm4286, %v4374, %v4376
  %v4378 = vrot.slane %v574, 2
  %v4379 = vsel %vm4286, %v4376, %v4378
  %v4380 = vrot.slane %v575, 2
  %v4381 = vsel %vm4286, %v4378, %v4380
  %v4382 = vrot.slane %v576, 2
  %v4383 = vsel %vm4286, %v4380, %v4382
  %v4384 = vrot.slane %v577, 2
  %v4385 = vsel %vm4286, %v4382, %v4384
  %v4386 = vrot.slane %v578, 2
  %v4387 = vsel %vm4286, %v4384, %v4386
  %v4388 = vrot.slane %v579, 2
  %v4389 = vsel %vm4286, %v4386, %v4388
  %v4390 = vrot.slane %v580, 2
  %v4391 = vsel %vm4286, %v4388, %v4390
  %v4392 = vrot.slane %v581, 2
  %v4393 = vsel %vm4286, %v4390, %v4392
  %v4394 = vrot.slane %v582, 2
  %v4395 = vsel %vm4286, %v4392, %v4394
  %v4396 = vrot.slane %v583, 2
  %v4397 = vsel %vm4286, %v4394, %v4396
  %v4398 = vrot.slane %v584, 2
  %v4399 = vsel %vm4286, %v4396, %v4398
  %v4400 = vrot.slane %v585, 2
  %v4401 = vsel %vm4286, %v4398, %v4400
  %v4402 = vrot.slane %v586, 2
  %v4403 = vsel %vm4286, %v4400, %v4402
  %v4404 = vrot.slane %v587, 2
  %v4405 = vsel %vm4286, %v4402, %v4404
  %v4406 = vrot.slane %v588, 2
  %v4407 = vsel %vm4286, %v4404, %v4406
  %v4408 = vrot.slane %v589, 2
  %v4409 = vsel %vm4286, %v4406, %v4408
  %v4410 = vrot.slane %v590, 2
  %v4411 = vsel %vm4286, %v4408, %v4410
  %v4412 = vrot.slane %v603, 2
  %v4413 = vsel %vm4286, %v4410, %v4412
  %v4414 = vrot.slane %v604, 2
  %v4415 = vsel %vm4286, %v4412, %v4414
  %v4417 = vsel %vm1126, %v4289, 0
  %v4420 = vsel %vm1126, %v4291, 0
  %v4423 = vsel %vm1126, %v4293, 0
  %v4426 = vsel %vm1126, %v4295, 0
  %v4429 = vsel %vm1126, %v4297, 0
  %v4432 = vsel %vm1126, %v4299, 0
  %v4435 = vsel %vm1126, %v4301, 0
  %v4438 = vsel %vm1126, %v4303, 0
  %v4441 = vsel %vm1126, %v4305, 0
  %v4444 = vsel %vm1126, %v4307, 0
  %v4447 = vsel %vm1126, %v4309, 0
  %v4450 = vsel %vm1126, %v4311, 0
  %v4453 = vsel %vm1126, %v4313, 0
  %v4456 = vsel %vm1126, %v4315, 0
  %v4459 = vsel %vm1126, %v4317, 0
  %v4462 = vsel %vm1126, %v4319, 0
  %v4465 = vsel %vm1126, %v4321, 0
  %v4468 = vsel %vm1126, %v4323, 0
  %v4471 = vsel %vm1126, %v4325, 0
  %v4474 = vsel %vm1126, %v4327, 0
  %v4477 = vsel %vm1126, %v4329, 0
  %v4480 = vsel %vm1126, %v4331, 0
  %v4483 = vsel %vm1126, %v4333, 0
  %v4486 = vsel %vm1126, %v4335, 0
  %v4489 = vsel %vm1126, %v4337, 0
  %v4492 = vsel %vm1126, %v4339, 0
  %v4495 = vsel %vm1126, %v4341, 0
  %v4498 = vsel %vm1126, %v4343, 0
  %v4501 = vsel %vm1126, %v4345, 0
  %v4504 = vsel %vm1126, %v4347, 0
  %v4507 = vsel %vm1126, %v4349, 0
  %v4510 = vsel %vm1126, %v4351, 0
  %v4513 = vsel %vm1126, %v4353, 0
  %v4516 = vsel %vm1126, %v4355, 0
  %v4519 = vsel %vm1126, %v4357, 0
  %v4522 = vsel %vm1126, %v4359, 0
  %v4525 = vsel %vm1126, %v4361, 0
  %v4528 = vsel %vm1126, %v4363, 0
  %v4531 = vsel %vm1126, %v4365, 0
  %v4534 = vsel %vm1126, %v4367, 0
  %v4537 = vsel %vm1126, %v4369, 0
  %v4540 = vsel %vm1126, %v4371, 0
  %v4543 = vsel %vm1126, %v4373, 0
  %v4546 = vsel %vm1126, %v4375, 0
  %v4549 = vsel %vm1126, %v4377, 0
  %v4552 = vsel %vm1126, %v4379, 0
  %v4555 = vsel %vm1126, %v4381, 0
  %v4558 = vsel %vm1126, %v4383, 0
  %v4561 = vsel %vm1126, %v4385, 0
  %v4564 = vsel %vm1126, %v4387, 0
  %v4567 = vsel %vm1126, %v4389, 0
  %v4570 = vsel %vm1126, %v4391, 0
  %v4573 = vsel %vm1126, %v4393, 0
  %v4576 = vsel %vm1126, %v4395, 0
  %v4579 = vsel %vm1126, %v4397, 0
  %v4582 = vsel %vm1126, %v4399, 0
  %v4585 = vsel %vm1126, %v4401, 0
  %v4588 = vsel %vm1126, %v4403, 0
  %v4591 = vsel %vm1126, %v4405, 0
  %v4594 = vsel %vm1126, %v4407, 0
  %v4597 = vsel %vm1126, %v4409, 0
  %v4600 = vsel %vm1126, %v4411, 0
  %v4603 = vsel %vm1126, %v4413, 0
  %v4606 = vsel %vm1126, %v4415, 0
  %v4609 = vsel %vm1319, %v4285, 0
  %4611 = vmatpush.bf16.msra.mxu0 0
  %4612 = vmatpush.bf16.msra.mxu0 0
  %4613 = vmatpush.bf16.msra.mxu0 0
  %4614 = vmatpush.bf16.msra.mxu0 0
  %4615 = vmatpush.bf16.msra.mxu0 0
  %4616 = vmatpush.bf16.msra.mxu0 0
  %4617 = vmatpush.bf16.msra.mxu0 0
  %4618 = vmatpush.bf16.msra.mxu0 %v4609
  %4619 = vmatmul.bf16.gmra.mxu0 %v4417
  %v4620 = vpop.f32.mrf.mxu0
  %v4621 = vadd.f32 0.0, %v4620
  %v4622 = vpop.f32.mrf.mxu0
  %v4623 = vadd.f32 0.0, %v4622
  %4624 = vmatmul.bf16.gmra.mxu0 %v4420
  %v4625 = vpop.f32.mrf.mxu0
  %v4626 = vadd.f32 0.0, %v4625
  %v4627 = vpop.f32.mrf.mxu0
  %v4628 = vadd.f32 0.0, %v4627
  %4629 = vmatmul.bf16.gmra.mxu0 %v4423
  %v4630 = vpop.f32.mrf.mxu0
  %v4631 = vadd.f32 0.0, %v4630
  %v4632 = vpop.f32.mrf.mxu0
  %v4633 = vadd.f32 0.0, %v4632
  %4634 = vmatmul.bf16.gmra.mxu0 %v4426
  %v4635 = vpop.f32.mrf.mxu0
  %v4636 = vadd.f32 0.0, %v4635
  %v4637 = vpop.f32.mrf.mxu0
  %v4638 = vadd.f32 0.0, %v4637
  %4639 = vmatmul.bf16.gmra.mxu0 %v4429
  %v4640 = vpop.f32.mrf.mxu0
  %v4641 = vadd.f32 0.0, %v4640
  %v4642 = vpop.f32.mrf.mxu0
  %v4643 = vadd.f32 0.0, %v4642
  %4644 = vmatmul.bf16.gmra.mxu0 %v4432
  %v4645 = vpop.f32.mrf.mxu0
  %v4646 = vadd.f32 0.0, %v4645
  %v4647 = vpop.f32.mrf.mxu0
  %v4648 = vadd.f32 0.0, %v4647
  %4649 = vmatmul.bf16.gmra.mxu0 %v4435
  %v4650 = vpop.f32.mrf.mxu0
  %v4651 = vadd.f32 0.0, %v4650
  %v4652 = vpop.f32.mrf.mxu0
  %v4653 = vadd.f32 0.0, %v4652
  %4654 = vmatmul.bf16.gmra.mxu0 %v4438
  %v4655 = vpop.f32.mrf.mxu0
  %v4656 = vadd.f32 0.0, %v4655
  %v4657 = vpop.f32.mrf.mxu0
  %v4658 = vadd.f32 0.0, %v4657
  %4659 = vmatmul.bf16.gmra.mxu0 %v4441
  %v4660 = vpop.f32.mrf.mxu0
  %v4661 = vadd.f32 0.0, %v4660
  %v4662 = vpop.f32.mrf.mxu0
  %v4663 = vadd.f32 0.0, %v4662
  %4664 = vmatmul.bf16.gmra.mxu0 %v4444
  %v4665 = vpop.f32.mrf.mxu0
  %v4666 = vadd.f32 0.0, %v4665
  %v4667 = vpop.f32.mrf.mxu0
  %v4668 = vadd.f32 0.0, %v4667
  %4669 = vmatmul.bf16.gmra.mxu0 %v4447
  %v4670 = vpop.f32.mrf.mxu0
  %v4671 = vadd.f32 0.0, %v4670
  %v4672 = vpop.f32.mrf.mxu0
  %v4673 = vadd.f32 0.0, %v4672
  %4674 = vmatmul.bf16.gmra.mxu0 %v4450
  %v4675 = vpop.f32.mrf.mxu0
  %v4676 = vadd.f32 0.0, %v4675
  %v4677 = vpop.f32.mrf.mxu0
  %v4678 = vadd.f32 0.0, %v4677
  %4679 = vmatmul.bf16.gmra.mxu0 %v4453
  %v4680 = vpop.f32.mrf.mxu0
  %v4681 = vadd.f32 0.0, %v4680
  %v4682 = vpop.f32.mrf.mxu0
  %v4683 = vadd.f32 0.0, %v4682
  %4684 = vmatmul.bf16.gmra.mxu0 %v4456
  %v4685 = vpop.f32.mrf.mxu0
  %v4686 = vadd.f32 0.0, %v4685
  %v4687 = vpop.f32.mrf.mxu0
  %v4688 = vadd.f32 0.0, %v4687
  %4689 = vmatmul.bf16.gmra.mxu0 %v4459
  %v4690 = vpop.f32.mrf.mxu0
  %v4691 = vadd.f32 0.0, %v4690
  %v4692 = vpop.f32.mrf.mxu0
  %v4693 = vadd.f32 0.0, %v4692
  %4694 = vmatmul.bf16.gmra.mxu0 %v4462
  %v4695 = vpop.f32.mrf.mxu0
  %v4696 = vadd.f32 0.0, %v4695
  %v4697 = vpop.f32.mrf.mxu0
  %v4698 = vadd.f32 0.0, %v4697
  %4699 = vmatmul.bf16.gmra.mxu0 %v4465
  %v4700 = vpop.f32.mrf.mxu0
  %v4701 = vadd.f32 0.0, %v4700
  %v4702 = vpop.f32.mrf.mxu0
  %v4703 = vadd.f32 0.0, %v4702
  %4704 = vmatmul.bf16.gmra.mxu0 %v4468
  %v4705 = vpop.f32.mrf.mxu0
  %v4706 = vadd.f32 0.0, %v4705
  %v4707 = vpop.f32.mrf.mxu0
  %v4708 = vadd.f32 0.0, %v4707
  %4709 = vmatmul.bf16.gmra.mxu0 %v4471
  %v4710 = vpop.f32.mrf.mxu0
  %v4711 = vadd.f32 0.0, %v4710
  %v4712 = vpop.f32.mrf.mxu0
  %v4713 = vadd.f32 0.0, %v4712
  %4714 = vmatmul.bf16.gmra.mxu0 %v4474
  %v4715 = vpop.f32.mrf.mxu0
  %v4716 = vadd.f32 0.0, %v4715
  %v4717 = vpop.f32.mrf.mxu0
  %v4718 = vadd.f32 0.0, %v4717
  %4719 = vmatmul.bf16.gmra.mxu0 %v4477
  %v4720 = vpop.f32.mrf.mxu0
  %v4721 = vadd.f32 0.0, %v4720
  %v4722 = vpop.f32.mrf.mxu0
  %v4723 = vadd.f32 0.0, %v4722
  %4724 = vmatmul.bf16.gmra.mxu0 %v4480
  %v4725 = vpop.f32.mrf.mxu0
  %v4726 = vadd.f32 0.0, %v4725
  %v4727 = vpop.f32.mrf.mxu0
  %v4728 = vadd.f32 0.0, %v4727
  %4729 = vmatmul.bf16.gmra.mxu0 %v4483
  %v4730 = vpop.f32.mrf.mxu0
  %v4731 = vadd.f32 0.0, %v4730
  %v4732 = vpop.f32.mrf.mxu0
  %v4733 = vadd.f32 0.0, %v4732
  %4734 = vmatmul.bf16.gmra.mxu0 %v4486
  %v4735 = vpop.f32.mrf.mxu0
  %v4736 = vadd.f32 0.0, %v4735
  %v4737 = vpop.f32.mrf.mxu0
  %v4738 = vadd.f32 0.0, %v4737
  %4739 = vmatmul.bf16.gmra.mxu0 %v4489
  %v4740 = vpop.f32.mrf.mxu0
  %v4741 = vadd.f32 0.0, %v4740
  %v4742 = vpop.f32.mrf.mxu0
  %v4743 = vadd.f32 0.0, %v4742
  %4744 = vmatmul.bf16.gmra.mxu0 %v4492
  %v4745 = vpop.f32.mrf.mxu0
  %v4746 = vadd.f32 0.0, %v4745
  %v4747 = vpop.f32.mrf.mxu0
  %v4748 = vadd.f32 0.0, %v4747
  %4749 = vmatmul.bf16.gmra.mxu0 %v4495
  %v4750 = vpop.f32.mrf.mxu0
  %v4751 = vadd.f32 0.0, %v4750
  %v4752 = vpop.f32.mrf.mxu0
  %v4753 = vadd.f32 0.0, %v4752
  %4754 = vmatmul.bf16.gmra.mxu0 %v4498
  %v4755 = vpop.f32.mrf.mxu0
  %v4756 = vadd.f32 0.0, %v4755
  %v4757 = vpop.f32.mrf.mxu0
  %v4758 = vadd.f32 0.0, %v4757
  %4759 = vmatmul.bf16.gmra.mxu0 %v4501
  %v4760 = vpop.f32.mrf.mxu0
  %v4761 = vadd.f32 0.0, %v4760
  %v4762 = vpop.f32.mrf.mxu0
  %v4763 = vadd.f32 0.0, %v4762
  %4764 = vmatmul.bf16.gmra.mxu0 %v4504
  %v4765 = vpop.f32.mrf.mxu0
  %v4766 = vadd.f32 0.0, %v4765
  %v4767 = vpop.f32.mrf.mxu0
  %v4768 = vadd.f32 0.0, %v4767
  %4769 = vmatmul.bf16.gmra.mxu0 %v4507
  %v4770 = vpop.f32.mrf.mxu0
  %v4771 = vadd.f32 0.0, %v4770
  %v4772 = vpop.f32.mrf.mxu0
  %v4773 = vadd.f32 0.0, %v4772
  %4774 = vmatmul.bf16.gmra.mxu0 %v4510
  %v4775 = vpop.f32.mrf.mxu0
  %v4776 = vadd.f32 0.0, %v4775
  %v4777 = vpop.f32.mrf.mxu0
  %v4778 = vadd.f32 0.0, %v4777
  %4779 = vmatmul.bf16.gmra.mxu0 %v4513
  %v4780 = vpop.f32.mrf.mxu0
  %v4781 = vadd.f32 0.0, %v4780
  %v4782 = vpop.f32.mrf.mxu0
  %v4783 = vadd.f32 0.0, %v4782
  %4784 = vmatmul.bf16.gmra.mxu0 %v4516
  %v4785 = vpop.f32.mrf.mxu0
  %v4786 = vadd.f32 0.0, %v4785
  %v4787 = vpop.f32.mrf.mxu0
  %v4788 = vadd.f32 0.0, %v4787
  %4789 = vmatmul.bf16.gmra.mxu0 %v4519
  %v4790 = vpop.f32.mrf.mxu0
  %v4791 = vadd.f32 0.0, %v4790
  %v4792 = vpop.f32.mrf.mxu0
  %v4793 = vadd.f32 0.0, %v4792
  %4794 = vmatmul.bf16.gmra.mxu0 %v4522
  %v4795 = vpop.f32.mrf.mxu0
  %v4796 = vadd.f32 0.0, %v4795
  %v4797 = vpop.f32.mrf.mxu0
  %v4798 = vadd.f32 0.0, %v4797
  %4799 = vmatmul.bf16.gmra.mxu0 %v4525
  %v4800 = vpop.f32.mrf.mxu0
  %v4801 = vadd.f32 0.0, %v4800
  %v4802 = vpop.f32.mrf.mxu0
  %v4803 = vadd.f32 0.0, %v4802
  %4804 = vmatmul.bf16.gmra.mxu0 %v4528
  %v4805 = vpop.f32.mrf.mxu0
  %v4806 = vadd.f32 0.0, %v4805
  %v4807 = vpop.f32.mrf.mxu0
  %v4808 = vadd.f32 0.0, %v4807
  %4809 = vmatmul.bf16.gmra.mxu0 %v4531
  %v4810 = vpop.f32.mrf.mxu0
  %v4811 = vadd.f32 0.0, %v4810
  %v4812 = vpop.f32.mrf.mxu0
  %v4813 = vadd.f32 0.0, %v4812
  %4814 = vmatmul.bf16.gmra.mxu0 %v4534
  %v4815 = vpop.f32.mrf.mxu0
  %v4816 = vadd.f32 0.0, %v4815
  %v4817 = vpop.f32.mrf.mxu0
  %v4818 = vadd.f32 0.0, %v4817
  %4819 = vmatmul.bf16.gmra.mxu0 %v4537
  %v4820 = vpop.f32.mrf.mxu0
  %v4821 = vadd.f32 0.0, %v4820
  %v4822 = vpop.f32.mrf.mxu0
  %v4823 = vadd.f32 0.0, %v4822
  %4824 = vmatmul.bf16.gmra.mxu0 %v4540
  %v4825 = vpop.f32.mrf.mxu0
  %v4826 = vadd.f32 0.0, %v4825
  %v4827 = vpop.f32.mrf.mxu0
  %v4828 = vadd.f32 0.0, %v4827
  %4829 = vmatmul.bf16.gmra.mxu0 %v4543
  %v4830 = vpop.f32.mrf.mxu0
  %v4831 = vadd.f32 0.0, %v4830
  %v4832 = vpop.f32.mrf.mxu0
  %v4833 = vadd.f32 0.0, %v4832
  %4834 = vmatmul.bf16.gmra.mxu0 %v4546
  %v4835 = vpop.f32.mrf.mxu0
  %v4836 = vadd.f32 0.0, %v4835
  %v4837 = vpop.f32.mrf.mxu0
  %v4838 = vadd.f32 0.0, %v4837
  %4839 = vmatmul.bf16.gmra.mxu0 %v4549
  %v4840 = vpop.f32.mrf.mxu0
  %v4841 = vadd.f32 0.0, %v4840
  %v4842 = vpop.f32.mrf.mxu0
  %v4843 = vadd.f32 0.0, %v4842
  %4844 = vmatmul.bf16.gmra.mxu0 %v4552
  %v4845 = vpop.f32.mrf.mxu0
  %v4846 = vadd.f32 0.0, %v4845
  %v4847 = vpop.f32.mrf.mxu0
  %v4848 = vadd.f32 0.0, %v4847
  %4849 = vmatmul.bf16.gmra.mxu0 %v4555
  %v4850 = vpop.f32.mrf.mxu0
  %v4851 = vadd.f32 0.0, %v4850
  %v4852 = vpop.f32.mrf.mxu0
  %v4853 = vadd.f32 0.0, %v4852
  %4854 = vmatmul.bf16.gmra.mxu0 %v4558
  %v4855 = vpop.f32.mrf.mxu0
  %v4856 = vadd.f32 0.0, %v4855
  %v4857 = vpop.f32.mrf.mxu0
  %v4858 = vadd.f32 0.0, %v4857
  %4859 = vmatmul.bf16.gmra.mxu0 %v4561
  %v4860 = vpop.f32.mrf.mxu0
  %v4861 = vadd.f32 0.0, %v4860
  %v4862 = vpop.f32.mrf.mxu0
  %v4863 = vadd.f32 0.0, %v4862
  %4864 = vmatmul.bf16.gmra.mxu0 %v4564
  %v4865 = vpop.f32.mrf.mxu0
  %v4866 = vadd.f32 0.0, %v4865
  %v4867 = vpop.f32.mrf.mxu0
  %v4868 = vadd.f32 0.0, %v4867
  %4869 = vmatmul.bf16.gmra.mxu0 %v4567
  %v4870 = vpop.f32.mrf.mxu0
  %v4871 = vadd.f32 0.0, %v4870
  %v4872 = vpop.f32.mrf.mxu0
  %v4873 = vadd.f32 0.0, %v4872
  %4874 = vmatmul.bf16.gmra.mxu0 %v4570
  %v4875 = vpop.f32.mrf.mxu0
  %v4876 = vadd.f32 0.0, %v4875
  %v4877 = vpop.f32.mrf.mxu0
  %v4878 = vadd.f32 0.0, %v4877
  %4879 = vmatmul.bf16.gmra.mxu0 %v4573
  %v4880 = vpop.f32.mrf.mxu0
  %v4881 = vadd.f32 0.0, %v4880
  %v4882 = vpop.f32.mrf.mxu0
  %v4883 = vadd.f32 0.0, %v4882
  %4884 = vmatmul.bf16.gmra.mxu0 %v4576
  %v4885 = vpop.f32.mrf.mxu0
  %v4886 = vadd.f32 0.0, %v4885
  %v4887 = vpop.f32.mrf.mxu0
  %v4888 = vadd.f32 0.0, %v4887
  %4889 = vmatmul.bf16.gmra.mxu0 %v4579
  %v4890 = vpop.f32.mrf.mxu0
  %v4891 = vadd.f32 0.0, %v4890
  %v4892 = vpop.f32.mrf.mxu0
  %v4893 = vadd.f32 0.0, %v4892
  %4894 = vmatmul.bf16.gmra.mxu0 %v4582
  %v4895 = vpop.f32.mrf.mxu0
  %v4896 = vadd.f32 0.0, %v4895
  %v4897 = vpop.f32.mrf.mxu0
  %v4898 = vadd.f32 0.0, %v4897
  %4899 = vmatmul.bf16.gmra.mxu0 %v4585
  %v4900 = vpop.f32.mrf.mxu0
  %v4901 = vadd.f32 0.0, %v4900
  %v4902 = vpop.f32.mrf.mxu0
  %v4903 = vadd.f32 0.0, %v4902
  %4904 = vmatmul.bf16.gmra.mxu0 %v4588
  %v4905 = vpop.f32.mrf.mxu0
  %v4906 = vadd.f32 0.0, %v4905
  %v4907 = vpop.f32.mrf.mxu0
  %v4908 = vadd.f32 0.0, %v4907
  %4909 = vmatmul.bf16.gmra.mxu0 %v4591
  %v4910 = vpop.f32.mrf.mxu0
  %v4911 = vadd.f32 0.0, %v4910
  %v4912 = vpop.f32.mrf.mxu0
  %v4913 = vadd.f32 0.0, %v4912
  %4914 = vmatmul.bf16.gmra.mxu0 %v4594
  %v4915 = vpop.f32.mrf.mxu0
  %v4916 = vadd.f32 0.0, %v4915
  %v4917 = vpop.f32.mrf.mxu0
  %v4918 = vadd.f32 0.0, %v4917
  %4919 = vmatmul.bf16.gmra.mxu0 %v4597
  %v4920 = vpop.f32.mrf.mxu0
  %v4921 = vadd.f32 0.0, %v4920
  %v4922 = vpop.f32.mrf.mxu0
  %v4923 = vadd.f32 0.0, %v4922
  %4924 = vmatmul.bf16.gmra.mxu0 %v4600
  %v4925 = vpop.f32.mrf.mxu0
  %v4926 = vadd.f32 0.0, %v4925
  %v4927 = vpop.f32.mrf.mxu0
  %v4928 = vadd.f32 0.0, %v4927
  %4929 = vmatmul.bf16.gmra.mxu0 %v4603
  %v4930 = vpop.f32.mrf.mxu0
  %v4931 = vadd.f32 0.0, %v4930
  %v4932 = vpop.f32.mrf.mxu0
  %v4933 = vadd.f32 0.0, %v4932
  %4934 = vmatmul.bf16.gmra.mxu0 %v4606
  %v4935 = vpop.f32.mrf.mxu0
  %v4936 = vadd.f32 0.0, %v4935
  %v4937 = vpop.f32.mrf.mxu0
  %v4938 = vadd.f32 0.0, %v4937
  %4939 = vdwg.mxu0
  %v4940 = vadd.f32 %v4156, %v4621
  %v4941 = vadd.f32 %v4157, %v4623
  %v4942 = vadd.f32 %v4158, %v4626
  %v4943 = vadd.f32 %v4159, %v4628
  %v4944 = vadd.f32 %v4160, %v4631
  %v4945 = vadd.f32 %v4161, %v4633
  %v4946 = vadd.f32 %v4162, %v4636
  %v4947 = vadd.f32 %v4163, %v4638
  %v4948 = vadd.f32 %v4164, %v4641
  %v4949 = vadd.f32 %v4165, %v4643
  %v4950 = vadd.f32 %v4166, %v4646
  %v4951 = vadd.f32 %v4167, %v4648
  %v4952 = vadd.f32 %v4168, %v4651
  %v4953 = vadd.f32 %v4169, %v4653
  %v4954 = vadd.f32 %v4170, %v4656
  %v4955 = vadd.f32 %v4171, %v4658
  %v4956 = vadd.f32 %v4172, %v4661
  %v4957 = vadd.f32 %v4173, %v4663
  %v4958 = vadd.f32 %v4174, %v4666
  %v4959 = vadd.f32 %v4175, %v4668
  %v4960 = vadd.f32 %v4176, %v4671
  %v4961 = vadd.f32 %v4177, %v4673
  %v4962 = vadd.f32 %v4178, %v4676
  %v4963 = vadd.f32 %v4179, %v4678
  %v4964 = vadd.f32 %v4180, %v4681
  %v4965 = vadd.f32 %v4181, %v4683
  %v4966 = vadd.f32 %v4182, %v4686
  %v4967 = vadd.f32 %v4183, %v4688
  %v4968 = vadd.f32 %v4184, %v4691
  %v4969 = vadd.f32 %v4185, %v4693
  %v4970 = vadd.f32 %v4186, %v4696
  %v4971 = vadd.f32 %v4187, %v4698
  %v4972 = vadd.f32 %v4188, %v4701
  %v4973 = vadd.f32 %v4189, %v4703
  %v4974 = vadd.f32 %v4190, %v4706
  %v4975 = vadd.f32 %v4191, %v4708
  %v4976 = vadd.f32 %v4192, %v4711
  %v4977 = vadd.f32 %v4193, %v4713
  %v4978 = vadd.f32 %v4194, %v4716
  %v4979 = vadd.f32 %v4195, %v4718
  %v4980 = vadd.f32 %v4196, %v4721
  %v4981 = vadd.f32 %v4197, %v4723
  %v4982 = vadd.f32 %v4198, %v4726
  %v4983 = vadd.f32 %v4199, %v4728
  %v4984 = vadd.f32 %v4200, %v4731
  %v4985 = vadd.f32 %v4201, %v4733
  %v4986 = vadd.f32 %v4202, %v4736
  %v4987 = vadd.f32 %v4203, %v4738
  %v4988 = vadd.f32 %v4204, %v4741
  %v4989 = vadd.f32 %v4205, %v4743
  %v4990 = vadd.f32 %v4206, %v4746
  %v4991 = vadd.f32 %v4207, %v4748
  %v4992 = vadd.f32 %v4208, %v4751
  %v4993 = vadd.f32 %v4209, %v4753
  %v4994 = vadd.f32 %v4210, %v4756
  %v4995 = vadd.f32 %v4211, %v4758
  %v4996 = vadd.f32 %v4212, %v4761
  %v4997 = vadd.f32 %v4213, %v4763
  %v4998 = vadd.f32 %v4214, %v4766
  %v4999 = vadd.f32 %v4215, %v4768
  %v5000 = vadd.f32 %v4216, %v4771
  %v5001 = vadd.f32 %v4217, %v4773
  %v5002 = vadd.f32 %v4218, %v4776
  %v5003 = vadd.f32 %v4219, %v4778
  %v5004 = vadd.f32 %v4220, %v4781
  %v5005 = vadd.f32 %v4221, %v4783
  %v5006 = vadd.f32 %v4222, %v4786
  %v5007 = vadd.f32 %v4223, %v4788
  %v5008 = vadd.f32 %v4224, %v4791
  %v5009 = vadd.f32 %v4225, %v4793
  %v5010 = vadd.f32 %v4226, %v4796
  %v5011 = vadd.f32 %v4227, %v4798
  %v5012 = vadd.f32 %v4228, %v4801
  %v5013 = vadd.f32 %v4229, %v4803
  %v5014 = vadd.f32 %v4230, %v4806
  %v5015 = vadd.f32 %v4231, %v4808
  %v5016 = vadd.f32 %v4232, %v4811
  %v5017 = vadd.f32 %v4233, %v4813
  %v5018 = vadd.f32 %v4234, %v4816
  %v5019 = vadd.f32 %v4235, %v4818
  %v5020 = vadd.f32 %v4236, %v4821
  %v5021 = vadd.f32 %v4237, %v4823
  %v5022 = vadd.f32 %v4238, %v4826
  %v5023 = vadd.f32 %v4239, %v4828
  %v5024 = vadd.f32 %v4240, %v4831
  %v5025 = vadd.f32 %v4241, %v4833
  %v5026 = vadd.f32 %v4242, %v4836
  %v5027 = vadd.f32 %v4243, %v4838
  %v5028 = vadd.f32 %v4244, %v4841
  %v5029 = vadd.f32 %v4245, %v4843
  %v5030 = vadd.f32 %v4246, %v4846
  %v5031 = vadd.f32 %v4247, %v4848
  %v5032 = vadd.f32 %v4248, %v4851
  %v5033 = vadd.f32 %v4249, %v4853
  %v5034 = vadd.f32 %v4250, %v4856
  %v5035 = vadd.f32 %v4251, %v4858
  %v5036 = vadd.f32 %v4252, %v4861
  %v5037 = vadd.f32 %v4253, %v4863
  %v5038 = vadd.f32 %v4254, %v4866
  %v5039 = vadd.f32 %v4255, %v4868
  %v5040 = vadd.f32 %v4256, %v4871
  %v5041 = vadd.f32 %v4257, %v4873
  %v5042 = vadd.f32 %v4258, %v4876
  %v5043 = vadd.f32 %v4259, %v4878
  %v5044 = vadd.f32 %v4260, %v4881
  %v5045 = vadd.f32 %v4261, %v4883
  %v5046 = vadd.f32 %v4262, %v4886
  %v5047 = vadd.f32 %v4263, %v4888
  %v5048 = vadd.f32 %v4264, %v4891
  %v5049 = vadd.f32 %v4265, %v4893
  %v5050 = vadd.f32 %v4266, %v4896
  %v5051 = vadd.f32 %v4267, %v4898
  %v5052 = vadd.f32 %v4268, %v4901
  %v5053 = vadd.f32 %v4269, %v4903
  %v5054 = vadd.f32 %v4270, %v4906
  %v5055 = vadd.f32 %v4271, %v4908
  %v5056 = vadd.f32 %v4272, %v4911
  %v5057 = vadd.f32 %v4273, %v4913
  %v5058 = vadd.f32 %v4274, %v4916
  %v5059 = vadd.f32 %v4275, %v4918
  %v5060 = vadd.f32 %v4276, %v4921
  %v5061 = vadd.f32 %v4277, %v4923
  %v5062 = vadd.f32 %v4278, %v4926
  %v5063 = vadd.f32 %v4279, %v4928
  %v5064 = vadd.f32 %v4280, %v4931
  %v5065 = vadd.f32 %v4281, %v4933
  %v5066 = vadd.f32 %v4282, %v4936
  %v5067 = vadd.f32 %v4283, %v4938
  %s5068 = scalar_lea.vmem %s3, 12
  %v5069 = vld [vmem:[%s5068] sm:$0x3]
  %v5070 = vrot.slane %v605, 2
  %v5071 = vsel %vm4286, %v4414, %v5070
  %v5073 = vsel %vm1126, %v5071, 0
  %v5076 = vsel %vm1319, %v5069, 0
  %5078 = vmatpush.bf16.msra.mxu0 0
  %5079 = vmatpush.bf16.msra.mxu0 0
  %5080 = vmatpush.bf16.msra.mxu0 0
  %5081 = vmatpush.bf16.msra.mxu0 0
  %5082 = vmatpush.bf16.msra.mxu0 0
  %5083 = vmatpush.bf16.msra.mxu0 0
  %5084 = vmatpush.bf16.msra.mxu0 0
  %5085 = vmatpush.bf16.msra.mxu0 %v5076
  %5086 = vmatmul.bf16.gmra.mxu0 %v4420
  %v5087 = vpop.f32.mrf.mxu0
  %v5088 = vadd.f32 0.0, %v5087
  %v5089 = vpop.f32.mrf.mxu0
  %v5090 = vadd.f32 0.0, %v5089
  %5091 = vmatmul.bf16.gmra.mxu0 %v4423
  %v5092 = vpop.f32.mrf.mxu0
  %v5093 = vadd.f32 0.0, %v5092
  %v5094 = vpop.f32.mrf.mxu0
  %v5095 = vadd.f32 0.0, %v5094
  %5096 = vmatmul.bf16.gmra.mxu0 %v4426
  %v5097 = vpop.f32.mrf.mxu0
  %v5098 = vadd.f32 0.0, %v5097
  %v5099 = vpop.f32.mrf.mxu0
  %v5100 = vadd.f32 0.0, %v5099
  %5101 = vmatmul.bf16.gmra.mxu0 %v4429
  %v5102 = vpop.f32.mrf.mxu0
  %v5103 = vadd.f32 0.0, %v5102
  %v5104 = vpop.f32.mrf.mxu0
  %v5105 = vadd.f32 0.0, %v5104
  %5106 = vmatmul.bf16.gmra.mxu0 %v4432
  %v5107 = vpop.f32.mrf.mxu0
  %v5108 = vadd.f32 0.0, %v5107
  %v5109 = vpop.f32.mrf.mxu0
  %v5110 = vadd.f32 0.0, %v5109
  %5111 = vmatmul.bf16.gmra.mxu0 %v4435
  %v5112 = vpop.f32.mrf.mxu0
  %v5113 = vadd.f32 0.0, %v5112
  %v5114 = vpop.f32.mrf.mxu0
  %v5115 = vadd.f32 0.0, %v5114
  %5116 = vmatmul.bf16.gmra.mxu0 %v4438
  %v5117 = vpop.f32.mrf.mxu0
  %v5118 = vadd.f32 0.0, %v5117
  %v5119 = vpop.f32.mrf.mxu0
  %v5120 = vadd.f32 0.0, %v5119
  %5121 = vmatmul.bf16.gmra.mxu0 %v4441
  %v5122 = vpop.f32.mrf.mxu0
  %v5123 = vadd.f32 0.0, %v5122
  %v5124 = vpop.f32.mrf.mxu0
  %v5125 = vadd.f32 0.0, %v5124
  %5126 = vmatmul.bf16.gmra.mxu0 %v4444
  %v5127 = vpop.f32.mrf.mxu0
  %v5128 = vadd.f32 0.0, %v5127
  %v5129 = vpop.f32.mrf.mxu0
  %v5130 = vadd.f32 0.0, %v5129
  %5131 = vmatmul.bf16.gmra.mxu0 %v4447
  %v5132 = vpop.f32.mrf.mxu0
  %v5133 = vadd.f32 0.0, %v5132
  %v5134 = vpop.f32.mrf.mxu0
  %v5135 = vadd.f32 0.0, %v5134
  %5136 = vmatmul.bf16.gmra.mxu0 %v4450
  %v5137 = vpop.f32.mrf.mxu0
  %v5138 = vadd.f32 0.0, %v5137
  %v5139 = vpop.f32.mrf.mxu0
  %v5140 = vadd.f32 0.0, %v5139
  %5141 = vmatmul.bf16.gmra.mxu0 %v4453
  %v5142 = vpop.f32.mrf.mxu0
  %v5143 = vadd.f32 0.0, %v5142
  %v5144 = vpop.f32.mrf.mxu0
  %v5145 = vadd.f32 0.0, %v5144
  %5146 = vmatmul.bf16.gmra.mxu0 %v4456
  %v5147 = vpop.f32.mrf.mxu0
  %v5148 = vadd.f32 0.0, %v5147
  %v5149 = vpop.f32.mrf.mxu0
  %v5150 = vadd.f32 0.0, %v5149
  %5151 = vmatmul.bf16.gmra.mxu0 %v4459
  %v5152 = vpop.f32.mrf.mxu0
  %v5153 = vadd.f32 0.0, %v5152
  %v5154 = vpop.f32.mrf.mxu0
  %v5155 = vadd.f32 0.0, %v5154
  %5156 = vmatmul.bf16.gmra.mxu0 %v4462
  %v5157 = vpop.f32.mrf.mxu0
  %v5158 = vadd.f32 0.0, %v5157
  %v5159 = vpop.f32.mrf.mxu0
  %v5160 = vadd.f32 0.0, %v5159
  %5161 = vmatmul.bf16.gmra.mxu0 %v4465
  %v5162 = vpop.f32.mrf.mxu0
  %v5163 = vadd.f32 0.0, %v5162
  %v5164 = vpop.f32.mrf.mxu0
  %v5165 = vadd.f32 0.0, %v5164
  %5166 = vmatmul.bf16.gmra.mxu0 %v4468
  %v5167 = vpop.f32.mrf.mxu0
  %v5168 = vadd.f32 0.0, %v5167
  %v5169 = vpop.f32.mrf.mxu0
  %v5170 = vadd.f32 0.0, %v5169
  %5171 = vmatmul.bf16.gmra.mxu0 %v4471
  %v5172 = vpop.f32.mrf.mxu0
  %v5173 = vadd.f32 0.0, %v5172
  %v5174 = vpop.f32.mrf.mxu0
  %v5175 = vadd.f32 0.0, %v5174
  %5176 = vmatmul.bf16.gmra.mxu0 %v4474
  %v5177 = vpop.f32.mrf.mxu0
  %v5178 = vadd.f32 0.0, %v5177
  %v5179 = vpop.f32.mrf.mxu0
  %v5180 = vadd.f32 0.0, %v5179
  %5181 = vmatmul.bf16.gmra.mxu0 %v4477
  %v5182 = vpop.f32.mrf.mxu0
  %v5183 = vadd.f32 0.0, %v5182
  %v5184 = vpop.f32.mrf.mxu0
  %v5185 = vadd.f32 0.0, %v5184
  %5186 = vmatmul.bf16.gmra.mxu0 %v4480
  %v5187 = vpop.f32.mrf.mxu0
  %v5188 = vadd.f32 0.0, %v5187
  %v5189 = vpop.f32.mrf.mxu0
  %v5190 = vadd.f32 0.0, %v5189
  %5191 = vmatmul.bf16.gmra.mxu0 %v4483
  %v5192 = vpop.f32.mrf.mxu0
  %v5193 = vadd.f32 0.0, %v5192
  %v5194 = vpop.f32.mrf.mxu0
  %v5195 = vadd.f32 0.0, %v5194
  %5196 = vmatmul.bf16.gmra.mxu0 %v4486
  %v5197 = vpop.f32.mrf.mxu0
  %v5198 = vadd.f32 0.0, %v5197
  %v5199 = vpop.f32.mrf.mxu0
  %v5200 = vadd.f32 0.0, %v5199
  %5201 = vmatmul.bf16.gmra.mxu0 %v4489
  %v5202 = vpop.f32.mrf.mxu0
  %v5203 = vadd.f32 0.0, %v5202
  %v5204 = vpop.f32.mrf.mxu0
  %v5205 = vadd.f32 0.0, %v5204
  %5206 = vmatmul.bf16.gmra.mxu0 %v4492
  %v5207 = vpop.f32.mrf.mxu0
  %v5208 = vadd.f32 0.0, %v5207
  %v5209 = vpop.f32.mrf.mxu0
  %v5210 = vadd.f32 0.0, %v5209
  %5211 = vmatmul.bf16.gmra.mxu0 %v4495
  %v5212 = vpop.f32.mrf.mxu0
  %v5213 = vadd.f32 0.0, %v5212
  %v5214 = vpop.f32.mrf.mxu0
  %v5215 = vadd.f32 0.0, %v5214
  %5216 = vmatmul.bf16.gmra.mxu0 %v4498
  %v5217 = vpop.f32.mrf.mxu0
  %v5218 = vadd.f32 0.0, %v5217
  %v5219 = vpop.f32.mrf.mxu0
  %v5220 = vadd.f32 0.0, %v5219
  %5221 = vmatmul.bf16.gmra.mxu0 %v4501
  %v5222 = vpop.f32.mrf.mxu0
  %v5223 = vadd.f32 0.0, %v5222
  %v5224 = vpop.f32.mrf.mxu0
  %v5225 = vadd.f32 0.0, %v5224
  %5226 = vmatmul.bf16.gmra.mxu0 %v4504
  %v5227 = vpop.f32.mrf.mxu0
  %v5228 = vadd.f32 0.0, %v5227
  %v5229 = vpop.f32.mrf.mxu0
  %v5230 = vadd.f32 0.0, %v5229
  %5231 = vmatmul.bf16.gmra.mxu0 %v4507
  %v5232 = vpop.f32.mrf.mxu0
  %v5233 = vadd.f32 0.0, %v5232
  %v5234 = vpop.f32.mrf.mxu0
  %v5235 = vadd.f32 0.0, %v5234
  %5236 = vmatmul.bf16.gmra.mxu0 %v4510
  %v5237 = vpop.f32.mrf.mxu0
  %v5238 = vadd.f32 0.0, %v5237
  %v5239 = vpop.f32.mrf.mxu0
  %v5240 = vadd.f32 0.0, %v5239
  %5241 = vmatmul.bf16.gmra.mxu0 %v4513
  %v5242 = vpop.f32.mrf.mxu0
  %v5243 = vadd.f32 0.0, %v5242
  %v5244 = vpop.f32.mrf.mxu0
  %v5245 = vadd.f32 0.0, %v5244
  %5246 = vmatmul.bf16.gmra.mxu0 %v4516
  %v5247 = vpop.f32.mrf.mxu0
  %v5248 = vadd.f32 0.0, %v5247
  %v5249 = vpop.f32.mrf.mxu0
  %v5250 = vadd.f32 0.0, %v5249
  %5251 = vmatmul.bf16.gmra.mxu0 %v4519
  %v5252 = vpop.f32.mrf.mxu0
  %v5253 = vadd.f32 0.0, %v5252
  %v5254 = vpop.f32.mrf.mxu0
  %v5255 = vadd.f32 0.0, %v5254
  %5256 = vmatmul.bf16.gmra.mxu0 %v4522
  %v5257 = vpop.f32.mrf.mxu0
  %v5258 = vadd.f32 0.0, %v5257
  %v5259 = vpop.f32.mrf.mxu0
  %v5260 = vadd.f32 0.0, %v5259
  %5261 = vmatmul.bf16.gmra.mxu0 %v4525
  %v5262 = vpop.f32.mrf.mxu0
  %v5263 = vadd.f32 0.0, %v5262
  %v5264 = vpop.f32.mrf.mxu0
  %v5265 = vadd.f32 0.0, %v5264
  %5266 = vmatmul.bf16.gmra.mxu0 %v4528
  %v5267 = vpop.f32.mrf.mxu0
  %v5268 = vadd.f32 0.0, %v5267
  %v5269 = vpop.f32.mrf.mxu0
  %v5270 = vadd.f32 0.0, %v5269
  %5271 = vmatmul.bf16.gmra.mxu0 %v4531
  %v5272 = vpop.f32.mrf.mxu0
  %v5273 = vadd.f32 0.0, %v5272
  %v5274 = vpop.f32.mrf.mxu0
  %v5275 = vadd.f32 0.0, %v5274
  %5276 = vmatmul.bf16.gmra.mxu0 %v4534
  %v5277 = vpop.f32.mrf.mxu0
  %v5278 = vadd.f32 0.0, %v5277
  %v5279 = vpop.f32.mrf.mxu0
  %v5280 = vadd.f32 0.0, %v5279
  %5281 = vmatmul.bf16.gmra.mxu0 %v4537
  %v5282 = vpop.f32.mrf.mxu0
  %v5283 = vadd.f32 0.0, %v5282
  %v5284 = vpop.f32.mrf.mxu0
  %v5285 = vadd.f32 0.0, %v5284
  %5286 = vmatmul.bf16.gmra.mxu0 %v4540
  %v5287 = vpop.f32.mrf.mxu0
  %v5288 = vadd.f32 0.0, %v5287
  %v5289 = vpop.f32.mrf.mxu0
  %v5290 = vadd.f32 0.0, %v5289
  %5291 = vmatmul.bf16.gmra.mxu0 %v4543
  %v5292 = vpop.f32.mrf.mxu0
  %v5293 = vadd.f32 0.0, %v5292
  %v5294 = vpop.f32.mrf.mxu0
  %v5295 = vadd.f32 0.0, %v5294
  %5296 = vmatmul.bf16.gmra.mxu0 %v4546
  %v5297 = vpop.f32.mrf.mxu0
  %v5298 = vadd.f32 0.0, %v5297
  %v5299 = vpop.f32.mrf.mxu0
  %v5300 = vadd.f32 0.0, %v5299
  %5301 = vmatmul.bf16.gmra.mxu0 %v4549
  %v5302 = vpop.f32.mrf.mxu0
  %v5303 = vadd.f32 0.0, %v5302
  %v5304 = vpop.f32.mrf.mxu0
  %v5305 = vadd.f32 0.0, %v5304
  %5306 = vmatmul.bf16.gmra.mxu0 %v4552
  %v5307 = vpop.f32.mrf.mxu0
  %v5308 = vadd.f32 0.0, %v5307
  %v5309 = vpop.f32.mrf.mxu0
  %v5310 = vadd.f32 0.0, %v5309
  %5311 = vmatmul.bf16.gmra.mxu0 %v4555
  %v5312 = vpop.f32.mrf.mxu0
  %v5313 = vadd.f32 0.0, %v5312
  %v5314 = vpop.f32.mrf.mxu0
  %v5315 = vadd.f32 0.0, %v5314
  %5316 = vmatmul.bf16.gmra.mxu0 %v4558
  %v5317 = vpop.f32.mrf.mxu0
  %v5318 = vadd.f32 0.0, %v5317
  %v5319 = vpop.f32.mrf.mxu0
  %v5320 = vadd.f32 0.0, %v5319
  %5321 = vmatmul.bf16.gmra.mxu0 %v4561
  %v5322 = vpop.f32.mrf.mxu0
  %v5323 = vadd.f32 0.0, %v5322
  %v5324 = vpop.f32.mrf.mxu0
  %v5325 = vadd.f32 0.0, %v5324
  %5326 = vmatmul.bf16.gmra.mxu0 %v4564
  %v5327 = vpop.f32.mrf.mxu0
  %v5328 = vadd.f32 0.0, %v5327
  %v5329 = vpop.f32.mrf.mxu0
  %v5330 = vadd.f32 0.0, %v5329
  %5331 = vmatmul.bf16.gmra.mxu0 %v4567
  %v5332 = vpop.f32.mrf.mxu0
  %v5333 = vadd.f32 0.0, %v5332
  %v5334 = vpop.f32.mrf.mxu0
  %v5335 = vadd.f32 0.0, %v5334
  %5336 = vmatmul.bf16.gmra.mxu0 %v4570
  %v5337 = vpop.f32.mrf.mxu0
  %v5338 = vadd.f32 0.0, %v5337
  %v5339 = vpop.f32.mrf.mxu0
  %v5340 = vadd.f32 0.0, %v5339
  %5341 = vmatmul.bf16.gmra.mxu0 %v4573
  %v5342 = vpop.f32.mrf.mxu0
  %v5343 = vadd.f32 0.0, %v5342
  %v5344 = vpop.f32.mrf.mxu0
  %v5345 = vadd.f32 0.0, %v5344
  %5346 = vmatmul.bf16.gmra.mxu0 %v4576
  %v5347 = vpop.f32.mrf.mxu0
  %v5348 = vadd.f32 0.0, %v5347
  %v5349 = vpop.f32.mrf.mxu0
  %v5350 = vadd.f32 0.0, %v5349
  %5351 = vmatmul.bf16.gmra.mxu0 %v4579
  %v5352 = vpop.f32.mrf.mxu0
  %v5353 = vadd.f32 0.0, %v5352
  %v5354 = vpop.f32.mrf.mxu0
  %v5355 = vadd.f32 0.0, %v5354
  %5356 = vmatmul.bf16.gmra.mxu0 %v4582
  %v5357 = vpop.f32.mrf.mxu0
  %v5358 = vadd.f32 0.0, %v5357
  %v5359 = vpop.f32.mrf.mxu0
  %v5360 = vadd.f32 0.0, %v5359
  %5361 = vmatmul.bf16.gmra.mxu0 %v4585
  %v5362 = vpop.f32.mrf.mxu0
  %v5363 = vadd.f32 0.0, %v5362
  %v5364 = vpop.f32.mrf.mxu0
  %v5365 = vadd.f32 0.0, %v5364
  %5366 = vmatmul.bf16.gmra.mxu0 %v4588
  %v5367 = vpop.f32.mrf.mxu0
  %v5368 = vadd.f32 0.0, %v5367
  %v5369 = vpop.f32.mrf.mxu0
  %v5370 = vadd.f32 0.0, %v5369
  %5371 = vmatmul.bf16.gmra.mxu0 %v4591
  %v5372 = vpop.f32.mrf.mxu0
  %v5373 = vadd.f32 0.0, %v5372
  %v5374 = vpop.f32.mrf.mxu0
  %v5375 = vadd.f32 0.0, %v5374
  %5376 = vmatmul.bf16.gmra.mxu0 %v4594
  %v5377 = vpop.f32.mrf.mxu0
  %v5378 = vadd.f32 0.0, %v5377
  %v5379 = vpop.f32.mrf.mxu0
  %v5380 = vadd.f32 0.0, %v5379
  %5381 = vmatmul.bf16.gmra.mxu0 %v4597
  %v5382 = vpop.f32.mrf.mxu0
  %v5383 = vadd.f32 0.0, %v5382
  %v5384 = vpop.f32.mrf.mxu0
  %v5385 = vadd.f32 0.0, %v5384
  %5386 = vmatmul.bf16.gmra.mxu0 %v4600
  %v5387 = vpop.f32.mrf.mxu0
  %v5388 = vadd.f32 0.0, %v5387
  %v5389 = vpop.f32.mrf.mxu0
  %v5390 = vadd.f32 0.0, %v5389
  %5391 = vmatmul.bf16.gmra.mxu0 %v4603
  %v5392 = vpop.f32.mrf.mxu0
  %v5393 = vadd.f32 0.0, %v5392
  %v5394 = vpop.f32.mrf.mxu0
  %v5395 = vadd.f32 0.0, %v5394
  %5396 = vmatmul.bf16.gmra.mxu0 %v4606
  %v5397 = vpop.f32.mrf.mxu0
  %v5398 = vadd.f32 0.0, %v5397
  %v5399 = vpop.f32.mrf.mxu0
  %v5400 = vadd.f32 0.0, %v5399
  %5401 = vmatmul.bf16.gmra.mxu0 %v5073
  %v5402 = vpop.f32.mrf.mxu0
  %v5403 = vadd.f32 0.0, %v5402
  %v5404 = vpop.f32.mrf.mxu0
  %v5405 = vadd.f32 0.0, %v5404
  %5406 = vdwg.mxu0
  %v5407 = vadd.f32 %v4940, %v5088
  %v5408 = vadd.f32 %v4941, %v5090
  %v5409 = vadd.f32 %v4942, %v5093
  %v5410 = vadd.f32 %v4943, %v5095
  %v5411 = vadd.f32 %v4944, %v5098
  %v5412 = vadd.f32 %v4945, %v5100
  %v5413 = vadd.f32 %v4946, %v5103
  %v5414 = vadd.f32 %v4947, %v5105
  %v5415 = vadd.f32 %v4948, %v5108
  %v5416 = vadd.f32 %v4949, %v5110
  %v5417 = vadd.f32 %v4950, %v5113
  %v5418 = vadd.f32 %v4951, %v5115
  %v5419 = vadd.f32 %v4952, %v5118
  %v5420 = vadd.f32 %v4953, %v5120
  %v5421 = vadd.f32 %v4954, %v5123
  %v5422 = vadd.f32 %v4955, %v5125
  %v5423 = vadd.f32 %v4956, %v5128
  %v5424 = vadd.f32 %v4957, %v5130
  %v5425 = vadd.f32 %v4958, %v5133
  %v5426 = vadd.f32 %v4959, %v5135
  %v5427 = vadd.f32 %v4960, %v5138
  %v5428 = vadd.f32 %v4961, %v5140
  %v5429 = vadd.f32 %v4962, %v5143
  %v5430 = vadd.f32 %v4963, %v5145
  %v5431 = vadd.f32 %v4964, %v5148
  %v5432 = vadd.f32 %v4965, %v5150
  %v5433 = vadd.f32 %v4966, %v5153
  %v5434 = vadd.f32 %v4967, %v5155
  %v5435 = vadd.f32 %v4968, %v5158
  %v5436 = vadd.f32 %v4969, %v5160
  %v5437 = vadd.f32 %v4970, %v5163
  %v5438 = vadd.f32 %v4971, %v5165
  %v5439 = vadd.f32 %v4972, %v5168
  %v5440 = vadd.f32 %v4973, %v5170
  %v5441 = vadd.f32 %v4974, %v5173
  %v5442 = vadd.f32 %v4975, %v5175
  %v5443 = vadd.f32 %v4976, %v5178
  %v5444 = vadd.f32 %v4977, %v5180
  %v5445 = vadd.f32 %v4978, %v5183
  %v5446 = vadd.f32 %v4979, %v5185
  %v5447 = vadd.f32 %v4980, %v5188
  %v5448 = vadd.f32 %v4981, %v5190
  %v5449 = vadd.f32 %v4982, %v5193
  %v5450 = vadd.f32 %v4983, %v5195
  %v5451 = vadd.f32 %v4984, %v5198
  %v5452 = vadd.f32 %v4985, %v5200
  %v5453 = vadd.f32 %v4986, %v5203
  %v5454 = vadd.f32 %v4987, %v5205
  %v5455 = vadd.f32 %v4988, %v5208
  %v5456 = vadd.f32 %v4989, %v5210
  %v5457 = vadd.f32 %v4990, %v5213
  %v5458 = vadd.f32 %v4991, %v5215
  %v5459 = vadd.f32 %v4992, %v5218
  %v5460 = vadd.f32 %v4993, %v5220
  %v5461 = vadd.f32 %v4994, %v5223
  %v5462 = vadd.f32 %v4995, %v5225
  %v5463 = vadd.f32 %v4996, %v5228
  %v5464 = vadd.f32 %v4997, %v5230
  %v5465 = vadd.f32 %v4998, %v5233
  %v5466 = vadd.f32 %v4999, %v5235
  %v5467 = vadd.f32 %v5000, %v5238
  %v5468 = vadd.f32 %v5001, %v5240
  %v5469 = vadd.f32 %v5002, %v5243
  %v5470 = vadd.f32 %v5003, %v5245
  %v5471 = vadd.f32 %v5004, %v5248
  %v5472 = vadd.f32 %v5005, %v5250
  %v5473 = vadd.f32 %v5006, %v5253
  %v5474 = vadd.f32 %v5007, %v5255
  %v5475 = vadd.f32 %v5008, %v5258
  %v5476 = vadd.f32 %v5009, %v5260
  %v5477 = vadd.f32 %v5010, %v5263
  %v5478 = vadd.f32 %v5011, %v5265
  %v5479 = vadd.f32 %v5012, %v5268
  %v5480 = vadd.f32 %v5013, %v5270
  %v5481 = vadd.f32 %v5014, %v5273
  %v5482 = vadd.f32 %v5015, %v5275
  %v5483 = vadd.f32 %v5016, %v5278
  %v5484 = vadd.f32 %v5017, %v5280
  %v5485 = vadd.f32 %v5018, %v5283
  %v5486 = vadd.f32 %v5019, %v5285
  %v5487 = vadd.f32 %v5020, %v5288
  %v5488 = vadd.f32 %v5021, %v5290
  %v5489 = vadd.f32 %v5022, %v5293
  %v5490 = vadd.f32 %v5023, %v5295
  %v5491 = vadd.f32 %v5024, %v5298
  %v5492 = vadd.f32 %v5025, %v5300
  %v5493 = vadd.f32 %v5026, %v5303
  %v5494 = vadd.f32 %v5027, %v5305
  %v5495 = vadd.f32 %v5028, %v5308
  %v5496 = vadd.f32 %v5029, %v5310
  %v5497 = vadd.f32 %v5030, %v5313
  %v5498 = vadd.f32 %v5031, %v5315
  %v5499 = vadd.f32 %v5032, %v5318
  %v5500 = vadd.f32 %v5033, %v5320
  %v5501 = vadd.f32 %v5034, %v5323
  %v5502 = vadd.f32 %v5035, %v5325
  %v5503 = vadd.f32 %v5036, %v5328
  %v5504 = vadd.f32 %v5037, %v5330
  %v5505 = vadd.f32 %v5038, %v5333
  %v5506 = vadd.f32 %v5039, %v5335
  %v5507 = vadd.f32 %v5040, %v5338
  %v5508 = vadd.f32 %v5041, %v5340
  %v5509 = vadd.f32 %v5042, %v5343
  %v5510 = vadd.f32 %v5043, %v5345
  %v5511 = vadd.f32 %v5044, %v5348
  %v5512 = vadd.f32 %v5045, %v5350
  %v5513 = vadd.f32 %v5046, %v5353
  %v5514 = vadd.f32 %v5047, %v5355
  %v5515 = vadd.f32 %v5048, %v5358
  %v5516 = vadd.f32 %v5049, %v5360
  %v5517 = vadd.f32 %v5050, %v5363
  %v5518 = vadd.f32 %v5051, %v5365
  %v5519 = vadd.f32 %v5052, %v5368
  %v5520 = vadd.f32 %v5053, %v5370
  %v5521 = vadd.f32 %v5054, %v5373
  %v5522 = vadd.f32 %v5055, %v5375
  %v5523 = vadd.f32 %v5056, %v5378
  %v5524 = vadd.f32 %v5057, %v5380
  %v5525 = vadd.f32 %v5058, %v5383
  %v5526 = vadd.f32 %v5059, %v5385
  %v5527 = vadd.f32 %v5060, %v5388
  %v5528 = vadd.f32 %v5061, %v5390
  %v5529 = vadd.f32 %v5062, %v5393
  %v5530 = vadd.f32 %v5063, %v5395
  %v5531 = vadd.f32 %v5064, %v5398
  %v5532 = vadd.f32 %v5065, %v5400
  %v5533 = vadd.f32 %v5066, %v5403
  %v5534 = vadd.f32 %v5067, %v5405
  %s5535 = scalar_lea.vmem %s3, 14
  %v5536 = vld [vmem:[%s5535] sm:$0x3]
  %vm5537 = vsmask.f32 5376
  %v5538 = vrot.slane %v630, 2
  %v5539 = vrot.slane %v626, 3
  %v5540 = vor.u32 %v5538, %v5539
  %v5541 = vrot.slane %v638, 2
  %v5542 = vrot.slane %v634, 3
  %v5543 = vor.u32 %v5541, %v5542
  %v5544 = vsel %vm5537, %v5540, %v5543
  %v5545 = vrot.slane %v646, 2
  %v5546 = vrot.slane %v642, 3
  %v5547 = vor.u32 %v5545, %v5546
  %v5548 = vsel %vm5537, %v5543, %v5547
  %v5549 = vrot.slane %v654, 2
  %v5550 = vrot.slane %v650, 3
  %v5551 = vor.u32 %v5549, %v5550
  %v5552 = vsel %vm5537, %v5547, %v5551
  %v5553 = vrot.slane %v662, 2
  %v5554 = vrot.slane %v658, 3
  %v5555 = vor.u32 %v5553, %v5554
  %v5556 = vsel %vm5537, %v5551, %v5555
  %v5557 = vrot.slane %v670, 2
  %v5558 = vrot.slane %v666, 3
  %v5559 = vor.u32 %v5557, %v5558
  %v5560 = vsel %vm5537, %v5555, %v5559
  %v5561 = vrot.slane %v678, 2
  %v5562 = vrot.slane %v674, 3
  %v5563 = vor.u32 %v5561, %v5562
  %v5564 = vsel %vm5537, %v5559, %v5563
  %v5565 = vrot.slane %v686, 2
  %v5566 = vrot.slane %v682, 3
  %v5567 = vor.u32 %v5565, %v5566
  %v5568 = vsel %vm5537, %v5563, %v5567
  %v5569 = vrot.slane %v694, 2
  %v5570 = vrot.slane %v690, 3
  %v5571 = vor.u32 %v5569, %v5570
  %v5572 = vsel %vm5537, %v5567, %v5571
  %v5573 = vrot.slane %v702, 2
  %v5574 = vrot.slane %v698, 3
  %v5575 = vor.u32 %v5573, %v5574
  %v5576 = vsel %vm5537, %v5571, %v5575
  %v5577 = vrot.slane %v710, 2
  %v5578 = vrot.slane %v706, 3
  %v5579 = vor.u32 %v5577, %v5578
  %v5580 = vsel %vm5537, %v5575, %v5579
  %v5581 = vrot.slane %v718, 2
  %v5582 = vrot.slane %v714, 3
  %v5583 = vor.u32 %v5581, %v5582
  %v5584 = vsel %vm5537, %v5579, %v5583
  %v5585 = vrot.slane %v726, 2
  %v5586 = vrot.slane %v722, 3
  %v5587 = vor.u32 %v5585, %v5586
  %v5588 = vsel %vm5537, %v5583, %v5587
  %v5589 = vrot.slane %v734, 2
  %v5590 = vrot.slane %v730, 3
  %v5591 = vor.u32 %v5589, %v5590
  %v5592 = vsel %vm5537, %v5587, %v5591
  %v5593 = vrot.slane %v742, 2
  %v5594 = vrot.slane %v738, 3
  %v5595 = vor.u32 %v5593, %v5594
  %v5596 = vsel %vm5537, %v5591, %v5595
  %v5597 = vrot.slane %v750, 2
  %v5598 = vrot.slane %v746, 3
  %v5599 = vor.u32 %v5597, %v5598
  %v5600 = vsel %vm5537, %v5595, %v5599
  %v5601 = vrot.slane %v758, 2
  %v5602 = vrot.slane %v754, 3
  %v5603 = vor.u32 %v5601, %v5602
  %v5604 = vsel %vm5537, %v5599, %v5603
  %v5605 = vrot.slane %v766, 2
  %v5606 = vrot.slane %v762, 3
  %v5607 = vor.u32 %v5605, %v5606
  %v5608 = vsel %vm5537, %v5603, %v5607
  %v5609 = vrot.slane %v774, 2
  %v5610 = vrot.slane %v770, 3
  %v5611 = vor.u32 %v5609, %v5610
  %v5612 = vsel %vm5537, %v5607, %v5611
  %v5613 = vrot.slane %v782, 2
  %v5614 = vrot.slane %v778, 3
  %v5615 = vor.u32 %v5613, %v5614
  %v5616 = vsel %vm5537, %v5611, %v5615
  %v5617 = vrot.slane %v790, 2
  %v5618 = vrot.slane %v786, 3
  %v5619 = vor.u32 %v5617, %v5618
  %v5620 = vsel %vm5537, %v5615, %v5619
  %v5621 = vrot.slane %v798, 2
  %v5622 = vrot.slane %v794, 3
  %v5623 = vor.u32 %v5621, %v5622
  %v5624 = vsel %vm5537, %v5619, %v5623
  %v5625 = vrot.slane %v806, 2
  %v5626 = vrot.slane %v802, 3
  %v5627 = vor.u32 %v5625, %v5626
  %v5628 = vsel %vm5537, %v5623, %v5627
  %v5629 = vrot.slane %v814, 2
  %v5630 = vrot.slane %v810, 3
  %v5631 = vor.u32 %v5629, %v5630
  %v5632 = vsel %vm5537, %v5627, %v5631
  %v5633 = vrot.slane %v822, 2
  %v5634 = vrot.slane %v818, 3
  %v5635 = vor.u32 %v5633, %v5634
  %v5636 = vsel %vm5537, %v5631, %v5635
  %v5637 = vrot.slane %v830, 2
  %v5638 = vrot.slane %v826, 3
  %v5639 = vor.u32 %v5637, %v5638
  %v5640 = vsel %vm5537, %v5635, %v5639
  %v5641 = vrot.slane %v838, 2
  %v5642 = vrot.slane %v834, 3
  %v5643 = vor.u32 %v5641, %v5642
  %v5644 = vsel %vm5537, %v5639, %v5643
  %v5645 = vrot.slane %v846, 2
  %v5646 = vrot.slane %v842, 3
  %v5647 = vor.u32 %v5645, %v5646
  %v5648 = vsel %vm5537, %v5643, %v5647
  %v5649 = vrot.slane %v854, 2
  %v5650 = vrot.slane %v850, 3
  %v5651 = vor.u32 %v5649, %v5650
  %v5652 = vsel %vm5537, %v5647, %v5651
  %v5653 = vrot.slane %v862, 2
  %v5654 = vrot.slane %v858, 3
  %v5655 = vor.u32 %v5653, %v5654
  %v5656 = vsel %vm5537, %v5651, %v5655
  %v5657 = vrot.slane %v870, 2
  %v5658 = vrot.slane %v866, 3
  %v5659 = vor.u32 %v5657, %v5658
  %v5660 = vsel %vm5537, %v5655, %v5659
  %v5661 = vrot.slane %v878, 2
  %v5662 = vrot.slane %v874, 3
  %v5663 = vor.u32 %v5661, %v5662
  %v5664 = vsel %vm5537, %v5659, %v5663
  %v5665 = vrot.slane %v886, 2
  %v5666 = vrot.slane %v882, 3
  %v5667 = vor.u32 %v5665, %v5666
  %v5668 = vsel %vm5537, %v5663, %v5667
  %v5669 = vrot.slane %v894, 2
  %v5670 = vrot.slane %v890, 3
  %v5671 = vor.u32 %v5669, %v5670
  %v5672 = vsel %vm5537, %v5667, %v5671
  %v5673 = vrot.slane %v902, 2
  %v5674 = vrot.slane %v898, 3
  %v5675 = vor.u32 %v5673, %v5674
  %v5676 = vsel %vm5537, %v5671, %v5675
  %v5677 = vrot.slane %v910, 2
  %v5678 = vrot.slane %v906, 3
  %v5679 = vor.u32 %v5677, %v5678
  %v5680 = vsel %vm5537, %v5675, %v5679
  %v5681 = vrot.slane %v918, 2
  %v5682 = vrot.slane %v914, 3
  %v5683 = vor.u32 %v5681, %v5682
  %v5684 = vsel %vm5537, %v5679, %v5683
  %v5685 = vrot.slane %v926, 2
  %v5686 = vrot.slane %v922, 3
  %v5687 = vor.u32 %v5685, %v5686
  %v5688 = vsel %vm5537, %v5683, %v5687
  %v5689 = vrot.slane %v934, 2
  %v5690 = vrot.slane %v930, 3
  %v5691 = vor.u32 %v5689, %v5690
  %v5692 = vsel %vm5537, %v5687, %v5691
  %v5693 = vrot.slane %v942, 2
  %v5694 = vrot.slane %v938, 3
  %v5695 = vor.u32 %v5693, %v5694
  %v5696 = vsel %vm5537, %v5691, %v5695
  %v5697 = vrot.slane %v950, 2
  %v5698 = vrot.slane %v946, 3
  %v5699 = vor.u32 %v5697, %v5698
  %v5700 = vsel %vm5537, %v5695, %v5699
  %v5701 = vrot.slane %v958, 2
  %v5702 = vrot.slane %v954, 3
  %v5703 = vor.u32 %v5701, %v5702
  %v5704 = vsel %vm5537, %v5699, %v5703
  %v5705 = vrot.slane %v966, 2
  %v5706 = vrot.slane %v962, 3
  %v5707 = vor.u32 %v5705, %v5706
  %v5708 = vsel %vm5537, %v5703, %v5707
  %v5709 = vrot.slane %v974, 2
  %v5710 = vrot.slane %v970, 3
  %v5711 = vor.u32 %v5709, %v5710
  %v5712 = vsel %vm5537, %v5707, %v5711
  %v5713 = vrot.slane %v982, 2
  %v5714 = vrot.slane %v978, 3
  %v5715 = vor.u32 %v5713, %v5714
  %v5716 = vsel %vm5537, %v5711, %v5715
  %v5717 = vrot.slane %v990, 2
  %v5718 = vrot.slane %v986, 3
  %v5719 = vor.u32 %v5717, %v5718
  %v5720 = vsel %vm5537, %v5715, %v5719
  %v5721 = vrot.slane %v998, 2
  %v5722 = vrot.slane %v994, 3
  %v5723 = vor.u32 %v5721, %v5722
  %v5724 = vsel %vm5537, %v5719, %v5723
  %v5725 = vrot.slane %v1006, 2
  %v5726 = vrot.slane %v1002, 3
  %v5727 = vor.u32 %v5725, %v5726
  %v5728 = vsel %vm5537, %v5723, %v5727
  %v5729 = vrot.slane %v1014, 2
  %v5730 = vrot.slane %v1010, 3
  %v5731 = vor.u32 %v5729, %v5730
  %v5732 = vsel %vm5537, %v5727, %v5731
  %v5733 = vrot.slane %v1022, 2
  %v5734 = vrot.slane %v1018, 3
  %v5735 = vor.u32 %v5733, %v5734
  %v5736 = vsel %vm5537, %v5731, %v5735
  %v5737 = vrot.slane %v1030, 2
  %v5738 = vrot.slane %v1026, 3
  %v5739 = vor.u32 %v5737, %v5738
  %v5740 = vsel %vm5537, %v5735, %v5739
  %v5741 = vrot.slane %v1038, 2
  %v5742 = vrot.slane %v1034, 3
  %v5743 = vor.u32 %v5741, %v5742
  %v5744 = vsel %vm5537, %v5739, %v5743
  %v5745 = vrot.slane %v1046, 2
  %v5746 = vrot.slane %v1042, 3
  %v5747 = vor.u32 %v5745, %v5746
  %v5748 = vsel %vm5537, %v5743, %v5747
  %v5749 = vrot.slane %v1054, 2
  %v5750 = vrot.slane %v1050, 3
  %v5751 = vor.u32 %v5749, %v5750
  %v5752 = vsel %vm5537, %v5747, %v5751
  %v5753 = vrot.slane %v1062, 2
  %v5754 = vrot.slane %v1058, 3
  %v5755 = vor.u32 %v5753, %v5754
  %v5756 = vsel %vm5537, %v5751, %v5755
  %v5757 = vrot.slane %v1070, 2
  %v5758 = vrot.slane %v1066, 3
  %v5759 = vor.u32 %v5757, %v5758
  %v5760 = vsel %vm5537, %v5755, %v5759
  %v5761 = vrot.slane %v1078, 2
  %v5762 = vrot.slane %v1074, 3
  %v5763 = vor.u32 %v5761, %v5762
  %v5764 = vsel %vm5537, %v5759, %v5763
  %v5765 = vrot.slane %v1086, 2
  %v5766 = vrot.slane %v1082, 3
  %v5767 = vor.u32 %v5765, %v5766
  %v5768 = vsel %vm5537, %v5763, %v5767
  %v5769 = vrot.slane %v1094, 2
  %v5770 = vrot.slane %v1090, 3
  %v5771 = vor.u32 %v5769, %v5770
  %v5772 = vsel %vm5537, %v5767, %v5771
  %v5773 = vrot.slane %v1102, 2
  %v5774 = vrot.slane %v1098, 3
  %v5775 = vor.u32 %v5773, %v5774
  %v5776 = vsel %vm5537, %v5771, %v5775
  %v5777 = vrot.slane %v1110, 2
  %v5778 = vrot.slane %v1106, 3
  %v5779 = vor.u32 %v5777, %v5778
  %v5780 = vsel %vm5537, %v5775, %v5779
  %v5781 = vrot.slane %v1118, 2
  %v5782 = vrot.slane %v1114, 3
  %v5783 = vor.u32 %v5781, %v5782
  %v5784 = vsel %vm5537, %v5779, %v5783
  %v5785 = vrot.slane %v3617, 2
  %v5786 = vrot.slane %v1122, 3
  %v5787 = vor.u32 %v5785, %v5786
  %v5788 = vsel %vm5537, %v5783, %v5787
  %v5789 = vrot.slane %v3624, 2
  %v5790 = vrot.slane %v3627, 3
  %v5791 = vor.u32 %v5789, %v5790
  %v5792 = vsel %vm5537, %v5787, %v5791
  %v5794 = vshrl.u32 %v605, 16
  %v5796 = vrot.slane %v5794, 2
  %v5797 = vshll.u32 %v605, 16
  %v5799 = vrot.slane %v5797, 3
  %v5800 = vor.u32 %v5796, %v5799
  %v5801 = vsel %vm5537, %v5791, %v5800
  %v5803 = vsel %vm1126, %v5544, 0
  %v5806 = vsel %vm1126, %v5548, 0
  %v5809 = vsel %vm1126, %v5552, 0
  %v5812 = vsel %vm1126, %v5556, 0
  %v5815 = vsel %vm1126, %v5560, 0
  %v5818 = vsel %vm1126, %v5564, 0
  %v5821 = vsel %vm1126, %v5568, 0
  %v5824 = vsel %vm1126, %v5572, 0
  %v5827 = vsel %vm1126, %v5576, 0
  %v5830 = vsel %vm1126, %v5580, 0
  %v5833 = vsel %vm1126, %v5584, 0
  %v5836 = vsel %vm1126, %v5588, 0
  %v5839 = vsel %vm1126, %v5592, 0
  %v5842 = vsel %vm1126, %v5596, 0
  %v5845 = vsel %vm1126, %v5600, 0
  %v5848 = vsel %vm1126, %v5604, 0
  %v5851 = vsel %vm1126, %v5608, 0
  %v5854 = vsel %vm1126, %v5612, 0
  %v5857 = vsel %vm1126, %v5616, 0
  %v5860 = vsel %vm1126, %v5620, 0
  %v5863 = vsel %vm1126, %v5624, 0
  %v5866 = vsel %vm1126, %v5628, 0
  %v5869 = vsel %vm1126, %v5632, 0
  %v5872 = vsel %vm1126, %v5636, 0
  %v5875 = vsel %vm1126, %v5640, 0
  %v5878 = vsel %vm1126, %v5644, 0
  %v5881 = vsel %vm1126, %v5648, 0
  %v5884 = vsel %vm1126, %v5652, 0
  %v5887 = vsel %vm1126, %v5656, 0
  %v5890 = vsel %vm1126, %v5660, 0
  %v5893 = vsel %vm1126, %v5664, 0
  %v5896 = vsel %vm1126, %v5668, 0
  %v5899 = vsel %vm1126, %v5672, 0
  %v5902 = vsel %vm1126, %v5676, 0
  %v5905 = vsel %vm1126, %v5680, 0
  %v5908 = vsel %vm1126, %v5684, 0
  %v5911 = vsel %vm1126, %v5688, 0
  %v5914 = vsel %vm1126, %v5692, 0
  %v5917 = vsel %vm1126, %v5696, 0
  %v5920 = vsel %vm1126, %v5700, 0
  %v5923 = vsel %vm1126, %v5704, 0
  %v5926 = vsel %vm1126, %v5708, 0
  %v5929 = vsel %vm1126, %v5712, 0
  %v5932 = vsel %vm1126, %v5716, 0
  %v5935 = vsel %vm1126, %v5720, 0
  %v5938 = vsel %vm1126, %v5724, 0
  %v5941 = vsel %vm1126, %v5728, 0
  %v5944 = vsel %vm1126, %v5732, 0
  %v5947 = vsel %vm1126, %v5736, 0
  %v5950 = vsel %vm1126, %v5740, 0
  %v5953 = vsel %vm1126, %v5744, 0
  %v5956 = vsel %vm1126, %v5748, 0
  %v5959 = vsel %vm1126, %v5752, 0
  %v5962 = vsel %vm1126, %v5756, 0
  %v5965 = vsel %vm1126, %v5760, 0
  %v5968 = vsel %vm1126, %v5764, 0
  %v5971 = vsel %vm1126, %v5768, 0
  %v5974 = vsel %vm1126, %v5772, 0
  %v5977 = vsel %vm1126, %v5776, 0
  %v5980 = vsel %vm1126, %v5780, 0
  %v5983 = vsel %vm1126, %v5784, 0
  %v5986 = vsel %vm1126, %v5788, 0
  %v5989 = vsel %vm1126, %v5792, 0
  %v5992 = vsel %vm1126, %v5801, 0
  %v5995 = vsel %vm1319, %v5536, 0
  %5997 = vmatpush.bf16.msra.mxu0 0
  %5998 = vmatpush.bf16.msra.mxu0 0
  %5999 = vmatpush.bf16.msra.mxu0 0
  %6000 = vmatpush.bf16.msra.mxu0 0
  %6001 = vmatpush.bf16.msra.mxu0 0
  %6002 = vmatpush.bf16.msra.mxu0 0
  %6003 = vmatpush.bf16.msra.mxu0 0
  %6004 = vmatpush.bf16.msra.mxu0 %v5995
  %6005 = vmatmul.bf16.gmra.mxu0 %v5803
  %v6006 = vpop.f32.mrf.mxu0
  %v6007 = vadd.f32 0.0, %v6006
  %v6008 = vpop.f32.mrf.mxu0
  %v6009 = vadd.f32 0.0, %v6008
  %6010 = vmatmul.bf16.gmra.mxu0 %v5806
  %v6011 = vpop.f32.mrf.mxu0
  %v6012 = vadd.f32 0.0, %v6011
  %v6013 = vpop.f32.mrf.mxu0
  %v6014 = vadd.f32 0.0, %v6013
  %6015 = vmatmul.bf16.gmra.mxu0 %v5809
  %v6016 = vpop.f32.mrf.mxu0
  %v6017 = vadd.f32 0.0, %v6016
  %v6018 = vpop.f32.mrf.mxu0
  %v6019 = vadd.f32 0.0, %v6018
  %6020 = vmatmul.bf16.gmra.mxu0 %v5812
  %v6021 = vpop.f32.mrf.mxu0
  %v6022 = vadd.f32 0.0, %v6021
  %v6023 = vpop.f32.mrf.mxu0
  %v6024 = vadd.f32 0.0, %v6023
  %6025 = vmatmul.bf16.gmra.mxu0 %v5815
  %v6026 = vpop.f32.mrf.mxu0
  %v6027 = vadd.f32 0.0, %v6026
  %v6028 = vpop.f32.mrf.mxu0
  %v6029 = vadd.f32 0.0, %v6028
  %6030 = vmatmul.bf16.gmra.mxu0 %v5818
  %v6031 = vpop.f32.mrf.mxu0
  %v6032 = vadd.f32 0.0, %v6031
  %v6033 = vpop.f32.mrf.mxu0
  %v6034 = vadd.f32 0.0, %v6033
  %6035 = vmatmul.bf16.gmra.mxu0 %v5821
  %v6036 = vpop.f32.mrf.mxu0
  %v6037 = vadd.f32 0.0, %v6036
  %v6038 = vpop.f32.mrf.mxu0
  %v6039 = vadd.f32 0.0, %v6038
  %6040 = vmatmul.bf16.gmra.mxu0 %v5824
  %v6041 = vpop.f32.mrf.mxu0
  %v6042 = vadd.f32 0.0, %v6041
  %v6043 = vpop.f32.mrf.mxu0
  %v6044 = vadd.f32 0.0, %v6043
  %6045 = vmatmul.bf16.gmra.mxu0 %v5827
  %v6046 = vpop.f32.mrf.mxu0
  %v6047 = vadd.f32 0.0, %v6046
  %v6048 = vpop.f32.mrf.mxu0
  %v6049 = vadd.f32 0.0, %v6048
  %6050 = vmatmul.bf16.gmra.mxu0 %v5830
  %v6051 = vpop.f32.mrf.mxu0
  %v6052 = vadd.f32 0.0, %v6051
  %v6053 = vpop.f32.mrf.mxu0
  %v6054 = vadd.f32 0.0, %v6053
  %6055 = vmatmul.bf16.gmra.mxu0 %v5833
  %v6056 = vpop.f32.mrf.mxu0
  %v6057 = vadd.f32 0.0, %v6056
  %v6058 = vpop.f32.mrf.mxu0
  %v6059 = vadd.f32 0.0, %v6058
  %6060 = vmatmul.bf16.gmra.mxu0 %v5836
  %v6061 = vpop.f32.mrf.mxu0
  %v6062 = vadd.f32 0.0, %v6061
  %v6063 = vpop.f32.mrf.mxu0
  %v6064 = vadd.f32 0.0, %v6063
  %6065 = vmatmul.bf16.gmra.mxu0 %v5839
  %v6066 = vpop.f32.mrf.mxu0
  %v6067 = vadd.f32 0.0, %v6066
  %v6068 = vpop.f32.mrf.mxu0
  %v6069 = vadd.f32 0.0, %v6068
  %6070 = vmatmul.bf16.gmra.mxu0 %v5842
  %v6071 = vpop.f32.mrf.mxu0
  %v6072 = vadd.f32 0.0, %v6071
  %v6073 = vpop.f32.mrf.mxu0
  %v6074 = vadd.f32 0.0, %v6073
  %6075 = vmatmul.bf16.gmra.mxu0 %v5845
  %v6076 = vpop.f32.mrf.mxu0
  %v6077 = vadd.f32 0.0, %v6076
  %v6078 = vpop.f32.mrf.mxu0
  %v6079 = vadd.f32 0.0, %v6078
  %6080 = vmatmul.bf16.gmra.mxu0 %v5848
  %v6081 = vpop.f32.mrf.mxu0
  %v6082 = vadd.f32 0.0, %v6081
  %v6083 = vpop.f32.mrf.mxu0
  %v6084 = vadd.f32 0.0, %v6083
  %6085 = vmatmul.bf16.gmra.mxu0 %v5851
  %v6086 = vpop.f32.mrf.mxu0
  %v6087 = vadd.f32 0.0, %v6086
  %v6088 = vpop.f32.mrf.mxu0
  %v6089 = vadd.f32 0.0, %v6088
  %6090 = vmatmul.bf16.gmra.mxu0 %v5854
  %v6091 = vpop.f32.mrf.mxu0
  %v6092 = vadd.f32 0.0, %v6091
  %v6093 = vpop.f32.mrf.mxu0
  %v6094 = vadd.f32 0.0, %v6093
  %6095 = vmatmul.bf16.gmra.mxu0 %v5857
  %v6096 = vpop.f32.mrf.mxu0
  %v6097 = vadd.f32 0.0, %v6096
  %v6098 = vpop.f32.mrf.mxu0
  %v6099 = vadd.f32 0.0, %v6098
  %6100 = vmatmul.bf16.gmra.mxu0 %v5860
  %v6101 = vpop.f32.mrf.mxu0
  %v6102 = vadd.f32 0.0, %v6101
  %v6103 = vpop.f32.mrf.mxu0
  %v6104 = vadd.f32 0.0, %v6103
  %6105 = vmatmul.bf16.gmra.mxu0 %v5863
  %v6106 = vpop.f32.mrf.mxu0
  %v6107 = vadd.f32 0.0, %v6106
  %v6108 = vpop.f32.mrf.mxu0
  %v6109 = vadd.f32 0.0, %v6108
  %6110 = vmatmul.bf16.gmra.mxu0 %v5866
  %v6111 = vpop.f32.mrf.mxu0
  %v6112 = vadd.f32 0.0, %v6111
  %v6113 = vpop.f32.mrf.mxu0
  %v6114 = vadd.f32 0.0, %v6113
  %6115 = vmatmul.bf16.gmra.mxu0 %v5869
  %v6116 = vpop.f32.mrf.mxu0
  %v6117 = vadd.f32 0.0, %v6116
  %v6118 = vpop.f32.mrf.mxu0
  %v6119 = vadd.f32 0.0, %v6118
  %6120 = vmatmul.bf16.gmra.mxu0 %v5872
  %v6121 = vpop.f32.mrf.mxu0
  %v6122 = vadd.f32 0.0, %v6121
  %v6123 = vpop.f32.mrf.mxu0
  %v6124 = vadd.f32 0.0, %v6123
  %6125 = vmatmul.bf16.gmra.mxu0 %v5875
  %v6126 = vpop.f32.mrf.mxu0
  %v6127 = vadd.f32 0.0, %v6126
  %v6128 = vpop.f32.mrf.mxu0
  %v6129 = vadd.f32 0.0, %v6128
  %6130 = vmatmul.bf16.gmra.mxu0 %v5878
  %v6131 = vpop.f32.mrf.mxu0
  %v6132 = vadd.f32 0.0, %v6131
  %v6133 = vpop.f32.mrf.mxu0
  %v6134 = vadd.f32 0.0, %v6133
  %6135 = vmatmul.bf16.gmra.mxu0 %v5881
  %v6136 = vpop.f32.mrf.mxu0
  %v6137 = vadd.f32 0.0, %v6136
  %v6138 = vpop.f32.mrf.mxu0
  %v6139 = vadd.f32 0.0, %v6138
  %6140 = vmatmul.bf16.gmra.mxu0 %v5884
  %v6141 = vpop.f32.mrf.mxu0
  %v6142 = vadd.f32 0.0, %v6141
  %v6143 = vpop.f32.mrf.mxu0
  %v6144 = vadd.f32 0.0, %v6143
  %6145 = vmatmul.bf16.gmra.mxu0 %v5887
  %v6146 = vpop.f32.mrf.mxu0
  %v6147 = vadd.f32 0.0, %v6146
  %v6148 = vpop.f32.mrf.mxu0
  %v6149 = vadd.f32 0.0, %v6148
  %6150 = vmatmul.bf16.gmra.mxu0 %v5890
  %v6151 = vpop.f32.mrf.mxu0
  %v6152 = vadd.f32 0.0, %v6151
  %v6153 = vpop.f32.mrf.mxu0
  %v6154 = vadd.f32 0.0, %v6153
  %6155 = vmatmul.bf16.gmra.mxu0 %v5893
  %v6156 = vpop.f32.mrf.mxu0
  %v6157 = vadd.f32 0.0, %v6156
  %v6158 = vpop.f32.mrf.mxu0
  %v6159 = vadd.f32 0.0, %v6158
  %6160 = vmatmul.bf16.gmra.mxu0 %v5896
  %v6161 = vpop.f32.mrf.mxu0
  %v6162 = vadd.f32 0.0, %v6161
  %v6163 = vpop.f32.mrf.mxu0
  %v6164 = vadd.f32 0.0, %v6163
  %6165 = vmatmul.bf16.gmra.mxu0 %v5899
  %v6166 = vpop.f32.mrf.mxu0
  %v6167 = vadd.f32 0.0, %v6166
  %v6168 = vpop.f32.mrf.mxu0
  %v6169 = vadd.f32 0.0, %v6168
  %6170 = vmatmul.bf16.gmra.mxu0 %v5902
  %v6171 = vpop.f32.mrf.mxu0
  %v6172 = vadd.f32 0.0, %v6171
  %v6173 = vpop.f32.mrf.mxu0
  %v6174 = vadd.f32 0.0, %v6173
  %6175 = vmatmul.bf16.gmra.mxu0 %v5905
  %v6176 = vpop.f32.mrf.mxu0
  %v6177 = vadd.f32 0.0, %v6176
  %v6178 = vpop.f32.mrf.mxu0
  %v6179 = vadd.f32 0.0, %v6178
  %6180 = vmatmul.bf16.gmra.mxu0 %v5908
  %v6181 = vpop.f32.mrf.mxu0
  %v6182 = vadd.f32 0.0, %v6181
  %v6183 = vpop.f32.mrf.mxu0
  %v6184 = vadd.f32 0.0, %v6183
  %6185 = vmatmul.bf16.gmra.mxu0 %v5911
  %v6186 = vpop.f32.mrf.mxu0
  %v6187 = vadd.f32 0.0, %v6186
  %v6188 = vpop.f32.mrf.mxu0
  %v6189 = vadd.f32 0.0, %v6188
  %6190 = vmatmul.bf16.gmra.mxu0 %v5914
  %v6191 = vpop.f32.mrf.mxu0
  %v6192 = vadd.f32 0.0, %v6191
  %v6193 = vpop.f32.mrf.mxu0
  %v6194 = vadd.f32 0.0, %v6193
  %6195 = vmatmul.bf16.gmra.mxu0 %v5917
  %v6196 = vpop.f32.mrf.mxu0
  %v6197 = vadd.f32 0.0, %v6196
  %v6198 = vpop.f32.mrf.mxu0
  %v6199 = vadd.f32 0.0, %v6198
  %6200 = vmatmul.bf16.gmra.mxu0 %v5920
  %v6201 = vpop.f32.mrf.mxu0
  %v6202 = vadd.f32 0.0, %v6201
  %v6203 = vpop.f32.mrf.mxu0
  %v6204 = vadd.f32 0.0, %v6203
  %6205 = vmatmul.bf16.gmra.mxu0 %v5923
  %v6206 = vpop.f32.mrf.mxu0
  %v6207 = vadd.f32 0.0, %v6206
  %v6208 = vpop.f32.mrf.mxu0
  %v6209 = vadd.f32 0.0, %v6208
  %6210 = vmatmul.bf16.gmra.mxu0 %v5926
  %v6211 = vpop.f32.mrf.mxu0
  %v6212 = vadd.f32 0.0, %v6211
  %v6213 = vpop.f32.mrf.mxu0
  %v6214 = vadd.f32 0.0, %v6213
  %6215 = vmatmul.bf16.gmra.mxu0 %v5929
  %v6216 = vpop.f32.mrf.mxu0
  %v6217 = vadd.f32 0.0, %v6216
  %v6218 = vpop.f32.mrf.mxu0
  %v6219 = vadd.f32 0.0, %v6218
  %6220 = vmatmul.bf16.gmra.mxu0 %v5932
  %v6221 = vpop.f32.mrf.mxu0
  %v6222 = vadd.f32 0.0, %v6221
  %v6223 = vpop.f32.mrf.mxu0
  %v6224 = vadd.f32 0.0, %v6223
  %6225 = vmatmul.bf16.gmra.mxu0 %v5935
  %v6226 = vpop.f32.mrf.mxu0
  %v6227 = vadd.f32 0.0, %v6226
  %v6228 = vpop.f32.mrf.mxu0
  %v6229 = vadd.f32 0.0, %v6228
  %6230 = vmatmul.bf16.gmra.mxu0 %v5938
  %v6231 = vpop.f32.mrf.mxu0
  %v6232 = vadd.f32 0.0, %v6231
  %v6233 = vpop.f32.mrf.mxu0
  %v6234 = vadd.f32 0.0, %v6233
  %6235 = vmatmul.bf16.gmra.mxu0 %v5941
  %v6236 = vpop.f32.mrf.mxu0
  %v6237 = vadd.f32 0.0, %v6236
  %v6238 = vpop.f32.mrf.mxu0
  %v6239 = vadd.f32 0.0, %v6238
  %6240 = vmatmul.bf16.gmra.mxu0 %v5944
  %v6241 = vpop.f32.mrf.mxu0
  %v6242 = vadd.f32 0.0, %v6241
  %v6243 = vpop.f32.mrf.mxu0
  %v6244 = vadd.f32 0.0, %v6243
  %6245 = vmatmul.bf16.gmra.mxu0 %v5947
  %v6246 = vpop.f32.mrf.mxu0
  %v6247 = vadd.f32 0.0, %v6246
  %v6248 = vpop.f32.mrf.mxu0
  %v6249 = vadd.f32 0.0, %v6248
  %6250 = vmatmul.bf16.gmra.mxu0 %v5950
  %v6251 = vpop.f32.mrf.mxu0
  %v6252 = vadd.f32 0.0, %v6251
  %v6253 = vpop.f32.mrf.mxu0
  %v6254 = vadd.f32 0.0, %v6253
  %6255 = vmatmul.bf16.gmra.mxu0 %v5953
  %v6256 = vpop.f32.mrf.mxu0
  %v6257 = vadd.f32 0.0, %v6256
  %v6258 = vpop.f32.mrf.mxu0
  %v6259 = vadd.f32 0.0, %v6258
  %6260 = vmatmul.bf16.gmra.mxu0 %v5956
  %v6261 = vpop.f32.mrf.mxu0
  %v6262 = vadd.f32 0.0, %v6261
  %v6263 = vpop.f32.mrf.mxu0
  %v6264 = vadd.f32 0.0, %v6263
  %6265 = vmatmul.bf16.gmra.mxu0 %v5959
  %v6266 = vpop.f32.mrf.mxu0
  %v6267 = vadd.f32 0.0, %v6266
  %v6268 = vpop.f32.mrf.mxu0
  %v6269 = vadd.f32 0.0, %v6268
  %6270 = vmatmul.bf16.gmra.mxu0 %v5962
  %v6271 = vpop.f32.mrf.mxu0
  %v6272 = vadd.f32 0.0, %v6271
  %v6273 = vpop.f32.mrf.mxu0
  %v6274 = vadd.f32 0.0, %v6273
  %6275 = vmatmul.bf16.gmra.mxu0 %v5965
  %v6276 = vpop.f32.mrf.mxu0
  %v6277 = vadd.f32 0.0, %v6276
  %v6278 = vpop.f32.mrf.mxu0
  %v6279 = vadd.f32 0.0, %v6278
  %6280 = vmatmul.bf16.gmra.mxu0 %v5968
  %v6281 = vpop.f32.mrf.mxu0
  %v6282 = vadd.f32 0.0, %v6281
  %v6283 = vpop.f32.mrf.mxu0
  %v6284 = vadd.f32 0.0, %v6283
  %6285 = vmatmul.bf16.gmra.mxu0 %v5971
  %v6286 = vpop.f32.mrf.mxu0
  %v6287 = vadd.f32 0.0, %v6286
  %v6288 = vpop.f32.mrf.mxu0
  %v6289 = vadd.f32 0.0, %v6288
  %6290 = vmatmul.bf16.gmra.mxu0 %v5974
  %v6291 = vpop.f32.mrf.mxu0
  %v6292 = vadd.f32 0.0, %v6291
  %v6293 = vpop.f32.mrf.mxu0
  %v6294 = vadd.f32 0.0, %v6293
  %6295 = vmatmul.bf16.gmra.mxu0 %v5977
  %v6296 = vpop.f32.mrf.mxu0
  %v6297 = vadd.f32 0.0, %v6296
  %v6298 = vpop.f32.mrf.mxu0
  %v6299 = vadd.f32 0.0, %v6298
  %6300 = vmatmul.bf16.gmra.mxu0 %v5980
  %v6301 = vpop.f32.mrf.mxu0
  %v6302 = vadd.f32 0.0, %v6301
  %v6303 = vpop.f32.mrf.mxu0
  %v6304 = vadd.f32 0.0, %v6303
  %6305 = vmatmul.bf16.gmra.mxu0 %v5983
  %v6306 = vpop.f32.mrf.mxu0
  %v6307 = vadd.f32 0.0, %v6306
  %v6308 = vpop.f32.mrf.mxu0
  %v6309 = vadd.f32 0.0, %v6308
  %6310 = vmatmul.bf16.gmra.mxu0 %v5986
  %v6311 = vpop.f32.mrf.mxu0
  %v6312 = vadd.f32 0.0, %v6311
  %v6313 = vpop.f32.mrf.mxu0
  %v6314 = vadd.f32 0.0, %v6313
  %6315 = vmatmul.bf16.gmra.mxu0 %v5989
  %v6316 = vpop.f32.mrf.mxu0
  %v6317 = vadd.f32 0.0, %v6316
  %v6318 = vpop.f32.mrf.mxu0
  %v6319 = vadd.f32 0.0, %v6318
  %6320 = vmatmul.bf16.gmra.mxu0 %v5992
  %v6321 = vpop.f32.mrf.mxu0
  %v6322 = vadd.f32 0.0, %v6321
  %v6323 = vpop.f32.mrf.mxu0
  %v6324 = vadd.f32 0.0, %v6323
  %6325 = vdwg.mxu0
  %v6326 = vadd.f32 %v5407, %v6007
  %v6327 = vadd.f32 %v5408, %v6009
  %v6328 = vadd.f32 %v5409, %v6012
  %v6329 = vadd.f32 %v5410, %v6014
  %v6330 = vadd.f32 %v5411, %v6017
  %v6331 = vadd.f32 %v5412, %v6019
  %v6332 = vadd.f32 %v5413, %v6022
  %v6333 = vadd.f32 %v5414, %v6024
  %v6334 = vadd.f32 %v5415, %v6027
  %v6335 = vadd.f32 %v5416, %v6029
  %v6336 = vadd.f32 %v5417, %v6032
  %v6337 = vadd.f32 %v5418, %v6034
  %v6338 = vadd.f32 %v5419, %v6037
  %v6339 = vadd.f32 %v5420, %v6039
  %v6340 = vadd.f32 %v5421, %v6042
  %v6341 = vadd.f32 %v5422, %v6044
  %v6342 = vadd.f32 %v5423, %v6047
  %v6343 = vadd.f32 %v5424, %v6049
  %v6344 = vadd.f32 %v5425, %v6052
  %v6345 = vadd.f32 %v5426, %v6054
  %v6346 = vadd.f32 %v5427, %v6057
  %v6347 = vadd.f32 %v5428, %v6059
  %v6348 = vadd.f32 %v5429, %v6062
  %v6349 = vadd.f32 %v5430, %v6064
  %v6350 = vadd.f32 %v5431, %v6067
  %v6351 = vadd.f32 %v5432, %v6069
  %v6352 = vadd.f32 %v5433, %v6072
  %v6353 = vadd.f32 %v5434, %v6074
  %v6354 = vadd.f32 %v5435, %v6077
  %v6355 = vadd.f32 %v5436, %v6079
  %v6356 = vadd.f32 %v5437, %v6082
  %v6357 = vadd.f32 %v5438, %v6084
  %v6358 = vadd.f32 %v5439, %v6087
  %v6359 = vadd.f32 %v5440, %v6089
  %v6360 = vadd.f32 %v5441, %v6092
  %v6361 = vadd.f32 %v5442, %v6094
  %v6362 = vadd.f32 %v5443, %v6097
  %v6363 = vadd.f32 %v5444, %v6099
  %v6364 = vadd.f32 %v5445, %v6102
  %v6365 = vadd.f32 %v5446, %v6104
  %v6366 = vadd.f32 %v5447, %v6107
  %v6367 = vadd.f32 %v5448, %v6109
  %v6368 = vadd.f32 %v5449, %v6112
  %v6369 = vadd.f32 %v5450, %v6114
  %v6370 = vadd.f32 %v5451, %v6117
  %v6371 = vadd.f32 %v5452, %v6119
  %v6372 = vadd.f32 %v5453, %v6122
  %v6373 = vadd.f32 %v5454, %v6124
  %v6374 = vadd.f32 %v5455, %v6127
  %v6375 = vadd.f32 %v5456, %v6129
  %v6376 = vadd.f32 %v5457, %v6132
  %v6377 = vadd.f32 %v5458, %v6134
  %v6378 = vadd.f32 %v5459, %v6137
  %v6379 = vadd.f32 %v5460, %v6139
  %v6380 = vadd.f32 %v5461, %v6142
  %v6381 = vadd.f32 %v5462, %v6144
  %v6382 = vadd.f32 %v5463, %v6147
  %v6383 = vadd.f32 %v5464, %v6149
  %v6384 = vadd.f32 %v5465, %v6152
  %v6385 = vadd.f32 %v5466, %v6154
  %v6386 = vadd.f32 %v5467, %v6157
  %v6387 = vadd.f32 %v5468, %v6159
  %v6388 = vadd.f32 %v5469, %v6162
  %v6389 = vadd.f32 %v5470, %v6164
  %v6390 = vadd.f32 %v5471, %v6167
  %v6391 = vadd.f32 %v5472, %v6169
  %v6392 = vadd.f32 %v5473, %v6172
  %v6393 = vadd.f32 %v5474, %v6174
  %v6394 = vadd.f32 %v5475, %v6177
  %v6395 = vadd.f32 %v5476, %v6179
  %v6396 = vadd.f32 %v5477, %v6182
  %v6397 = vadd.f32 %v5478, %v6184
  %v6398 = vadd.f32 %v5479, %v6187
  %v6399 = vadd.f32 %v5480, %v6189
  %v6400 = vadd.f32 %v5481, %v6192
  %v6401 = vadd.f32 %v5482, %v6194
  %v6402 = vadd.f32 %v5483, %v6197
  %v6403 = vadd.f32 %v5484, %v6199
  %v6404 = vadd.f32 %v5485, %v6202
  %v6405 = vadd.f32 %v5486, %v6204
  %v6406 = vadd.f32 %v5487, %v6207
  %v6407 = vadd.f32 %v5488, %v6209
  %v6408 = vadd.f32 %v5489, %v6212
  %v6409 = vadd.f32 %v5490, %v6214
  %v6410 = vadd.f32 %v5491, %v6217
  %v6411 = vadd.f32 %v5492, %v6219
  %v6412 = vadd.f32 %v5493, %v6222
  %v6413 = vadd.f32 %v5494, %v6224
  %v6414 = vadd.f32 %v5495, %v6227
  %v6415 = vadd.f32 %v5496, %v6229
  %v6416 = vadd.f32 %v5497, %v6232
  %v6417 = vadd.f32 %v5498, %v6234
  %v6418 = vadd.f32 %v5499, %v6237
  %v6419 = vadd.f32 %v5500, %v6239
  %v6420 = vadd.f32 %v5501, %v6242
  %v6421 = vadd.f32 %v5502, %v6244
  %v6422 = vadd.f32 %v5503, %v6247
  %v6423 = vadd.f32 %v5504, %v6249
  %v6424 = vadd.f32 %v5505, %v6252
  %v6425 = vadd.f32 %v5506, %v6254
  %v6426 = vadd.f32 %v5507, %v6257
  %v6427 = vadd.f32 %v5508, %v6259
  %v6428 = vadd.f32 %v5509, %v6262
  %v6429 = vadd.f32 %v5510, %v6264
  %v6430 = vadd.f32 %v5511, %v6267
  %v6431 = vadd.f32 %v5512, %v6269
  %v6432 = vadd.f32 %v5513, %v6272
  %v6433 = vadd.f32 %v5514, %v6274
  %v6434 = vadd.f32 %v5515, %v6277
  %v6435 = vadd.f32 %v5516, %v6279
  %v6436 = vadd.f32 %v5517, %v6282
  %v6437 = vadd.f32 %v5518, %v6284
  %v6438 = vadd.f32 %v5519, %v6287
  %v6439 = vadd.f32 %v5520, %v6289
  %v6440 = vadd.f32 %v5521, %v6292
  %v6441 = vadd.f32 %v5522, %v6294
  %v6442 = vadd.f32 %v5523, %v6297
  %v6443 = vadd.f32 %v5524, %v6299
  %v6444 = vadd.f32 %v5525, %v6302
  %v6445 = vadd.f32 %v5526, %v6304
  %v6446 = vadd.f32 %v5527, %v6307
  %v6447 = vadd.f32 %v5528, %v6309
  %v6448 = vadd.f32 %v5529, %v6312
  %v6449 = vadd.f32 %v5530, %v6314
  %v6450 = vadd.f32 %v5531, %v6317
  %v6451 = vadd.f32 %v5532, %v6319
  %v6452 = vadd.f32 %v5533, %v6322
  %v6453 = vadd.f32 %v5534, %v6324
  %s6454 = scalar_lea.vmem %s3, 16
  %v6455 = vld [vmem:[%s6454] sm:$0x3]
  %vm6456 = vcmask 1044480
  %v6457 = vrot.slane %v529, 3
  %v6458 = vrot.slane %v530, 3
  %v6459 = vsel %vm6456, %v6457, %v6458
  %v6460 = vrot.slane %v531, 3
  %v6461 = vsel %vm6456, %v6458, %v6460
  %v6462 = vrot.slane %v532, 3
  %v6463 = vsel %vm6456, %v6460, %v6462
  %v6464 = vrot.slane %v533, 3
  %v6465 = vsel %vm6456, %v6462, %v6464
  %v6466 = vrot.slane %v534, 3
  %v6467 = vsel %vm6456, %v6464, %v6466
  %v6468 = vrot.slane %v535, 3
  %v6469 = vsel %vm6456, %v6466, %v6468
  %v6470 = vrot.slane %v536, 3
  %v6471 = vsel %vm6456, %v6468, %v6470
  %v6472 = vrot.slane %v537, 3
  %v6473 = vsel %vm6456, %v6470, %v6472
  %v6474 = vrot.slane %v538, 3
  %v6475 = vsel %vm6456, %v6472, %v6474
  %v6476 = vrot.slane %v539, 3
  %v6477 = vsel %vm6456, %v6474, %v6476
  %v6478 = vrot.slane %v540, 3
  %v6479 = vsel %vm6456, %v6476, %v6478
  %v6480 = vrot.slane %v541, 3
  %v6481 = vsel %vm6456, %v6478, %v6480
  %v6482 = vrot.slane %v542, 3
  %v6483 = vsel %vm6456, %v6480, %v6482
  %v6484 = vrot.slane %v543, 3
  %v6485 = vsel %vm6456, %v6482, %v6484
  %v6486 = vrot.slane %v544, 3
  %v6487 = vsel %vm6456, %v6484, %v6486
  %v6488 = vrot.slane %v545, 3
  %v6489 = vsel %vm6456, %v6486, %v6488
  %v6490 = vrot.slane %v546, 3
  %v6491 = vsel %vm6456, %v6488, %v6490
  %v6492 = vrot.slane %v547, 3
  %v6493 = vsel %vm6456, %v6490, %v6492
  %v6494 = vrot.slane %v548, 3
  %v6495 = vsel %vm6456, %v6492, %v6494
  %v6496 = vrot.slane %v549, 3
  %v6497 = vsel %vm6456, %v6494, %v6496
  %v6498 = vrot.slane %v550, 3
  %v6499 = vsel %vm6456, %v6496, %v6498
  %v6500 = vrot.slane %v551, 3
  %v6501 = vsel %vm6456, %v6498, %v6500
  %v6502 = vrot.slane %v552, 3
  %v6503 = vsel %vm6456, %v6500, %v6502
  %v6504 = vrot.slane %v553, 3
  %v6505 = vsel %vm6456, %v6502, %v6504
  %v6506 = vrot.slane %v554, 3
  %v6507 = vsel %vm6456, %v6504, %v6506
  %v6508 = vrot.slane %v555, 3
  %v6509 = vsel %vm6456, %v6506, %v6508
  %v6510 = vrot.slane %v556, 3
  %v6511 = vsel %vm6456, %v6508, %v6510
  %v6512 = vrot.slane %v557, 3
  %v6513 = vsel %vm6456, %v6510, %v6512
  %v6514 = vrot.slane %v558, 3
  %v6515 = vsel %vm6456, %v6512, %v6514
  %v6516 = vrot.slane %v559, 3
  %v6517 = vsel %vm6456, %v6514, %v6516
  %v6518 = vrot.slane %v560, 3
  %v6519 = vsel %vm6456, %v6516, %v6518
  %v6520 = vrot.slane %v561, 3
  %v6521 = vsel %vm6456, %v6518, %v6520
  %v6522 = vrot.slane %v562, 3
  %v6523 = vsel %vm6456, %v6520, %v6522
  %v6524 = vrot.slane %v563, 3
  %v6525 = vsel %vm6456, %v6522, %v6524
  %v6526 = vrot.slane %v564, 3
  %v6527 = vsel %vm6456, %v6524, %v6526
  %v6528 = vrot.slane %v565, 3
  %v6529 = vsel %vm6456, %v6526, %v6528
  %v6530 = vrot.slane %v566, 3
  %v6531 = vsel %vm6456, %v6528, %v6530
  %v6532 = vrot.slane %v567, 3
  %v6533 = vsel %vm6456, %v6530, %v6532
  %v6534 = vrot.slane %v568, 3
  %v6535 = vsel %vm6456, %v6532, %v6534
  %v6536 = vrot.slane %v569, 3
  %v6537 = vsel %vm6456, %v6534, %v6536
  %v6538 = vrot.slane %v570, 3
  %v6539 = vsel %vm6456, %v6536, %v6538
  %v6540 = vrot.slane %v571, 3
  %v6541 = vsel %vm6456, %v6538, %v6540
  %v6542 = vrot.slane %v572, 3
  %v6543 = vsel %vm6456, %v6540, %v6542
  %v6544 = vrot.slane %v573, 3
  %v6545 = vsel %vm6456, %v6542, %v6544
  %v6546 = vrot.slane %v574, 3
  %v6547 = vsel %vm6456, %v6544, %v6546
  %v6548 = vrot.slane %v575, 3
  %v6549 = vsel %vm6456, %v6546, %v6548
  %v6550 = vrot.slane %v576, 3
  %v6551 = vsel %vm6456, %v6548, %v6550
  %v6552 = vrot.slane %v577, 3
  %v6553 = vsel %vm6456, %v6550, %v6552
  %v6554 = vrot.slane %v578, 3
  %v6555 = vsel %vm6456, %v6552, %v6554
  %v6556 = vrot.slane %v579, 3
  %v6557 = vsel %vm6456, %v6554, %v6556
  %v6558 = vrot.slane %v580, 3
  %v6559 = vsel %vm6456, %v6556, %v6558
  %v6560 = vrot.slane %v581, 3
  %v6561 = vsel %vm6456, %v6558, %v6560
  %v6562 = vrot.slane %v582, 3
  %v6563 = vsel %vm6456, %v6560, %v6562
  %v6564 = vrot.slane %v583, 3
  %v6565 = vsel %vm6456, %v6562, %v6564
  %v6566 = vrot.slane %v584, 3
  %v6567 = vsel %vm6456, %v6564, %v6566
  %v6568 = vrot.slane %v585, 3
  %v6569 = vsel %vm6456, %v6566, %v6568
  %v6570 = vrot.slane %v586, 3
  %v6571 = vsel %vm6456, %v6568, %v6570
  %v6572 = vrot.slane %v587, 3
  %v6573 = vsel %vm6456, %v6570, %v6572
  %v6574 = vrot.slane %v588, 3
  %v6575 = vsel %vm6456, %v6572, %v6574
  %v6576 = vrot.slane %v589, 3
  %v6577 = vsel %vm6456, %v6574, %v6576
  %v6578 = vrot.slane %v590, 3
  %v6579 = vsel %vm6456, %v6576, %v6578
  %v6580 = vrot.slane %v603, 3
  %v6581 = vsel %vm6456, %v6578, %v6580
  %v6582 = vrot.slane %v604, 3
  %v6583 = vsel %vm6456, %v6580, %v6582
  %v6584 = vrot.slane %v605, 3
  %v6585 = vsel %vm6456, %v6582, %v6584
  %v6587 = vsel %vm1126, %v6459, 0
  %v6590 = vsel %vm1126, %v6461, 0
  %v6593 = vsel %vm1126, %v6463, 0
  %v6596 = vsel %vm1126, %v6465, 0
  %v6599 = vsel %vm1126, %v6467, 0
  %v6602 = vsel %vm1126, %v6469, 0
  %v6605 = vsel %vm1126, %v6471, 0
  %v6608 = vsel %vm1126, %v6473, 0
  %v6611 = vsel %vm1126, %v6475, 0
  %v6614 = vsel %vm1126, %v6477, 0
  %v6617 = vsel %vm1126, %v6479, 0
  %v6620 = vsel %vm1126, %v6481, 0
  %v6623 = vsel %vm1126, %v6483, 0
  %v6626 = vsel %vm1126, %v6485, 0
  %v6629 = vsel %vm1126, %v6487, 0
  %v6632 = vsel %vm1126, %v6489, 0
  %v6635 = vsel %vm1126, %v6491, 0
  %v6638 = vsel %vm1126, %v6493, 0
  %v6641 = vsel %vm1126, %v6495, 0
  %v6644 = vsel %vm1126, %v6497, 0
  %v6647 = vsel %vm1126, %v6499, 0
  %v6650 = vsel %vm1126, %v6501, 0
  %v6653 = vsel %vm1126, %v6503, 0
  %v6656 = vsel %vm1126, %v6505, 0
  %v6659 = vsel %vm1126, %v6507, 0
  %v6662 = vsel %vm1126, %v6509, 0
  %v6665 = vsel %vm1126, %v6511, 0
  %v6668 = vsel %vm1126, %v6513, 0
  %v6671 = vsel %vm1126, %v6515, 0
  %v6674 = vsel %vm1126, %v6517, 0
  %v6677 = vsel %vm1126, %v6519, 0
  %v6680 = vsel %vm1126, %v6521, 0
  %v6683 = vsel %vm1126, %v6523, 0
  %v6686 = vsel %vm1126, %v6525, 0
  %v6689 = vsel %vm1126, %v6527, 0
  %v6692 = vsel %vm1126, %v6529, 0
  %v6695 = vsel %vm1126, %v6531, 0
  %v6698 = vsel %vm1126, %v6533, 0
  %v6701 = vsel %vm1126, %v6535, 0
  %v6704 = vsel %vm1126, %v6537, 0
  %v6707 = vsel %vm1126, %v6539, 0
  %v6710 = vsel %vm1126, %v6541, 0
  %v6713 = vsel %vm1126, %v6543, 0
  %v6716 = vsel %vm1126, %v6545, 0
  %v6719 = vsel %vm1126, %v6547, 0
  %v6722 = vsel %vm1126, %v6549, 0
  %v6725 = vsel %vm1126, %v6551, 0
  %v6728 = vsel %vm1126, %v6553, 0
  %v6731 = vsel %vm1126, %v6555, 0
  %v6734 = vsel %vm1126, %v6557, 0
  %v6737 = vsel %vm1126, %v6559, 0
  %v6740 = vsel %vm1126, %v6561, 0
  %v6743 = vsel %vm1126, %v6563, 0
  %v6746 = vsel %vm1126, %v6565, 0
  %v6749 = vsel %vm1126, %v6567, 0
  %v6752 = vsel %vm1126, %v6569, 0
  %v6755 = vsel %vm1126, %v6571, 0
  %v6758 = vsel %vm1126, %v6573, 0
  %v6761 = vsel %vm1126, %v6575, 0
  %v6764 = vsel %vm1126, %v6577, 0
  %v6767 = vsel %vm1126, %v6579, 0
  %v6770 = vsel %vm1126, %v6581, 0
  %v6773 = vsel %vm1126, %v6583, 0
  %v6776 = vsel %vm1126, %v6585, 0
  %v6779 = vsel %vm1319, %v6455, 0
  %6781 = vmatpush.bf16.msra.mxu0 0
  %6782 = vmatpush.bf16.msra.mxu0 0
  %6783 = vmatpush.bf16.msra.mxu0 0
  %6784 = vmatpush.bf16.msra.mxu0 0
  %6785 = vmatpush.bf16.msra.mxu0 0
  %6786 = vmatpush.bf16.msra.mxu0 0
  %6787 = vmatpush.bf16.msra.mxu0 0
  %6788 = vmatpush.bf16.msra.mxu0 %v6779
  %6789 = vmatmul.bf16.gmra.mxu0 %v6587
  %v6790 = vpop.f32.mrf.mxu0
  %v6791 = vadd.f32 0.0, %v6790
  %v6792 = vpop.f32.mrf.mxu0
  %v6793 = vadd.f32 0.0, %v6792
  %6794 = vmatmul.bf16.gmra.mxu0 %v6590
  %v6795 = vpop.f32.mrf.mxu0
  %v6796 = vadd.f32 0.0, %v6795
  %v6797 = vpop.f32.mrf.mxu0
  %v6798 = vadd.f32 0.0, %v6797
  %6799 = vmatmul.bf16.gmra.mxu0 %v6593
  %v6800 = vpop.f32.mrf.mxu0
  %v6801 = vadd.f32 0.0, %v6800
  %v6802 = vpop.f32.mrf.mxu0
  %v6803 = vadd.f32 0.0, %v6802
  %6804 = vmatmul.bf16.gmra.mxu0 %v6596
  %v6805 = vpop.f32.mrf.mxu0
  %v6806 = vadd.f32 0.0, %v6805
  %v6807 = vpop.f32.mrf.mxu0
  %v6808 = vadd.f32 0.0, %v6807
  %6809 = vmatmul.bf16.gmra.mxu0 %v6599
  %v6810 = vpop.f32.mrf.mxu0
  %v6811 = vadd.f32 0.0, %v6810
  %v6812 = vpop.f32.mrf.mxu0
  %v6813 = vadd.f32 0.0, %v6812
  %6814 = vmatmul.bf16.gmra.mxu0 %v6602
  %v6815 = vpop.f32.mrf.mxu0
  %v6816 = vadd.f32 0.0, %v6815
  %v6817 = vpop.f32.mrf.mxu0
  %v6818 = vadd.f32 0.0, %v6817
  %6819 = vmatmul.bf16.gmra.mxu0 %v6605
  %v6820 = vpop.f32.mrf.mxu0
  %v6821 = vadd.f32 0.0, %v6820
  %v6822 = vpop.f32.mrf.mxu0
  %v6823 = vadd.f32 0.0, %v6822
  %6824 = vmatmul.bf16.gmra.mxu0 %v6608
  %v6825 = vpop.f32.mrf.mxu0
  %v6826 = vadd.f32 0.0, %v6825
  %v6827 = vpop.f32.mrf.mxu0
  %v6828 = vadd.f32 0.0, %v6827
  %6829 = vmatmul.bf16.gmra.mxu0 %v6611
  %v6830 = vpop.f32.mrf.mxu0
  %v6831 = vadd.f32 0.0, %v6830
  %v6832 = vpop.f32.mrf.mxu0
  %v6833 = vadd.f32 0.0, %v6832
  %6834 = vmatmul.bf16.gmra.mxu0 %v6614
  %v6835 = vpop.f32.mrf.mxu0
  %v6836 = vadd.f32 0.0, %v6835
  %v6837 = vpop.f32.mrf.mxu0
  %v6838 = vadd.f32 0.0, %v6837
  %6839 = vmatmul.bf16.gmra.mxu0 %v6617
  %v6840 = vpop.f32.mrf.mxu0
  %v6841 = vadd.f32 0.0, %v6840
  %v6842 = vpop.f32.mrf.mxu0
  %v6843 = vadd.f32 0.0, %v6842
  %6844 = vmatmul.bf16.gmra.mxu0 %v6620
  %v6845 = vpop.f32.mrf.mxu0
  %v6846 = vadd.f32 0.0, %v6845
  %v6847 = vpop.f32.mrf.mxu0
  %v6848 = vadd.f32 0.0, %v6847
  %6849 = vmatmul.bf16.gmra.mxu0 %v6623
  %v6850 = vpop.f32.mrf.mxu0
  %v6851 = vadd.f32 0.0, %v6850
  %v6852 = vpop.f32.mrf.mxu0
  %v6853 = vadd.f32 0.0, %v6852
  %6854 = vmatmul.bf16.gmra.mxu0 %v6626
  %v6855 = vpop.f32.mrf.mxu0
  %v6856 = vadd.f32 0.0, %v6855
  %v6857 = vpop.f32.mrf.mxu0
  %v6858 = vadd.f32 0.0, %v6857
  %6859 = vmatmul.bf16.gmra.mxu0 %v6629
  %v6860 = vpop.f32.mrf.mxu0
  %v6861 = vadd.f32 0.0, %v6860
  %v6862 = vpop.f32.mrf.mxu0
  %v6863 = vadd.f32 0.0, %v6862
  %6864 = vmatmul.bf16.gmra.mxu0 %v6632
  %v6865 = vpop.f32.mrf.mxu0
  %v6866 = vadd.f32 0.0, %v6865
  %v6867 = vpop.f32.mrf.mxu0
  %v6868 = vadd.f32 0.0, %v6867
  %6869 = vmatmul.bf16.gmra.mxu0 %v6635
  %v6870 = vpop.f32.mrf.mxu0
  %v6871 = vadd.f32 0.0, %v6870
  %v6872 = vpop.f32.mrf.mxu0
  %v6873 = vadd.f32 0.0, %v6872
  %6874 = vmatmul.bf16.gmra.mxu0 %v6638
  %v6875 = vpop.f32.mrf.mxu0
  %v6876 = vadd.f32 0.0, %v6875
  %v6877 = vpop.f32.mrf.mxu0
  %v6878 = vadd.f32 0.0, %v6877
  %6879 = vmatmul.bf16.gmra.mxu0 %v6641
  %v6880 = vpop.f32.mrf.mxu0
  %v6881 = vadd.f32 0.0, %v6880
  %v6882 = vpop.f32.mrf.mxu0
  %v6883 = vadd.f32 0.0, %v6882
  %6884 = vmatmul.bf16.gmra.mxu0 %v6644
  %v6885 = vpop.f32.mrf.mxu0
  %v6886 = vadd.f32 0.0, %v6885
  %v6887 = vpop.f32.mrf.mxu0
  %v6888 = vadd.f32 0.0, %v6887
  %6889 = vmatmul.bf16.gmra.mxu0 %v6647
  %v6890 = vpop.f32.mrf.mxu0
  %v6891 = vadd.f32 0.0, %v6890
  %v6892 = vpop.f32.mrf.mxu0
  %v6893 = vadd.f32 0.0, %v6892
  %6894 = vmatmul.bf16.gmra.mxu0 %v6650
  %v6895 = vpop.f32.mrf.mxu0
  %v6896 = vadd.f32 0.0, %v6895
  %v6897 = vpop.f32.mrf.mxu0
  %v6898 = vadd.f32 0.0, %v6897
  %6899 = vmatmul.bf16.gmra.mxu0 %v6653
  %v6900 = vpop.f32.mrf.mxu0
  %v6901 = vadd.f32 0.0, %v6900
  %v6902 = vpop.f32.mrf.mxu0
  %v6903 = vadd.f32 0.0, %v6902
  %6904 = vmatmul.bf16.gmra.mxu0 %v6656
  %v6905 = vpop.f32.mrf.mxu0
  %v6906 = vadd.f32 0.0, %v6905
  %v6907 = vpop.f32.mrf.mxu0
  %v6908 = vadd.f32 0.0, %v6907
  %6909 = vmatmul.bf16.gmra.mxu0 %v6659
  %v6910 = vpop.f32.mrf.mxu0
  %v6911 = vadd.f32 0.0, %v6910
  %v6912 = vpop.f32.mrf.mxu0
  %v6913 = vadd.f32 0.0, %v6912
  %6914 = vmatmul.bf16.gmra.mxu0 %v6662
  %v6915 = vpop.f32.mrf.mxu0
  %v6916 = vadd.f32 0.0, %v6915
  %v6917 = vpop.f32.mrf.mxu0
  %v6918 = vadd.f32 0.0, %v6917
  %6919 = vmatmul.bf16.gmra.mxu0 %v6665
  %v6920 = vpop.f32.mrf.mxu0
  %v6921 = vadd.f32 0.0, %v6920
  %v6922 = vpop.f32.mrf.mxu0
  %v6923 = vadd.f32 0.0, %v6922
  %6924 = vmatmul.bf16.gmra.mxu0 %v6668
  %v6925 = vpop.f32.mrf.mxu0
  %v6926 = vadd.f32 0.0, %v6925
  %v6927 = vpop.f32.mrf.mxu0
  %v6928 = vadd.f32 0.0, %v6927
  %6929 = vmatmul.bf16.gmra.mxu0 %v6671
  %v6930 = vpop.f32.mrf.mxu0
  %v6931 = vadd.f32 0.0, %v6930
  %v6932 = vpop.f32.mrf.mxu0
  %v6933 = vadd.f32 0.0, %v6932
  %6934 = vmatmul.bf16.gmra.mxu0 %v6674
  %v6935 = vpop.f32.mrf.mxu0
  %v6936 = vadd.f32 0.0, %v6935
  %v6937 = vpop.f32.mrf.mxu0
  %v6938 = vadd.f32 0.0, %v6937
  %6939 = vmatmul.bf16.gmra.mxu0 %v6677
  %v6940 = vpop.f32.mrf.mxu0
  %v6941 = vadd.f32 0.0, %v6940
  %v6942 = vpop.f32.mrf.mxu0
  %v6943 = vadd.f32 0.0, %v6942
  %6944 = vmatmul.bf16.gmra.mxu0 %v6680
  %v6945 = vpop.f32.mrf.mxu0
  %v6946 = vadd.f32 0.0, %v6945
  %v6947 = vpop.f32.mrf.mxu0
  %v6948 = vadd.f32 0.0, %v6947
  %6949 = vmatmul.bf16.gmra.mxu0 %v6683
  %v6950 = vpop.f32.mrf.mxu0
  %v6951 = vadd.f32 0.0, %v6950
  %v6952 = vpop.f32.mrf.mxu0
  %v6953 = vadd.f32 0.0, %v6952
  %6954 = vmatmul.bf16.gmra.mxu0 %v6686
  %v6955 = vpop.f32.mrf.mxu0
  %v6956 = vadd.f32 0.0, %v6955
  %v6957 = vpop.f32.mrf.mxu0
  %v6958 = vadd.f32 0.0, %v6957
  %6959 = vmatmul.bf16.gmra.mxu0 %v6689
  %v6960 = vpop.f32.mrf.mxu0
  %v6961 = vadd.f32 0.0, %v6960
  %v6962 = vpop.f32.mrf.mxu0
  %v6963 = vadd.f32 0.0, %v6962
  %6964 = vmatmul.bf16.gmra.mxu0 %v6692
  %v6965 = vpop.f32.mrf.mxu0
  %v6966 = vadd.f32 0.0, %v6965
  %v6967 = vpop.f32.mrf.mxu0
  %v6968 = vadd.f32 0.0, %v6967
  %6969 = vmatmul.bf16.gmra.mxu0 %v6695
  %v6970 = vpop.f32.mrf.mxu0
  %v6971 = vadd.f32 0.0, %v6970
  %v6972 = vpop.f32.mrf.mxu0
  %v6973 = vadd.f32 0.0, %v6972
  %6974 = vmatmul.bf16.gmra.mxu0 %v6698
  %v6975 = vpop.f32.mrf.mxu0
  %v6976 = vadd.f32 0.0, %v6975
  %v6977 = vpop.f32.mrf.mxu0
  %v6978 = vadd.f32 0.0, %v6977
  %6979 = vmatmul.bf16.gmra.mxu0 %v6701
  %v6980 = vpop.f32.mrf.mxu0
  %v6981 = vadd.f32 0.0, %v6980
  %v6982 = vpop.f32.mrf.mxu0
  %v6983 = vadd.f32 0.0, %v6982
  %6984 = vmatmul.bf16.gmra.mxu0 %v6704
  %v6985 = vpop.f32.mrf.mxu0
  %v6986 = vadd.f32 0.0, %v6985
  %v6987 = vpop.f32.mrf.mxu0
  %v6988 = vadd.f32 0.0, %v6987
  %6989 = vmatmul.bf16.gmra.mxu0 %v6707
  %v6990 = vpop.f32.mrf.mxu0
  %v6991 = vadd.f32 0.0, %v6990
  %v6992 = vpop.f32.mrf.mxu0
  %v6993 = vadd.f32 0.0, %v6992
  %6994 = vmatmul.bf16.gmra.mxu0 %v6710
  %v6995 = vpop.f32.mrf.mxu0
  %v6996 = vadd.f32 0.0, %v6995
  %v6997 = vpop.f32.mrf.mxu0
  %v6998 = vadd.f32 0.0, %v6997
  %6999 = vmatmul.bf16.gmra.mxu0 %v6713
  %v7000 = vpop.f32.mrf.mxu0
  %v7001 = vadd.f32 0.0, %v7000
  %v7002 = vpop.f32.mrf.mxu0
  %v7003 = vadd.f32 0.0, %v7002
  %7004 = vmatmul.bf16.gmra.mxu0 %v6716
  %v7005 = vpop.f32.mrf.mxu0
  %v7006 = vadd.f32 0.0, %v7005
  %v7007 = vpop.f32.mrf.mxu0
  %v7008 = vadd.f32 0.0, %v7007
  %7009 = vmatmul.bf16.gmra.mxu0 %v6719
  %v7010 = vpop.f32.mrf.mxu0
  %v7011 = vadd.f32 0.0, %v7010
  %v7012 = vpop.f32.mrf.mxu0
  %v7013 = vadd.f32 0.0, %v7012
  %7014 = vmatmul.bf16.gmra.mxu0 %v6722
  %v7015 = vpop.f32.mrf.mxu0
  %v7016 = vadd.f32 0.0, %v7015
  %v7017 = vpop.f32.mrf.mxu0
  %v7018 = vadd.f32 0.0, %v7017
  %7019 = vmatmul.bf16.gmra.mxu0 %v6725
  %v7020 = vpop.f32.mrf.mxu0
  %v7021 = vadd.f32 0.0, %v7020
  %v7022 = vpop.f32.mrf.mxu0
  %v7023 = vadd.f32 0.0, %v7022
  %7024 = vmatmul.bf16.gmra.mxu0 %v6728
  %v7025 = vpop.f32.mrf.mxu0
  %v7026 = vadd.f32 0.0, %v7025
  %v7027 = vpop.f32.mrf.mxu0
  %v7028 = vadd.f32 0.0, %v7027
  %7029 = vmatmul.bf16.gmra.mxu0 %v6731
  %v7030 = vpop.f32.mrf.mxu0
  %v7031 = vadd.f32 0.0, %v7030
  %v7032 = vpop.f32.mrf.mxu0
  %v7033 = vadd.f32 0.0, %v7032
  %7034 = vmatmul.bf16.gmra.mxu0 %v6734
  %v7035 = vpop.f32.mrf.mxu0
  %v7036 = vadd.f32 0.0, %v7035
  %v7037 = vpop.f32.mrf.mxu0
  %v7038 = vadd.f32 0.0, %v7037
  %7039 = vmatmul.bf16.gmra.mxu0 %v6737
  %v7040 = vpop.f32.mrf.mxu0
  %v7041 = vadd.f32 0.0, %v7040
  %v7042 = vpop.f32.mrf.mxu0
  %v7043 = vadd.f32 0.0, %v7042
  %7044 = vmatmul.bf16.gmra.mxu0 %v6740
  %v7045 = vpop.f32.mrf.mxu0
  %v7046 = vadd.f32 0.0, %v7045
  %v7047 = vpop.f32.mrf.mxu0
  %v7048 = vadd.f32 0.0, %v7047
  %7049 = vmatmul.bf16.gmra.mxu0 %v6743
  %v7050 = vpop.f32.mrf.mxu0
  %v7051 = vadd.f32 0.0, %v7050
  %v7052 = vpop.f32.mrf.mxu0
  %v7053 = vadd.f32 0.0, %v7052
  %7054 = vmatmul.bf16.gmra.mxu0 %v6746
  %v7055 = vpop.f32.mrf.mxu0
  %v7056 = vadd.f32 0.0, %v7055
  %v7057 = vpop.f32.mrf.mxu0
  %v7058 = vadd.f32 0.0, %v7057
  %7059 = vmatmul.bf16.gmra.mxu0 %v6749
  %v7060 = vpop.f32.mrf.mxu0
  %v7061 = vadd.f32 0.0, %v7060
  %v7062 = vpop.f32.mrf.mxu0
  %v7063 = vadd.f32 0.0, %v7062
  %7064 = vmatmul.bf16.gmra.mxu0 %v6752
  %v7065 = vpop.f32.mrf.mxu0
  %v7066 = vadd.f32 0.0, %v7065
  %v7067 = vpop.f32.mrf.mxu0
  %v7068 = vadd.f32 0.0, %v7067
  %7069 = vmatmul.bf16.gmra.mxu0 %v6755
  %v7070 = vpop.f32.mrf.mxu0
  %v7071 = vadd.f32 0.0, %v7070
  %v7072 = vpop.f32.mrf.mxu0
  %v7073 = vadd.f32 0.0, %v7072
  %7074 = vmatmul.bf16.gmra.mxu0 %v6758
  %v7075 = vpop.f32.mrf.mxu0
  %v7076 = vadd.f32 0.0, %v7075
  %v7077 = vpop.f32.mrf.mxu0
  %v7078 = vadd.f32 0.0, %v7077
  %7079 = vmatmul.bf16.gmra.mxu0 %v6761
  %v7080 = vpop.f32.mrf.mxu0
  %v7081 = vadd.f32 0.0, %v7080
  %v7082 = vpop.f32.mrf.mxu0
  %v7083 = vadd.f32 0.0, %v7082
  %7084 = vmatmul.bf16.gmra.mxu0 %v6764
  %v7085 = vpop.f32.mrf.mxu0
  %v7086 = vadd.f32 0.0, %v7085
  %v7087 = vpop.f32.mrf.mxu0
  %v7088 = vadd.f32 0.0, %v7087
  %7089 = vmatmul.bf16.gmra.mxu0 %v6767
  %v7090 = vpop.f32.mrf.mxu0
  %v7091 = vadd.f32 0.0, %v7090
  %v7092 = vpop.f32.mrf.mxu0
  %v7093 = vadd.f32 0.0, %v7092
  %7094 = vmatmul.bf16.gmra.mxu0 %v6770
  %v7095 = vpop.f32.mrf.mxu0
  %v7096 = vadd.f32 0.0, %v7095
  %v7097 = vpop.f32.mrf.mxu0
  %v7098 = vadd.f32 0.0, %v7097
  %7099 = vmatmul.bf16.gmra.mxu0 %v6773
  %v7100 = vpop.f32.mrf.mxu0
  %v7101 = vadd.f32 0.0, %v7100
  %v7102 = vpop.f32.mrf.mxu0
  %v7103 = vadd.f32 0.0, %v7102
  %7104 = vmatmul.bf16.gmra.mxu0 %v6776
  %v7105 = vpop.f32.mrf.mxu0
  %v7106 = vadd.f32 0.0, %v7105
  %v7107 = vpop.f32.mrf.mxu0
  %v7108 = vadd.f32 0.0, %v7107
  %7109 = vdwg.mxu0
  %v7110 = vadd.f32 %v6326, %v6791
  %v7111 = vadd.f32 %v6327, %v6793
  %v7112 = vadd.f32 %v6328, %v6796
  %v7113 = vadd.f32 %v6329, %v6798
  %v7114 = vadd.f32 %v6330, %v6801
  %v7115 = vadd.f32 %v6331, %v6803
  %v7116 = vadd.f32 %v6332, %v6806
  %v7117 = vadd.f32 %v6333, %v6808
  %v7118 = vadd.f32 %v6334, %v6811
  %v7119 = vadd.f32 %v6335, %v6813
  %v7120 = vadd.f32 %v6336, %v6816
  %v7121 = vadd.f32 %v6337, %v6818
  %v7122 = vadd.f32 %v6338, %v6821
  %v7123 = vadd.f32 %v6339, %v6823
  %v7124 = vadd.f32 %v6340, %v6826
  %v7125 = vadd.f32 %v6341, %v6828
  %v7126 = vadd.f32 %v6342, %v6831
  %v7127 = vadd.f32 %v6343, %v6833
  %v7128 = vadd.f32 %v6344, %v6836
  %v7129 = vadd.f32 %v6345, %v6838
  %v7130 = vadd.f32 %v6346, %v6841
  %v7131 = vadd.f32 %v6347, %v6843
  %v7132 = vadd.f32 %v6348, %v6846
  %v7133 = vadd.f32 %v6349, %v6848
  %v7134 = vadd.f32 %v6350, %v6851
  %v7135 = vadd.f32 %v6351, %v6853
  %v7136 = vadd.f32 %v6352, %v6856
  %v7137 = vadd.f32 %v6353, %v6858
  %v7138 = vadd.f32 %v6354, %v6861
  %v7139 = vadd.f32 %v6355, %v6863
  %v7140 = vadd.f32 %v6356, %v6866
  %v7141 = vadd.f32 %v6357, %v6868
  %v7142 = vadd.f32 %v6358, %v6871
  %v7143 = vadd.f32 %v6359, %v6873
  %v7144 = vadd.f32 %v6360, %v6876
  %v7145 = vadd.f32 %v6361, %v6878
  %v7146 = vadd.f32 %v6362, %v6881
  %v7147 = vadd.f32 %v6363, %v6883
  %v7148 = vadd.f32 %v6364, %v6886
  %v7149 = vadd.f32 %v6365, %v6888
  %v7150 = vadd.f32 %v6366, %v6891
  %v7151 = vadd.f32 %v6367, %v6893
  %v7152 = vadd.f32 %v6368, %v6896
  %v7153 = vadd.f32 %v6369, %v6898
  %v7154 = vadd.f32 %v6370, %v6901
  %v7155 = vadd.f32 %v6371, %v6903
  %v7156 = vadd.f32 %v6372, %v6906
  %v7157 = vadd.f32 %v6373, %v6908
  %v7158 = vadd.f32 %v6374, %v6911
  %v7159 = vadd.f32 %v6375, %v6913
  %v7160 = vadd.f32 %v6376, %v6916
  %v7161 = vadd.f32 %v6377, %v6918
  %v7162 = vadd.f32 %v6378, %v6921
  %v7163 = vadd.f32 %v6379, %v6923
  %v7164 = vadd.f32 %v6380, %v6926
  %v7165 = vadd.f32 %v6381, %v6928
  %v7166 = vadd.f32 %v6382, %v6931
  %v7167 = vadd.f32 %v6383, %v6933
  %v7168 = vadd.f32 %v6384, %v6936
  %v7169 = vadd.f32 %v6385, %v6938
  %v7170 = vadd.f32 %v6386, %v6941
  %v7171 = vadd.f32 %v6387, %v6943
  %v7172 = vadd.f32 %v6388, %v6946
  %v7173 = vadd.f32 %v6389, %v6948
  %v7174 = vadd.f32 %v6390, %v6951
  %v7175 = vadd.f32 %v6391, %v6953
  %v7176 = vadd.f32 %v6392, %v6956
  %v7177 = vadd.f32 %v6393, %v6958
  %v7178 = vadd.f32 %v6394, %v6961
  %v7179 = vadd.f32 %v6395, %v6963
  %v7180 = vadd.f32 %v6396, %v6966
  %v7181 = vadd.f32 %v6397, %v6968
  %v7182 = vadd.f32 %v6398, %v6971
  %v7183 = vadd.f32 %v6399, %v6973
  %v7184 = vadd.f32 %v6400, %v6976
  %v7185 = vadd.f32 %v6401, %v6978
  %v7186 = vadd.f32 %v6402, %v6981
  %v7187 = vadd.f32 %v6403, %v6983
  %v7188 = vadd.f32 %v6404, %v6986
  %v7189 = vadd.f32 %v6405, %v6988
  %v7190 = vadd.f32 %v6406, %v6991
  %v7191 = vadd.f32 %v6407, %v6993
  %v7192 = vadd.f32 %v6408, %v6996
  %v7193 = vadd.f32 %v6409, %v6998
  %v7194 = vadd.f32 %v6410, %v7001
  %v7195 = vadd.f32 %v6411, %v7003
  %v7196 = vadd.f32 %v6412, %v7006
  %v7197 = vadd.f32 %v6413, %v7008
  %v7198 = vadd.f32 %v6414, %v7011
  %v7199 = vadd.f32 %v6415, %v7013
  %v7200 = vadd.f32 %v6416, %v7016
  %v7201 = vadd.f32 %v6417, %v7018
  %v7202 = vadd.f32 %v6418, %v7021
  %v7203 = vadd.f32 %v6419, %v7023
  %v7204 = vadd.f32 %v6420, %v7026
  %v7205 = vadd.f32 %v6421, %v7028
  %v7206 = vadd.f32 %v6422, %v7031
  %v7207 = vadd.f32 %v6423, %v7033
  %v7208 = vadd.f32 %v6424, %v7036
  %v7209 = vadd.f32 %v6425, %v7038
  %v7210 = vadd.f32 %v6426, %v7041
  %v7211 = vadd.f32 %v6427, %v7043
  %v7212 = vadd.f32 %v6428, %v7046
  %v7213 = vadd.f32 %v6429, %v7048
  %v7214 = vadd.f32 %v6430, %v7051
  %v7215 = vadd.f32 %v6431, %v7053
  %v7216 = vadd.f32 %v6432, %v7056
  %v7217 = vadd.f32 %v6433, %v7058
  %v7218 = vadd.f32 %v6434, %v7061
  %v7219 = vadd.f32 %v6435, %v7063
  %v7220 = vadd.f32 %v6436, %v7066
  %v7221 = vadd.f32 %v6437, %v7068
  %v7222 = vadd.f32 %v6438, %v7071
  %v7223 = vadd.f32 %v6439, %v7073
  %v7224 = vadd.f32 %v6440, %v7076
  %v7225 = vadd.f32 %v6441, %v7078
  %v7226 = vadd.f32 %v6442, %v7081
  %v7227 = vadd.f32 %v6443, %v7083
  %v7228 = vadd.f32 %v6444, %v7086
  %v7229 = vadd.f32 %v6445, %v7088
  %v7230 = vadd.f32 %v6446, %v7091
  %v7231 = vadd.f32 %v6447, %v7093
  %v7232 = vadd.f32 %v6448, %v7096
  %v7233 = vadd.f32 %v6449, %v7098
  %v7234 = vadd.f32 %v6450, %v7101
  %v7235 = vadd.f32 %v6451, %v7103
  %v7236 = vadd.f32 %v6452, %v7106
  %v7237 = vadd.f32 %v6453, %v7108
  %v7238 = vld [vmem:[%s119] sm:$0xff]
  %v7239 = vld [vmem:[%s119 + $0x8] sm:$0xff]
  %v7240 = vld [vmem:[%s119 + $0x10] sm:$0xff]
  %v7241 = vld [vmem:[%s119 + $0x18] sm:$0xff]
  %v7242 = vld [vmem:[%s119 + $0x20] sm:$0xff]
  %v7243 = vld [vmem:[%s119 + $0x28] sm:$0xff]
  %v7244 = vld [vmem:[%s119 + $0x30] sm:$0xff]
  %v7245 = vld [vmem:[%s119 + $0x38] sm:$0xff]
  %v7246 = vld [vmem:[%s119 + $0x40] sm:$0xff]
  %v7247 = vld [vmem:[%s119 + $0x48] sm:$0xff]
  %v7248 = vld [vmem:[%s119 + $0x50] sm:$0xff]
  %v7249 = vld [vmem:[%s119 + $0x58] sm:$0xff]
  %v7250 = vld [vmem:[%s119 + $0x60] sm:$0xff]
  %v7251 = vld [vmem:[%s119 + $0x68] sm:$0xff]
  %v7252 = vld [vmem:[%s119 + $0x70] sm:$0xff]
  %v7253 = vld [vmem:[%s119 + $0x78] sm:$0xff]
  %v7254 = vld [vmem:[%s119 + $0x80] sm:$0xff]
  %v7255 = vld [vmem:[%s119 + $0x88] sm:$0xff]
  %v7256 = vld [vmem:[%s119 + $0x90] sm:$0xff]
  %v7257 = vld [vmem:[%s119 + $0x98] sm:$0xff]
  %v7258 = vld [vmem:[%s119 + $0xa0] sm:$0xff]
  %v7259 = vld [vmem:[%s119 + $0xa8] sm:$0xff]
  %v7260 = vld [vmem:[%s119 + $0xb0] sm:$0xff]
  %v7261 = vld [vmem:[%s119 + $0xb8] sm:$0xff]
  %v7262 = vld [vmem:[%s119 + $0xc0] sm:$0xff]
  %v7263 = vld [vmem:[%s119 + $0xc8] sm:$0xff]
  %v7264 = vld [vmem:[%s119 + $0xd0] sm:$0xff]
  %v7265 = vld [vmem:[%s119 + $0xd8] sm:$0xff]
  %v7266 = vld [vmem:[%s119 + $0xe0] sm:$0xff]
  %v7267 = vld [vmem:[%s119 + $0xe8] sm:$0xff]
  %v7268 = vld [vmem:[%s119 + $0xf0] sm:$0xff]
  %v7269 = vld [vmem:[%s119 + $0xf8] sm:$0xff]
  %v7270 = vld [vmem:[%s119 + $0x100] sm:$0xff]
  %v7271 = vld [vmem:[%s119 + $0x108] sm:$0xff]
  %v7272 = vld [vmem:[%s119 + $0x110] sm:$0xff]
  %v7273 = vld [vmem:[%s119 + $0x118] sm:$0xff]
  %v7274 = vld [vmem:[%s119 + $0x120] sm:$0xff]
  %v7275 = vld [vmem:[%s119 + $0x128] sm:$0xff]
  %v7276 = vld [vmem:[%s119 + $0x130] sm:$0xff]
  %v7277 = vld [vmem:[%s119 + $0x138] sm:$0xff]
  %v7278 = vld [vmem:[%s119 + $0x140] sm:$0xff]
  %v7279 = vld [vmem:[%s119 + $0x148] sm:$0xff]
  %v7280 = vld [vmem:[%s119 + $0x150] sm:$0xff]
  %v7281 = vld [vmem:[%s119 + $0x158] sm:$0xff]
  %v7282 = vld [vmem:[%s119 + $0x160] sm:$0xff]
  %v7283 = vld [vmem:[%s119 + $0x168] sm:$0xff]
  %v7284 = vld [vmem:[%s119 + $0x170] sm:$0xff]
  %v7285 = vld [vmem:[%s119 + $0x178] sm:$0xff]
  %v7286 = vld [vmem:[%s119 + $0x180] sm:$0xff]
  %v7287 = vld [vmem:[%s119 + $0x188] sm:$0xff]
  %v7288 = vld [vmem:[%s119 + $0x190] sm:$0xff]
  %v7289 = vld [vmem:[%s119 + $0x198] sm:$0xff]
  %v7290 = vld [vmem:[%s119 + $0x1a0] sm:$0xff]
  %v7291 = vld [vmem:[%s119 + $0x1a8] sm:$0xff]
  %v7292 = vld [vmem:[%s119 + $0x1b0] sm:$0xff]
  %v7293 = vld [vmem:[%s119 + $0x1b8] sm:$0xff]
  %v7294 = vld [vmem:[%s119 + $0x1c0] sm:$0xff]
  %v7295 = vld [vmem:[%s119 + $0x1c8] sm:$0xff]
  %v7296 = vld [vmem:[%s119 + $0x1d0] sm:$0xff]
  %v7297 = vld [vmem:[%s119 + $0x1d8] sm:$0xff]
  %v7298 = vld [vmem:[%s119 + $0x1e0] sm:$0xff]
  %v7299 = vld [vmem:[%s119 + $0x1e8] sm:$0xff]
  %v7300 = vld [vmem:[%s119 + $0x1f0] sm:$0xff]
  %v7301 = vld [vmem:[%s119 + $0x1f8] sm:$0xff]
  %v7302 = vld [vmem:[%s119 + $0x200] sm:$0xff]
  %v7303 = vld [vmem:[%s119 + $0x208] sm:$0xff]
  %v7304 = vld [vmem:[%s119 + $0x210] sm:$0xff]
  %v7305 = vld [vmem:[%s119 + $0x218] sm:$0xff]
  %v7306 = vld [vmem:[%s119 + $0x220] sm:$0xff]
  %v7307 = vld [vmem:[%s119 + $0x228] sm:$0xff]
  %v7308 = vld [vmem:[%s119 + $0x230] sm:$0xff]
  %v7309 = vld [vmem:[%s119 + $0x238] sm:$0xff]
  %v7310 = vld [vmem:[%s119 + $0x240] sm:$0xff]
  %v7311 = vld [vmem:[%s119 + $0x248] sm:$0xff]
  %v7312 = vld [vmem:[%s119 + $0x250] sm:$0xff]
  %v7313 = vld [vmem:[%s119 + $0x258] sm:$0xff]
  %v7314 = vld [vmem:[%s119 + $0x260] sm:$0xff]
  %v7315 = vld [vmem:[%s119 + $0x268] sm:$0xff]
  %v7316 = vld [vmem:[%s119 + $0x270] sm:$0xff]
  %v7317 = vld [vmem:[%s119 + $0x278] sm:$0xff]
  %v7318 = vld [vmem:[%s119 + $0x280] sm:$0xff]
  %v7319 = vld [vmem:[%s119 + $0x288] sm:$0xff]
  %v7320 = vld [vmem:[%s119 + $0x290] sm:$0xff]
  %v7321 = vld [vmem:[%s119 + $0x298] sm:$0xff]
  %v7322 = vld [vmem:[%s119 + $0x2a0] sm:$0xff]
  %v7323 = vld [vmem:[%s119 + $0x2a8] sm:$0xff]
  %v7324 = vld [vmem:[%s119 + $0x2b0] sm:$0xff]
  %v7325 = vld [vmem:[%s119 + $0x2b8] sm:$0xff]
  %v7326 = vld [vmem:[%s119 + $0x2c0] sm:$0xff]
  %v7327 = vld [vmem:[%s119 + $0x2c8] sm:$0xff]
  %v7328 = vld [vmem:[%s119 + $0x2d0] sm:$0xff]
  %v7329 = vld [vmem:[%s119 + $0x2d8] sm:$0xff]
  %v7330 = vld [vmem:[%s119 + $0x2e0] sm:$0xff]
  %v7331 = vld [vmem:[%s119 + $0x2e8] sm:$0xff]
  %v7332 = vld [vmem:[%s119 + $0x2f0] sm:$0xff]
  %v7333 = vld [vmem:[%s119 + $0x2f8] sm:$0xff]
  %v7334 = vld [vmem:[%s119 + $0x300] sm:$0xff]
  %v7335 = vld [vmem:[%s119 + $0x308] sm:$0xff]
  %v7336 = vld [vmem:[%s119 + $0x310] sm:$0xff]
  %v7337 = vld [vmem:[%s119 + $0x318] sm:$0xff]
  %v7338 = vld [vmem:[%s119 + $0x320] sm:$0xff]
  %v7339 = vld [vmem:[%s119 + $0x328] sm:$0xff]
  %v7340 = vld [vmem:[%s119 + $0x330] sm:$0xff]
  %v7341 = vld [vmem:[%s119 + $0x338] sm:$0xff]
  %v7342 = vld [vmem:[%s119 + $0x340] sm:$0xff]
  %v7343 = vld [vmem:[%s119 + $0x348] sm:$0xff]
  %v7344 = vld [vmem:[%s119 + $0x350] sm:$0xff]
  %v7345 = vld [vmem:[%s119 + $0x358] sm:$0xff]
  %v7346 = vld [vmem:[%s119 + $0x360] sm:$0xff]
  %v7347 = vld [vmem:[%s119 + $0x368] sm:$0xff]
  %v7348 = vld [vmem:[%s119 + $0x370] sm:$0xff]
  %v7349 = vld [vmem:[%s119 + $0x378] sm:$0xff]
  %v7350 = vld [vmem:[%s119 + $0x380] sm:$0xff]
  %v7351 = vld [vmem:[%s119 + $0x388] sm:$0xff]
  %v7352 = vld [vmem:[%s119 + $0x390] sm:$0xff]
  %v7353 = vld [vmem:[%s119 + $0x398] sm:$0xff]
  %v7354 = vld [vmem:[%s119 + $0x3a0] sm:$0xff]
  %v7355 = vld [vmem:[%s119 + $0x3a8] sm:$0xff]
  %v7356 = vld [vmem:[%s119 + $0x3b0] sm:$0xff]
  %v7357 = vld [vmem:[%s119 + $0x3b8] sm:$0xff]
  %v7358 = vld [vmem:[%s119 + $0x3c0] sm:$0xff]
  %v7359 = vld [vmem:[%s119 + $0x3c8] sm:$0xff]
  %v7360 = vld [vmem:[%s119 + $0x3d0] sm:$0xff]
  %v7361 = vld [vmem:[%s119 + $0x3d8] sm:$0xff]
  %v7362 = vld [vmem:[%s119 + $0x3e0] sm:$0xff]
  %v7363 = vld [vmem:[%s119 + $0x3e8] sm:$0xff]
  %v7364 = vld [vmem:[%s119 + $0x3f0] sm:$0xff]
  %v7365 = vld [vmem:[%s119 + $0x3f8] sm:$0xff]
  %v7366 = vld [vmem:[%s5] sm:$0x1]
  %7368 = vset.pattern.permute.xlu0 0
  %7369 = vperm.xlu0 %7368, %v7238
  %v7370 = vpop.permute.xlu0 %7369
  %7373 = vset.pattern.permute.xlu0 0
  %7374 = vperm.xlu0 %7373, %v7239
  %v7375 = vpop.permute.xlu0 %7374
  %7378 = vset.pattern.permute.xlu0 0
  %7379 = vperm.xlu0 %7378, %v7240
  %v7380 = vpop.permute.xlu0 %7379
  %7383 = vset.pattern.permute.xlu0 0
  %7384 = vperm.xlu0 %7383, %v7241
  %v7385 = vpop.permute.xlu0 %7384
  %7388 = vset.pattern.permute.xlu0 0
  %7389 = vperm.xlu0 %7388, %v7242
  %v7390 = vpop.permute.xlu0 %7389
  %7393 = vset.pattern.permute.xlu0 0
  %7394 = vperm.xlu0 %7393, %v7243
  %v7395 = vpop.permute.xlu0 %7394
  %7398 = vset.pattern.permute.xlu0 0
  %7399 = vperm.xlu0 %7398, %v7244
  %v7400 = vpop.permute.xlu0 %7399
  %7403 = vset.pattern.permute.xlu0 0
  %7404 = vperm.xlu0 %7403, %v7245
  %v7405 = vpop.permute.xlu0 %7404
  %7408 = vset.pattern.permute.xlu0 0
  %7409 = vperm.xlu0 %7408, %v7246
  %v7410 = vpop.permute.xlu0 %7409
  %7413 = vset.pattern.permute.xlu0 0
  %7414 = vperm.xlu0 %7413, %v7247
  %v7415 = vpop.permute.xlu0 %7414
  %7418 = vset.pattern.permute.xlu0 0
  %7419 = vperm.xlu0 %7418, %v7248
  %v7420 = vpop.permute.xlu0 %7419
  %7423 = vset.pattern.permute.xlu0 0
  %7424 = vperm.xlu0 %7423, %v7249
  %v7425 = vpop.permute.xlu0 %7424
  %7428 = vset.pattern.permute.xlu0 0
  %7429 = vperm.xlu0 %7428, %v7250
  %v7430 = vpop.permute.xlu0 %7429
  %7433 = vset.pattern.permute.xlu0 0
  %7434 = vperm.xlu0 %7433, %v7251
  %v7435 = vpop.permute.xlu0 %7434
  %7438 = vset.pattern.permute.xlu0 0
  %7439 = vperm.xlu0 %7438, %v7252
  %v7440 = vpop.permute.xlu0 %7439
  %7443 = vset.pattern.permute.xlu0 0
  %7444 = vperm.xlu0 %7443, %v7253
  %v7445 = vpop.permute.xlu0 %7444
  %7448 = vset.pattern.permute.xlu0 0
  %7449 = vperm.xlu0 %7448, %v7254
  %v7450 = vpop.permute.xlu0 %7449
  %7453 = vset.pattern.permute.xlu0 0
  %7454 = vperm.xlu0 %7453, %v7255
  %v7455 = vpop.permute.xlu0 %7454
  %7458 = vset.pattern.permute.xlu0 0
  %7459 = vperm.xlu0 %7458, %v7256
  %v7460 = vpop.permute.xlu0 %7459
  %7463 = vset.pattern.permute.xlu0 0
  %7464 = vperm.xlu0 %7463, %v7257
  %v7465 = vpop.permute.xlu0 %7464
  %7468 = vset.pattern.permute.xlu0 0
  %7469 = vperm.xlu0 %7468, %v7258
  %v7470 = vpop.permute.xlu0 %7469
  %7473 = vset.pattern.permute.xlu0 0
  %7474 = vperm.xlu0 %7473, %v7259
  %v7475 = vpop.permute.xlu0 %7474
  %7478 = vset.pattern.permute.xlu0 0
  %7479 = vperm.xlu0 %7478, %v7260
  %v7480 = vpop.permute.xlu0 %7479
  %7483 = vset.pattern.permute.xlu0 0
  %7484 = vperm.xlu0 %7483, %v7261
  %v7485 = vpop.permute.xlu0 %7484
  %7488 = vset.pattern.permute.xlu0 0
  %7489 = vperm.xlu0 %7488, %v7262
  %v7490 = vpop.permute.xlu0 %7489
  %7493 = vset.pattern.permute.xlu0 0
  %7494 = vperm.xlu0 %7493, %v7263
  %v7495 = vpop.permute.xlu0 %7494
  %7498 = vset.pattern.permute.xlu0 0
  %7499 = vperm.xlu0 %7498, %v7264
  %v7500 = vpop.permute.xlu0 %7499
  %7503 = vset.pattern.permute.xlu0 0
  %7504 = vperm.xlu0 %7503, %v7265
  %v7505 = vpop.permute.xlu0 %7504
  %7508 = vset.pattern.permute.xlu0 0
  %7509 = vperm.xlu0 %7508, %v7266
  %v7510 = vpop.permute.xlu0 %7509
  %7513 = vset.pattern.permute.xlu0 0
  %7514 = vperm.xlu0 %7513, %v7267
  %v7515 = vpop.permute.xlu0 %7514
  %7518 = vset.pattern.permute.xlu0 0
  %7519 = vperm.xlu0 %7518, %v7268
  %v7520 = vpop.permute.xlu0 %7519
  %7523 = vset.pattern.permute.xlu0 0
  %7524 = vperm.xlu0 %7523, %v7269
  %v7525 = vpop.permute.xlu0 %7524
  %7528 = vset.pattern.permute.xlu0 0
  %7529 = vperm.xlu0 %7528, %v7270
  %v7530 = vpop.permute.xlu0 %7529
  %7533 = vset.pattern.permute.xlu0 0
  %7534 = vperm.xlu0 %7533, %v7271
  %v7535 = vpop.permute.xlu0 %7534
  %7538 = vset.pattern.permute.xlu0 0
  %7539 = vperm.xlu0 %7538, %v7272
  %v7540 = vpop.permute.xlu0 %7539
  %7543 = vset.pattern.permute.xlu0 0
  %7544 = vperm.xlu0 %7543, %v7273
  %v7545 = vpop.permute.xlu0 %7544
  %7548 = vset.pattern.permute.xlu0 0
  %7549 = vperm.xlu0 %7548, %v7274
  %v7550 = vpop.permute.xlu0 %7549
  %7553 = vset.pattern.permute.xlu0 0
  %7554 = vperm.xlu0 %7553, %v7275
  %v7555 = vpop.permute.xlu0 %7554
  %7558 = vset.pattern.permute.xlu0 0
  %7559 = vperm.xlu0 %7558, %v7276
  %v7560 = vpop.permute.xlu0 %7559
  %7563 = vset.pattern.permute.xlu0 0
  %7564 = vperm.xlu0 %7563, %v7277
  %v7565 = vpop.permute.xlu0 %7564
  %7568 = vset.pattern.permute.xlu0 0
  %7569 = vperm.xlu0 %7568, %v7278
  %v7570 = vpop.permute.xlu0 %7569
  %7573 = vset.pattern.permute.xlu0 0
  %7574 = vperm.xlu0 %7573, %v7279
  %v7575 = vpop.permute.xlu0 %7574
  %7578 = vset.pattern.permute.xlu0 0
  %7579 = vperm.xlu0 %7578, %v7280
  %v7580 = vpop.permute.xlu0 %7579
  %7583 = vset.pattern.permute.xlu0 0
  %7584 = vperm.xlu0 %7583, %v7281
  %v7585 = vpop.permute.xlu0 %7584
  %7588 = vset.pattern.permute.xlu0 0
  %7589 = vperm.xlu0 %7588, %v7282
  %v7590 = vpop.permute.xlu0 %7589
  %7593 = vset.pattern.permute.xlu0 0
  %7594 = vperm.xlu0 %7593, %v7283
  %v7595 = vpop.permute.xlu0 %7594
  %7598 = vset.pattern.permute.xlu0 0
  %7599 = vperm.xlu0 %7598, %v7284
  %v7600 = vpop.permute.xlu0 %7599
  %7603 = vset.pattern.permute.xlu0 0
  %7604 = vperm.xlu0 %7603, %v7285
  %v7605 = vpop.permute.xlu0 %7604
  %7608 = vset.pattern.permute.xlu0 0
  %7609 = vperm.xlu0 %7608, %v7286
  %v7610 = vpop.permute.xlu0 %7609
  %7613 = vset.pattern.permute.xlu0 0
  %7614 = vperm.xlu0 %7613, %v7287
  %v7615 = vpop.permute.xlu0 %7614
  %7618 = vset.pattern.permute.xlu0 0
  %7619 = vperm.xlu0 %7618, %v7288
  %v7620 = vpop.permute.xlu0 %7619
  %7623 = vset.pattern.permute.xlu0 0
  %7624 = vperm.xlu0 %7623, %v7289
  %v7625 = vpop.permute.xlu0 %7624
  %7628 = vset.pattern.permute.xlu0 0
  %7629 = vperm.xlu0 %7628, %v7290
  %v7630 = vpop.permute.xlu0 %7629
  %7633 = vset.pattern.permute.xlu0 0
  %7634 = vperm.xlu0 %7633, %v7291
  %v7635 = vpop.permute.xlu0 %7634
  %7638 = vset.pattern.permute.xlu0 0
  %7639 = vperm.xlu0 %7638, %v7292
  %v7640 = vpop.permute.xlu0 %7639
  %7643 = vset.pattern.permute.xlu0 0
  %7644 = vperm.xlu0 %7643, %v7293
  %v7645 = vpop.permute.xlu0 %7644
  %7648 = vset.pattern.permute.xlu0 0
  %7649 = vperm.xlu0 %7648, %v7294
  %v7650 = vpop.permute.xlu0 %7649
  %7653 = vset.pattern.permute.xlu0 0
  %7654 = vperm.xlu0 %7653, %v7295
  %v7655 = vpop.permute.xlu0 %7654
  %7658 = vset.pattern.permute.xlu0 0
  %7659 = vperm.xlu0 %7658, %v7296
  %v7660 = vpop.permute.xlu0 %7659
  %7663 = vset.pattern.permute.xlu0 0
  %7664 = vperm.xlu0 %7663, %v7297
  %v7665 = vpop.permute.xlu0 %7664
  %7668 = vset.pattern.permute.xlu0 0
  %7669 = vperm.xlu0 %7668, %v7298
  %v7670 = vpop.permute.xlu0 %7669
  %7673 = vset.pattern.permute.xlu0 0
  %7674 = vperm.xlu0 %7673, %v7299
  %v7675 = vpop.permute.xlu0 %7674
  %7678 = vset.pattern.permute.xlu0 0
  %7679 = vperm.xlu0 %7678, %v7300
  %v7680 = vpop.permute.xlu0 %7679
  %7683 = vset.pattern.permute.xlu0 0
  %7684 = vperm.xlu0 %7683, %v7301
  %v7685 = vpop.permute.xlu0 %7684
  %7688 = vset.pattern.permute.xlu0 0
  %7689 = vperm.xlu0 %7688, %v7302
  %v7690 = vpop.permute.xlu0 %7689
  %7693 = vset.pattern.permute.xlu0 0
  %7694 = vperm.xlu0 %7693, %v7303
  %v7695 = vpop.permute.xlu0 %7694
  %7698 = vset.pattern.permute.xlu0 0
  %7699 = vperm.xlu0 %7698, %v7304
  %v7700 = vpop.permute.xlu0 %7699
  %7703 = vset.pattern.permute.xlu0 0
  %7704 = vperm.xlu0 %7703, %v7305
  %v7705 = vpop.permute.xlu0 %7704
  %7708 = vset.pattern.permute.xlu0 0
  %7709 = vperm.xlu0 %7708, %v7306
  %v7710 = vpop.permute.xlu0 %7709
  %7713 = vset.pattern.permute.xlu0 0
  %7714 = vperm.xlu0 %7713, %v7307
  %v7715 = vpop.permute.xlu0 %7714
  %7718 = vset.pattern.permute.xlu0 0
  %7719 = vperm.xlu0 %7718, %v7308
  %v7720 = vpop.permute.xlu0 %7719
  %7723 = vset.pattern.permute.xlu0 0
  %7724 = vperm.xlu0 %7723, %v7309
  %v7725 = vpop.permute.xlu0 %7724
  %7728 = vset.pattern.permute.xlu0 0
  %7729 = vperm.xlu0 %7728, %v7310
  %v7730 = vpop.permute.xlu0 %7729
  %7733 = vset.pattern.permute.xlu0 0
  %7734 = vperm.xlu0 %7733, %v7311
  %v7735 = vpop.permute.xlu0 %7734
  %7738 = vset.pattern.permute.xlu0 0
  %7739 = vperm.xlu0 %7738, %v7312
  %v7740 = vpop.permute.xlu0 %7739
  %7743 = vset.pattern.permute.xlu0 0
  %7744 = vperm.xlu0 %7743, %v7313
  %v7745 = vpop.permute.xlu0 %7744
  %7748 = vset.pattern.permute.xlu0 0
  %7749 = vperm.xlu0 %7748, %v7314
  %v7750 = vpop.permute.xlu0 %7749
  %7753 = vset.pattern.permute.xlu0 0
  %7754 = vperm.xlu0 %7753, %v7315
  %v7755 = vpop.permute.xlu0 %7754
  %7758 = vset.pattern.permute.xlu0 0
  %7759 = vperm.xlu0 %7758, %v7316
  %v7760 = vpop.permute.xlu0 %7759
  %7763 = vset.pattern.permute.xlu0 0
  %7764 = vperm.xlu0 %7763, %v7317
  %v7765 = vpop.permute.xlu0 %7764
  %7768 = vset.pattern.permute.xlu0 0
  %7769 = vperm.xlu0 %7768, %v7318
  %v7770 = vpop.permute.xlu0 %7769
  %7773 = vset.pattern.permute.xlu0 0
  %7774 = vperm.xlu0 %7773, %v7319
  %v7775 = vpop.permute.xlu0 %7774
  %7778 = vset.pattern.permute.xlu0 0
  %7779 = vperm.xlu0 %7778, %v7320
  %v7780 = vpop.permute.xlu0 %7779
  %7783 = vset.pattern.permute.xlu0 0
  %7784 = vperm.xlu0 %7783, %v7321
  %v7785 = vpop.permute.xlu0 %7784
  %7788 = vset.pattern.permute.xlu0 0
  %7789 = vperm.xlu0 %7788, %v7322
  %v7790 = vpop.permute.xlu0 %7789
  %7793 = vset.pattern.permute.xlu0 0
  %7794 = vperm.xlu0 %7793, %v7323
  %v7795 = vpop.permute.xlu0 %7794
  %7798 = vset.pattern.permute.xlu0 0
  %7799 = vperm.xlu0 %7798, %v7324
  %v7800 = vpop.permute.xlu0 %7799
  %7803 = vset.pattern.permute.xlu0 0
  %7804 = vperm.xlu0 %7803, %v7325
  %v7805 = vpop.permute.xlu0 %7804
  %7808 = vset.pattern.permute.xlu0 0
  %7809 = vperm.xlu0 %7808, %v7326
  %v7810 = vpop.permute.xlu0 %7809
  %7813 = vset.pattern.permute.xlu0 0
  %7814 = vperm.xlu0 %7813, %v7327
  %v7815 = vpop.permute.xlu0 %7814
  %7818 = vset.pattern.permute.xlu0 0
  %7819 = vperm.xlu0 %7818, %v7328
  %v7820 = vpop.permute.xlu0 %7819
  %7823 = vset.pattern.permute.xlu0 0
  %7824 = vperm.xlu0 %7823, %v7329
  %v7825 = vpop.permute.xlu0 %7824
  %7828 = vset.pattern.permute.xlu0 0
  %7829 = vperm.xlu0 %7828, %v7330
  %v7830 = vpop.permute.xlu0 %7829
  %7833 = vset.pattern.permute.xlu0 0
  %7834 = vperm.xlu0 %7833, %v7331
  %v7835 = vpop.permute.xlu0 %7834
  %7838 = vset.pattern.permute.xlu0 0
  %7839 = vperm.xlu0 %7838, %v7332
  %v7840 = vpop.permute.xlu0 %7839
  %7843 = vset.pattern.permute.xlu0 0
  %7844 = vperm.xlu0 %7843, %v7333
  %v7845 = vpop.permute.xlu0 %7844
  %7848 = vset.pattern.permute.xlu0 0
  %7849 = vperm.xlu0 %7848, %v7334
  %v7850 = vpop.permute.xlu0 %7849
  %7853 = vset.pattern.permute.xlu0 0
  %7854 = vperm.xlu0 %7853, %v7335
  %v7855 = vpop.permute.xlu0 %7854
  %7858 = vset.pattern.permute.xlu0 0
  %7859 = vperm.xlu0 %7858, %v7336
  %v7860 = vpop.permute.xlu0 %7859
  %7863 = vset.pattern.permute.xlu0 0
  %7864 = vperm.xlu0 %7863, %v7337
  %v7865 = vpop.permute.xlu0 %7864
  %7868 = vset.pattern.permute.xlu0 0
  %7869 = vperm.xlu0 %7868, %v7338
  %v7870 = vpop.permute.xlu0 %7869
  %7873 = vset.pattern.permute.xlu0 0
  %7874 = vperm.xlu0 %7873, %v7339
  %v7875 = vpop.permute.xlu0 %7874
  %7878 = vset.pattern.permute.xlu0 0
  %7879 = vperm.xlu0 %7878, %v7340
  %v7880 = vpop.permute.xlu0 %7879
  %7883 = vset.pattern.permute.xlu0 0
  %7884 = vperm.xlu0 %7883, %v7341
  %v7885 = vpop.permute.xlu0 %7884
  %7888 = vset.pattern.permute.xlu0 0
  %7889 = vperm.xlu0 %7888, %v7342
  %v7890 = vpop.permute.xlu0 %7889
  %7893 = vset.pattern.permute.xlu0 0
  %7894 = vperm.xlu0 %7893, %v7343
  %v7895 = vpop.permute.xlu0 %7894
  %7898 = vset.pattern.permute.xlu0 0
  %7899 = vperm.xlu0 %7898, %v7344
  %v7900 = vpop.permute.xlu0 %7899
  %7903 = vset.pattern.permute.xlu0 0
  %7904 = vperm.xlu0 %7903, %v7345
  %v7905 = vpop.permute.xlu0 %7904
  %7908 = vset.pattern.permute.xlu0 0
  %7909 = vperm.xlu0 %7908, %v7346
  %v7910 = vpop.permute.xlu0 %7909
  %7913 = vset.pattern.permute.xlu0 0
  %7914 = vperm.xlu0 %7913, %v7347
  %v7915 = vpop.permute.xlu0 %7914
  %7918 = vset.pattern.permute.xlu0 0
  %7919 = vperm.xlu0 %7918, %v7348
  %v7920 = vpop.permute.xlu0 %7919
  %7923 = vset.pattern.permute.xlu0 0
  %7924 = vperm.xlu0 %7923, %v7349
  %v7925 = vpop.permute.xlu0 %7924
  %7928 = vset.pattern.permute.xlu0 0
  %7929 = vperm.xlu0 %7928, %v7350
  %v7930 = vpop.permute.xlu0 %7929
  %7933 = vset.pattern.permute.xlu0 0
  %7934 = vperm.xlu0 %7933, %v7351
  %v7935 = vpop.permute.xlu0 %7934
  %7938 = vset.pattern.permute.xlu0 0
  %7939 = vperm.xlu0 %7938, %v7352
  %v7940 = vpop.permute.xlu0 %7939
  %7943 = vset.pattern.permute.xlu0 0
  %7944 = vperm.xlu0 %7943, %v7353
  %v7945 = vpop.permute.xlu0 %7944
  %7948 = vset.pattern.permute.xlu0 0
  %7949 = vperm.xlu0 %7948, %v7354
  %v7950 = vpop.permute.xlu0 %7949
  %7953 = vset.pattern.permute.xlu0 0
  %7954 = vperm.xlu0 %7953, %v7355
  %v7955 = vpop.permute.xlu0 %7954
  %7958 = vset.pattern.permute.xlu0 0
  %7959 = vperm.xlu0 %7958, %v7356
  %v7960 = vpop.permute.xlu0 %7959
  %7963 = vset.pattern.permute.xlu0 0
  %7964 = vperm.xlu0 %7963, %v7357
  %v7965 = vpop.permute.xlu0 %7964
  %7968 = vset.pattern.permute.xlu0 0
  %7969 = vperm.xlu0 %7968, %v7358
  %v7970 = vpop.permute.xlu0 %7969
  %7973 = vset.pattern.permute.xlu0 0
  %7974 = vperm.xlu0 %7973, %v7359
  %v7975 = vpop.permute.xlu0 %7974
  %7978 = vset.pattern.permute.xlu0 0
  %7979 = vperm.xlu0 %7978, %v7360
  %v7980 = vpop.permute.xlu0 %7979
  %7983 = vset.pattern.permute.xlu0 0
  %7984 = vperm.xlu0 %7983, %v7361
  %v7985 = vpop.permute.xlu0 %7984
  %7988 = vset.pattern.permute.xlu0 0
  %7989 = vperm.xlu0 %7988, %v7362
  %v7990 = vpop.permute.xlu0 %7989
  %7993 = vset.pattern.permute.xlu0 0
  %7994 = vperm.xlu0 %7993, %v7363
  %v7995 = vpop.permute.xlu0 %7994
  %7998 = vset.pattern.permute.xlu0 0
  %7999 = vperm.xlu0 %7998, %v7364
  %v8000 = vpop.permute.xlu0 %7999
  %8003 = vset.pattern.permute.xlu0 0
  %8004 = vperm.xlu0 %8003, %v7365
  %v8005 = vpop.permute.xlu0 %8004
  %v8007 = vmul.f32 %v7110, %v7370
  %v8008 = vmul.f32 %v7111, %v7375
  %v8009 = vmul.f32 %v7112, %v7380
  %v8010 = vmul.f32 %v7113, %v7385
  %v8011 = vmul.f32 %v7114, %v7390
  %v8012 = vmul.f32 %v7115, %v7395
  %v8013 = vmul.f32 %v7116, %v7400
  %v8014 = vmul.f32 %v7117, %v7405
  %v8015 = vmul.f32 %v7118, %v7410
  %v8016 = vmul.f32 %v7119, %v7415
  %v8017 = vmul.f32 %v7120, %v7420
  %v8018 = vmul.f32 %v7121, %v7425
  %v8019 = vmul.f32 %v7122, %v7430
  %v8020 = vmul.f32 %v7123, %v7435
  %v8021 = vmul.f32 %v7124, %v7440
  %v8022 = vmul.f32 %v7125, %v7445
  %v8023 = vmul.f32 %v7126, %v7450
  %v8024 = vmul.f32 %v7127, %v7455
  %v8025 = vmul.f32 %v7128, %v7460
  %v8026 = vmul.f32 %v7129, %v7465
  %v8027 = vmul.f32 %v7130, %v7470
  %v8028 = vmul.f32 %v7131, %v7475
  %v8029 = vmul.f32 %v7132, %v7480
  %v8030 = vmul.f32 %v7133, %v7485
  %v8031 = vmul.f32 %v7134, %v7490
  %v8032 = vmul.f32 %v7135, %v7495
  %v8033 = vmul.f32 %v7136, %v7500
  %v8034 = vmul.f32 %v7137, %v7505
  %v8035 = vmul.f32 %v7138, %v7510
  %v8036 = vmul.f32 %v7139, %v7515
  %v8037 = vmul.f32 %v7140, %v7520
  %v8038 = vmul.f32 %v7141, %v7525
  %v8039 = vmul.f32 %v7142, %v7530
  %v8040 = vmul.f32 %v7143, %v7535
  %v8041 = vmul.f32 %v7144, %v7540
  %v8042 = vmul.f32 %v7145, %v7545
  %v8043 = vmul.f32 %v7146, %v7550
  %v8044 = vmul.f32 %v7147, %v7555
  %v8045 = vmul.f32 %v7148, %v7560
  %v8046 = vmul.f32 %v7149, %v7565
  %v8047 = vmul.f32 %v7150, %v7570
  %v8048 = vmul.f32 %v7151, %v7575
  %v8049 = vmul.f32 %v7152, %v7580
  %v8050 = vmul.f32 %v7153, %v7585
  %v8051 = vmul.f32 %v7154, %v7590
  %v8052 = vmul.f32 %v7155, %v7595
  %v8053 = vmul.f32 %v7156, %v7600
  %v8054 = vmul.f32 %v7157, %v7605
  %v8055 = vmul.f32 %v7158, %v7610
  %v8056 = vmul.f32 %v7159, %v7615
  %v8057 = vmul.f32 %v7160, %v7620
  %v8058 = vmul.f32 %v7161, %v7625
  %v8059 = vmul.f32 %v7162, %v7630
  %v8060 = vmul.f32 %v7163, %v7635
  %v8061 = vmul.f32 %v7164, %v7640
  %v8062 = vmul.f32 %v7165, %v7645
  %v8063 = vmul.f32 %v7166, %v7650
  %v8064 = vmul.f32 %v7167, %v7655
  %v8065 = vmul.f32 %v7168, %v7660
  %v8066 = vmul.f32 %v7169, %v7665
  %v8067 = vmul.f32 %v7170, %v7670
  %v8068 = vmul.f32 %v7171, %v7675
  %v8069 = vmul.f32 %v7172, %v7680
  %v8070 = vmul.f32 %v7173, %v7685
  %v8071 = vmul.f32 %v7174, %v7690
  %v8072 = vmul.f32 %v7175, %v7695
  %v8073 = vmul.f32 %v7176, %v7700
  %v8074 = vmul.f32 %v7177, %v7705
  %v8075 = vmul.f32 %v7178, %v7710
  %v8076 = vmul.f32 %v7179, %v7715
  %v8077 = vmul.f32 %v7180, %v7720
  %v8078 = vmul.f32 %v7181, %v7725
  %v8079 = vmul.f32 %v7182, %v7730
  %v8080 = vmul.f32 %v7183, %v7735
  %v8081 = vmul.f32 %v7184, %v7740
  %v8082 = vmul.f32 %v7185, %v7745
  %v8083 = vmul.f32 %v7186, %v7750
  %v8084 = vmul.f32 %v7187, %v7755
  %v8085 = vmul.f32 %v7188, %v7760
  %v8086 = vmul.f32 %v7189, %v7765
  %v8087 = vmul.f32 %v7190, %v7770
  %v8088 = vmul.f32 %v7191, %v7775
  %v8089 = vmul.f32 %v7192, %v7780
  %v8090 = vmul.f32 %v7193, %v7785
  %v8091 = vmul.f32 %v7194, %v7790
  %v8092 = vmul.f32 %v7195, %v7795
  %v8093 = vmul.f32 %v7196, %v7800
  %v8094 = vmul.f32 %v7197, %v7805
  %v8095 = vmul.f32 %v7198, %v7810
  %v8096 = vmul.f32 %v7199, %v7815
  %v8097 = vmul.f32 %v7200, %v7820
  %v8098 = vmul.f32 %v7201, %v7825
  %v8099 = vmul.f32 %v7202, %v7830
  %v8100 = vmul.f32 %v7203, %v7835
  %v8101 = vmul.f32 %v7204, %v7840
  %v8102 = vmul.f32 %v7205, %v7845
  %v8103 = vmul.f32 %v7206, %v7850
  %v8104 = vmul.f32 %v7207, %v7855
  %v8105 = vmul.f32 %v7208, %v7860
  %v8106 = vmul.f32 %v7209, %v7865
  %v8107 = vmul.f32 %v7210, %v7870
  %v8108 = vmul.f32 %v7211, %v7875
  %v8109 = vmul.f32 %v7212, %v7880
  %v8110 = vmul.f32 %v7213, %v7885
  %v8111 = vmul.f32 %v7214, %v7890
  %v8112 = vmul.f32 %v7215, %v7895
  %v8113 = vmul.f32 %v7216, %v7900
  %v8114 = vmul.f32 %v7217, %v7905
  %v8115 = vmul.f32 %v7218, %v7910
  %v8116 = vmul.f32 %v7219, %v7915
  %v8117 = vmul.f32 %v7220, %v7920
  %v8118 = vmul.f32 %v7221, %v7925
  %v8119 = vmul.f32 %v7222, %v7930
  %v8120 = vmul.f32 %v7223, %v7935
  %v8121 = vmul.f32 %v7224, %v7940
  %v8122 = vmul.f32 %v7225, %v7945
  %v8123 = vmul.f32 %v7226, %v7950
  %v8124 = vmul.f32 %v7227, %v7955
  %v8125 = vmul.f32 %v7228, %v7960
  %v8126 = vmul.f32 %v7229, %v7965
  %v8127 = vmul.f32 %v7230, %v7970
  %v8128 = vmul.f32 %v7231, %v7975
  %v8129 = vmul.f32 %v7232, %v7980
  %v8130 = vmul.f32 %v7233, %v7985
  %v8131 = vmul.f32 %v7234, %v7990
  %v8132 = vmul.f32 %v7235, %v7995
  %v8133 = vmul.f32 %v7236, %v8000
  %v8134 = vmul.f32 %v7237, %v8005
  %v8135 = vadd.f32 %v8007, %v8008
  %v8136 = vadd.f32 %v8135, %v8009
  %v8137 = vadd.f32 %v8136, %v8010
  %v8138 = vadd.f32 %v8137, %v8011
  %v8139 = vadd.f32 %v8138, %v8012
  %v8140 = vadd.f32 %v8139, %v8013
  %v8141 = vadd.f32 %v8140, %v8014
  %v8142 = vadd.f32 %v8141, %v8015
  %v8143 = vadd.f32 %v8142, %v8016
  %v8144 = vadd.f32 %v8143, %v8017
  %v8145 = vadd.f32 %v8144, %v8018
  %v8146 = vadd.f32 %v8145, %v8019
  %v8147 = vadd.f32 %v8146, %v8020
  %v8148 = vadd.f32 %v8147, %v8021
  %v8149 = vadd.f32 %v8148, %v8022
  %v8150 = vadd.f32 %v8149, %v8023
  %v8151 = vadd.f32 %v8150, %v8024
  %v8152 = vadd.f32 %v8151, %v8025
  %v8153 = vadd.f32 %v8152, %v8026
  %v8154 = vadd.f32 %v8153, %v8027
  %v8155 = vadd.f32 %v8154, %v8028
  %v8156 = vadd.f32 %v8155, %v8029
  %v8157 = vadd.f32 %v8156, %v8030
  %v8158 = vadd.f32 %v8157, %v8031
  %v8159 = vadd.f32 %v8158, %v8032
  %v8160 = vadd.f32 %v8159, %v8033
  %v8161 = vadd.f32 %v8160, %v8034
  %v8162 = vadd.f32 %v8161, %v8035
  %v8163 = vadd.f32 %v8162, %v8036
  %v8164 = vadd.f32 %v8163, %v8037
  %v8165 = vadd.f32 %v8164, %v8038
  %v8166 = vadd.f32 %v8165, %v8039
  %v8167 = vadd.f32 %v8166, %v8040
  %v8168 = vadd.f32 %v8167, %v8041
  %v8169 = vadd.f32 %v8168, %v8042
  %v8170 = vadd.f32 %v8169, %v8043
  %v8171 = vadd.f32 %v8170, %v8044
  %v8172 = vadd.f32 %v8171, %v8045
  %v8173 = vadd.f32 %v8172, %v8046
  %v8174 = vadd.f32 %v8173, %v8047
  %v8175 = vadd.f32 %v8174, %v8048
  %v8176 = vadd.f32 %v8175, %v8049
  %v8177 = vadd.f32 %v8176, %v8050
  %v8178 = vadd.f32 %v8177, %v8051
  %v8179 = vadd.f32 %v8178, %v8052
  %v8180 = vadd.f32 %v8179, %v8053
  %v8181 = vadd.f32 %v8180, %v8054
  %v8182 = vadd.f32 %v8181, %v8055
  %v8183 = vadd.f32 %v8182, %v8056
  %v8184 = vadd.f32 %v8183, %v8057
  %v8185 = vadd.f32 %v8184, %v8058
  %v8186 = vadd.f32 %v8185, %v8059
  %v8187 = vadd.f32 %v8186, %v8060
  %v8188 = vadd.f32 %v8187, %v8061
  %v8189 = vadd.f32 %v8188, %v8062
  %v8190 = vadd.f32 %v8189, %v8063
  %v8191 = vadd.f32 %v8190, %v8064
  %v8192 = vadd.f32 %v8191, %v8065
  %v8193 = vadd.f32 %v8192, %v8066
  %v8194 = vadd.f32 %v8193, %v8067
  %v8195 = vadd.f32 %v8194, %v8068
  %v8196 = vadd.f32 %v8195, %v8069
  %v8197 = vadd.f32 %v8196, %v8070
  %v8198 = vadd.f32 %v8197, %v8071
  %v8199 = vadd.f32 %v8198, %v8072
  %v8200 = vadd.f32 %v8199, %v8073
  %v8201 = vadd.f32 %v8200, %v8074
  %v8202 = vadd.f32 %v8201, %v8075
  %v8203 = vadd.f32 %v8202, %v8076
  %v8204 = vadd.f32 %v8203, %v8077
  %v8205 = vadd.f32 %v8204, %v8078
  %v8206 = vadd.f32 %v8205, %v8079
  %v8207 = vadd.f32 %v8206, %v8080
  %v8208 = vadd.f32 %v8207, %v8081
  %v8209 = vadd.f32 %v8208, %v8082
  %v8210 = vadd.f32 %v8209, %v8083
  %v8211 = vadd.f32 %v8210, %v8084
  %v8212 = vadd.f32 %v8211, %v8085
  %v8213 = vadd.f32 %v8212, %v8086
  %v8214 = vadd.f32 %v8213, %v8087
  %v8215 = vadd.f32 %v8214, %v8088
  %v8216 = vadd.f32 %v8215, %v8089
  %v8217 = vadd.f32 %v8216, %v8090
  %v8218 = vadd.f32 %v8217, %v8091
  %v8219 = vadd.f32 %v8218, %v8092
  %v8220 = vadd.f32 %v8219, %v8093
  %v8221 = vadd.f32 %v8220, %v8094
  %v8222 = vadd.f32 %v8221, %v8095
  %v8223 = vadd.f32 %v8222, %v8096
  %v8224 = vadd.f32 %v8223, %v8097
  %v8225 = vadd.f32 %v8224, %v8098
  %v8226 = vadd.f32 %v8225, %v8099
  %v8227 = vadd.f32 %v8226, %v8100
  %v8228 = vadd.f32 %v8227, %v8101
  %v8229 = vadd.f32 %v8228, %v8102
  %v8230 = vadd.f32 %v8229, %v8103
  %v8231 = vadd.f32 %v8230, %v8104
  %v8232 = vadd.f32 %v8231, %v8105
  %v8233 = vadd.f32 %v8232, %v8106
  %v8234 = vadd.f32 %v8233, %v8107
  %v8235 = vadd.f32 %v8234, %v8108
  %v8236 = vadd.f32 %v8235, %v8109
  %v8237 = vadd.f32 %v8236, %v8110
  %v8238 = vadd.f32 %v8237, %v8111
  %v8239 = vadd.f32 %v8238, %v8112
  %v8240 = vadd.f32 %v8239, %v8113
  %v8241 = vadd.f32 %v8240, %v8114
  %v8242 = vadd.f32 %v8241, %v8115
  %v8243 = vadd.f32 %v8242, %v8116
  %v8244 = vadd.f32 %v8243, %v8117
  %v8245 = vadd.f32 %v8244, %v8118
  %v8246 = vadd.f32 %v8245, %v8119
  %v8247 = vadd.f32 %v8246, %v8120
  %v8248 = vadd.f32 %v8247, %v8121
  %v8249 = vadd.f32 %v8248, %v8122
  %v8250 = vadd.f32 %v8249, %v8123
  %v8251 = vadd.f32 %v8250, %v8124
  %v8252 = vadd.f32 %v8251, %v8125
  %v8253 = vadd.f32 %v8252, %v8126
  %v8254 = vadd.f32 %v8253, %v8127
  %v8255 = vadd.f32 %v8254, %v8128
  %v8256 = vadd.f32 %v8255, %v8129
  %v8257 = vadd.f32 %v8256, %v8130
  %v8258 = vadd.f32 %v8257, %v8131
  %v8259 = vadd.f32 %v8258, %v8132
  %v8260 = vadd.f32 %v8259, %v8133
  %v8261 = vadd.f32 %v8260, %v8134
  %v8262 = vrot.slane %v8261, 4
  %v8263 = vadd.f32 %v8261, %v8262
  %v8264 = vrot.slane %v8263, 2
  %v8265 = vadd.f32 %v8263, %v8264
  %v8266 = vrot.slane %v8265, 1
  %v8267 = vadd.f32 %v8265, %v8266
  %v8268 = vadd.f32 %v7366, %v8267
  %8269 = vst [vmem:[%s5] sm:$0x1] %v8268
  %v8270 = vld [vmem:[%s6] sm:$0x1]
  %v8271 = vmul.f32 %v7110, %v7110
  %v8272 = vmul.f32 %v7111, %v7111
  %v8273 = vmul.f32 %v7112, %v7112
  %v8274 = vmul.f32 %v7113, %v7113
  %v8275 = vmul.f32 %v7114, %v7114
  %v8276 = vmul.f32 %v7115, %v7115
  %v8277 = vmul.f32 %v7116, %v7116
  %v8278 = vmul.f32 %v7117, %v7117
  %v8279 = vmul.f32 %v7118, %v7118
  %v8280 = vmul.f32 %v7119, %v7119
  %v8281 = vmul.f32 %v7120, %v7120
  %v8282 = vmul.f32 %v7121, %v7121
  %v8283 = vmul.f32 %v7122, %v7122
  %v8284 = vmul.f32 %v7123, %v7123
  %v8285 = vmul.f32 %v7124, %v7124
  %v8286 = vmul.f32 %v7125, %v7125
  %v8287 = vmul.f32 %v7126, %v7126
  %v8288 = vmul.f32 %v7127, %v7127
  %v8289 = vmul.f32 %v7128, %v7128
  %v8290 = vmul.f32 %v7129, %v7129
  %v8291 = vmul.f32 %v7130, %v7130
  %v8292 = vmul.f32 %v7131, %v7131
  %v8293 = vmul.f32 %v7132, %v7132
  %v8294 = vmul.f32 %v7133, %v7133
  %v8295 = vmul.f32 %v7134, %v7134
  %v8296 = vmul.f32 %v7135, %v7135
  %v8297 = vmul.f32 %v7136, %v7136
  %v8298 = vmul.f32 %v7137, %v7137
  %v8299 = vmul.f32 %v7138, %v7138
  %v8300 = vmul.f32 %v7139, %v7139
  %v8301 = vmul.f32 %v7140, %v7140
  %v8302 = vmul.f32 %v7141, %v7141
  %v8303 = vmul.f32 %v7142, %v7142
  %v8304 = vmul.f32 %v7143, %v7143
  %v8305 = vmul.f32 %v7144, %v7144
  %v8306 = vmul.f32 %v7145, %v7145
  %v8307 = vmul.f32 %v7146, %v7146
  %v8308 = vmul.f32 %v7147, %v7147
  %v8309 = vmul.f32 %v7148, %v7148
  %v8310 = vmul.f32 %v7149, %v7149
  %v8311 = vmul.f32 %v7150, %v7150
  %v8312 = vmul.f32 %v7151, %v7151
  %v8313 = vmul.f32 %v7152, %v7152
  %v8314 = vmul.f32 %v7153, %v7153
  %v8315 = vmul.f32 %v7154, %v7154
  %v8316 = vmul.f32 %v7155, %v7155
  %v8317 = vmul.f32 %v7156, %v7156
  %v8318 = vmul.f32 %v7157, %v7157
  %v8319 = vmul.f32 %v7158, %v7158
  %v8320 = vmul.f32 %v7159, %v7159
  %v8321 = vmul.f32 %v7160, %v7160
  %v8322 = vmul.f32 %v7161, %v7161
  %v8323 = vmul.f32 %v7162, %v7162
  %v8324 = vmul.f32 %v7163, %v7163
  %v8325 = vmul.f32 %v7164, %v7164
  %v8326 = vmul.f32 %v7165, %v7165
  %v8327 = vmul.f32 %v7166, %v7166
  %v8328 = vmul.f32 %v7167, %v7167
  %v8329 = vmul.f32 %v7168, %v7168
  %v8330 = vmul.f32 %v7169, %v7169
  %v8331 = vmul.f32 %v7170, %v7170
  %v8332 = vmul.f32 %v7171, %v7171
  %v8333 = vmul.f32 %v7172, %v7172
  %v8334 = vmul.f32 %v7173, %v7173
  %v8335 = vmul.f32 %v7174, %v7174
  %v8336 = vmul.f32 %v7175, %v7175
  %v8337 = vmul.f32 %v7176, %v7176
  %v8338 = vmul.f32 %v7177, %v7177
  %v8339 = vmul.f32 %v7178, %v7178
  %v8340 = vmul.f32 %v7179, %v7179
  %v8341 = vmul.f32 %v7180, %v7180
  %v8342 = vmul.f32 %v7181, %v7181
  %v8343 = vmul.f32 %v7182, %v7182
  %v8344 = vmul.f32 %v7183, %v7183
  %v8345 = vmul.f32 %v7184, %v7184
  %v8346 = vmul.f32 %v7185, %v7185
  %v8347 = vmul.f32 %v7186, %v7186
  %v8348 = vmul.f32 %v7187, %v7187
  %v8349 = vmul.f32 %v7188, %v7188
  %v8350 = vmul.f32 %v7189, %v7189
  %v8351 = vmul.f32 %v7190, %v7190
  %v8352 = vmul.f32 %v7191, %v7191
  %v8353 = vmul.f32 %v7192, %v7192
  %v8354 = vmul.f32 %v7193, %v7193
  %v8355 = vmul.f32 %v7194, %v7194
  %v8356 = vmul.f32 %v7195, %v7195
  %v8357 = vmul.f32 %v7196, %v7196
  %v8358 = vmul.f32 %v7197, %v7197
  %v8359 = vmul.f32 %v7198, %v7198
  %v8360 = vmul.f32 %v7199, %v7199
  %v8361 = vmul.f32 %v7200, %v7200
  %v8362 = vmul.f32 %v7201, %v7201
  %v8363 = vmul.f32 %v7202, %v7202
  %v8364 = vmul.f32 %v7203, %v7203
  %v8365 = vmul.f32 %v7204, %v7204
  %v8366 = vmul.f32 %v7205, %v7205
  %v8367 = vmul.f32 %v7206, %v7206
  %v8368 = vmul.f32 %v7207, %v7207
  %v8369 = vmul.f32 %v7208, %v7208
  %v8370 = vmul.f32 %v7209, %v7209
  %v8371 = vmul.f32 %v7210, %v7210
  %v8372 = vmul.f32 %v7211, %v7211
  %v8373 = vmul.f32 %v7212, %v7212
  %v8374 = vmul.f32 %v7213, %v7213
  %v8375 = vmul.f32 %v7214, %v7214
  %v8376 = vmul.f32 %v7215, %v7215
  %v8377 = vmul.f32 %v7216, %v7216
  %v8378 = vmul.f32 %v7217, %v7217
  %v8379 = vmul.f32 %v7218, %v7218
  %v8380 = vmul.f32 %v7219, %v7219
  %v8381 = vmul.f32 %v7220, %v7220
  %v8382 = vmul.f32 %v7221, %v7221
  %v8383 = vmul.f32 %v7222, %v7222
  %v8384 = vmul.f32 %v7223, %v7223
  %v8385 = vmul.f32 %v7224, %v7224
  %v8386 = vmul.f32 %v7225, %v7225
  %v8387 = vmul.f32 %v7226, %v7226
  %v8388 = vmul.f32 %v7227, %v7227
  %v8389 = vmul.f32 %v7228, %v7228
  %v8390 = vmul.f32 %v7229, %v7229
  %v8391 = vmul.f32 %v7230, %v7230
  %v8392 = vmul.f32 %v7231, %v7231
  %v8393 = vmul.f32 %v7232, %v7232
  %v8394 = vmul.f32 %v7233, %v7233
  %v8395 = vmul.f32 %v7234, %v7234
  %v8396 = vmul.f32 %v7235, %v7235
  %v8397 = vmul.f32 %v7236, %v7236
  %v8398 = vmul.f32 %v7237, %v7237
  %v8399 = vmul.f32 %v8271, %v7370
  %v8400 = vmul.f32 %v8272, %v7375
  %v8401 = vmul.f32 %v8273, %v7380
  %v8402 = vmul.f32 %v8274, %v7385
  %v8403 = vmul.f32 %v8275, %v7390
  %v8404 = vmul.f32 %v8276, %v7395
  %v8405 = vmul.f32 %v8277, %v7400
  %v8406 = vmul.f32 %v8278, %v7405
  %v8407 = vmul.f32 %v8279, %v7410
  %v8408 = vmul.f32 %v8280, %v7415
  %v8409 = vmul.f32 %v8281, %v7420
  %v8410 = vmul.f32 %v8282, %v7425
  %v8411 = vmul.f32 %v8283, %v7430
  %v8412 = vmul.f32 %v8284, %v7435
  %v8413 = vmul.f32 %v8285, %v7440
  %v8414 = vmul.f32 %v8286, %v7445
  %v8415 = vmul.f32 %v8287, %v7450
  %v8416 = vmul.f32 %v8288, %v7455
  %v8417 = vmul.f32 %v8289, %v7460
  %v8418 = vmul.f32 %v8290, %v7465
  %v8419 = vmul.f32 %v8291, %v7470
  %v8420 = vmul.f32 %v8292, %v7475
  %v8421 = vmul.f32 %v8293, %v7480
  %v8422 = vmul.f32 %v8294, %v7485
  %v8423 = vmul.f32 %v8295, %v7490
  %v8424 = vmul.f32 %v8296, %v7495
  %v8425 = vmul.f32 %v8297, %v7500
  %v8426 = vmul.f32 %v8298, %v7505
  %v8427 = vmul.f32 %v8299, %v7510
  %v8428 = vmul.f32 %v8300, %v7515
  %v8429 = vmul.f32 %v8301, %v7520
  %v8430 = vmul.f32 %v8302, %v7525
  %v8431 = vmul.f32 %v8303, %v7530
  %v8432 = vmul.f32 %v8304, %v7535
  %v8433 = vmul.f32 %v8305, %v7540
  %v8434 = vmul.f32 %v8306, %v7545
  %v8435 = vmul.f32 %v8307, %v7550
  %v8436 = vmul.f32 %v8308, %v7555
  %v8437 = vmul.f32 %v8309, %v7560
  %v8438 = vmul.f32 %v8310, %v7565
  %v8439 = vmul.f32 %v8311, %v7570
  %v8440 = vmul.f32 %v8312, %v7575
  %v8441 = vmul.f32 %v8313, %v7580
  %v8442 = vmul.f32 %v8314, %v7585
  %v8443 = vmul.f32 %v8315, %v7590
  %v8444 = vmul.f32 %v8316, %v7595
  %v8445 = vmul.f32 %v8317, %v7600
  %v8446 = vmul.f32 %v8318, %v7605
  %v8447 = vmul.f32 %v8319, %v7610
  %v8448 = vmul.f32 %v8320, %v7615
  %v8449 = vmul.f32 %v8321, %v7620
  %v8450 = vmul.f32 %v8322, %v7625
  %v8451 = vmul.f32 %v8323, %v7630
  %v8452 = vmul.f32 %v8324, %v7635
  %v8453 = vmul.f32 %v8325, %v7640
  %v8454 = vmul.f32 %v8326, %v7645
  %v8455 = vmul.f32 %v8327, %v7650
  %v8456 = vmul.f32 %v8328, %v7655
  %v8457 = vmul.f32 %v8329, %v7660
  %v8458 = vmul.f32 %v8330, %v7665
  %v8459 = vmul.f32 %v8331, %v7670
  %v8460 = vmul.f32 %v8332, %v7675
  %v8461 = vmul.f32 %v8333, %v7680
  %v8462 = vmul.f32 %v8334, %v7685
  %v8463 = vmul.f32 %v8335, %v7690
  %v8464 = vmul.f32 %v8336, %v7695
  %v8465 = vmul.f32 %v8337, %v7700
  %v8466 = vmul.f32 %v8338, %v7705
  %v8467 = vmul.f32 %v8339, %v7710
  %v8468 = vmul.f32 %v8340, %v7715
  %v8469 = vmul.f32 %v8341, %v7720
  %v8470 = vmul.f32 %v8342, %v7725
  %v8471 = vmul.f32 %v8343, %v7730
  %v8472 = vmul.f32 %v8344, %v7735
  %v8473 = vmul.f32 %v8345, %v7740
  %v8474 = vmul.f32 %v8346, %v7745
  %v8475 = vmul.f32 %v8347, %v7750
  %v8476 = vmul.f32 %v8348, %v7755
  %v8477 = vmul.f32 %v8349, %v7760
  %v8478 = vmul.f32 %v8350, %v7765
  %v8479 = vmul.f32 %v8351, %v7770
  %v8480 = vmul.f32 %v8352, %v7775
  %v8481 = vmul.f32 %v8353, %v7780
  %v8482 = vmul.f32 %v8354, %v7785
  %v8483 = vmul.f32 %v8355, %v7790
  %v8484 = vmul.f32 %v8356, %v7795
  %v8485 = vmul.f32 %v8357, %v7800
  %v8486 = vmul.f32 %v8358, %v7805
  %v8487 = vmul.f32 %v8359, %v7810
  %v8488 = vmul.f32 %v8360, %v7815
  %v8489 = vmul.f32 %v8361, %v7820
  %v8490 = vmul.f32 %v8362, %v7825
  %v8491 = vmul.f32 %v8363, %v7830
  %v8492 = vmul.f32 %v8364, %v7835
  %v8493 = vmul.f32 %v8365, %v7840
  %v8494 = vmul.f32 %v8366, %v7845
  %v8495 = vmul.f32 %v8367, %v7850
  %v8496 = vmul.f32 %v8368, %v7855
  %v8497 = vmul.f32 %v8369, %v7860
  %v8498 = vmul.f32 %v8370, %v7865
  %v8499 = vmul.f32 %v8371, %v7870
  %v8500 = vmul.f32 %v8372, %v7875
  %v8501 = vmul.f32 %v8373, %v7880
  %v8502 = vmul.f32 %v8374, %v7885
  %v8503 = vmul.f32 %v8375, %v7890
  %v8504 = vmul.f32 %v8376, %v7895
  %v8505 = vmul.f32 %v8377, %v7900
  %v8506 = vmul.f32 %v8378, %v7905
  %v8507 = vmul.f32 %v8379, %v7910
  %v8508 = vmul.f32 %v8380, %v7915
  %v8509 = vmul.f32 %v8381, %v7920
  %v8510 = vmul.f32 %v8382, %v7925
  %v8511 = vmul.f32 %v8383, %v7930
  %v8512 = vmul.f32 %v8384, %v7935
  %v8513 = vmul.f32 %v8385, %v7940
  %v8514 = vmul.f32 %v8386, %v7945
  %v8515 = vmul.f32 %v8387, %v7950
  %v8516 = vmul.f32 %v8388, %v7955
  %v8517 = vmul.f32 %v8389, %v7960
  %v8518 = vmul.f32 %v8390, %v7965
  %v8519 = vmul.f32 %v8391, %v7970
  %v8520 = vmul.f32 %v8392, %v7975
  %v8521 = vmul.f32 %v8393, %v7980
  %v8522 = vmul.f32 %v8394, %v7985
  %v8523 = vmul.f32 %v8395, %v7990
  %v8524 = vmul.f32 %v8396, %v7995
  %v8525 = vmul.f32 %v8397, %v8000
  %v8526 = vmul.f32 %v8398, %v8005
  %v8527 = vadd.f32 %v8399, %v8400
  %v8528 = vadd.f32 %v8527, %v8401
  %v8529 = vadd.f32 %v8528, %v8402
  %v8530 = vadd.f32 %v8529, %v8403
  %v8531 = vadd.f32 %v8530, %v8404
  %v8532 = vadd.f32 %v8531, %v8405
  %v8533 = vadd.f32 %v8532, %v8406
  %v8534 = vadd.f32 %v8533, %v8407
  %v8535 = vadd.f32 %v8534, %v8408
  %v8536 = vadd.f32 %v8535, %v8409
  %v8537 = vadd.f32 %v8536, %v8410
  %v8538 = vadd.f32 %v8537, %v8411
  %v8539 = vadd.f32 %v8538, %v8412
  %v8540 = vadd.f32 %v8539, %v8413
  %v8541 = vadd.f32 %v8540, %v8414
  %v8542 = vadd.f32 %v8541, %v8415
  %v8543 = vadd.f32 %v8542, %v8416
  %v8544 = vadd.f32 %v8543, %v8417
  %v8545 = vadd.f32 %v8544, %v8418
  %v8546 = vadd.f32 %v8545, %v8419
  %v8547 = vadd.f32 %v8546, %v8420
  %v8548 = vadd.f32 %v8547, %v8421
  %v8549 = vadd.f32 %v8548, %v8422
  %v8550 = vadd.f32 %v8549, %v8423
  %v8551 = vadd.f32 %v8550, %v8424
  %v8552 = vadd.f32 %v8551, %v8425
  %v8553 = vadd.f32 %v8552, %v8426
  %v8554 = vadd.f32 %v8553, %v8427
  %v8555 = vadd.f32 %v8554, %v8428
  %v8556 = vadd.f32 %v8555, %v8429
  %v8557 = vadd.f32 %v8556, %v8430
  %v8558 = vadd.f32 %v8557, %v8431
  %v8559 = vadd.f32 %v8558, %v8432
  %v8560 = vadd.f32 %v8559, %v8433
  %v8561 = vadd.f32 %v8560, %v8434
  %v8562 = vadd.f32 %v8561, %v8435
  %v8563 = vadd.f32 %v8562, %v8436
  %v8564 = vadd.f32 %v8563, %v8437
  %v8565 = vadd.f32 %v8564, %v8438
  %v8566 = vadd.f32 %v8565, %v8439
  %v8567 = vadd.f32 %v8566, %v8440
  %v8568 = vadd.f32 %v8567, %v8441
  %v8569 = vadd.f32 %v8568, %v8442
  %v8570 = vadd.f32 %v8569, %v8443
  %v8571 = vadd.f32 %v8570, %v8444
  %v8572 = vadd.f32 %v8571, %v8445
  %v8573 = vadd.f32 %v8572, %v8446
  %v8574 = vadd.f32 %v8573, %v8447
  %v8575 = vadd.f32 %v8574, %v8448
  %v8576 = vadd.f32 %v8575, %v8449
  %v8577 = vadd.f32 %v8576, %v8450
  %v8578 = vadd.f32 %v8577, %v8451
  %v8579 = vadd.f32 %v8578, %v8452
  %v8580 = vadd.f32 %v8579, %v8453
  %v8581 = vadd.f32 %v8580, %v8454
  %v8582 = vadd.f32 %v8581, %v8455
  %v8583 = vadd.f32 %v8582, %v8456
  %v8584 = vadd.f32 %v8583, %v8457
  %v8585 = vadd.f32 %v8584, %v8458
  %v8586 = vadd.f32 %v8585, %v8459
  %v8587 = vadd.f32 %v8586, %v8460
  %v8588 = vadd.f32 %v8587, %v8461
  %v8589 = vadd.f32 %v8588, %v8462
  %v8590 = vadd.f32 %v8589, %v8463
  %v8591 = vadd.f32 %v8590, %v8464
  %v8592 = vadd.f32 %v8591, %v8465
  %v8593 = vadd.f32 %v8592, %v8466
  %v8594 = vadd.f32 %v8593, %v8467
  %v8595 = vadd.f32 %v8594, %v8468
  %v8596 = vadd.f32 %v8595, %v8469
  %v8597 = vadd.f32 %v8596, %v8470
  %v8598 = vadd.f32 %v8597, %v8471
  %v8599 = vadd.f32 %v8598, %v8472
  %v8600 = vadd.f32 %v8599, %v8473
  %v8601 = vadd.f32 %v8600, %v8474
  %v8602 = vadd.f32 %v8601, %v8475
  %v8603 = vadd.f32 %v8602, %v8476
  %v8604 = vadd.f32 %v8603, %v8477
  %v8605 = vadd.f32 %v8604, %v8478
  %v8606 = vadd.f32 %v8605, %v8479
  %v8607 = vadd.f32 %v8606, %v8480
  %v8608 = vadd.f32 %v8607, %v8481
  %v8609 = vadd.f32 %v8608, %v8482
  %v8610 = vadd.f32 %v8609, %v8483
  %v8611 = vadd.f32 %v8610, %v8484
  %v8612 = vadd.f32 %v8611, %v8485
  %v8613 = vadd.f32 %v8612, %v8486
  %v8614 = vadd.f32 %v8613, %v8487
  %v8615 = vadd.f32 %v8614, %v8488
  %v8616 = vadd.f32 %v8615, %v8489
  %v8617 = vadd.f32 %v8616, %v8490
  %v8618 = vadd.f32 %v8617, %v8491
  %v8619 = vadd.f32 %v8618, %v8492
  %v8620 = vadd.f32 %v8619, %v8493
  %v8621 = vadd.f32 %v8620, %v8494
  %v8622 = vadd.f32 %v8621, %v8495
  %v8623 = vadd.f32 %v8622, %v8496
  %v8624 = vadd.f32 %v8623, %v8497
  %v8625 = vadd.f32 %v8624, %v8498
  %v8626 = vadd.f32 %v8625, %v8499
  %v8627 = vadd.f32 %v8626, %v8500
  %v8628 = vadd.f32 %v8627, %v8501
  %v8629 = vadd.f32 %v8628, %v8502
  %v8630 = vadd.f32 %v8629, %v8503
  %v8631 = vadd.f32 %v8630, %v8504
  %v8632 = vadd.f32 %v8631, %v8505
  %v8633 = vadd.f32 %v8632, %v8506
  %v8634 = vadd.f32 %v8633, %v8507
  %v8635 = vadd.f32 %v8634, %v8508
  %v8636 = vadd.f32 %v8635, %v8509
  %v8637 = vadd.f32 %v8636, %v8510
  %v8638 = vadd.f32 %v8637, %v8511
  %v8639 = vadd.f32 %v8638, %v8512
  %v8640 = vadd.f32 %v8639, %v8513
  %v8641 = vadd.f32 %v8640, %v8514
  %v8642 = vadd.f32 %v8641, %v8515
  %v8643 = vadd.f32 %v8642, %v8516
  %v8644 = vadd.f32 %v8643, %v8517
  %v8645 = vadd.f32 %v8644, %v8518
  %v8646 = vadd.f32 %v8645, %v8519
  %v8647 = vadd.f32 %v8646, %v8520
  %v8648 = vadd.f32 %v8647, %v8521
  %v8649 = vadd.f32 %v8648, %v8522
  %v8650 = vadd.f32 %v8649, %v8523
  %v8651 = vadd.f32 %v8650, %v8524
  %v8652 = vadd.f32 %v8651, %v8525
  %v8653 = vadd.f32 %v8652, %v8526
  %v8654 = vrot.slane %v8653, 4
  %v8655 = vadd.f32 %v8653, %v8654
  %v8656 = vrot.slane %v8655, 2
  %v8657 = vadd.f32 %v8655, %v8656
  %v8658 = vrot.slane %v8657, 1
  %v8659 = vadd.f32 %v8657, %v8658
  %v8660 = vadd.f32 %v8270, %v8659
  %8661 = vst [vmem:[%s6] sm:$0x1] %v8660
  %v8662 = vpack.c.bf16 %v7110, %v7110
  %v8663 = vpack.c.bf16 %v7111, %v7111
  %v8664 = vpack.c.bf16 %v7112, %v7112
  %v8665 = vpack.c.bf16 %v7113, %v7113
  %v8666 = vpack.c.bf16 %v7114, %v7114
  %v8667 = vpack.c.bf16 %v7115, %v7115
  %v8668 = vpack.c.bf16 %v7116, %v7116
  %v8669 = vpack.c.bf16 %v7117, %v7117
  %v8670 = vpack.c.bf16 %v7118, %v7118
  %v8671 = vpack.c.bf16 %v7119, %v7119
  %v8672 = vpack.c.bf16 %v7120, %v7120
  %v8673 = vpack.c.bf16 %v7121, %v7121
  %v8674 = vpack.c.bf16 %v7122, %v7122
  %v8675 = vpack.c.bf16 %v7123, %v7123
  %v8676 = vpack.c.bf16 %v7124, %v7124
  %v8677 = vpack.c.bf16 %v7125, %v7125
  %v8678 = vpack.c.bf16 %v7126, %v7126
  %v8679 = vpack.c.bf16 %v7127, %v7127
  %v8680 = vpack.c.bf16 %v7128, %v7128
  %v8681 = vpack.c.bf16 %v7129, %v7129
  %v8682 = vpack.c.bf16 %v7130, %v7130
  %v8683 = vpack.c.bf16 %v7131, %v7131
  %v8684 = vpack.c.bf16 %v7132, %v7132
  %v8685 = vpack.c.bf16 %v7133, %v7133
  %v8686 = vpack.c.bf16 %v7134, %v7134
  %v8687 = vpack.c.bf16 %v7135, %v7135
  %v8688 = vpack.c.bf16 %v7136, %v7136
  %v8689 = vpack.c.bf16 %v7137, %v7137
  %v8690 = vpack.c.bf16 %v7138, %v7138
  %v8691 = vpack.c.bf16 %v7139, %v7139
  %v8692 = vpack.c.bf16 %v7140, %v7140
  %v8693 = vpack.c.bf16 %v7141, %v7141
  %v8694 = vpack.c.bf16 %v7142, %v7142
  %v8695 = vpack.c.bf16 %v7143, %v7143
  %v8696 = vpack.c.bf16 %v7144, %v7144
  %v8697 = vpack.c.bf16 %v7145, %v7145
  %v8698 = vpack.c.bf16 %v7146, %v7146
  %v8699 = vpack.c.bf16 %v7147, %v7147
  %v8700 = vpack.c.bf16 %v7148, %v7148
  %v8701 = vpack.c.bf16 %v7149, %v7149
  %v8702 = vpack.c.bf16 %v7150, %v7150
  %v8703 = vpack.c.bf16 %v7151, %v7151
  %v8704 = vpack.c.bf16 %v7152, %v7152
  %v8705 = vpack.c.bf16 %v7153, %v7153
  %v8706 = vpack.c.bf16 %v7154, %v7154
  %v8707 = vpack.c.bf16 %v7155, %v7155
  %v8708 = vpack.c.bf16 %v7156, %v7156
  %v8709 = vpack.c.bf16 %v7157, %v7157
  %v8710 = vpack.c.bf16 %v7158, %v7158
  %v8711 = vpack.c.bf16 %v7159, %v7159
  %v8712 = vpack.c.bf16 %v7160, %v7160
  %v8713 = vpack.c.bf16 %v7161, %v7161
  %v8714 = vpack.c.bf16 %v7162, %v7162
  %v8715 = vpack.c.bf16 %v7163, %v7163
  %v8716 = vpack.c.bf16 %v7164, %v7164
  %v8717 = vpack.c.bf16 %v7165, %v7165
  %v8718 = vpack.c.bf16 %v7166, %v7166
  %v8719 = vpack.c.bf16 %v7167, %v7167
  %v8720 = vpack.c.bf16 %v7168, %v7168
  %v8721 = vpack.c.bf16 %v7169, %v7169
  %v8722 = vpack.c.bf16 %v7170, %v7170
  %v8723 = vpack.c.bf16 %v7171, %v7171
  %v8724 = vpack.c.bf16 %v7172, %v7172
  %v8725 = vpack.c.bf16 %v7173, %v7173
  %v8726 = vpack.c.bf16 %v7174, %v7174
  %v8727 = vpack.c.bf16 %v7175, %v7175
  %v8728 = vpack.c.bf16 %v7176, %v7176
  %v8729 = vpack.c.bf16 %v7177, %v7177
  %v8730 = vpack.c.bf16 %v7178, %v7178
  %v8731 = vpack.c.bf16 %v7179, %v7179
  %v8732 = vpack.c.bf16 %v7180, %v7180
  %v8733 = vpack.c.bf16 %v7181, %v7181
  %v8734 = vpack.c.bf16 %v7182, %v7182
  %v8735 = vpack.c.bf16 %v7183, %v7183
  %v8736 = vpack.c.bf16 %v7184, %v7184
  %v8737 = vpack.c.bf16 %v7185, %v7185
  %v8738 = vpack.c.bf16 %v7186, %v7186
  %v8739 = vpack.c.bf16 %v7187, %v7187
  %v8740 = vpack.c.bf16 %v7188, %v7188
  %v8741 = vpack.c.bf16 %v7189, %v7189
  %v8742 = vpack.c.bf16 %v7190, %v7190
  %v8743 = vpack.c.bf16 %v7191, %v7191
  %v8744 = vpack.c.bf16 %v7192, %v7192
  %v8745 = vpack.c.bf16 %v7193, %v7193
  %v8746 = vpack.c.bf16 %v7194, %v7194
  %v8747 = vpack.c.bf16 %v7195, %v7195
  %v8748 = vpack.c.bf16 %v7196, %v7196
  %v8749 = vpack.c.bf16 %v7197, %v7197
  %v8750 = vpack.c.bf16 %v7198, %v7198
  %v8751 = vpack.c.bf16 %v7199, %v7199
  %v8752 = vpack.c.bf16 %v7200, %v7200
  %v8753 = vpack.c.bf16 %v7201, %v7201
  %v8754 = vpack.c.bf16 %v7202, %v7202
  %v8755 = vpack.c.bf16 %v7203, %v7203
  %v8756 = vpack.c.bf16 %v7204, %v7204
  %v8757 = vpack.c.bf16 %v7205, %v7205
  %v8758 = vpack.c.bf16 %v7206, %v7206
  %v8759 = vpack.c.bf16 %v7207, %v7207
  %v8760 = vpack.c.bf16 %v7208, %v7208
  %v8761 = vpack.c.bf16 %v7209, %v7209
  %v8762 = vpack.c.bf16 %v7210, %v7210
  %v8763 = vpack.c.bf16 %v7211, %v7211
  %v8764 = vpack.c.bf16 %v7212, %v7212
  %v8765 = vpack.c.bf16 %v7213, %v7213
  %v8766 = vpack.c.bf16 %v7214, %v7214
  %v8767 = vpack.c.bf16 %v7215, %v7215
  %v8768 = vpack.c.bf16 %v7216, %v7216
  %v8769 = vpack.c.bf16 %v7217, %v7217
  %v8770 = vpack.c.bf16 %v7218, %v7218
  %v8771 = vpack.c.bf16 %v7219, %v7219
  %v8772 = vpack.c.bf16 %v7220, %v7220
  %v8773 = vpack.c.bf16 %v7221, %v7221
  %v8774 = vpack.c.bf16 %v7222, %v7222
  %v8775 = vpack.c.bf16 %v7223, %v7223
  %v8776 = vpack.c.bf16 %v7224, %v7224
  %v8777 = vpack.c.bf16 %v7225, %v7225
  %v8778 = vpack.c.bf16 %v7226, %v7226
  %v8779 = vpack.c.bf16 %v7227, %v7227
  %v8780 = vpack.c.bf16 %v7228, %v7228
  %v8781 = vpack.c.bf16 %v7229, %v7229
  %v8782 = vpack.c.bf16 %v7230, %v7230
  %v8783 = vpack.c.bf16 %v7231, %v7231
  %v8784 = vpack.c.bf16 %v7232, %v7232
  %v8785 = vpack.c.bf16 %v7233, %v7233
  %v8786 = vpack.c.bf16 %v7234, %v7234
  %v8787 = vpack.c.bf16 %v7235, %v7235
  %v8788 = vpack.c.bf16 %v7236, %v7236
  %v8789 = vpack.c.bf16 %v7237, %v7237
  %8790 = vst [vmem:[%s127] sm:$0xf] %v8662
  %8791 = vst [vmem:[%s127 + $0x4] sm:$0xf] %v8663
  %8792 = vst [vmem:[%s127 + $0x8] sm:$0xf] %v8664
  %8793 = vst [vmem:[%s127 + $0xc] sm:$0xf] %v8665
  %8794 = vst [vmem:[%s127 + $0x10] sm:$0xf] %v8666
  %8795 = vst [vmem:[%s127 + $0x14] sm:$0xf] %v8667
  %8796 = vst [vmem:[%s127 + $0x18] sm:$0xf] %v8668
  %8797 = vst [vmem:[%s127 + $0x1c] sm:$0xf] %v8669
  %8798 = vst [vmem:[%s127 + $0x20] sm:$0xf] %v8670
  %8799 = vst [vmem:[%s127 + $0x24] sm:$0xf] %v8671
  %8800 = vst [vmem:[%s127 + $0x28] sm:$0xf] %v8672
  %8801 = vst [vmem:[%s127 + $0x2c] sm:$0xf] %v8673
  %8802 = vst [vmem:[%s127 + $0x30] sm:$0xf] %v8674
  %8803 = vst [vmem:[%s127 + $0x34] sm:$0xf] %v8675
  %8804 = vst [vmem:[%s127 + $0x38] sm:$0xf] %v8676
  %8805 = vst [vmem:[%s127 + $0x3c] sm:$0xf] %v8677
  %8806 = vst [vmem:[%s127 + $0x40] sm:$0xf] %v8678
  %8807 = vst [vmem:[%s127 + $0x44] sm:$0xf] %v8679
  %8808 = vst [vmem:[%s127 + $0x48] sm:$0xf] %v8680
  %8809 = vst [vmem:[%s127 + $0x4c] sm:$0xf] %v8681
  %8810 = vst [vmem:[%s127 + $0x50] sm:$0xf] %v8682
  %8811 = vst [vmem:[%s127 + $0x54] sm:$0xf] %v8683
  %8812 = vst [vmem:[%s127 + $0x58] sm:$0xf] %v8684
  %8813 = vst [vmem:[%s127 + $0x5c] sm:$0xf] %v8685
  %8814 = vst [vmem:[%s127 + $0x60] sm:$0xf] %v8686
  %8815 = vst [vmem:[%s127 + $0x64] sm:$0xf] %v8687
  %8816 = vst [vmem:[%s127 + $0x68] sm:$0xf] %v8688
  %8817 = vst [vmem:[%s127 + $0x6c] sm:$0xf] %v8689
  %8818 = vst [vmem:[%s127 + $0x70] sm:$0xf] %v8690
  %8819 = vst [vmem:[%s127 + $0x74] sm:$0xf] %v8691
  %8820 = vst [vmem:[%s127 + $0x78] sm:$0xf] %v8692
  %8821 = vst [vmem:[%s127 + $0x7c] sm:$0xf] %v8693
  %8822 = vst [vmem:[%s127 + $0x80] sm:$0xf] %v8694
  %8823 = vst [vmem:[%s127 + $0x84] sm:$0xf] %v8695
  %8824 = vst [vmem:[%s127 + $0x88] sm:$0xf] %v8696
  %8825 = vst [vmem:[%s127 + $0x8c] sm:$0xf] %v8697
  %8826 = vst [vmem:[%s127 + $0x90] sm:$0xf] %v8698
  %8827 = vst [vmem:[%s127 + $0x94] sm:$0xf] %v8699
  %8828 = vst [vmem:[%s127 + $0x98] sm:$0xf] %v8700
  %8829 = vst [vmem:[%s127 + $0x9c] sm:$0xf] %v8701
  %8830 = vst [vmem:[%s127 + $0xa0] sm:$0xf] %v8702
  %8831 = vst [vmem:[%s127 + $0xa4] sm:$0xf] %v8703
  %8832 = vst [vmem:[%s127 + $0xa8] sm:$0xf] %v8704
  %8833 = vst [vmem:[%s127 + $0xac] sm:$0xf] %v8705
  %8834 = vst [vmem:[%s127 + $0xb0] sm:$0xf] %v8706
  %8835 = vst [vmem:[%s127 + $0xb4] sm:$0xf] %v8707
  %8836 = vst [vmem:[%s127 + $0xb8] sm:$0xf] %v8708
  %8837 = vst [vmem:[%s127 + $0xbc] sm:$0xf] %v8709
  %8838 = vst [vmem:[%s127 + $0xc0] sm:$0xf] %v8710
  %8839 = vst [vmem:[%s127 + $0xc4] sm:$0xf] %v8711
  %8840 = vst [vmem:[%s127 + $0xc8] sm:$0xf] %v8712
  %8841 = vst [vmem:[%s127 + $0xcc] sm:$0xf] %v8713
  %8842 = vst [vmem:[%s127 + $0xd0] sm:$0xf] %v8714
  %8843 = vst [vmem:[%s127 + $0xd4] sm:$0xf] %v8715
  %8844 = vst [vmem:[%s127 + $0xd8] sm:$0xf] %v8716
  %8845 = vst [vmem:[%s127 + $0xdc] sm:$0xf] %v8717
  %8846 = vst [vmem:[%s127 + $0xe0] sm:$0xf] %v8718
  %8847 = vst [vmem:[%s127 + $0xe4] sm:$0xf] %v8719
  %8848 = vst [vmem:[%s127 + $0xe8] sm:$0xf] %v8720
  %8849 = vst [vmem:[%s127 + $0xec] sm:$0xf] %v8721
  %8850 = vst [vmem:[%s127 + $0xf0] sm:$0xf] %v8722
  %8851 = vst [vmem:[%s127 + $0xf4] sm:$0xf] %v8723
  %8852 = vst [vmem:[%s127 + $0xf8] sm:$0xf] %v8724
  %8853 = vst [vmem:[%s127 + $0xfc] sm:$0xf] %v8725
  %8854 = vst [vmem:[%s127 + $0x100] sm:$0xf] %v8726
  %8855 = vst [vmem:[%s127 + $0x104] sm:$0xf] %v8727
  %8856 = vst [vmem:[%s127 + $0x108] sm:$0xf] %v8728
  %8857 = vst [vmem:[%s127 + $0x10c] sm:$0xf] %v8729
  %8858 = vst [vmem:[%s127 + $0x110] sm:$0xf] %v8730
  %8859 = vst [vmem:[%s127 + $0x114] sm:$0xf] %v8731
  %8860 = vst [vmem:[%s127 + $0x118] sm:$0xf] %v8732
  %8861 = vst [vmem:[%s127 + $0x11c] sm:$0xf] %v8733
  %8862 = vst [vmem:[%s127 + $0x120] sm:$0xf] %v8734
  %8863 = vst [vmem:[%s127 + $0x124] sm:$0xf] %v8735
  %8864 = vst [vmem:[%s127 + $0x128] sm:$0xf] %v8736
  %8865 = vst [vmem:[%s127 + $0x12c] sm:$0xf] %v8737
  %8866 = vst [vmem:[%s127 + $0x130] sm:$0xf] %v8738
  %8867 = vst [vmem:[%s127 + $0x134] sm:$0xf] %v8739
  %8868 = vst [vmem:[%s127 + $0x138] sm:$0xf] %v8740
  %8869 = vst [vmem:[%s127 + $0x13c] sm:$0xf] %v8741
  %8870 = vst [vmem:[%s127 + $0x140] sm:$0xf] %v8742
  %8871 = vst [vmem:[%s127 + $0x144] sm:$0xf] %v8743
  %8872 = vst [vmem:[%s127 + $0x148] sm:$0xf] %v8744
  %8873 = vst [vmem:[%s127 + $0x14c] sm:$0xf] %v8745
  %8874 = vst [vmem:[%s127 + $0x150] sm:$0xf] %v8746
  %8875 = vst [vmem:[%s127 + $0x154] sm:$0xf] %v8747
  %8876 = vst [vmem:[%s127 + $0x158] sm:$0xf] %v8748
  %8877 = vst [vmem:[%s127 + $0x15c] sm:$0xf] %v8749
  %8878 = vst [vmem:[%s127 + $0x160] sm:$0xf] %v8750
  %8879 = vst [vmem:[%s127 + $0x164] sm:$0xf] %v8751
  %8880 = vst [vmem:[%s127 + $0x168] sm:$0xf] %v8752
  %8881 = vst [vmem:[%s127 + $0x16c] sm:$0xf] %v8753
  %8882 = vst [vmem:[%s127 + $0x170] sm:$0xf] %v8754
  %8883 = vst [vmem:[%s127 + $0x174] sm:$0xf] %v8755
  %8884 = vst [vmem:[%s127 + $0x178] sm:$0xf] %v8756
  %8885 = vst [vmem:[%s127 + $0x17c] sm:$0xf] %v8757
  %8886 = vst [vmem:[%s127 + $0x180] sm:$0xf] %v8758
  %8887 = vst [vmem:[%s127 + $0x184] sm:$0xf] %v8759
  %8888 = vst [vmem:[%s127 + $0x188] sm:$0xf] %v8760
  %8889 = vst [vmem:[%s127 + $0x18c] sm:$0xf] %v8761
  %8890 = vst [vmem:[%s127 + $0x190] sm:$0xf] %v8762
  %8891 = vst [vmem:[%s127 + $0x194] sm:$0xf] %v8763
  %8892 = vst [vmem:[%s127 + $0x198] sm:$0xf] %v8764
  %8893 = vst [vmem:[%s127 + $0x19c] sm:$0xf] %v8765
  %8894 = vst [vmem:[%s127 + $0x1a0] sm:$0xf] %v8766
  %8895 = vst [vmem:[%s127 + $0x1a4] sm:$0xf] %v8767
  %8896 = vst [vmem:[%s127 + $0x1a8] sm:$0xf] %v8768
  %8897 = vst [vmem:[%s127 + $0x1ac] sm:$0xf] %v8769
  %8898 = vst [vmem:[%s127 + $0x1b0] sm:$0xf] %v8770
  %8899 = vst [vmem:[%s127 + $0x1b4] sm:$0xf] %v8771
  %8900 = vst [vmem:[%s127 + $0x1b8] sm:$0xf] %v8772
  %8901 = vst [vmem:[%s127 + $0x1bc] sm:$0xf] %v8773
  %8902 = vst [vmem:[%s127 + $0x1c0] sm:$0xf] %v8774
  %8903 = vst [vmem:[%s127 + $0x1c4] sm:$0xf] %v8775
  %8904 = vst [vmem:[%s127 + $0x1c8] sm:$0xf] %v8776
  %8905 = vst [vmem:[%s127 + $0x1cc] sm:$0xf] %v8777
  %8906 = vst [vmem:[%s127 + $0x1d0] sm:$0xf] %v8778
  %8907 = vst [vmem:[%s127 + $0x1d4] sm:$0xf] %v8779
  %8908 = vst [vmem:[%s127 + $0x1d8] sm:$0xf] %v8780
  %8909 = vst [vmem:[%s127 + $0x1dc] sm:$0xf] %v8781
  %8910 = vst [vmem:[%s127 + $0x1e0] sm:$0xf] %v8782
  %8911 = vst [vmem:[%s127 + $0x1e4] sm:$0xf] %v8783
  %8912 = vst [vmem:[%s127 + $0x1e8] sm:$0xf] %v8784
  %8913 = vst [vmem:[%s127 + $0x1ec] sm:$0xf] %v8785
  %8914 = vst [vmem:[%s127 + $0x1f0] sm:$0xf] %v8786
  %8915 = vst [vmem:[%s127 + $0x1f4] sm:$0xf] %v8787
  %8916 = vst [vmem:[%s127 + $0x1f8] sm:$0xf] %v8788
  %8917 = vst [vmem:[%s127 + $0x1fc] sm:$0xf] %v8789
  %s8918 = sadd.s32 0, 0
  %s8919 = smul.u32 128, %s8918
  %p8920 = scmp.lt.s32.totalorder %s8919, 127
  %s8921 = scalar_select %p8920, %s8919, 127
  %s8922 = smul.addr %s8921, 4
  %s8923 = scalar_lea.vmem %s4, %s8922
  // Predicated region
  $region22: #{conv_bn_relu.2} parent=0 // pred_check
    _
  $region23: #{conv_bn_relu.2} parent=0 // pred_check_branch
    %8925 = sbr.rel (0) target = $region25
  $region24: #{conv_bn_relu.2} parent=0 // pred_region
    %s8926 = sadd.s32 0, 0
    %s8927 = smul.u32 128, %s8926
  $region25: #{conv_bn_relu.2} parent=0 // pred_fallthru
    _
  // Predicated region
  $region26: #{conv_bn_relu.2} parent=0 // pred_check
    _
  $region27: #{conv_bn_relu.2} parent=0 // pred_check_branch
    %8929 = sbr.rel (0) target = $region29
  $region28: #{conv_bn_relu.2} parent=0 // pred_region
    _
  $region29: #{conv_bn_relu.2} parent=0 // pred_fallthru
    _
  // Predicated region
  $region30: #{conv_bn_relu.2} parent=0 // pred_check
    _
  $region31: #{conv_bn_relu.2} parent=0 // pred_check_branch
    %8931 = sbr.rel (0) target = $region33
  $region32: #{conv_bn_relu.2} parent=0 // pred_region
    _
  $region33: #{conv_bn_relu.2} parent=0 // pred_fallthru
    _
  // Predicated region
  $region34: #{conv_bn_relu.2} parent=0 // pred_check
    _
  $region35: #{conv_bn_relu.2} parent=0 // pred_check_branch
    %8933 = sbr.rel (0) target = $region37
  $region36: #{conv_bn_relu.2} parent=0 // pred_region
    %s8934 = sadd.s32 0, 0
    %s8935 = smul.u32 128, %s8934
    %p8936 = scmp.lt.s32.totalorder %s8935, 127
    %s8937 = scalar_select %p8936, %s8935, 127
    %s8938 = smul.addr %s8937, 4
    %s8939 = scalar_lea.vmem %s4, %s8938
  $region37: #{conv_bn_relu.2} parent=0 // pred_fallthru
    _
  // Predicated region
  $region38: #{conv_bn_relu.2} parent=0 // pred_check
    _
  $region39: #{conv_bn_relu.2} parent=0 // pred_check_branch
    %8941 = sbr.rel (0) target = $region41
  $region40: #{conv_bn_relu.2} parent=0 // pred_region
    _
  $region41: #{conv_bn_relu.2} parent=0 // pred_fallthru
    _
  // Predicated region
  $region42: #{conv_bn_relu.2} parent=0 // pred_check
    _
  $region43: #{conv_bn_relu.2} parent=0 // pred_check_branch
    %8943 = sbr.rel (0) target = $region45
  $region44: #{conv_bn_relu.2} parent=0 // pred_region
    _
  $region45: #{conv_bn_relu.2} parent=0 // pred_fallthru
    _

</llo_original>
